<compile_context>
chip_gen: v7x
topology: tpu7x:2x2x1
jax: 0.10.0
libtpu: 0.0.40
codegen_flags: <defaults>
</compile_context>

<pallas_src>
import jax
import jax.numpy as jnp
import numpy as np
from jax.experimental import pallas as pl
from jax.experimental.pallas import tpu as pltpu


LANES = 128


def _round_up(x, m):
    return ((x + m - 1) // m) * m


def _pick_batch_tile(n, hw, bytes_per_image, *, target_rows=1024,
                     vmem_budget_bytes=36 << 20, min_rows=256):
    """Images per grid step: aim for ~target_rows matmul rows, stay inside the
    VMEM budget, and keep >=2 grid steps when possible (2 TensorCores on v7x)."""
    bt = max(1, target_rows // max(hw, 1))
    bt = min(bt, max(1, vmem_budget_bytes // max(bytes_per_image, 1)))
    bt = min(bt, n)
    # Prefer >=2 grid steps so the "parallel" axis can shard across TCs, as
    # long as each step still feeds the MXU a reasonable number of rows.
    while bt > 1 and -(-n // bt) < 2 and (bt - 1) * hw >= min_rows:
        bt -= 1
    return max(bt, 1)


# ---------------------------------------------------------------------------
# Kernel
# ---------------------------------------------------------------------------
def _make_kernel(Bt, H, W, Cinp, Cbp, Coutp, dilation):
    d = dilation
    HW = H * W
    Hp, Wp = H + 2 * d, W + 2 * d
    assert Cinp == Coutp  # identity residual

    def kernel(x_ref, w1_ref, b1_ref, w2_ref, b2_ref, w3_ref, b3_ref,
               o_ref, pad_ref):
        # ---- conv1 (1x1, BN1 scale folded) + bias + ReLU --------------------
        x_bf = x_ref[...].reshape(Bt * HW, Cinp).astype(jnp.bfloat16)
        h1 = jnp.dot(x_bf, w1_ref[...], preferred_element_type=jnp.float32)
        h1 = jnp.maximum(h1 + b1_ref[...], 0.0)                  # (Bt*HW, Cbp)

        # ---- stage h1 into the zero-haloed scratch --------------------------
        # Only the thin halo border is zeroed, every step (keeps the scratch
        # correct even when the "parallel" grid axis is sharded across cores).
        pad_ref[:, 0:d, :, :] = jnp.zeros((Bt, d, Wp, Cbp), jnp.bfloat16)
        pad_ref[:, d + H:Hp, :, :] = jnp.zeros((Bt, d, Wp, Cbp), jnp.bfloat16)
        pad_ref[:, d:d + H, 0:d, :] = jnp.zeros((Bt, H, d, Cbp), jnp.bfloat16)
        pad_ref[:, d:d + H, d + W:Wp, :] = jnp.zeros((Bt, H, d, Cbp),
                                                     jnp.bfloat16)
        pad_ref[:, d:d + H, d:d + W, :] = (
            h1.astype(jnp.bfloat16).reshape(Bt, H, W, Cbp))

        # ---- conv2 (3x3, stride=1, pad=dil, dilation=dil) + bias + ReLU -----
        # 3 accumulated matmuls, one per kernel row (K = 3*Cbp), each reading
        # its taps as plain windows of the haloed scratch.
        acc = jnp.zeros((Bt * HW, Cbp), jnp.float32)
        for ky in range(3):
            lhs = jnp.concatenate(
                [pad_ref[:, ky * d:ky * d + H, kx * d:kx * d + W, :]
                 for kx in range(3)],
                axis=-1).reshape(Bt * HW, 3 * Cbp)
            w_row = w2_ref[ky * 3 * Cbp:(ky + 1) * 3 * Cbp, :]
            acc = acc + jnp.dot(lhs, w_row, preferred_element_type=jnp.float32)
        h2 = jnp.maximum(acc + b2_ref[...], 0.0)                 # (Bt*HW, Cbp)

        # ---- conv3 (1x1, BN3 scale folded) + bias ---------------------------
        h3 = jnp.dot(h2.astype(jnp.bfloat16), w3_ref[...],
                     preferred_element_type=jnp.float32)
        h3 = h3 + b3_ref[...]                                    # (Bt*HW, Coutp)

        # ---- identity residual (f32 add) + ReLU -----------------------------
        res = x_ref[...].reshape(Bt * HW, Cinp).astype(jnp.float32)
        out = jnp.maximum(h3 + res, 0.0)
        o_ref[...] = out.reshape(Bt, HW, Coutp).astype(o_ref.dtype)

    return kernel


# ---------------------------------------------------------------------------
# Parameter preparation: BN fold + scale fold into weights + lane padding.
# ---------------------------------------------------------------------------
def prepare_params(w1_oihw, bn1, w2_oihw, bn2, w3_oihw, bn3, eps=1e-5):
    def fold(bn):
        gamma, beta, mean, var = bn
        s = gamma / jnp.sqrt(var + eps)
        return s, beta - mean * s

    s1, b1 = fold(bn1)
    s2, b2 = fold(bn2)
    s3, b3 = fold(bn3)

    Cb, Cin = w1_oihw.shape[0], w1_oihw.shape[1]
    Cout = w3_oihw.shape[0]
    Cinp, Cbp, Coutp = (_round_up(Cin, LANES), _round_up(Cb, LANES),
                        _round_up(Cout, LANES))

    # conv1: OIHW (Cb, Cin, 1, 1) -> (Cin, Cb), fold s1 into output columns.
    w1 = jnp.transpose(w1_oihw[:, :, 0, 0], (1, 0)) * s1[None, :]
    w1p = jnp.zeros((Cinp, Cbp), jnp.float32).at[:Cin, :Cb].set(w1)
    b1p = jnp.zeros((1, Cbp), jnp.float32).at[0, :Cb].set(b1)

    # conv2: OIHW (Cb, Cb, 3, 3) -> (ky, kx, ci, co), fold s2, stack the 9 taps
    # (row-major ky,kx) into a single (9*Cbp, Cbp) matrix matching the kernel's
    # per-row (K = 3*Cbp) window order.
    # TODO(synk): when Cb < 128, pack 128//Cb taps per lane group (pltpu.roll +
    # VPU add) instead of padding every tap to 128 lanes.
    w2 = jnp.transpose(w2_oihw, (2, 3, 1, 0)) * s2[None, None, None, :]
    w2p = (jnp.zeros((9, Cbp, Cbp), jnp.float32)
           .at[:, :Cb, :Cb].set(w2.reshape(9, Cb, Cb))
           .reshape(9 * Cbp, Cbp))
    b2p = jnp.zeros((1, Cbp), jnp.float32).at[0, :Cb].set(b2)

    # conv3: OIHW (Cout, Cb, 1, 1) -> (Cb, Cout), fold s3.
    w3 = jnp.transpose(w3_oihw[:, :, 0, 0], (1, 0)) * s3[None, :]
    w3p = jnp.zeros((Cbp, Coutp), jnp.float32).at[:Cb, :Cout].set(w3)
    b3p = jnp.zeros((1, Coutp), jnp.float32).at[0, :Cout].set(b3)

    return {
        "w1": w1p.astype(jnp.bfloat16), "b1": b1p,
        "w2": w2p.astype(jnp.bfloat16), "b2": b2p,
        "w3": w3p.astype(jnp.bfloat16), "b3": b3p,
        "dims": (Cin, Cb, Cout, Cinp, Cbp, Coutp),
    }


# ---------------------------------------------------------------------------
# Packed-layout entry point (activations stay in (N, H*W, Cpad) across blocks).
# ---------------------------------------------------------------------------
def bottleneck_packed(x_packed, prep, H, W, *, dilation=1):
    Cin, Cb, Cout, Cinp, Cbp, Coutp = prep["dims"]
    N, HW, Cx = x_packed.shape
    assert HW == H * W and Cx == Cinp and Cinp == Coutp
    d = dilation
    Hp, Wp = H + 2 * d, W + 2 * d
    io_bytes = x_packed.dtype.itemsize

    # Rough per-image VMEM footprint: double-buffered in/out blocks, the haloed
    # conv2 scratch, one K-group im2col slab and the main f32 intermediates.
    per_image = (HW * (2 * Cinp + 2 * Coutp) * io_bytes
                 + Hp * Wp * Cbp * 2
                 + HW * (Cbp * 4 + 3 * Cbp * 2 + Cbp * 6 + Coutp * 8))
    Bt = _pick_batch_tile(N, HW, per_image)
    Npad = -(-N // Bt) * Bt
    x_pad = (jnp.pad(x_packed, ((0, Npad - N), (0, 0), (0, 0)))
             if Npad != N else x_packed)

    kernel = _make_kernel(Bt, H, W, Cinp, Cbp, Coutp, dilation)

    flops = 2 * Npad * HW * (Cinp * Cbp + 9 * Cbp * Cbp + Cbp * Coutp)
    bytes_accessed = (Npad * HW * (Cinp + Coutp) * io_bytes
                      + (Cinp * Cbp + 9 * Cbp * Cbp + Cbp * Coutp) * 2
                      + (2 * Cbp + Coutp) * 4)
    cost = pl.CostEstimate(flops=int(flops), transcendentals=0,
                           bytes_accessed=int(bytes_accessed))

    def build(weight_mode):
        def const_spec(shape):
            r = len(shape)
            idx = lambda n: (0,) * r
            if weight_mode is None:
                return pl.BlockSpec(shape, idx)
            return pl.BlockSpec(shape, idx, pipeline_mode=weight_mode)

        in_specs = [
            pl.BlockSpec((Bt, HW, Cinp), lambda n: (n, 0, 0)),   # x
            const_spec((Cinp, Cbp)), const_spec((1, Cbp)),       # w1, b1
            const_spec((9 * Cbp, Cbp)), const_spec((1, Cbp)),    # w2, b2
            const_spec((Cbp, Coutp)), const_spec((1, Coutp)),    # w3, b3
        ]
        out_spec = pl.BlockSpec((Bt, HW, Coutp), lambda n: (n, 0, 0))
        return pl.pallas_call(
            kernel,
            out_shape=jax.ShapeDtypeStruct((Npad, HW, Coutp), x_packed.dtype),
            grid=(Npad // Bt,),
            in_specs=in_specs,
            out_specs=out_spec,
            scratch_shapes=[pltpu.VMEM((Bt, Hp, Wp, Cbp), jnp.bfloat16)],
            compiler_params=pltpu.CompilerParams(
                dimension_semantics=("parallel",),   # images are independent
                vmem_limit_bytes=48 * 1024 * 1024),
            cost_estimate=cost,
        )

    args = (x_pad, prep["w1"], prep["b1"], prep["w2"], prep["b2"],
            prep["w3"], prep["b3"])
    try:
        # Grid-invariant weights/biases: single-buffer them to save VMEM.
        out = build(pl.Buffered(1))(*args)
    except Exception:
        # Fallback if this jax version rejects single-buffered BlockSpecs.
        out = build(None)(*args)
    return out[:N] if Npad != N else out


# ---------------------------------------------------------------------------
# NCHW wrapper: layout plumbing only (fused by XLA around the kernel).
# ---------------------------------------------------------------------------
def bottleneck_pallas(x_nchw, prep, *, stride=1, dilation=1,
                      io_dtype=jnp.bfloat16):
    Cin, Cb, Cout, Cinp, Cbp, Coutp = prep["dims"]
    N, C, H, W = x_nchw.shape
    assert C == Cin
    assert stride == 1 and Cout == Cin, (
        "identity residual requires stride==1 and planes==inplanes")

    # TODO(synk): in a full DLA network, keep activations in the packed
    # (N, H*W, Cpad) bf16 layout across consecutive blocks (bottleneck_packed)
    # instead of paying these NCHW<->NHWC + pad/slice HBM round trips per block.
    x_nhwc = jnp.transpose(x_nchw, (0, 2, 3, 1)).astype(io_dtype)
    x_p = jnp.pad(x_nhwc, ((0, 0), (0, 0), (0, 0), (0, Cinp - Cin)))
    x_2d = x_p.reshape(N, H * W, Cinp)

    out = bottleneck_packed(x_2d, prep, H, W, dilation=dilation)

    out = out[:, :, :Cout].reshape(N, H, W, Cout).astype(x_nchw.dtype)
    return jnp.transpose(out, (0, 3, 1, 2))


# ---------------------------------------------------------------------------
# Pure-JAX f32 reference (faithful to the PyTorch module, eval-mode BN).
# ---------------------------------------------------------------------------
def bottleneck_ref(x, w1, bn1, w2, bn2, w3, bn3, *, stride=1, dilation=1,
                   eps=1e-5):
    def bn(h, p):
        gamma, beta, mean, var = p
        s = gamma / jnp.sqrt(var + eps)
        b = beta - mean * s
        return h * s[None, :, None, None] + b[None, :, None, None]

    def conv(h, w, stride=1, padding=((0, 0), (0, 0)), dil=1):
        return jax.lax.conv_general_dilated(
            h, w, window_strides=(stride, stride), padding=padding,
            rhs_dilation=(dil, dil),
            dimension_numbers=("NCHW", "OIHW", "NCHW"))

    h = jnp.maximum(bn(conv(x, w1), bn1), 0.0)
    h = jnp.maximum(bn(conv(h, w2, stride=stride,
                            padding=((dilation, dilation), (dilation, dilation)),
                            dil=dilation), bn2), 0.0)
    h = bn(conv(h, w3), bn3)
    return jnp.maximum(h + x, 0.0)


if __name__ == "__main__":
    key = jax.random.PRNGKey(0)
    ks = jax.random.split(key, 8)

    # Small shapes consistent with the module (inplanes == planes so the
    # identity residual path of forward(x, residual=None) is valid).
    N, H, W = 2, 16, 16
    inplanes = planes = 16
    bottle = planes // 2            # Bottleneck.expansion = 2
    stride, dilation = 1, 1

    # Deterministic synthetic weights (PyTorch OIHW layout) and eval-mode BN.
    w1 = 0.1 * jax.random.normal(ks[0], (bottle, inplanes, 1, 1), jnp.float32)
    w2 = 0.1 * jax.random.normal(ks[1], (bottle, bottle, 3, 3), jnp.float32)
    w3 = 0.1 * jax.random.normal(ks[2], (planes, bottle, 1, 1), jnp.float32)

    def bn_init(k, c):
        kg, kb, km, kv = jax.random.split(k, 4)
        gamma = 1.0 + 0.1 * jax.random.normal(kg, (c,), jnp.float32)
        beta = 0.1 * jax.random.normal(kb, (c,), jnp.float32)
        mean = 0.1 * jax.random.normal(km, (c,), jnp.float32)
        var = jnp.abs(1.0 + 0.1 * jax.random.normal(kv, (c,), jnp.float32))
        return (gamma, beta, mean, var)

    bn1 = bn_init(ks[3], bottle)
    bn2 = bn_init(ks[4], bottle)
    bn3 = bn_init(ks[5], planes)

    # Input in PyTorch NCHW layout.
    x = jax.random.normal(ks[6], (N, inplanes, H, W), jnp.float32)

    prep = prepare_params(w1, bn1, w2, bn2, w3, bn3)
    out = bottleneck_pallas(x, prep, stride=stride, dilation=dilation)
    out = jax.block_until_ready(out)

    ref = bottleneck_ref(x, w1, bn1, w2, bn2, w3, bn3,
                         stride=stride, dilation=dilation)
    # Tolerance covers bf16 kernel I/O + bf16 MXU inputs (f32 accumulation).
    np.testing.assert_allclose(np.asarray(out), np.asarray(ref),
                               rtol=5e-2, atol=5e-2)
    print("KERNEL_OK")
</pallas_src>

<mosaic_0001>
module attributes {stable_mosaic.version = 11 : i64} {
  func.func @kernel(%arg0: i32, %arg1: memref<1x256x128xbf16, #tpu.memory_space<vmem>>, %arg2: memref<128x128xbf16, #tpu.memory_space<vmem>>, %arg3: memref<1x128xf32, #tpu.memory_space<vmem>>, %arg4: memref<1152x128xbf16, #tpu.memory_space<vmem>>, %arg5: memref<1x128xf32, #tpu.memory_space<vmem>>, %arg6: memref<128x128xbf16, #tpu.memory_space<vmem>>, %arg7: memref<1x128xf32, #tpu.memory_space<vmem>>, %arg8: memref<1x256x128xbf16, #tpu.memory_space<vmem>>, %arg9: memref<1x18x18x128xbf16, #tpu.memory_space<vmem>>) attributes {dimension_semantics = [#tpu.dimension_semantics<parallel>], iteration_bounds = array<i64: 2>, scalar_prefetch = 0 : i64, scratch_operands = 1 : i64, tpu.core_type = #tpu.core_type<tc>, window_params = [{transform_indices = @transform_0, window_bounds = array<i64: 1, 256, 128>}, {pipeline_mode = #tpu.pipeline_mode<synchronous>, transform_indices = @transform_1, window_bounds = array<i64: 128, 128>}, {pipeline_mode = #tpu.pipeline_mode<synchronous>, transform_indices = @transform_2, window_bounds = array<i64: 1, 128>}, {pipeline_mode = #tpu.pipeline_mode<synchronous>, transform_indices = @transform_3, window_bounds = array<i64: 1152, 128>}, {pipeline_mode = #tpu.pipeline_mode<synchronous>, transform_indices = @transform_4, window_bounds = array<i64: 1, 128>}, {pipeline_mode = #tpu.pipeline_mode<synchronous>, transform_indices = @transform_5, window_bounds = array<i64: 128, 128>}, {pipeline_mode = #tpu.pipeline_mode<synchronous>, transform_indices = @transform_6, window_bounds = array<i64: 1, 128>}, {transform_indices = @transform_7, window_bounds = array<i64: 1, 256, 128>}]} {
    %c0 = arith.constant 0 : index
    %c0_0 = arith.constant 0 : index
    %c0_1 = arith.constant 0 : index
    %0 = vector.load %arg1[%c0, %c0_0, %c0_1] : memref<1x256x128xbf16, #tpu.memory_space<vmem>>, vector<1x256x128xbf16>
    %1 = vector.shape_cast %0 : vector<1x256x128xbf16> to vector<256x128xbf16>
    %c0_2 = arith.constant 0 : index
    %c0_3 = arith.constant 0 : index
    %2 = vector.load %arg2[%c0_2, %c0_3] : memref<128x128xbf16, #tpu.memory_space<vmem>>, vector<128x128xbf16>
    %cst = arith.constant dense<0.000000e+00> : vector<256x128xf32>
    %3 = tpu.matmul %1, %2, %cst {dimension_numbers = #tpu.dot_dimension_numbers<[1], [0], [0], [1], [0, 0, 1, 1], [], []>} : vector<256x128xbf16>, vector<128x128xbf16>, vector<256x128xf32> -> vector<256x128xf32>
    %c0_4 = arith.constant 0 : index
    %c0_5 = arith.constant 0 : index
    %4 = vector.load %arg3[%c0_4, %c0_5] : memref<1x128xf32, #tpu.memory_space<vmem>>, vector<1x128xf32>
    %5 = vector.broadcast %4 : vector<1x128xf32> to vector<256x128xf32>
    %6 = arith.addf %3, %5 : vector<256x128xf32>
    %cst_6 = arith.constant 0.000000e+00 : f32
    %7 = vector.broadcast %cst_6 : f32 to vector<256x128xf32>
    %8 = arith.maximumf %6, %7 : vector<256x128xf32>
    %cst_7 = arith.constant 0.000000e+00 : bf16
    %9 = vector.broadcast %cst_7 : bf16 to vector<1x1x18x128xbf16>
    %c0_8 = arith.constant 0 : index
    %c0_9 = arith.constant 0 : index
    %c0_10 = arith.constant 0 : index
    %c0_11 = arith.constant 0 : index
    %10 = vector.load %arg9[%c0_8, %c0_9, %c0_10, %c0_11] : memref<1x18x18x128xbf16, #tpu.memory_space<vmem>>, vector<1x1x18x128xbf16>
    tpu.vector_store %arg9[%c0_8, %c0_9, %c0_10, %c0_11], %9 {strides = array<i32>} : memref<1x18x18x128xbf16, #tpu.memory_space<vmem>>, vector<1x1x18x128xbf16>,
    %cst_12 = arith.constant 0.000000e+00 : bf16
    %11 = vector.broadcast %cst_12 : bf16 to vector<1x1x18x128xbf16>
    %c0_13 = arith.constant 0 : index
    %c17 = arith.constant 17 : index
    %c0_14 = arith.constant 0 : index
    %c0_15 = arith.constant 0 : index
    %12 = vector.load %arg9[%c0_13, %c17, %c0_14, %c0_15] : memref<1x18x18x128xbf16, #tpu.memory_space<vmem>>, vector<1x1x18x128xbf16>
    tpu.vector_store %arg9[%c0_13, %c17, %c0_14, %c0_15], %11 {strides = array<i32>} : memref<1x18x18x128xbf16, #tpu.memory_space<vmem>>, vector<1x1x18x128xbf16>,
    %cst_16 = arith.constant 0.000000e+00 : bf16
    %13 = vector.broadcast %cst_16 : bf16 to vector<1x16x1x128xbf16>
    %c0_17 = arith.constant 0 : index
    %c1 = arith.constant 1 : index
    %c0_18 = arith.constant 0 : index
    %c0_19 = arith.constant 0 : index
    %14 = vector.load %arg9[%c0_17, %c1, %c0_18, %c0_19] : memref<1x18x18x128xbf16, #tpu.memory_space<vmem>>, vector<1x16x1x128xbf16>
    tpu.vector_store %arg9[%c0_17, %c1, %c0_18, %c0_19], %13 {strides = array<i32>} : memref<1x18x18x128xbf16, #tpu.memory_space<vmem>>, vector<1x16x1x128xbf16>,
    %cst_20 = arith.constant 0.000000e+00 : bf16
    %15 = vector.broadcast %cst_20 : bf16 to vector<1x16x1x128xbf16>
    %c0_21 = arith.constant 0 : index
    %c1_22 = arith.constant 1 : index
    %c17_23 = arith.constant 17 : index
    %c0_24 = arith.constant 0 : index
    %16 = vector.load %arg9[%c0_21, %c1_22, %c17_23, %c0_24] : memref<1x18x18x128xbf16, #tpu.memory_space<vmem>>, vector<1x16x1x128xbf16>
    tpu.vector_store %arg9[%c0_21, %c1_22, %c17_23, %c0_24], %15 {strides = array<i32>} : memref<1x18x18x128xbf16, #tpu.memory_space<vmem>>, vector<1x16x1x128xbf16>,
    %17 = arith.truncf %8 : vector<256x128xf32> to vector<256x128xbf16>
    %18 = vector.shape_cast %17 : vector<256x128xbf16> to vector<1x16x16x128xbf16>
    %c0_25 = arith.constant 0 : index
    %c1_26 = arith.constant 1 : index
    %c1_27 = arith.constant 1 : index
    %c0_28 = arith.constant 0 : index
    %19 = vector.load %arg9[%c0_25, %c1_26, %c1_27, %c0_28] : memref<1x18x18x128xbf16, #tpu.memory_space<vmem>>, vector<1x16x16x128xbf16>
    tpu.vector_store %arg9[%c0_25, %c1_26, %c1_27, %c0_28], %18 {strides = array<i32>} : memref<1x18x18x128xbf16, #tpu.memory_space<vmem>>, vector<1x16x16x128xbf16>,
    %cst_29 = arith.constant 0.000000e+00 : f32
    %20 = vector.broadcast %cst_29 : f32 to vector<256x128xf32>
    %c0_30 = arith.constant 0 : index
    %c0_31 = arith.constant 0 : index
    %c0_32 = arith.constant 0 : index
    %c0_33 = arith.constant 0 : index
    %21 = vector.load %arg9[%c0_30, %c0_31, %c0_32, %c0_33] : memref<1x18x18x128xbf16, #tpu.memory_space<vmem>>, vector<1x16x16x128xbf16>
    %c0_34 = arith.constant 0 : index
    %c0_35 = arith.constant 0 : index
    %c1_36 = arith.constant 1 : index
    %c0_37 = arith.constant 0 : index
    %22 = vector.load %arg9[%c0_34, %c0_35, %c1_36, %c0_37] : memref<1x18x18x128xbf16, #tpu.memory_space<vmem>>, vector<1x16x16x128xbf16>
    %c0_38 = arith.constant 0 : index
    %c0_39 = arith.constant 0 : index
    %c2 = arith.constant 2 : index
    %c0_40 = arith.constant 0 : index
    %23 = vector.load %arg9[%c0_38, %c0_39, %c2, %c0_40] : memref<1x18x18x128xbf16, #tpu.memory_space<vmem>>, vector<1x16x16x128xbf16>
    %24 = tpu.concatenate %21, %22, %23 in 3 : vector<1x16x16x128xbf16>, vector<1x16x16x128xbf16>, vector<1x16x16x128xbf16> -> vector<1x16x16x384xbf16>
    %25 = vector.shape_cast %24 : vector<1x16x16x384xbf16> to vector<256x384xbf16>
    %c0_41 = arith.constant 0 : index
    %c0_42 = arith.constant 0 : index
    %26 = vector.load %arg4[%c0_41, %c0_42] : memref<1152x128xbf16, #tpu.memory_space<vmem>>, vector<384x128xbf16>
    %cst_43 = arith.constant dense<0.000000e+00> : vector<256x128xf32>
    %27 = tpu.matmul %25, %26, %cst_43 {dimension_numbers = #tpu.dot_dimension_numbers<[1], [0], [0], [1], [0, 0, 1, 1], [], []>} : vector<256x384xbf16>, vector<384x128xbf16>, vector<256x128xf32> -> vector<256x128xf32>
    %28 = arith.addf %20, %27 : vector<256x128xf32>
    %c0_44 = arith.constant 0 : index
    %c1_45 = arith.constant 1 : index
    %c0_46 = arith.constant 0 : index
    %c0_47 = arith.constant 0 : index
    %29 = vector.load %arg9[%c0_44, %c1_45, %c0_46, %c0_47] : memref<1x18x18x128xbf16, #tpu.memory_space<vmem>>, vector<1x16x16x128xbf16>
    %c0_48 = arith.constant 0 : index
    %c1_49 = arith.constant 1 : index
    %c1_50 = arith.constant 1 : index
    %c0_51 = arith.constant 0 : index
    %30 = vector.load %arg9[%c0_48, %c1_49, %c1_50, %c0_51] : memref<1x18x18x128xbf16, #tpu.memory_space<vmem>>, vector<1x16x16x128xbf16>
    %c0_52 = arith.constant 0 : index
    %c1_53 = arith.constant 1 : index
    %c2_54 = arith.constant 2 : index
    %c0_55 = arith.constant 0 : index
    %31 = vector.load %arg9[%c0_52, %c1_53, %c2_54, %c0_55] : memref<1x18x18x128xbf16, #tpu.memory_space<vmem>>, vector<1x16x16x128xbf16>
    %32 = tpu.concatenate %29, %30, %31 in 3 : vector<1x16x16x128xbf16>, vector<1x16x16x128xbf16>, vector<1x16x16x128xbf16> -> vector<1x16x16x384xbf16>
    %33 = vector.shape_cast %32 : vector<1x16x16x384xbf16> to vector<256x384xbf16>
    %c384 = arith.constant 384 : index
    %c0_56 = arith.constant 0 : index
    %34 = vector.load %arg4[%c384, %c0_56] : memref<1152x128xbf16, #tpu.memory_space<vmem>>, vector<384x128xbf16>
    %cst_57 = arith.constant dense<0.000000e+00> : vector<256x128xf32>
    %35 = tpu.matmul %33, %34, %cst_57 {dimension_numbers = #tpu.dot_dimension_numbers<[1], [0], [0], [1], [0, 0, 1, 1], [], []>} : vector<256x384xbf16>, vector<384x128xbf16>, vector<256x128xf32> -> vector<256x128xf32>
    %36 = arith.addf %28, %35 : vector<256x128xf32>
    %c0_58 = arith.constant 0 : index
    %c2_59 = arith.constant 2 : index
    %c0_60 = arith.constant 0 : index
    %c0_61 = arith.constant 0 : index
    %37 = vector.load %arg9[%c0_58, %c2_59, %c0_60, %c0_61] : memref<1x18x18x128xbf16, #tpu.memory_space<vmem>>, vector<1x16x16x128xbf16>
    %c0_62 = arith.constant 0 : index
    %c2_63 = arith.constant 2 : index
    %c1_64 = arith.constant 1 : index
    %c0_65 = arith.constant 0 : index
    %38 = vector.load %arg9[%c0_62, %c2_63, %c1_64, %c0_65] : memref<1x18x18x128xbf16, #tpu.memory_space<vmem>>, vector<1x16x16x128xbf16>
    %c0_66 = arith.constant 0 : index
    %c2_67 = arith.constant 2 : index
    %c2_68 = arith.constant 2 : index
    %c0_69 = arith.constant 0 : index
    %39 = vector.load %arg9[%c0_66, %c2_67, %c2_68, %c0_69] : memref<1x18x18x128xbf16, #tpu.memory_space<vmem>>, vector<1x16x16x128xbf16>
    %40 = tpu.concatenate %37, %38, %39 in 3 : vector<1x16x16x128xbf16>, vector<1x16x16x128xbf16>, vector<1x16x16x128xbf16> -> vector<1x16x16x384xbf16>
    %41 = vector.shape_cast %40 : vector<1x16x16x384xbf16> to vector<256x384xbf16>
    %c768 = arith.constant 768 : index
    %c0_70 = arith.constant 0 : index
    %42 = vector.load %arg4[%c768, %c0_70] : memref<1152x128xbf16, #tpu.memory_space<vmem>>, vector<384x128xbf16>
    %cst_71 = arith.constant dense<0.000000e+00> : vector<256x128xf32>
    %43 = tpu.matmul %41, %42, %cst_71 {dimension_numbers = #tpu.dot_dimension_numbers<[1], [0], [0], [1], [0, 0, 1, 1], [], []>} : vector<256x384xbf16>, vector<384x128xbf16>, vector<256x128xf32> -> vector<256x128xf32>
    %44 = arith.addf %36, %43 : vector<256x128xf32>
    %c0_72 = arith.constant 0 : index
    %c0_73 = arith.constant 0 : index
    %45 = vector.load %arg5[%c0_72, %c0_73] : memref<1x128xf32, #tpu.memory_space<vmem>>, vector<1x128xf32>
    %46 = vector.broadcast %45 : vector<1x128xf32> to vector<256x128xf32>
    %47 = arith.addf %44, %46 : vector<256x128xf32>
    %cst_74 = arith.constant 0.000000e+00 : f32
    %48 = vector.broadcast %cst_74 : f32 to vector<256x128xf32>
    %49 = arith.maximumf %47, %48 : vector<256x128xf32>
    %50 = arith.truncf %49 : vector<256x128xf32> to vector<256x128xbf16>
    %c0_75 = arith.constant 0 : index
    %c0_76 = arith.constant 0 : index
    %51 = vector.load %arg6[%c0_75, %c0_76] : memref<128x128xbf16, #tpu.memory_space<vmem>>, vector<128x128xbf16>
    %cst_77 = arith.constant dense<0.000000e+00> : vector<256x128xf32>
    %52 = tpu.matmul %50, %51, %cst_77 {dimension_numbers = #tpu.dot_dimension_numbers<[1], [0], [0], [1], [0, 0, 1, 1], [], []>} : vector<256x128xbf16>, vector<128x128xbf16>, vector<256x128xf32> -> vector<256x128xf32>
    %c0_78 = arith.constant 0 : index
    %c0_79 = arith.constant 0 : index
    %53 = vector.load %arg7[%c0_78, %c0_79] : memref<1x128xf32, #tpu.memory_space<vmem>>, vector<1x128xf32>
    %54 = vector.broadcast %53 : vector<1x128xf32> to vector<256x128xf32>
    %55 = arith.addf %52, %54 : vector<256x128xf32>
    %c0_80 = arith.constant 0 : index
    %c0_81 = arith.constant 0 : index
    %c0_82 = arith.constant 0 : index
    %56 = vector.load %arg1[%c0_80, %c0_81, %c0_82] : memref<1x256x128xbf16, #tpu.memory_space<vmem>>, vector<1x256x128xbf16>
    %57 = vector.shape_cast %56 : vector<1x256x128xbf16> to vector<256x128xbf16>
    %58 = arith.extf %57 : vector<256x128xbf16> to vector<256x128xf32>
    %59 = arith.addf %55, %58 : vector<256x128xf32>
    %cst_83 = arith.constant 0.000000e+00 : f32
    %60 = vector.broadcast %cst_83 : f32 to vector<256x128xf32>
    %61 = arith.maximumf %59, %60 : vector<256x128xf32>
    %62 = vector.shape_cast %61 : vector<256x128xf32> to vector<1x256x128xf32>
    %63 = arith.truncf %62 : vector<1x256x128xf32> to vector<1x256x128xbf16>
    %c0_84 = arith.constant 0 : index
    %c0_85 = arith.constant 0 : index
    %c0_86 = arith.constant 0 : index
    %64 = vector.load %arg8[%c0_84, %c0_85, %c0_86] : memref<1x256x128xbf16, #tpu.memory_space<vmem>>, vector<1x256x128xbf16>
    tpu.vector_store %arg8[%c0_84, %c0_85, %c0_86], %63 {strides = array<i32>} : memref<1x256x128xbf16, #tpu.memory_space<vmem>>, vector<1x256x128xbf16>,
    return
  }
  func.func @transform_0(%arg0: i32) -> (i32, i32, i32) {
    %c0_i32 = arith.constant 0 : i32
    %c0_i32_0 = arith.constant 0 : i32
    %c0_i32_1 = arith.constant 0 : i32
    return %arg0, %c0_i32, %c0_i32_0 : i32, i32, i32
  }
  func.func @transform_1(%arg0: i32) -> (i32, i32) {
    %c0_i32 = arith.constant 0 : i32
    %c0_i32_0 = arith.constant 0 : i32
    %c0_i32_1 = arith.constant 0 : i32
    return %c0_i32, %c0_i32_0 : i32, i32
  }
  func.func @transform_2(%arg0: i32) -> (i32, i32) {
    %c0_i32 = arith.constant 0 : i32
    %c0_i32_0 = arith.constant 0 : i32
    %c0_i32_1 = arith.constant 0 : i32
    return %c0_i32, %c0_i32_0 : i32, i32
  }
  func.func @transform_3(%arg0: i32) -> (i32, i32) {
    %c0_i32 = arith.constant 0 : i32
    %c0_i32_0 = arith.constant 0 : i32
    %c0_i32_1 = arith.constant 0 : i32
    return %c0_i32, %c0_i32_0 : i32, i32
  }
  func.func @transform_4(%arg0: i32) -> (i32, i32) {
    %c0_i32 = arith.constant 0 : i32
    %c0_i32_0 = arith.constant 0 : i32
    %c0_i32_1 = arith.constant 0 : i32
    return %c0_i32, %c0_i32_0 : i32, i32
  }
  func.func @transform_5(%arg0: i32) -> (i32, i32) {
    %c0_i32 = arith.constant 0 : i32
    %c0_i32_0 = arith.constant 0 : i32
    %c0_i32_1 = arith.constant 0 : i32
    return %c0_i32, %c0_i32_0 : i32, i32
  }
  func.func @transform_6(%arg0: i32) -> (i32, i32) {
    %c0_i32 = arith.constant 0 : i32
    %c0_i32_0 = arith.constant 0 : i32
    %c0_i32_1 = arith.constant 0 : i32
    return %c0_i32, %c0_i32_0 : i32, i32
  }
  func.func @transform_7(%arg0: i32) -> (i32, i32, i32) {
    %c0_i32 = arith.constant 0 : i32
    %c0_i32_0 = arith.constant 0 : i32
    %c0_i32_1 = arith.constant 0 : i32
    return %arg0, %c0_i32, %c0_i32_0 : i32, i32, i32
  }
}

module attributes {stable_mosaic.version = 11 : i64} {
  func.func @kernel(%arg0: i32, %arg1: memref<1x256x128xbf16, #tpu.memory_space<vmem>>, %arg2: memref<128x128xbf16, #tpu.memory_space<vmem>>, %arg3: memref<1x128xf32, #tpu.memory_space<vmem>>, %arg4: memref<1152x128xbf16, #tpu.memory_space<vmem>>, %arg5: memref<1x128xf32, #tpu.memory_space<vmem>>, %arg6: memref<128x128xbf16, #tpu.memory_space<vmem>>, %arg7: memref<1x128xf32, #tpu.memory_space<vmem>>, %arg8: memref<1x256x128xbf16, #tpu.memory_space<vmem>>, %arg9: memref<1x18x18x128xbf16, #tpu.memory_space<vmem>>) attributes {dimension_semantics = [#tpu.dimension_semantics<parallel>], iteration_bounds = array<i64: 2>, scalar_prefetch = 0 : i64, scratch_operands = 1 : i64, tpu.core_type = #tpu.core_type<tc>, window_params = [{transform_indices = @transform_0, window_bounds = array<i64: 1, 256, 128>}, {pipeline_mode = #tpu.pipeline_mode<synchronous>, transform_indices = @transform_1, window_bounds = array<i64: 128, 128>}, {pipeline_mode = #tpu.pipeline_mode<synchronous>, transform_indices = @transform_2, window_bounds = array<i64: 1, 128>}, {pipeline_mode = #tpu.pipeline_mode<synchronous>, transform_indices = @transform_3, window_bounds = array<i64: 1152, 128>}, {pipeline_mode = #tpu.pipeline_mode<synchronous>, transform_indices = @transform_4, window_bounds = array<i64: 1, 128>}, {pipeline_mode = #tpu.pipeline_mode<synchronous>, transform_indices = @transform_5, window_bounds = array<i64: 128, 128>}, {pipeline_mode = #tpu.pipeline_mode<synchronous>, transform_indices = @transform_6, window_bounds = array<i64: 1, 128>}, {transform_indices = @transform_7, window_bounds = array<i64: 1, 256, 128>}]} {
    %c0 = arith.constant 0 : index
    %c0_0 = arith.constant 0 : index
    %c0_1 = arith.constant 0 : index
    %0 = vector.load %arg1[%c0, %c0_0, %c0_1] : memref<1x256x128xbf16, #tpu.memory_space<vmem>>, vector<1x256x128xbf16>
    %1 = vector.shape_cast %0 : vector<1x256x128xbf16> to vector<256x128xbf16>
    %c0_2 = arith.constant 0 : index
    %c0_3 = arith.constant 0 : index
    %2 = vector.load %arg2[%c0_2, %c0_3] : memref<128x128xbf16, #tpu.memory_space<vmem>>, vector<128x128xbf16>
    %cst = arith.constant dense<0.000000e+00> : vector<256x128xf32>
    %3 = tpu.matmul %1, %2, %cst {dimension_numbers = #tpu.dot_dimension_numbers<[1], [0], [0], [1], [0, 0, 1, 1], [], []>} : vector<256x128xbf16>, vector<128x128xbf16>, vector<256x128xf32> -> vector<256x128xf32>
    %c0_4 = arith.constant 0 : index
    %c0_5 = arith.constant 0 : index
    %4 = vector.load %arg3[%c0_4, %c0_5] : memref<1x128xf32, #tpu.memory_space<vmem>>, vector<1x128xf32>
    %5 = vector.broadcast %4 : vector<1x128xf32> to vector<256x128xf32>
    %6 = arith.addf %3, %5 : vector<256x128xf32>
    %cst_6 = arith.constant 0.000000e+00 : f32
    %7 = vector.broadcast %cst_6 : f32 to vector<256x128xf32>
    %8 = arith.maximumf %6, %7 : vector<256x128xf32>
    %cst_7 = arith.constant 0.000000e+00 : bf16
    %9 = vector.broadcast %cst_7 : bf16 to vector<1x1x18x128xbf16>
    %c0_8 = arith.constant 0 : index
    %c0_9 = arith.constant 0 : index
    %c0_10 = arith.constant 0 : index
    %c0_11 = arith.constant 0 : index
    %10 = vector.load %arg9[%c0_8, %c0_9, %c0_10, %c0_11] : memref<1x18x18x128xbf16, #tpu.memory_space<vmem>>, vector<1x1x18x128xbf16>
    tpu.vector_store %arg9[%c0_8, %c0_9, %c0_10, %c0_11], %9 {strides = array<i32>} : memref<1x18x18x128xbf16, #tpu.memory_space<vmem>>, vector<1x1x18x128xbf16>,
    %cst_12 = arith.constant 0.000000e+00 : bf16
    %11 = vector.broadcast %cst_12 : bf16 to vector<1x1x18x128xbf16>
    %c0_13 = arith.constant 0 : index
    %c17 = arith.constant 17 : index
    %c0_14 = arith.constant 0 : index
    %c0_15 = arith.constant 0 : index
    %12 = vector.load %arg9[%c0_13, %c17, %c0_14, %c0_15] : memref<1x18x18x128xbf16, #tpu.memory_space<vmem>>, vector<1x1x18x128xbf16>
    tpu.vector_store %arg9[%c0_13, %c17, %c0_14, %c0_15], %11 {strides = array<i32>} : memref<1x18x18x128xbf16, #tpu.memory_space<vmem>>, vector<1x1x18x128xbf16>,
    %cst_16 = arith.constant 0.000000e+00 : bf16
    %13 = vector.broadcast %cst_16 : bf16 to vector<1x16x1x128xbf16>
    %c0_17 = arith.constant 0 : index
    %c1 = arith.constant 1 : index
    %c0_18 = arith.constant 0 : index
    %c0_19 = arith.constant 0 : index
    %14 = vector.load %arg9[%c0_17, %c1, %c0_18, %c0_19] : memref<1x18x18x128xbf16, #tpu.memory_space<vmem>>, vector<1x16x1x128xbf16>
    tpu.vector_store %arg9[%c0_17, %c1, %c0_18, %c0_19], %13 {strides = array<i32>} : memref<1x18x18x128xbf16, #tpu.memory_space<vmem>>, vector<1x16x1x128xbf16>,
    %cst_20 = arith.constant 0.000000e+00 : bf16
    %15 = vector.broadcast %cst_20 : bf16 to vector<1x16x1x128xbf16>
    %c0_21 = arith.constant 0 : index
    %c1_22 = arith.constant 1 : index
    %c17_23 = arith.constant 17 : index
    %c0_24 = arith.constant 0 : index
    %16 = vector.load %arg9[%c0_21, %c1_22, %c17_23, %c0_24] : memref<1x18x18x128xbf16, #tpu.memory_space<vmem>>, vector<1x16x1x128xbf16>
    tpu.vector_store %arg9[%c0_21, %c1_22, %c17_23, %c0_24], %15 {strides = array<i32>} : memref<1x18x18x128xbf16, #tpu.memory_space<vmem>>, vector<1x16x1x128xbf16>,
    %17 = arith.truncf %8 : vector<256x128xf32> to vector<256x128xbf16>
    %18 = vector.shape_cast %17 : vector<256x128xbf16> to vector<1x16x16x128xbf16>
    %c0_25 = arith.constant 0 : index
    %c1_26 = arith.constant 1 : index
    %c1_27 = arith.constant 1 : index
    %c0_28 = arith.constant 0 : index
    %19 = vector.load %arg9[%c0_25, %c1_26, %c1_27, %c0_28] : memref<1x18x18x128xbf16, #tpu.memory_space<vmem>>, vector<1x16x16x128xbf16>
    tpu.vector_store %arg9[%c0_25, %c1_26, %c1_27, %c0_28], %18 {strides = array<i32>} : memref<1x18x18x128xbf16, #tpu.memory_space<vmem>>, vector<1x16x16x128xbf16>,
    %cst_29 = arith.constant 0.000000e+00 : f32
    %20 = vector.broadcast %cst_29 : f32 to vector<256x128xf32>
    %c0_30 = arith.constant 0 : index
    %c0_31 = arith.constant 0 : index
    %c0_32 = arith.constant 0 : index
    %c0_33 = arith.constant 0 : index
    %21 = vector.load %arg9[%c0_30, %c0_31, %c0_32, %c0_33] : memref<1x18x18x128xbf16, #tpu.memory_space<vmem>>, vector<1x16x16x128xbf16>
    %c0_34 = arith.constant 0 : index
    %c0_35 = arith.constant 0 : index
    %c1_36 = arith.constant 1 : index
    %c0_37 = arith.constant 0 : index
    %22 = vector.load %arg9[%c0_34, %c0_35, %c1_36, %c0_37] : memref<1x18x18x128xbf16, #tpu.memory_space<vmem>>, vector<1x16x16x128xbf16>
    %c0_38 = arith.constant 0 : index
    %c0_39 = arith.constant 0 : index
    %c2 = arith.constant 2 : index
    %c0_40 = arith.constant 0 : index
    %23 = vector.load %arg9[%c0_38, %c0_39, %c2, %c0_40] : memref<1x18x18x128xbf16, #tpu.memory_space<vmem>>, vector<1x16x16x128xbf16>
    %24 = tpu.concatenate %21, %22, %23 in 3 : vector<1x16x16x128xbf16>, vector<1x16x16x128xbf16>, vector<1x16x16x128xbf16> -> vector<1x16x16x384xbf16>
    %25 = vector.shape_cast %24 : vector<1x16x16x384xbf16> to vector<256x384xbf16>
    %c0_41 = arith.constant 0 : index
    %c0_42 = arith.constant 0 : index
    %26 = vector.load %arg4[%c0_41, %c0_42] : memref<1152x128xbf16, #tpu.memory_space<vmem>>, vector<384x128xbf16>
    %cst_43 = arith.constant dense<0.000000e+00> : vector<256x128xf32>
    %27 = tpu.matmul %25, %26, %cst_43 {dimension_numbers = #tpu.dot_dimension_numbers<[1], [0], [0], [1], [0, 0, 1, 1], [], []>} : vector<256x384xbf16>, vector<384x128xbf16>, vector<256x128xf32> -> vector<256x128xf32>
    %28 = arith.addf %20, %27 : vector<256x128xf32>
    %c0_44 = arith.constant 0 : index
    %c1_45 = arith.constant 1 : index
    %c0_46 = arith.constant 0 : index
    %c0_47 = arith.constant 0 : index
    %29 = vector.load %arg9[%c0_44, %c1_45, %c0_46, %c0_47] : memref<1x18x18x128xbf16, #tpu.memory_space<vmem>>, vector<1x16x16x128xbf16>
    %c0_48 = arith.constant 0 : index
    %c1_49 = arith.constant 1 : index
    %c1_50 = arith.constant 1 : index
    %c0_51 = arith.constant 0 : index
    %30 = vector.load %arg9[%c0_48, %c1_49, %c1_50, %c0_51] : memref<1x18x18x128xbf16, #tpu.memory_space<vmem>>, vector<1x16x16x128xbf16>
    %c0_52 = arith.constant 0 : index
    %c1_53 = arith.constant 1 : index
    %c2_54 = arith.constant 2 : index
    %c0_55 = arith.constant 0 : index
    %31 = vector.load %arg9[%c0_52, %c1_53, %c2_54, %c0_55] : memref<1x18x18x128xbf16, #tpu.memory_space<vmem>>, vector<1x16x16x128xbf16>
    %32 = tpu.concatenate %29, %30, %31 in 3 : vector<1x16x16x128xbf16>, vector<1x16x16x128xbf16>, vector<1x16x16x128xbf16> -> vector<1x16x16x384xbf16>
    %33 = vector.shape_cast %32 : vector<1x16x16x384xbf16> to vector<256x384xbf16>
    %c384 = arith.constant 384 : index
    %c0_56 = arith.constant 0 : index
    %34 = vector.load %arg4[%c384, %c0_56] : memref<1152x128xbf16, #tpu.memory_space<vmem>>, vector<384x128xbf16>
    %cst_57 = arith.constant dense<0.000000e+00> : vector<256x128xf32>
    %35 = tpu.matmul %33, %34, %cst_57 {dimension_numbers = #tpu.dot_dimension_numbers<[1], [0], [0], [1], [0, 0, 1, 1], [], []>} : vector<256x384xbf16>, vector<384x128xbf16>, vector<256x128xf32> -> vector<256x128xf32>
    %36 = arith.addf %28, %35 : vector<256x128xf32>
    %c0_58 = arith.constant 0 : index
    %c2_59 = arith.constant 2 : index
    %c0_60 = arith.constant 0 : index
    %c0_61 = arith.constant 0 : index
    %37 = vector.load %arg9[%c0_58, %c2_59, %c0_60, %c0_61] : memref<1x18x18x128xbf16, #tpu.memory_space<vmem>>, vector<1x16x16x128xbf16>
    %c0_62 = arith.constant 0 : index
    %c2_63 = arith.constant 2 : index
    %c1_64 = arith.constant 1 : index
    %c0_65 = arith.constant 0 : index
    %38 = vector.load %arg9[%c0_62, %c2_63, %c1_64, %c0_65] : memref<1x18x18x128xbf16, #tpu.memory_space<vmem>>, vector<1x16x16x128xbf16>
    %c0_66 = arith.constant 0 : index
    %c2_67 = arith.constant 2 : index
    %c2_68 = arith.constant 2 : index
    %c0_69 = arith.constant 0 : index
    %39 = vector.load %arg9[%c0_66, %c2_67, %c2_68, %c0_69] : memref<1x18x18x128xbf16, #tpu.memory_space<vmem>>, vector<1x16x16x128xbf16>
    %40 = tpu.concatenate %37, %38, %39 in 3 : vector<1x16x16x128xbf16>, vector<1x16x16x128xbf16>, vector<1x16x16x128xbf16> -> vector<1x16x16x384xbf16>
    %41 = vector.shape_cast %40 : vector<1x16x16x384xbf16> to vector<256x384xbf16>
    %c768 = arith.constant 768 : index
    %c0_70 = arith.constant 0 : index
    %42 = vector.load %arg4[%c768, %c0_70] : memref<1152x128xbf16, #tpu.memory_space<vmem>>, vector<384x128xbf16>
    %cst_71 = arith.constant dense<0.000000e+00> : vector<256x128xf32>
    %43 = tpu.matmul %41, %42, %cst_71 {dimension_numbers = #tpu.dot_dimension_numbers<[1], [0], [0], [1], [0, 0, 1, 1], [], []>} : vector<256x384xbf16>, vector<384x128xbf16>, vector<256x128xf32> -> vector<256x128xf32>
    %44 = arith.addf %36, %43 : vector<256x128xf32>
    %c0_72 = arith.constant 0 : index
    %c0_73 = arith.constant 0 : index
    %45 = vector.load %arg5[%c0_72, %c0_73] : memref<1x128xf32, #tpu.memory_space<vmem>>, vector<1x128xf32>
    %46 = vector.broadcast %45 : vector<1x128xf32> to vector<256x128xf32>
    %47 = arith.addf %44, %46 : vector<256x128xf32>
    %cst_74 = arith.constant 0.000000e+00 : f32
    %48 = vector.broadcast %cst_74 : f32 to vector<256x128xf32>
    %49 = arith.maximumf %47, %48 : vector<256x128xf32>
    %50 = arith.truncf %49 : vector<256x128xf32> to vector<256x128xbf16>
    %c0_75 = arith.constant 0 : index
    %c0_76 = arith.constant 0 : index
    %51 = vector.load %arg6[%c0_75, %c0_76] : memref<128x128xbf16, #tpu.memory_space<vmem>>, vector<128x128xbf16>
    %cst_77 = arith.constant dense<0.000000e+00> : vector<256x128xf32>
    %52 = tpu.matmul %50, %51, %cst_77 {dimension_numbers = #tpu.dot_dimension_numbers<[1], [0], [0], [1], [0, 0, 1, 1], [], []>} : vector<256x128xbf16>, vector<128x128xbf16>, vector<256x128xf32> -> vector<256x128xf32>
    %c0_78 = arith.constant 0 : index
    %c0_79 = arith.constant 0 : index
    %53 = vector.load %arg7[%c0_78, %c0_79] : memref<1x128xf32, #tpu.memory_space<vmem>>, vector<1x128xf32>
    %54 = vector.broadcast %53 : vector<1x128xf32> to vector<256x128xf32>
    %55 = arith.addf %52, %54 : vector<256x128xf32>
    %c0_80 = arith.constant 0 : index
    %c0_81 = arith.constant 0 : index
    %c0_82 = arith.constant 0 : index
    %56 = vector.load %arg1[%c0_80, %c0_81, %c0_82] : memref<1x256x128xbf16, #tpu.memory_space<vmem>>, vector<1x256x128xbf16>
    %57 = vector.shape_cast %56 : vector<1x256x128xbf16> to vector<256x128xbf16>
    %58 = arith.extf %57 : vector<256x128xbf16> to vector<256x128xf32>
    %59 = arith.addf %55, %58 : vector<256x128xf32>
    %cst_83 = arith.constant 0.000000e+00 : f32
    %60 = vector.broadcast %cst_83 : f32 to vector<256x128xf32>
    %61 = arith.maximumf %59, %60 : vector<256x128xf32>
    %62 = vector.shape_cast %61 : vector<256x128xf32> to vector<1x256x128xf32>
    %63 = arith.truncf %62 : vector<1x256x128xf32> to vector<1x256x128xbf16>
    %c0_84 = arith.constant 0 : index
    %c0_85 = arith.constant 0 : index
    %c0_86 = arith.constant 0 : index
    %64 = vector.load %arg8[%c0_84, %c0_85, %c0_86] : memref<1x256x128xbf16, #tpu.memory_space<vmem>>, vector<1x256x128xbf16>
    tpu.vector_store %arg8[%c0_84, %c0_85, %c0_86], %63 {strides = array<i32>} : memref<1x256x128xbf16, #tpu.memory_space<vmem>>, vector<1x256x128xbf16>,
    return
  }
  func.func @transform_0(%arg0: i32) -> (i32, i32, i32) {
    %c0_i32 = arith.constant 0 : i32
    %c0_i32_0 = arith.constant 0 : i32
    %c0_i32_1 = arith.constant 0 : i32
    return %arg0, %c0_i32, %c0_i32_0 : i32, i32, i32
  }
  func.func @transform_1(%arg0: i32) -> (i32, i32) {
    %c0_i32 = arith.constant 0 : i32
    %c0_i32_0 = arith.constant 0 : i32
    %c0_i32_1 = arith.constant 0 : i32
    return %c0_i32, %c0_i32_0 : i32, i32
  }
  func.func @transform_2(%arg0: i32) -> (i32, i32) {
    %c0_i32 = arith.constant 0 : i32
    %c0_i32_0 = arith.constant 0 : i32
    %c0_i32_1 = arith.constant 0 : i32
    return %c0_i32, %c0_i32_0 : i32, i32
  }
  func.func @transform_3(%arg0: i32) -> (i32, i32) {
    %c0_i32 = arith.constant 0 : i32
    %c0_i32_0 = arith.constant 0 : i32
    %c0_i32_1 = arith.constant 0 : i32
    return %c0_i32, %c0_i32_0 : i32, i32
  }
  func.func @transform_4(%arg0: i32) -> (i32, i32) {
    %c0_i32 = arith.constant 0 : i32
    %c0_i32_0 = arith.constant 0 : i32
    %c0_i32_1 = arith.constant 0 : i32
    return %c0_i32, %c0_i32_0 : i32, i32
  }
  func.func @transform_5(%arg0: i32) -> (i32, i32) {
    %c0_i32 = arith.constant 0 : i32
    %c0_i32_0 = arith.constant 0 : i32
    %c0_i32_1 = arith.constant 0 : i32
    return %c0_i32, %c0_i32_0 : i32, i32
  }
  func.func @transform_6(%arg0: i32) -> (i32, i32) {
    %c0_i32 = arith.constant 0 : i32
    %c0_i32_0 = arith.constant 0 : i32
    %c0_i32_1 = arith.constant 0 : i32
    return %c0_i32, %c0_i32_0 : i32, i32
  }
  func.func @transform_7(%arg0: i32) -> (i32, i32, i32) {
    %c0_i32 = arith.constant 0 : i32
    %c0_i32_0 = arith.constant 0 : i32
    %c0_i32_1 = arith.constant 0 : i32
    return %arg0, %c0_i32, %c0_i32_0 : i32, i32, i32
  }
}

</mosaic_0001>

<llo_original>
// kernel: tpu_custom_call.1
$region0: #{tpu_custom_call.1}
  #allocation0 [shape = 'u32[]', space=smem, size = 0x4, offset = 0x4, fixed_abs, tag = 'smem constant byte address 0x4 - core index']
  #allocation1 [shape = 'u32[144,128]{1,0:T(1,128)}', space=vmem, size = 0x12000, scoped, tag = 'internal scratch']
  #allocation2 [shape = 'bf16[1,18,18,128]{3,2,1,0:T(8,128)(2,1)}', space=vmem, size = 0x1b000, scoped, tag = 'scratch operand']
  %s0 = inlined_call_operand.hbm [shape: bf16[2,256,128], index: 0, kind: input, shape index: {}]
  %s1 = inlined_call_operand.hbm [shape: bf16[128,128], index: 1, kind: input, shape index: {}]
  %s2 = inlined_call_operand.vmem [shape: f32[1,128], index: 2, kind: input, shape index: {}]
  %s3 = inlined_call_operand.hbm [shape: bf16[1152,128], index: 3, kind: input, shape index: {}]
  %s4 = inlined_call_operand.vmem [shape: f32[1,128], index: 4, kind: input, shape index: {}]
  %s5 = inlined_call_operand.hbm [shape: bf16[128,128], index: 5, kind: input, shape index: {}]
  %s6 = inlined_call_operand.vmem [shape: f32[1,128], index: 6, kind: input, shape index: {}]
  %s7 = inlined_call_operand.hbm [shape: bf16[2,256,128], index: 7, kind: output, shape index: {}]
  %s8 = sld [smem:[#allocation0]]
  $region77: #{tpu_custom_call.1} parent=0
    _
  %s10 = ssub.s32 1, %s8
  %s11 = scalar_select 0, %s10, %s8
  $region1: #{tpu_custom_call.1} parent=0
    #allocation3 [shape = 'u8[131072]{0}', space=vmem, size = 0x20000, scoped, tag = 'input window, operand 0']
    #allocation4 [shape = 's32[2]{0}', space=sflag, size = 0x8, scoped, tag = 'scoped memory for tpu_custom_call.1']
    #allocation5 [shape = 's32[2]{0}', space=sflag, size = 0x8, scoped, tag = 'scoped memory for tpu_custom_call.1']
    #allocation6 [shape = 'u8[32768]{0}', space=vmem, size = 0x8000, scoped, tag = 'input window, operand 1, single buffered']
    #allocation7 [shape = 's32[1]{0}', space=sflag, size = 0x4, scoped, tag = 'scoped memory for tpu_custom_call.1']
    #allocation8 [shape = 'u8[294912]{0}', space=vmem, size = 0x48000, scoped, tag = 'input window, operand 3, single buffered']
    #allocation9 [shape = 'u8[32768]{0}', space=vmem, size = 0x8000, scoped, tag = 'input window, operand 5, single buffered']
    #allocation10 [shape = 's32[1]{0}', space=sflag, size = 0x4, scoped, tag = 'scoped memory for tpu_custom_call.1']
    #allocation11 [shape = 'u8[131072]{0}', space=vmem, size = 0x20000, scoped, tag = 'output window, operand 0']
    %12 = vsyncpa [#allocation4], 0
    %s13 = scalar_lea.sflag [#allocation4], 1
    %14 = vsyncpa %s13, 0
    %15 = vsyncpa [#allocation7], 0
    %16 = vsyncpa [#allocation10], 0
    %17 = vsyncpa [#allocation5], 0
    %s18 = scalar_lea.sflag [#allocation5], 1
    %19 = vsyncpa %s18, 0
    loop: start=0, step=1, limit=4
    $region2: #{tpu_custom_call.1} parent=1 // loop_pre_header
      _
    $region3: #{tpu_custom_call.1} parent=1 // loop_header
      %s21 = sphi 0, %s25
      %p22 = scmp.ge.s32.totalorder %s21, 4
      %s31 = sphi 0, %s33
      %s34 = sphi 0, %s31
      %s35 = sphi 0, %s34
      %s51 = sphi 0, %s35
      %s55 = sphi 0, %s55
      %s57 = sphi 0, %s55
      %s58 = sphi 0, %s57
      %s72 = sphi 0, %s58
      %s76 = sphi 0, %s76
      %s78 = sphi 0, %s76
      %s79 = sphi 0, %s78
      %s93 = sphi 0, %s79
      %s97 = sphi 0, %s97
      %s99 = sphi 0, %s97
      %s100 = sphi 0, %s99
      %s114 = sphi 0, %s100
      %s118 = sphi 0, %s118
      %s120 = sphi 0, %s118
      %s121 = sphi 0, %s120
      %s135 = sphi 0, %s121
      %s139 = sphi 0, %s139
      %s141 = sphi 0, %s139
      %s142 = sphi 0, %s141
      %s156 = sphi 0, %s142
      %s160 = sphi 0, %s160
      %s162 = sphi 0, %s160
      %s163 = sphi 0, %s162
      %s177 = sphi 0, %s163
      %s183 = sphi 0, %s185
      %s186 = sphi 0, %s183
      %s187 = sphi 0, %s186
      %s203 = sphi 0, %s187
    $region4: #{tpu_custom_call.1} parent=1 // loop_header_branch
      %24 = sbr.rel (%p22) target = $region8
    $region5: #{tpu_custom_call.1} parent=1 // loop_body
      %s26 = ssub.s32 %s21, 1
      %s27 = ssub.s32 %s21, 2
      %s28 = sadd.s32 %s21, 1
      %s29 = ssub.s32 %s21, %s28
      %p30 = scmp.eq.s32.totalorder %s29, 0
      %s32 = sadd.s32 %s31, 1
      %s33 = scalar_select %p30, %s31, %s32
      %p36 = pneg %p30
      %p37 = scmp.eq.s32.totalorder %s21, 1
      %p38 = por %p36, %p37
      %p39 = scmp.ne.s32.totalorder %s31, %s34
      %p40 = scmp.eq.s32.totalorder %s21, 0
      %p41 = por %p39, %p40
      %p42 = scmp.ne.s32.totalorder %s31, %s34
      %p43 = scmp.eq.s32.totalorder %s26, 1
      %p44 = por %p42, %p43
      %p45 = scmp.ne.s32.totalorder %s34, %s35
      %p46 = scmp.eq.s32.totalorder %s26, 0
      %p47 = por %p45, %p46
      %p48 = scmp.ne.s32.totalorder %s34, %s35
      %p49 = scmp.eq.s32.totalorder %s27, 1
      %p50 = por %p48, %p49
      %p52 = scmp.ne.s32.totalorder %s35, %s51
      %p53 = scmp.eq.s32.totalorder %s27, 0
      %p54 = por %p52, %p53
      %s56 = sadd.s32 %s55, 1
      %p59 = scmp.eq.s32.totalorder %s21, 1
      %p60 = scmp.ne.s32.totalorder %s55, %s57
      %p61 = scmp.eq.s32.totalorder %s21, 0
      %p62 = por %p60, %p61
      %p63 = scmp.ne.s32.totalorder %s55, %s57
      %p64 = scmp.eq.s32.totalorder %s26, 1
      %p65 = por %p63, %p64
      %p66 = scmp.ne.s32.totalorder %s57, %s58
      %p67 = scmp.eq.s32.totalorder %s26, 0
      %p68 = por %p66, %p67
      %p69 = scmp.ne.s32.totalorder %s57, %s58
      %p70 = scmp.eq.s32.totalorder %s27, 1
      %p71 = por %p69, %p70
      %p73 = scmp.ne.s32.totalorder %s58, %s72
      %p74 = scmp.eq.s32.totalorder %s27, 0
      %p75 = por %p73, %p74
      %s77 = sadd.s32 %s76, 1
      %p80 = scmp.eq.s32.totalorder %s21, 1
      %p81 = scmp.ne.s32.totalorder %s76, %s78
      %p82 = scmp.eq.s32.totalorder %s21, 0
      %p83 = por %p81, %p82
      %p84 = scmp.ne.s32.totalorder %s76, %s78
      %p85 = scmp.eq.s32.totalorder %s26, 1
      %p86 = por %p84, %p85
      %p87 = scmp.ne.s32.totalorder %s78, %s79
      %p88 = scmp.eq.s32.totalorder %s26, 0
      %p89 = por %p87, %p88
      %p90 = scmp.ne.s32.totalorder %s78, %s79
      %p91 = scmp.eq.s32.totalorder %s27, 1
      %p92 = por %p90, %p91
      %p94 = scmp.ne.s32.totalorder %s79, %s93
      %p95 = scmp.eq.s32.totalorder %s27, 0
      %p96 = por %p94, %p95
      %s98 = sadd.s32 %s97, 1
      %p101 = scmp.eq.s32.totalorder %s21, 1
      %p102 = scmp.ne.s32.totalorder %s97, %s99
      %p103 = scmp.eq.s32.totalorder %s21, 0
      %p104 = por %p102, %p103
      %p105 = scmp.ne.s32.totalorder %s97, %s99
      %p106 = scmp.eq.s32.totalorder %s26, 1
      %p107 = por %p105, %p106
      %p108 = scmp.ne.s32.totalorder %s99, %s100
      %p109 = scmp.eq.s32.totalorder %s26, 0
      %p110 = por %p108, %p109
      %p111 = scmp.ne.s32.totalorder %s99, %s100
      %p112 = scmp.eq.s32.totalorder %s27, 1
      %p113 = por %p111, %p112
      %p115 = scmp.ne.s32.totalorder %s100, %s114
      %p116 = scmp.eq.s32.totalorder %s27, 0
      %p117 = por %p115, %p116
      %s119 = sadd.s32 %s118, 1
      %p122 = scmp.eq.s32.totalorder %s21, 1
      %p123 = scmp.ne.s32.totalorder %s118, %s120
      %p124 = scmp.eq.s32.totalorder %s21, 0
      %p125 = por %p123, %p124
      %p126 = scmp.ne.s32.totalorder %s118, %s120
      %p127 = scmp.eq.s32.totalorder %s26, 1
      %p128 = por %p126, %p127
      %p129 = scmp.ne.s32.totalorder %s120, %s121
      %p130 = scmp.eq.s32.totalorder %s26, 0
      %p131 = por %p129, %p130
      %p132 = scmp.ne.s32.totalorder %s120, %s121
      %p133 = scmp.eq.s32.totalorder %s27, 1
      %p134 = por %p132, %p133
      %p136 = scmp.ne.s32.totalorder %s121, %s135
      %p137 = scmp.eq.s32.totalorder %s27, 0
      %p138 = por %p136, %p137
      %s140 = sadd.s32 %s139, 1
      %p143 = scmp.eq.s32.totalorder %s21, 1
      %p144 = scmp.ne.s32.totalorder %s139, %s141
      %p145 = scmp.eq.s32.totalorder %s21, 0
      %p146 = por %p144, %p145
      %p147 = scmp.ne.s32.totalorder %s139, %s141
      %p148 = scmp.eq.s32.totalorder %s26, 1
      %p149 = por %p147, %p148
      %p150 = scmp.ne.s32.totalorder %s141, %s142
      %p151 = scmp.eq.s32.totalorder %s26, 0
      %p152 = por %p150, %p151
      %p153 = scmp.ne.s32.totalorder %s141, %s142
      %p154 = scmp.eq.s32.totalorder %s27, 1
      %p155 = por %p153, %p154
      %p157 = scmp.ne.s32.totalorder %s142, %s156
      %p158 = scmp.eq.s32.totalorder %s27, 0
      %p159 = por %p157, %p158
      %s161 = sadd.s32 %s160, 1
      %p164 = scmp.eq.s32.totalorder %s21, 1
      %p165 = scmp.ne.s32.totalorder %s160, %s162
      %p166 = scmp.eq.s32.totalorder %s21, 0
      %p167 = por %p165, %p166
      %p168 = scmp.ne.s32.totalorder %s160, %s162
      %p169 = scmp.eq.s32.totalorder %s26, 1
      %p170 = por %p168, %p169
      %p171 = scmp.ne.s32.totalorder %s162, %s163
      %p172 = scmp.eq.s32.totalorder %s26, 0
      %p173 = por %p171, %p172
      %p174 = scmp.ne.s32.totalorder %s162, %s163
      %p175 = scmp.eq.s32.totalorder %s27, 1
      %p176 = por %p174, %p175
      %p178 = scmp.ne.s32.totalorder %s163, %s177
      %p179 = scmp.eq.s32.totalorder %s27, 0
      %p180 = por %p178, %p179
      %s181 = ssub.s32 %s21, %s28
      %p182 = scmp.eq.s32.totalorder %s181, 0
      %s184 = sadd.s32 %s183, 1
      %s185 = scalar_select %p182, %s183, %s184
      %p188 = pneg %p182
      %p189 = scmp.eq.s32.totalorder %s21, 1
      %p190 = por %p188, %p189
      %p191 = scmp.ne.s32.totalorder %s183, %s186
      %p192 = scmp.eq.s32.totalorder %s21, 0
      %p193 = por %p191, %p192
      %p194 = scmp.ne.s32.totalorder %s183, %s186
      %p195 = scmp.eq.s32.totalorder %s26, 1
      %p196 = por %p194, %p195
      %p197 = scmp.ne.s32.totalorder %s186, %s187
      %p198 = scmp.eq.s32.totalorder %s26, 0
      %p199 = por %p197, %p198
      %p200 = scmp.ne.s32.totalorder %s186, %s187
      %p201 = scmp.eq.s32.totalorder %s27, 1
      %p202 = por %p200, %p201
      %p204 = scmp.ne.s32.totalorder %s187, %s203
      %p205 = scmp.eq.s32.totalorder %s27, 0
      %p206 = por %p204, %p205
      %p207 = scmp.le.s32.totalorder 1, %s21
      %p208 = scmp.lt.s32.totalorder %s21, 3
      %p209 = pnand %p207, %p208
      %p210 = pneg %p209
      // Predicated region
      $region9: #{tpu_custom_call.1} parent=5 // pred_check
        _
      $region10: #{tpu_custom_call.1} parent=5 // pred_check_branch
        %212 = sbr.rel (%p209) target = $region12
      $region11: #{tpu_custom_call.1} parent=5 // pred_region
        %s213 = ssub.s32 %s21, 1
        // Predicated region
        $region13: #{tpu_custom_call.1} parent=11 // pred_check
          %p214 = pneg %p68
        $region14: #{tpu_custom_call.1} parent=11 // pred_check_branch
          %216 = sbr.rel (%p214) target = $region16
        $region15: #{tpu_custom_call.1} parent=11 // pred_region
          %s218 = ssub.s32 1024, 1024
          %219 = vsyncadd [#allocation7], %s218
          %s220 = sshll.u32 [#allocation6], 4
          %s221 = int_to_ptr.vmem [resolvable:$true] %s220
          %226 = dma.hbm_to_vmem [thread:$0]  %s1, 1024, %s221, [#allocation7], 64, 64, 4
        $region16: #{tpu_custom_call.1} parent=11 // pred_fallthru
          _
        // Predicated region
        $region17: #{tpu_custom_call.1} parent=11 // pred_check
          %p227 = pneg %p89
        $region18: #{tpu_custom_call.1} parent=11 // pred_check_branch
          %229 = sbr.rel (%p227) target = $region20
        $region19: #{tpu_custom_call.1} parent=11 // pred_region
          _
        $region20: #{tpu_custom_call.1} parent=11 // pred_fallthru
          _
        // Predicated region
        $region21: #{tpu_custom_call.1} parent=11 // pred_check
          %p230 = pneg %p110
        $region22: #{tpu_custom_call.1} parent=11 // pred_check_branch
          %232 = sbr.rel (%p230) target = $region24
        $region23: #{tpu_custom_call.1} parent=11 // pred_region
          %s234 = ssub.s32 9216, 9216
          %235 = vsyncadd [#allocation7], %s234
          %s236 = sshll.u32 [#allocation8], 4
          %s237 = int_to_ptr.vmem [resolvable:$true] %s236
          %242 = dma.hbm_to_vmem [thread:$0]  %s3, 9216, %s237, [#allocation7], 64, 64, 4
        $region24: #{tpu_custom_call.1} parent=11 // pred_fallthru
          _
        // Predicated region
        $region25: #{tpu_custom_call.1} parent=11 // pred_check
          %p243 = pneg %p131
        $region26: #{tpu_custom_call.1} parent=11 // pred_check_branch
          %245 = sbr.rel (%p243) target = $region28
        $region27: #{tpu_custom_call.1} parent=11 // pred_region
          _
        $region28: #{tpu_custom_call.1} parent=11 // pred_fallthru
          _
        // Predicated region
        $region29: #{tpu_custom_call.1} parent=11 // pred_check
          %p246 = pneg %p152
        $region30: #{tpu_custom_call.1} parent=11 // pred_check_branch
          %248 = sbr.rel (%p246) target = $region32
        $region31: #{tpu_custom_call.1} parent=11 // pred_region
          %s250 = ssub.s32 1024, 1024
          %251 = vsyncadd [#allocation10], %s250
          %s252 = sshll.u32 [#allocation9], 4
          %s253 = int_to_ptr.vmem [resolvable:$true] %s252
          %258 = dma.hbm_to_vmem [thread:$0]  %s5, 1024, %s253, [#allocation10], 64, 64, 4
        $region32: #{tpu_custom_call.1} parent=11 // pred_fallthru
          _
        // Predicated region
        $region33: #{tpu_custom_call.1} parent=11 // pred_check
          %p259 = pneg %p173
        $region34: #{tpu_custom_call.1} parent=11 // pred_check_branch
          %261 = sbr.rel (%p259) target = $region36
        $region35: #{tpu_custom_call.1} parent=11 // pred_region
          _
        $region36: #{tpu_custom_call.1} parent=11 // pred_fallthru
          _
      $region12: #{tpu_custom_call.1} parent=5 // pred_fallthru
        _
      %p262 = scmp.lt.s32.totalorder %s21, 2
      // Predicated region
      $region37: #{tpu_custom_call.1} parent=5 // pred_check
        %p263 = pneg %p262
      $region38: #{tpu_custom_call.1} parent=5 // pred_check_branch
        %265 = sbr.rel (%p263) target = $region40
      $region39: #{tpu_custom_call.1} parent=5 // pred_region
        // Predicated region
        $region41: #{tpu_custom_call.1} parent=39 // pred_check
          %p266 = pneg %p41
        $region42: #{tpu_custom_call.1} parent=39 // pred_check_branch
          %268 = sbr.rel (%p266) target = $region44
        $region43: #{tpu_custom_call.1} parent=39 // pred_region
          %s269 = sand.u32 %s31, 1
          %s270 = scalar_lea.sflag [#allocation4], %s269
          %s271 = sand.u32 %s31, 1
          %s272 = smul.addr %s271, 128
          %s273 = scalar_lea.vmem [#allocation3], %s272
          %s275 = ssub.s32 2048, 2048
          %276 = vsyncadd %s270, %s275
          %s277 = smul.addr %s21, 32
          %s278 = smul.addr %s277, 64
          %s279 = scalar_lea.hbm %s0, %s278
          %s280 = sshll.u32 %s273, 4
          %s281 = int_to_ptr.vmem [resolvable:$true] %s280
          %286 = dma.hbm_to_vmem [thread:$0]  %s279, 2048, %s281, %s270, 64, 64, 4
        $region44: #{tpu_custom_call.1} parent=39 // pred_fallthru
          _
      $region40: #{tpu_custom_call.1} parent=5 // pred_fallthru
        _
      %p287 = scmp.le.s32.totalorder 1, %s21
      %p288 = scmp.lt.s32.totalorder %s21, 3
      %p289 = pnand %p287, %p288
      %p290 = pneg %p289
      // Predicated region
      $region45: #{tpu_custom_call.1} parent=5 // pred_check
        _
      $region46: #{tpu_custom_call.1} parent=5 // pred_check_branch
        %292 = sbr.rel (%p289) target = $region48
      $region47: #{tpu_custom_call.1} parent=5 // pred_region
        %s293 = ssub.s32 %s21, 1
        %s294 = sand.u32 %s34, 1
        %s295 = scalar_lea.sflag [#allocation4], %s294
        %s296 = sand.u32 %s34, 1
        %s297 = smul.addr %s296, 128
        %s298 = scalar_lea.vmem [#allocation3], %s297
        // Predicated region
        $region49: #{tpu_custom_call.1} parent=47 // pred_check
          %p299 = pneg %p47
        $region50: #{tpu_custom_call.1} parent=47 // pred_check_branch
          %301 = sbr.rel (%p299) target = $region52
        $region51: #{tpu_custom_call.1} parent=47 // pred_region
          %302 = dma.done %s295, 2048
        $region52: #{tpu_custom_call.1} parent=47 // pred_fallthru
          _
        // Predicated region
        $region53: #{tpu_custom_call.1} parent=47 // pred_check
          %p303 = pneg %p68
        $region54: #{tpu_custom_call.1} parent=47 // pred_check_branch
          %305 = sbr.rel (%p303) target = $region56
        $region55: #{tpu_custom_call.1} parent=47 // pred_region
          %306 = dma.done [#allocation7], 1024
        $region56: #{tpu_custom_call.1} parent=47 // pred_fallthru
          _
        // Predicated region
        $region57: #{tpu_custom_call.1} parent=47 // pred_check
          %p307 = pneg %p110
        $region58: #{tpu_custom_call.1} parent=47 // pred_check_branch
          %309 = sbr.rel (%p307) target = $region60
        $region59: #{tpu_custom_call.1} parent=47 // pred_region
          %310 = dma.done [#allocation7], 9216
        $region60: #{tpu_custom_call.1} parent=47 // pred_fallthru
          _
        // Predicated region
        $region61: #{tpu_custom_call.1} parent=47 // pred_check
          %p311 = pneg %p152
        $region62: #{tpu_custom_call.1} parent=47 // pred_check_branch
          %313 = sbr.rel (%p311) target = $region64
        $region63: #{tpu_custom_call.1} parent=47 // pred_region
          %314 = dma.done [#allocation10], 1024
        $region64: #{tpu_custom_call.1} parent=47 // pred_fallthru
          _
        %s315 = sand.u32 %s34, 1
        %s316 = scalar_lea.sflag [#allocation4], %s315
        %s317 = sand.u32 %s34, 1
        %s318 = smul.addr %s317, 128
        %s319 = scalar_lea.vmem [#allocation3], %s318
        %p320 = pneg %p47
        %p321 = pneg %p44
        %p322 = pneg %p68
        %p323 = pneg %p65
        %p324 = pneg %p89
        %p325 = pneg %p86
        %p326 = pneg %p110
        %p327 = pneg %p107
        %p328 = pneg %p131
        %p329 = pneg %p128
        %p330 = pneg %p152
        %p331 = pneg %p149
        %p332 = pneg %p173
        %p333 = pneg %p170
        %p334 = pneg %p199
        %p335 = pneg %p196
        %s336 = sand.u32 %s186, 1
        %s337 = scalar_lea.sflag [#allocation5], %s336
        %s338 = sand.u32 %s186, 1
        %s339 = smul.addr %s338, 128
        %s340 = scalar_lea.vmem [#allocation11], %s339
        %v342 = vld [vmem:[%s298] sm:$0xf]
        %v343 = vld [vmem:[%s298 + $0x4] sm:$0xf]
        %v344 = vld [vmem:[%s298 + $0x8] sm:$0xf]
        %v345 = vld [vmem:[%s298 + $0xc] sm:$0xf]
        %v346 = vld [vmem:[%s298 + $0x10] sm:$0xf]
        %v347 = vld [vmem:[%s298 + $0x14] sm:$0xf]
        %v348 = vld [vmem:[%s298 + $0x18] sm:$0xf]
        %v349 = vld [vmem:[%s298 + $0x1c] sm:$0xf]
        %v350 = vld [vmem:[%s298 + $0x20] sm:$0xf]
        %v351 = vld [vmem:[%s298 + $0x24] sm:$0xf]
        %v352 = vld [vmem:[%s298 + $0x28] sm:$0xf]
        %v353 = vld [vmem:[%s298 + $0x2c] sm:$0xf]
        %v354 = vld [vmem:[%s298 + $0x30] sm:$0xf]
        %v355 = vld [vmem:[%s298 + $0x34] sm:$0xf]
        %v356 = vld [vmem:[%s298 + $0x38] sm:$0xf]
        %v357 = vld [vmem:[%s298 + $0x3c] sm:$0xf]
        %v358 = vld [vmem:[%s298 + $0x40] sm:$0xf]
        %v359 = vld [vmem:[%s298 + $0x44] sm:$0xf]
        %v360 = vld [vmem:[%s298 + $0x48] sm:$0xf]
        %v361 = vld [vmem:[%s298 + $0x4c] sm:$0xf]
        %v362 = vld [vmem:[%s298 + $0x50] sm:$0xf]
        %v363 = vld [vmem:[%s298 + $0x54] sm:$0xf]
        %v364 = vld [vmem:[%s298 + $0x58] sm:$0xf]
        %v365 = vld [vmem:[%s298 + $0x5c] sm:$0xf]
        %v366 = vld [vmem:[%s298 + $0x60] sm:$0xf]
        %v367 = vld [vmem:[%s298 + $0x64] sm:$0xf]
        %v368 = vld [vmem:[%s298 + $0x68] sm:$0xf]
        %v369 = vld [vmem:[%s298 + $0x6c] sm:$0xf]
        %v370 = vld [vmem:[%s298 + $0x70] sm:$0xf]
        %v371 = vld [vmem:[%s298 + $0x74] sm:$0xf]
        %v372 = vld [vmem:[%s298 + $0x78] sm:$0xf]
        %v373 = vld [vmem:[%s298 + $0x7c] sm:$0xf]
        %v374 = vld [vmem:[#allocation6] sm:$0xf]
        %v375 = vld [vmem:[#allocation6 + $0x4] sm:$0xf]
        %v376 = vld [vmem:[#allocation6 + $0x8] sm:$0xf]
        %v377 = vld [vmem:[#allocation6 + $0xc] sm:$0xf]
        %v378 = vld [vmem:[#allocation6 + $0x10] sm:$0xf]
        %v379 = vld [vmem:[#allocation6 + $0x14] sm:$0xf]
        %v380 = vld [vmem:[#allocation6 + $0x18] sm:$0xf]
        %v381 = vld [vmem:[#allocation6 + $0x1c] sm:$0xf]
        %v382 = vld [vmem:[#allocation6 + $0x20] sm:$0xf]
        %v383 = vld [vmem:[#allocation6 + $0x24] sm:$0xf]
        %v384 = vld [vmem:[#allocation6 + $0x28] sm:$0xf]
        %v385 = vld [vmem:[#allocation6 + $0x2c] sm:$0xf]
        %v386 = vld [vmem:[#allocation6 + $0x30] sm:$0xf]
        %v387 = vld [vmem:[#allocation6 + $0x34] sm:$0xf]
        %v388 = vld [vmem:[#allocation6 + $0x38] sm:$0xf]
        %v389 = vld [vmem:[#allocation6 + $0x3c] sm:$0xf]
        %v390 = vld [vmem:[%s2] sm:$0x1]
        %v392 = vlaneseq
        %v393 = vshrl.u32 %v392, 7
        %v394 = vsub.s32 0, %v393
        %v395 = vrot.slane %v390, %v394
        %v429 = vunpack.c.l.b16 %v342
        %v430 = vunpack.c.l.b16 %v343
        %v431 = vunpack.c.l.b16 %v344
        %v432 = vunpack.c.l.b16 %v345
        %v433 = vunpack.c.l.b16 %v346
        %v434 = vunpack.c.l.b16 %v347
        %v435 = vunpack.c.l.b16 %v348
        %v436 = vunpack.c.l.b16 %v349
        %v437 = vunpack.c.l.b16 %v350
        %v438 = vunpack.c.l.b16 %v351
        %v439 = vunpack.c.l.b16 %v352
        %v440 = vunpack.c.l.b16 %v353
        %v441 = vunpack.c.l.b16 %v354
        %v442 = vunpack.c.l.b16 %v355
        %v443 = vunpack.c.l.b16 %v356
        %v444 = vunpack.c.l.b16 %v357
        %v445 = vunpack.c.l.b16 %v358
        %v446 = vunpack.c.l.b16 %v359
        %v447 = vunpack.c.l.b16 %v360
        %v448 = vunpack.c.l.b16 %v361
        %v449 = vunpack.c.l.b16 %v362
        %v450 = vunpack.c.l.b16 %v363
        %v451 = vunpack.c.l.b16 %v364
        %v452 = vunpack.c.l.b16 %v365
        %v453 = vunpack.c.l.b16 %v366
        %v454 = vunpack.c.l.b16 %v367
        %v455 = vunpack.c.l.b16 %v368
        %v456 = vunpack.c.l.b16 %v369
        %v457 = vunpack.c.l.b16 %v370
        %v458 = vunpack.c.l.b16 %v371
        %v459 = vunpack.c.l.b16 %v372
        %v460 = vunpack.c.l.b16 %v373
        %v461 = vpack.c.b16 %v430, %v429
        %v462 = vpack.c.b16 %v432, %v431
        %v463 = vpack.c.b16 %v434, %v433
        %v464 = vpack.c.b16 %v436, %v435
        %v465 = vpack.c.b16 %v438, %v437
        %v466 = vpack.c.b16 %v440, %v439
        %v467 = vpack.c.b16 %v442, %v441
        %v468 = vpack.c.b16 %v444, %v443
        %v469 = vpack.c.b16 %v446, %v445
        %v470 = vpack.c.b16 %v448, %v447
        %v471 = vpack.c.b16 %v450, %v449
        %v472 = vpack.c.b16 %v452, %v451
        %v473 = vpack.c.b16 %v454, %v453
        %v474 = vpack.c.b16 %v456, %v455
        %v475 = vpack.c.b16 %v458, %v457
        %v476 = vpack.c.b16 %v460, %v459
        %v509 = vunpack.c.l.b16 %v374
        %v510 = vunpack.c.l.b16 %v375
        %v511 = vunpack.c.l.b16 %v376
        %v512 = vunpack.c.l.b16 %v377
        %v513 = vunpack.c.l.b16 %v378
        %v514 = vunpack.c.l.b16 %v379
        %v515 = vunpack.c.l.b16 %v380
        %v516 = vunpack.c.l.b16 %v381
        %v517 = vunpack.c.l.b16 %v382
        %v518 = vunpack.c.l.b16 %v383
        %v519 = vunpack.c.l.b16 %v384
        %v520 = vunpack.c.l.b16 %v385
        %v521 = vunpack.c.l.b16 %v386
        %v522 = vunpack.c.l.b16 %v387
        %v523 = vunpack.c.l.b16 %v388
        %v524 = vunpack.c.l.b16 %v389
        %v525 = vpack.c.b16 %v510, %v509
        %v526 = vpack.c.b16 %v512, %v511
        %v527 = vpack.c.b16 %v514, %v513
        %v528 = vpack.c.b16 %v516, %v515
        %v529 = vpack.c.b16 %v518, %v517
        %v530 = vpack.c.b16 %v520, %v519
        %v531 = vpack.c.b16 %v522, %v521
        %v532 = vpack.c.b16 %v524, %v523
        %541 = vmatprep.subr.bf16.mxu0 0
        %542 = vmatpush1.bf16.msra.mxu0 %v525
        %543 = vmatprep.subr.bf16.mxu0 0
        %544 = vmatpush1.bf16.msra.mxu0 %v526
        %545 = vmatprep.subr.bf16.mxu0 0
        %546 = vmatpush1.bf16.msra.mxu0 %v527
        %547 = vmatprep.subr.bf16.mxu0 0
        %548 = vmatpush1.bf16.msra.mxu0 %v528
        %549 = vmatprep.subr.bf16.mxu0 0
        %550 = vmatpush1.bf16.msra.mxu0 %v529
        %551 = vmatprep.subr.bf16.mxu0 0
        %552 = vmatpush1.bf16.msra.mxu0 %v530
        %553 = vmatprep.subr.bf16.mxu0 0
        %554 = vmatpush1.bf16.msra.mxu0 %v531
        %555 = vmatprep.subr.bf16.mxu0 0
        %556 = vmatpush1.bf16.msra.mxu0 %v532
        %557 = vmatprep.subr.bf16.mxu0 0
        %558 = vmatpush1.bf16.msra.mxu0 0
        %559 = vmatprep.subr.bf16.mxu0 0
        %560 = vmatpush1.bf16.msra.mxu0 0
        %561 = vmatprep.subr.bf16.mxu0 0
        %562 = vmatpush1.bf16.msra.mxu0 0
        %563 = vmatprep.subr.bf16.mxu0 0
        %564 = vmatpush1.bf16.msra.mxu0 0
        %565 = vmatprep.subr.bf16.mxu0 0
        %566 = vmatpush1.bf16.msra.mxu0 0
        %567 = vmatprep.subr.bf16.mxu0 0
        %568 = vmatpush1.bf16.msra.mxu0 0
        %569 = vmatprep.subr.bf16.mxu0 0
        %570 = vmatpush1.bf16.msra.mxu0 0
        %571 = vmatprep.subr.bf16.mxu0 0
        %572 = vmatpush1.bf16.msra.mxu0 0
        %573 = vmatprep.mubr.bf16.mxu0 0
        %574 = vmatmul.mubr.bf16.gmra.mrb[0].mxu0 %v461
        %v575 = vpop.f32.mrb[0].mxu0
        %v576 = vadd.f32 %v395, %v575
        %v577 = vpop.f32.mrb[0].mxu0
        %v578 = vpop.f32.mrb[0].mxu0
        %v579 = vadd.f32 %v395, %v578
        %v580 = vpop.f32.mrb[0].mxu0
        %581 = vmatprep.mubr.bf16.mxu0 0
        %582 = vmatmul.mubr.bf16.gmra.mrb[0].mxu0 %v462
        %v583 = vpop.f32.mrb[0].mxu0
        %v584 = vadd.f32 %v395, %v583
        %v585 = vpop.f32.mrb[0].mxu0
        %v586 = vpop.f32.mrb[0].mxu0
        %v587 = vadd.f32 %v395, %v586
        %v588 = vpop.f32.mrb[0].mxu0
        %589 = vmatprep.mubr.bf16.mxu0 0
        %590 = vmatmul.mubr.bf16.gmra.mrb[0].mxu0 %v463
        %v591 = vpop.f32.mrb[0].mxu0
        %v592 = vadd.f32 %v395, %v591
        %v593 = vpop.f32.mrb[0].mxu0
        %v594 = vpop.f32.mrb[0].mxu0
        %v595 = vadd.f32 %v395, %v594
        %v596 = vpop.f32.mrb[0].mxu0
        %597 = vmatprep.mubr.bf16.mxu0 0
        %598 = vmatmul.mubr.bf16.gmra.mrb[0].mxu0 %v464
        %v599 = vpop.f32.mrb[0].mxu0
        %v600 = vadd.f32 %v395, %v599
        %v601 = vpop.f32.mrb[0].mxu0
        %v602 = vpop.f32.mrb[0].mxu0
        %v603 = vadd.f32 %v395, %v602
        %v604 = vpop.f32.mrb[0].mxu0
        %605 = vmatprep.mubr.bf16.mxu0 0
        %606 = vmatmul.mubr.bf16.gmra.mrb[0].mxu0 %v465
        %v607 = vpop.f32.mrb[0].mxu0
        %v608 = vadd.f32 %v395, %v607
        %v609 = vpop.f32.mrb[0].mxu0
        %v610 = vpop.f32.mrb[0].mxu0
        %v611 = vadd.f32 %v395, %v610
        %v612 = vpop.f32.mrb[0].mxu0
        %613 = vmatprep.mubr.bf16.mxu0 0
        %614 = vmatmul.mubr.bf16.gmra.mrb[0].mxu0 %v466
        %v615 = vpop.f32.mrb[0].mxu0
        %v616 = vadd.f32 %v395, %v615
        %v617 = vpop.f32.mrb[0].mxu0
        %v618 = vpop.f32.mrb[0].mxu0
        %v619 = vadd.f32 %v395, %v618
        %v620 = vpop.f32.mrb[0].mxu0
        %621 = vmatprep.mubr.bf16.mxu0 0
        %622 = vmatmul.mubr.bf16.gmra.mrb[0].mxu0 %v467
        %v623 = vpop.f32.mrb[0].mxu0
        %v624 = vadd.f32 %v395, %v623
        %v625 = vpop.f32.mrb[0].mxu0
        %v626 = vpop.f32.mrb[0].mxu0
        %v627 = vadd.f32 %v395, %v626
        %v628 = vpop.f32.mrb[0].mxu0
        %629 = vmatprep.mubr.bf16.mxu0 0
        %630 = vmatmul.mubr.bf16.gmra.mrb[0].mxu0 %v468
        %v631 = vpop.f32.mrb[0].mxu0
        %v632 = vadd.f32 %v395, %v631
        %v633 = vpop.f32.mrb[0].mxu0
        %v634 = vpop.f32.mrb[0].mxu0
        %v635 = vadd.f32 %v395, %v634
        %v636 = vpop.f32.mrb[0].mxu0
        %637 = vmatprep.mubr.bf16.mxu0 0
        %638 = vmatmul.mubr.bf16.gmra.mrb[0].mxu0 %v469
        %v639 = vpop.f32.mrb[0].mxu0
        %v640 = vadd.f32 %v395, %v639
        %v641 = vpop.f32.mrb[0].mxu0
        %v642 = vpop.f32.mrb[0].mxu0
        %v643 = vadd.f32 %v395, %v642
        %v644 = vpop.f32.mrb[0].mxu0
        %645 = vmatprep.mubr.bf16.mxu0 0
        %646 = vmatmul.mubr.bf16.gmra.mrb[0].mxu0 %v470
        %v647 = vpop.f32.mrb[0].mxu0
        %v648 = vadd.f32 %v395, %v647
        %v649 = vpop.f32.mrb[0].mxu0
        %v650 = vpop.f32.mrb[0].mxu0
        %v651 = vadd.f32 %v395, %v650
        %v652 = vpop.f32.mrb[0].mxu0
        %653 = vmatprep.mubr.bf16.mxu0 0
        %654 = vmatmul.mubr.bf16.gmra.mrb[0].mxu0 %v471
        %v655 = vpop.f32.mrb[0].mxu0
        %v656 = vadd.f32 %v395, %v655
        %v657 = vpop.f32.mrb[0].mxu0
        %v658 = vpop.f32.mrb[0].mxu0
        %v659 = vadd.f32 %v395, %v658
        %v660 = vpop.f32.mrb[0].mxu0
        %661 = vmatprep.mubr.bf16.mxu0 0
        %662 = vmatmul.mubr.bf16.gmra.mrb[0].mxu0 %v472
        %v663 = vpop.f32.mrb[0].mxu0
        %v664 = vadd.f32 %v395, %v663
        %v665 = vpop.f32.mrb[0].mxu0
        %v666 = vpop.f32.mrb[0].mxu0
        %v667 = vadd.f32 %v395, %v666
        %v668 = vpop.f32.mrb[0].mxu0
        %669 = vmatprep.mubr.bf16.mxu0 0
        %670 = vmatmul.mubr.bf16.gmra.mrb[0].mxu0 %v473
        %v671 = vpop.f32.mrb[0].mxu0
        %v672 = vadd.f32 %v395, %v671
        %v673 = vpop.f32.mrb[0].mxu0
        %v674 = vpop.f32.mrb[0].mxu0
        %v675 = vadd.f32 %v395, %v674
        %v676 = vpop.f32.mrb[0].mxu0
        %677 = vmatprep.mubr.bf16.mxu0 0
        %678 = vmatmul.mubr.bf16.gmra.mrb[0].mxu0 %v474
        %v679 = vpop.f32.mrb[0].mxu0
        %v680 = vadd.f32 %v395, %v679
        %v681 = vpop.f32.mrb[0].mxu0
        %v682 = vpop.f32.mrb[0].mxu0
        %v683 = vadd.f32 %v395, %v682
        %v684 = vpop.f32.mrb[0].mxu0
        %685 = vmatprep.mubr.bf16.mxu0 0
        %686 = vmatmul.mubr.bf16.gmra.mrb[0].mxu0 %v475
        %v687 = vpop.f32.mrb[0].mxu0
        %v688 = vadd.f32 %v395, %v687
        %v689 = vpop.f32.mrb[0].mxu0
        %v690 = vpop.f32.mrb[0].mxu0
        %v691 = vadd.f32 %v395, %v690
        %v692 = vpop.f32.mrb[0].mxu0
        %693 = vmatprep.mubr.bf16.mxu0 0
        %694 = vmatmul.mubr.bf16.gmra.mrb[0].mxu0 %v476
        %v695 = vpop.f32.mrb[0].mxu0
        %v696 = vadd.f32 %v395, %v695
        %v697 = vpop.f32.mrb[0].mxu0
        %v698 = vpop.f32.mrb[0].mxu0
        %v699 = vadd.f32 %v395, %v698
        %v700 = vpop.f32.mrb[0].mxu0
        %701 = vdwg.mxu0
        %v702 = vmax.f32 %v576, 0.0
        %v703 = vmax.f32 %v579, 0.0
        %v704 = vmax.f32 %v584, 0.0
        %v705 = vmax.f32 %v587, 0.0
        %v706 = vmax.f32 %v592, 0.0
        %v707 = vmax.f32 %v595, 0.0
        %v708 = vmax.f32 %v600, 0.0
        %v709 = vmax.f32 %v603, 0.0
        %v710 = vmax.f32 %v608, 0.0
        %v711 = vmax.f32 %v611, 0.0
        %v712 = vmax.f32 %v616, 0.0
        %v713 = vmax.f32 %v619, 0.0
        %v714 = vmax.f32 %v624, 0.0
        %v715 = vmax.f32 %v627, 0.0
        %v716 = vmax.f32 %v632, 0.0
        %v717 = vmax.f32 %v635, 0.0
        %v718 = vmax.f32 %v640, 0.0
        %v719 = vmax.f32 %v643, 0.0
        %v720 = vmax.f32 %v648, 0.0
        %v721 = vmax.f32 %v651, 0.0
        %v722 = vmax.f32 %v656, 0.0
        %v723 = vmax.f32 %v659, 0.0
        %v724 = vmax.f32 %v664, 0.0
        %v725 = vmax.f32 %v667, 0.0
        %v726 = vmax.f32 %v672, 0.0
        %v727 = vmax.f32 %v675, 0.0
        %v728 = vmax.f32 %v680, 0.0
        %v729 = vmax.f32 %v683, 0.0
        %v730 = vmax.f32 %v688, 0.0
        %v731 = vmax.f32 %v691, 0.0
        %v732 = vmax.f32 %v696, 0.0
        %v733 = vmax.f32 %v699, 0.0
        %734 = vst [vmem:[#allocation2] sm:$0xf] 0
        %735 = vst [vmem:[#allocation2 + $0x4] sm:$0xf] 0
        %736 = vst [vmem:[#allocation2 + $0x8] sm:$0x1] 0
        %s737 = scalar_lea.vmem [#allocation2], 204
        %738 = vst [vmem:[%s737] sm:$0xf] 0
        %739 = vst [vmem:[%s737 + $0x4] sm:$0xf] 0
        %740 = vst [vmem:[%s737 + $0x8] sm:$0x1] 0
        %s741 = scalar_lea.vmem [#allocation2], 12
        %vm742 = vcmask 1040384
        %vm743 = vsmask.f32 256
        %vm744 = vmand %vm742, %vm743
        %v745 = vld [vmem:[%s741] sm:$0x1]
        %v746 = vsel %vm744, 0, %v745
        %747 = vst [vmem:[%s741] sm:$0x1] %v746
        %v748 = vld [vmem:[%s741 + $0xc] sm:$0x1]
        %v749 = vsel %vm744, 0, %v748
        %750 = vst [vmem:[%s741 + $0xc] sm:$0x1] %v749
        %v751 = vld [vmem:[%s741 + $0x18] sm:$0x1]
        %v752 = vsel %vm744, 0, %v751
        %753 = vst [vmem:[%s741 + $0x18] sm:$0x1] %v752
        %v754 = vld [vmem:[%s741 + $0x24] sm:$0x1]
        %v755 = vsel %vm744, 0, %v754
        %756 = vst [vmem:[%s741 + $0x24] sm:$0x1] %v755
        %v757 = vld [vmem:[%s741 + $0x30] sm:$0x1]
        %v758 = vsel %vm744, 0, %v757
        %759 = vst [vmem:[%s741 + $0x30] sm:$0x1] %v758
        %v760 = vld [vmem:[%s741 + $0x3c] sm:$0x1]
        %v761 = vsel %vm744, 0, %v760
        %762 = vst [vmem:[%s741 + $0x3c] sm:$0x1] %v761
        %v763 = vld [vmem:[%s741 + $0x48] sm:$0x1]
        %v764 = vsel %vm744, 0, %v763
        %765 = vst [vmem:[%s741 + $0x48] sm:$0x1] %v764
        %v766 = vld [vmem:[%s741 + $0x54] sm:$0x1]
        %v767 = vsel %vm744, 0, %v766
        %768 = vst [vmem:[%s741 + $0x54] sm:$0x1] %v767
        %v769 = vld [vmem:[%s741 + $0x60] sm:$0x1]
        %v770 = vsel %vm744, 0, %v769
        %771 = vst [vmem:[%s741 + $0x60] sm:$0x1] %v770
        %v772 = vld [vmem:[%s741 + $0x6c] sm:$0x1]
        %v773 = vsel %vm744, 0, %v772
        %774 = vst [vmem:[%s741 + $0x6c] sm:$0x1] %v773
        %v775 = vld [vmem:[%s741 + $0x78] sm:$0x1]
        %v776 = vsel %vm744, 0, %v775
        %777 = vst [vmem:[%s741 + $0x78] sm:$0x1] %v776
        %v778 = vld [vmem:[%s741 + $0x84] sm:$0x1]
        %v779 = vsel %vm744, 0, %v778
        %780 = vst [vmem:[%s741 + $0x84] sm:$0x1] %v779
        %v781 = vld [vmem:[%s741 + $0x90] sm:$0x1]
        %v782 = vsel %vm744, 0, %v781
        %783 = vst [vmem:[%s741 + $0x90] sm:$0x1] %v782
        %v784 = vld [vmem:[%s741 + $0x9c] sm:$0x1]
        %v785 = vsel %vm744, 0, %v784
        %786 = vst [vmem:[%s741 + $0x9c] sm:$0x1] %v785
        %v787 = vld [vmem:[%s741 + $0xa8] sm:$0x1]
        %v788 = vsel %vm744, 0, %v787
        %789 = vst [vmem:[%s741 + $0xa8] sm:$0x1] %v788
        %v790 = vld [vmem:[%s741 + $0xb4] sm:$0x1]
        %v791 = vsel %vm744, 0, %v790
        %792 = vst [vmem:[%s741 + $0xb4] sm:$0x1] %v791
        %vm793 = vsmask.f32 7938
        %vm794 = vmand %vm742, %vm793
        %v795 = vld [vmem:[%s741 + $0x8] sm:$0x1]
        %v796 = vsel %vm794, 0, %v795
        %797 = vst [vmem:[%s741 + $0x8] sm:$0x1] %v796
        %v798 = vld [vmem:[%s741 + $0x14] sm:$0x1]
        %v799 = vsel %vm794, 0, %v798
        %800 = vst [vmem:[%s741 + $0x14] sm:$0x1] %v799
        %v801 = vld [vmem:[%s741 + $0x20] sm:$0x1]
        %v802 = vsel %vm794, 0, %v801
        %803 = vst [vmem:[%s741 + $0x20] sm:$0x1] %v802
        %v804 = vld [vmem:[%s741 + $0x2c] sm:$0x1]
        %v805 = vsel %vm794, 0, %v804
        %806 = vst [vmem:[%s741 + $0x2c] sm:$0x1] %v805
        %v807 = vld [vmem:[%s741 + $0x38] sm:$0x1]
        %v808 = vsel %vm794, 0, %v807
        %809 = vst [vmem:[%s741 + $0x38] sm:$0x1] %v808
        %v810 = vld [vmem:[%s741 + $0x44] sm:$0x1]
        %v811 = vsel %vm794, 0, %v810
        %812 = vst [vmem:[%s741 + $0x44] sm:$0x1] %v811
        %v813 = vld [vmem:[%s741 + $0x50] sm:$0x1]
        %v814 = vsel %vm794, 0, %v813
        %815 = vst [vmem:[%s741 + $0x50] sm:$0x1] %v814
        %v816 = vld [vmem:[%s741 + $0x5c] sm:$0x1]
        %v817 = vsel %vm794, 0, %v816
        %818 = vst [vmem:[%s741 + $0x5c] sm:$0x1] %v817
        %v819 = vld [vmem:[%s741 + $0x68] sm:$0x1]
        %v820 = vsel %vm794, 0, %v819
        %821 = vst [vmem:[%s741 + $0x68] sm:$0x1] %v820
        %v822 = vld [vmem:[%s741 + $0x74] sm:$0x1]
        %v823 = vsel %vm794, 0, %v822
        %824 = vst [vmem:[%s741 + $0x74] sm:$0x1] %v823
        %v825 = vld [vmem:[%s741 + $0x80] sm:$0x1]
        %v826 = vsel %vm794, 0, %v825
        %827 = vst [vmem:[%s741 + $0x80] sm:$0x1] %v826
        %v828 = vld [vmem:[%s741 + $0x8c] sm:$0x1]
        %v829 = vsel %vm794, 0, %v828
        %830 = vst [vmem:[%s741 + $0x8c] sm:$0x1] %v829
        %v831 = vld [vmem:[%s741 + $0x98] sm:$0x1]
        %v832 = vsel %vm794, 0, %v831
        %833 = vst [vmem:[%s741 + $0x98] sm:$0x1] %v832
        %v834 = vld [vmem:[%s741 + $0xa4] sm:$0x1]
        %v835 = vsel %vm794, 0, %v834
        %836 = vst [vmem:[%s741 + $0xa4] sm:$0x1] %v835
        %v837 = vld [vmem:[%s741 + $0xb0] sm:$0x1]
        %v838 = vsel %vm794, 0, %v837
        %839 = vst [vmem:[%s741 + $0xb0] sm:$0x1] %v838
        %v840 = vld [vmem:[%s741 + $0xbc] sm:$0x1]
        %v841 = vsel %vm794, 0, %v840
        %842 = vst [vmem:[%s741 + $0xbc] sm:$0x1] %v841
        %v843 = vpack.c.bf16 %v703, %v702
        %v844 = vpack.c.bf16 %v705, %v704
        %v845 = vpack.c.bf16 %v707, %v706
        %v846 = vpack.c.bf16 %v709, %v708
        %v847 = vpack.c.bf16 %v711, %v710
        %v848 = vpack.c.bf16 %v713, %v712
        %v849 = vpack.c.bf16 %v715, %v714
        %v850 = vpack.c.bf16 %v717, %v716
        %v851 = vpack.c.bf16 %v719, %v718
        %v852 = vpack.c.bf16 %v721, %v720
        %v853 = vpack.c.bf16 %v723, %v722
        %v854 = vpack.c.bf16 %v725, %v724
        %v855 = vpack.c.bf16 %v727, %v726
        %v856 = vpack.c.bf16 %v729, %v728
        %v857 = vpack.c.bf16 %v731, %v730
        %v858 = vpack.c.bf16 %v733, %v732
        %v875 = vunpack.c.l.b16 %v843
        %v876 = vunpack.c.h.b16 %v843
        %v877 = vunpack.c.l.b16 %v844
        %v878 = vunpack.c.h.b16 %v844
        %v879 = vunpack.c.l.b16 %v845
        %v880 = vunpack.c.h.b16 %v845
        %v881 = vunpack.c.l.b16 %v846
        %v882 = vunpack.c.h.b16 %v846
        %v883 = vunpack.c.l.b16 %v847
        %v884 = vunpack.c.h.b16 %v847
        %v885 = vunpack.c.l.b16 %v848
        %v886 = vunpack.c.h.b16 %v848
        %v887 = vunpack.c.l.b16 %v849
        %v888 = vunpack.c.h.b16 %v849
        %v889 = vunpack.c.l.b16 %v850
        %v890 = vunpack.c.h.b16 %v850
        %v891 = vunpack.c.l.b16 %v851
        %v892 = vunpack.c.h.b16 %v851
        %v893 = vunpack.c.l.b16 %v852
        %v894 = vunpack.c.h.b16 %v852
        %v895 = vunpack.c.l.b16 %v853
        %v896 = vunpack.c.h.b16 %v853
        %v897 = vunpack.c.l.b16 %v854
        %v898 = vunpack.c.h.b16 %v854
        %v899 = vunpack.c.l.b16 %v855
        %v900 = vunpack.c.h.b16 %v855
        %v901 = vunpack.c.l.b16 %v856
        %v902 = vunpack.c.h.b16 %v856
        %v903 = vunpack.c.l.b16 %v857
        %v904 = vunpack.c.h.b16 %v857
        %v905 = vunpack.c.l.b16 %v858
        %v906 = vunpack.c.h.b16 %v858
        %v907 = vpack.c.b16 %v875, %v875
        %v908 = vpack.c.b16 %v876, %v876
        %v909 = vpack.c.b16 %v877, %v877
        %v910 = vpack.c.b16 %v878, %v878
        %v911 = vpack.c.b16 %v879, %v879
        %v912 = vpack.c.b16 %v880, %v880
        %v913 = vpack.c.b16 %v881, %v881
        %v914 = vpack.c.b16 %v882, %v882
        %v915 = vpack.c.b16 %v883, %v883
        %v916 = vpack.c.b16 %v884, %v884
        %v917 = vpack.c.b16 %v885, %v885
        %v918 = vpack.c.b16 %v886, %v886
        %v919 = vpack.c.b16 %v887, %v887
        %v920 = vpack.c.b16 %v888, %v888
        %v921 = vpack.c.b16 %v889, %v889
        %v922 = vpack.c.b16 %v890, %v890
        %v923 = vpack.c.b16 %v891, %v891
        %v924 = vpack.c.b16 %v892, %v892
        %v925 = vpack.c.b16 %v893, %v893
        %v926 = vpack.c.b16 %v894, %v894
        %v927 = vpack.c.b16 %v895, %v895
        %v928 = vpack.c.b16 %v896, %v896
        %v929 = vpack.c.b16 %v897, %v897
        %v930 = vpack.c.b16 %v898, %v898
        %v931 = vpack.c.b16 %v899, %v899
        %v932 = vpack.c.b16 %v900, %v900
        %v933 = vpack.c.b16 %v901, %v901
        %v934 = vpack.c.b16 %v902, %v902
        %v935 = vpack.c.b16 %v903, %v903
        %v936 = vpack.c.b16 %v904, %v904
        %v937 = vpack.c.b16 %v905, %v905
        %v938 = vpack.c.b16 %v906, %v906
        %vm939 = vsmask.f32 4368
        %vm940 = vmor %vm743, %vm939
        %v942 = vshrl.u32 %v907, 16
        %v944 = vrot.slane %v942, 7
        %v945 = vshll.u32 %v907, 16
        %v947 = vor.u32 %v944, %v945
        %v948 = vrot.slane %v944, 4
        %v950 = vshrl.u32 %v908, 16
        %v952 = vrot.slane %v950, 7
        %v953 = vshll.u32 %v908, 16
        %v955 = vor.u32 %v952, %v953
        %v956 = vsel %vm940, %v948, %v955
        %v957 = vrot.slane %v952, 4
        %v959 = vshrl.u32 %v909, 16
        %v961 = vrot.slane %v959, 7
        %v962 = vshll.u32 %v909, 16
        %v964 = vor.u32 %v961, %v962
        %v965 = vrot.slane %v961, 4
        %v967 = vshrl.u32 %v910, 16
        %v969 = vrot.slane %v967, 7
        %v970 = vshll.u32 %v910, 16
        %v972 = vor.u32 %v969, %v970
        %v973 = vsel %vm940, %v965, %v972
        %v974 = vrot.slane %v969, 4
        %v976 = vshrl.u32 %v911, 16
        %v978 = vrot.slane %v976, 7
        %v979 = vshll.u32 %v911, 16
        %v981 = vor.u32 %v978, %v979
        %v982 = vrot.slane %v978, 4
        %v984 = vshrl.u32 %v912, 16
        %v986 = vrot.slane %v984, 7
        %v987 = vshll.u32 %v912, 16
        %v989 = vor.u32 %v986, %v987
        %v990 = vsel %vm940, %v982, %v989
        %v991 = vrot.slane %v986, 4
        %v993 = vshrl.u32 %v913, 16
        %v995 = vrot.slane %v993, 7
        %v996 = vshll.u32 %v913, 16
        %v998 = vor.u32 %v995, %v996
        %v999 = vrot.slane %v995, 4
        %v1001 = vshrl.u32 %v914, 16
        %v1003 = vrot.slane %v1001, 7
        %v1004 = vshll.u32 %v914, 16
        %v1006 = vor.u32 %v1003, %v1004
        %v1007 = vsel %vm940, %v999, %v1006
        %v1008 = vrot.slane %v1003, 4
        %v1010 = vshrl.u32 %v915, 16
        %v1012 = vrot.slane %v1010, 7
        %v1013 = vshll.u32 %v915, 16
        %v1015 = vor.u32 %v1012, %v1013
        %v1016 = vrot.slane %v1012, 4
        %v1018 = vshrl.u32 %v916, 16
        %v1020 = vrot.slane %v1018, 7
        %v1021 = vshll.u32 %v916, 16
        %v1023 = vor.u32 %v1020, %v1021
        %v1024 = vsel %vm940, %v1016, %v1023
        %v1025 = vrot.slane %v1020, 4
        %v1027 = vshrl.u32 %v917, 16
        %v1029 = vrot.slane %v1027, 7
        %v1030 = vshll.u32 %v917, 16
        %v1032 = vor.u32 %v1029, %v1030
        %v1033 = vrot.slane %v1029, 4
        %v1035 = vshrl.u32 %v918, 16
        %v1037 = vrot.slane %v1035, 7
        %v1038 = vshll.u32 %v918, 16
        %v1040 = vor.u32 %v1037, %v1038
        %v1041 = vsel %vm940, %v1033, %v1040
        %v1042 = vrot.slane %v1037, 4
        %v1044 = vshrl.u32 %v919, 16
        %v1046 = vrot.slane %v1044, 7
        %v1047 = vshll.u32 %v919, 16
        %v1049 = vor.u32 %v1046, %v1047
        %v1050 = vrot.slane %v1046, 4
        %v1052 = vshrl.u32 %v920, 16
        %v1054 = vrot.slane %v1052, 7
        %v1055 = vshll.u32 %v920, 16
        %v1057 = vor.u32 %v1054, %v1055
        %v1058 = vsel %vm940, %v1050, %v1057
        %v1059 = vrot.slane %v1054, 4
        %v1061 = vshrl.u32 %v921, 16
        %v1063 = vrot.slane %v1061, 7
        %v1064 = vshll.u32 %v921, 16
        %v1066 = vor.u32 %v1063, %v1064
        %v1067 = vrot.slane %v1063, 4
        %v1069 = vshrl.u32 %v922, 16
        %v1071 = vrot.slane %v1069, 7
        %v1072 = vshll.u32 %v922, 16
        %v1074 = vor.u32 %v1071, %v1072
        %v1075 = vsel %vm940, %v1067, %v1074
        %v1076 = vrot.slane %v1071, 4
        %v1078 = vshrl.u32 %v923, 16
        %v1080 = vrot.slane %v1078, 7
        %v1081 = vshll.u32 %v923, 16
        %v1083 = vor.u32 %v1080, %v1081
        %v1084 = vrot.slane %v1080, 4
        %v1086 = vshrl.u32 %v924, 16
        %v1088 = vrot.slane %v1086, 7
        %v1089 = vshll.u32 %v924, 16
        %v1091 = vor.u32 %v1088, %v1089
        %v1092 = vsel %vm940, %v1084, %v1091
        %v1093 = vrot.slane %v1088, 4
        %v1095 = vshrl.u32 %v925, 16
        %v1097 = vrot.slane %v1095, 7
        %v1098 = vshll.u32 %v925, 16
        %v1100 = vor.u32 %v1097, %v1098
        %v1101 = vrot.slane %v1097, 4
        %v1103 = vshrl.u32 %v926, 16
        %v1105 = vrot.slane %v1103, 7
        %v1106 = vshll.u32 %v926, 16
        %v1108 = vor.u32 %v1105, %v1106
        %v1109 = vsel %vm940, %v1101, %v1108
        %v1110 = vrot.slane %v1105, 4
        %v1112 = vshrl.u32 %v927, 16
        %v1114 = vrot.slane %v1112, 7
        %v1115 = vshll.u32 %v927, 16
        %v1117 = vor.u32 %v1114, %v1115
        %v1118 = vrot.slane %v1114, 4
        %v1120 = vshrl.u32 %v928, 16
        %v1122 = vrot.slane %v1120, 7
        %v1123 = vshll.u32 %v928, 16
        %v1125 = vor.u32 %v1122, %v1123
        %v1126 = vsel %vm940, %v1118, %v1125
        %v1127 = vrot.slane %v1122, 4
        %v1129 = vshrl.u32 %v929, 16
        %v1131 = vrot.slane %v1129, 7
        %v1132 = vshll.u32 %v929, 16
        %v1134 = vor.u32 %v1131, %v1132
        %v1135 = vrot.slane %v1131, 4
        %v1137 = vshrl.u32 %v930, 16
        %v1139 = vrot.slane %v1137, 7
        %v1140 = vshll.u32 %v930, 16
        %v1142 = vor.u32 %v1139, %v1140
        %v1143 = vsel %vm940, %v1135, %v1142
        %v1144 = vrot.slane %v1139, 4
        %v1146 = vshrl.u32 %v931, 16
        %v1148 = vrot.slane %v1146, 7
        %v1149 = vshll.u32 %v931, 16
        %v1151 = vor.u32 %v1148, %v1149
        %v1152 = vrot.slane %v1148, 4
        %v1154 = vshrl.u32 %v932, 16
        %v1156 = vrot.slane %v1154, 7
        %v1157 = vshll.u32 %v932, 16
        %v1159 = vor.u32 %v1156, %v1157
        %v1160 = vsel %vm940, %v1152, %v1159
        %v1161 = vrot.slane %v1156, 4
        %v1163 = vshrl.u32 %v933, 16
        %v1165 = vrot.slane %v1163, 7
        %v1166 = vshll.u32 %v933, 16
        %v1168 = vor.u32 %v1165, %v1166
        %v1169 = vrot.slane %v1165, 4
        %v1171 = vshrl.u32 %v934, 16
        %v1173 = vrot.slane %v1171, 7
        %v1174 = vshll.u32 %v934, 16
        %v1176 = vor.u32 %v1173, %v1174
        %v1177 = vsel %vm940, %v1169, %v1176
        %v1178 = vrot.slane %v1173, 4
        %v1180 = vshrl.u32 %v935, 16
        %v1182 = vrot.slane %v1180, 7
        %v1183 = vshll.u32 %v935, 16
        %v1185 = vor.u32 %v1182, %v1183
        %v1186 = vrot.slane %v1182, 4
        %v1188 = vshrl.u32 %v936, 16
        %v1190 = vrot.slane %v1188, 7
        %v1191 = vshll.u32 %v936, 16
        %v1193 = vor.u32 %v1190, %v1191
        %v1194 = vsel %vm940, %v1186, %v1193
        %v1195 = vrot.slane %v1190, 4
        %v1197 = vshrl.u32 %v937, 16
        %v1199 = vrot.slane %v1197, 7
        %v1200 = vshll.u32 %v937, 16
        %v1202 = vor.u32 %v1199, %v1200
        %v1203 = vrot.slane %v1199, 4
        %v1205 = vshrl.u32 %v938, 16
        %v1207 = vrot.slane %v1205, 7
        %v1208 = vshll.u32 %v938, 16
        %v1210 = vor.u32 %v1207, %v1208
        %v1211 = vsel %vm940, %v1203, %v1210
        %v1212 = vrot.slane %v1207, 4
        %vm1261 = vcmask 1043456
        %vm1262 = vmand %vm1261, %vm793
        %v1263 = vld [vmem:[%s741] sm:$0xf]
        %v1264 = vsel %vm1262, %v947, %v1263
        %1265 = vst [vmem:[%s741] sm:$0xf] %v1264
        %1266 = vst [vmem:[%s741 + $0x4] sm:$0xf] %v956
        %v1267 = vld [vmem:[%s741 + $0x8] sm:$0x1]
        %v1268 = vsel %vm744, %v957, %v1267
        %1269 = vst [vmem:[%s741 + $0x8] sm:$0x1] %v1268
        %v1270 = vld [vmem:[%s741 + $0xc] sm:$0xf]
        %v1271 = vsel %vm1262, %v964, %v1270
        %1272 = vst [vmem:[%s741 + $0xc] sm:$0xf] %v1271
        %1273 = vst [vmem:[%s741 + $0x10] sm:$0xf] %v973
        %v1274 = vld [vmem:[%s741 + $0x14] sm:$0x1]
        %v1275 = vsel %vm744, %v974, %v1274
        %1276 = vst [vmem:[%s741 + $0x14] sm:$0x1] %v1275
        %v1277 = vld [vmem:[%s741 + $0x18] sm:$0xf]
        %v1278 = vsel %vm1262, %v981, %v1277
        %1279 = vst [vmem:[%s741 + $0x18] sm:$0xf] %v1278
        %1280 = vst [vmem:[%s741 + $0x1c] sm:$0xf] %v990
        %v1281 = vld [vmem:[%s741 + $0x20] sm:$0x1]
        %v1282 = vsel %vm744, %v991, %v1281
        %1283 = vst [vmem:[%s741 + $0x20] sm:$0x1] %v1282
        %v1284 = vld [vmem:[%s741 + $0x24] sm:$0xf]
        %v1285 = vsel %vm1262, %v998, %v1284
        %1286 = vst [vmem:[%s741 + $0x24] sm:$0xf] %v1285
        %1287 = vst [vmem:[%s741 + $0x28] sm:$0xf] %v1007
        %v1288 = vld [vmem:[%s741 + $0x2c] sm:$0x1]
        %v1289 = vsel %vm744, %v1008, %v1288
        %1290 = vst [vmem:[%s741 + $0x2c] sm:$0x1] %v1289
        %v1291 = vld [vmem:[%s741 + $0x30] sm:$0xf]
        %v1292 = vsel %vm1262, %v1015, %v1291
        %1293 = vst [vmem:[%s741 + $0x30] sm:$0xf] %v1292
        %1294 = vst [vmem:[%s741 + $0x34] sm:$0xf] %v1024
        %v1295 = vld [vmem:[%s741 + $0x38] sm:$0x1]
        %v1296 = vsel %vm744, %v1025, %v1295
        %1297 = vst [vmem:[%s741 + $0x38] sm:$0x1] %v1296
        %v1298 = vld [vmem:[%s741 + $0x3c] sm:$0xf]
        %v1299 = vsel %vm1262, %v1032, %v1298
        %1300 = vst [vmem:[%s741 + $0x3c] sm:$0xf] %v1299
        %1301 = vst [vmem:[%s741 + $0x40] sm:$0xf] %v1041
        %v1302 = vld [vmem:[%s741 + $0x44] sm:$0x1]
        %v1303 = vsel %vm744, %v1042, %v1302
        %1304 = vst [vmem:[%s741 + $0x44] sm:$0x1] %v1303
        %v1305 = vld [vmem:[%s741 + $0x48] sm:$0xf]
        %v1306 = vsel %vm1262, %v1049, %v1305
        %1307 = vst [vmem:[%s741 + $0x48] sm:$0xf] %v1306
        %1308 = vst [vmem:[%s741 + $0x4c] sm:$0xf] %v1058
        %v1309 = vld [vmem:[%s741 + $0x50] sm:$0x1]
        %v1310 = vsel %vm744, %v1059, %v1309
        %1311 = vst [vmem:[%s741 + $0x50] sm:$0x1] %v1310
        %v1312 = vld [vmem:[%s741 + $0x54] sm:$0xf]
        %v1313 = vsel %vm1262, %v1066, %v1312
        %1314 = vst [vmem:[%s741 + $0x54] sm:$0xf] %v1313
        %1315 = vst [vmem:[%s741 + $0x58] sm:$0xf] %v1075
        %v1316 = vld [vmem:[%s741 + $0x5c] sm:$0x1]
        %v1317 = vsel %vm744, %v1076, %v1316
        %1318 = vst [vmem:[%s741 + $0x5c] sm:$0x1] %v1317
        %v1319 = vld [vmem:[%s741 + $0x60] sm:$0xf]
        %v1320 = vsel %vm1262, %v1083, %v1319
        %1321 = vst [vmem:[%s741 + $0x60] sm:$0xf] %v1320
        %1322 = vst [vmem:[%s741 + $0x64] sm:$0xf] %v1092
        %v1323 = vld [vmem:[%s741 + $0x68] sm:$0x1]
        %v1324 = vsel %vm744, %v1093, %v1323
        %1325 = vst [vmem:[%s741 + $0x68] sm:$0x1] %v1324
        %v1326 = vld [vmem:[%s741 + $0x6c] sm:$0xf]
        %v1327 = vsel %vm1262, %v1100, %v1326
        %1328 = vst [vmem:[%s741 + $0x6c] sm:$0xf] %v1327
        %1329 = vst [vmem:[%s741 + $0x70] sm:$0xf] %v1109
        %v1330 = vld [vmem:[%s741 + $0x74] sm:$0x1]
        %v1331 = vsel %vm744, %v1110, %v1330
        %1332 = vst [vmem:[%s741 + $0x74] sm:$0x1] %v1331
        %v1333 = vld [vmem:[%s741 + $0x78] sm:$0xf]
        %v1334 = vsel %vm1262, %v1117, %v1333
        %1335 = vst [vmem:[%s741 + $0x78] sm:$0xf] %v1334
        %1336 = vst [vmem:[%s741 + $0x7c] sm:$0xf] %v1126
        %v1337 = vld [vmem:[%s741 + $0x80] sm:$0x1]
        %v1338 = vsel %vm744, %v1127, %v1337
        %1339 = vst [vmem:[%s741 + $0x80] sm:$0x1] %v1338
        %v1340 = vld [vmem:[%s741 + $0x84] sm:$0xf]
        %v1341 = vsel %vm1262, %v1134, %v1340
        %1342 = vst [vmem:[%s741 + $0x84] sm:$0xf] %v1341
        %1343 = vst [vmem:[%s741 + $0x88] sm:$0xf] %v1143
        %v1344 = vld [vmem:[%s741 + $0x8c] sm:$0x1]
        %v1345 = vsel %vm744, %v1144, %v1344
        %1346 = vst [vmem:[%s741 + $0x8c] sm:$0x1] %v1345
        %v1347 = vld [vmem:[%s741 + $0x90] sm:$0xf]
        %v1348 = vsel %vm1262, %v1151, %v1347
        %1349 = vst [vmem:[%s741 + $0x90] sm:$0xf] %v1348
        %1350 = vst [vmem:[%s741 + $0x94] sm:$0xf] %v1160
        %v1351 = vld [vmem:[%s741 + $0x98] sm:$0x1]
        %v1352 = vsel %vm744, %v1161, %v1351
        %1353 = vst [vmem:[%s741 + $0x98] sm:$0x1] %v1352
        %v1354 = vld [vmem:[%s741 + $0x9c] sm:$0xf]
        %v1355 = vsel %vm1262, %v1168, %v1354
        %1356 = vst [vmem:[%s741 + $0x9c] sm:$0xf] %v1355
        %1357 = vst [vmem:[%s741 + $0xa0] sm:$0xf] %v1177
        %v1358 = vld [vmem:[%s741 + $0xa4] sm:$0x1]
        %v1359 = vsel %vm744, %v1178, %v1358
        %1360 = vst [vmem:[%s741 + $0xa4] sm:$0x1] %v1359
        %v1361 = vld [vmem:[%s741 + $0xa8] sm:$0xf]
        %v1362 = vsel %vm1262, %v1185, %v1361
        %1363 = vst [vmem:[%s741 + $0xa8] sm:$0xf] %v1362
        %1364 = vst [vmem:[%s741 + $0xac] sm:$0xf] %v1194
        %v1365 = vld [vmem:[%s741 + $0xb0] sm:$0x1]
        %v1366 = vsel %vm744, %v1195, %v1365
        %1367 = vst [vmem:[%s741 + $0xb0] sm:$0x1] %v1366
        %v1368 = vld [vmem:[%s741 + $0xb4] sm:$0xf]
        %v1369 = vsel %vm1262, %v1202, %v1368
        %1370 = vst [vmem:[%s741 + $0xb4] sm:$0xf] %v1369
        %1371 = vst [vmem:[%s741 + $0xb8] sm:$0xf] %v1211
        %v1372 = vld [vmem:[%s741 + $0xbc] sm:$0x1]
        %v1373 = vsel %vm744, %v1212, %v1372
        %1374 = vst [vmem:[%s741 + $0xbc] sm:$0x1] %v1373
        %v1375 = vld [vmem:[#allocation2] sm:$0xf]
        %v1376 = vld [vmem:[#allocation2 + $0x4] sm:$0xf]
        %v1377 = vld [vmem:[#allocation2 + $0xc] sm:$0xf]
        %v1378 = vld [vmem:[#allocation2 + $0x10] sm:$0xf]
        %v1379 = vld [vmem:[#allocation2 + $0x18] sm:$0xf]
        %v1380 = vld [vmem:[#allocation2 + $0x1c] sm:$0xf]
        %v1381 = vld [vmem:[#allocation2 + $0x24] sm:$0xf]
        %v1382 = vld [vmem:[#allocation2 + $0x28] sm:$0xf]
        %v1383 = vld [vmem:[#allocation2 + $0x30] sm:$0xf]
        %v1384 = vld [vmem:[#allocation2 + $0x34] sm:$0xf]
        %v1385 = vld [vmem:[#allocation2 + $0x3c] sm:$0xf]
        %v1386 = vld [vmem:[#allocation2 + $0x40] sm:$0xf]
        %v1387 = vld [vmem:[#allocation2 + $0x48] sm:$0xf]
        %v1388 = vld [vmem:[#allocation2 + $0x4c] sm:$0xf]
        %v1389 = vld [vmem:[#allocation2 + $0x54] sm:$0xf]
        %v1390 = vld [vmem:[#allocation2 + $0x58] sm:$0xf]
        %v1391 = vld [vmem:[#allocation2 + $0x60] sm:$0xf]
        %v1392 = vld [vmem:[#allocation2 + $0x64] sm:$0xf]
        %v1393 = vld [vmem:[#allocation2 + $0x6c] sm:$0xf]
        %v1394 = vld [vmem:[#allocation2 + $0x70] sm:$0xf]
        %v1395 = vld [vmem:[#allocation2 + $0x78] sm:$0xf]
        %v1396 = vld [vmem:[#allocation2 + $0x7c] sm:$0xf]
        %v1397 = vld [vmem:[#allocation2 + $0x84] sm:$0xf]
        %v1398 = vld [vmem:[#allocation2 + $0x88] sm:$0xf]
        %v1399 = vld [vmem:[#allocation2 + $0x90] sm:$0xf]
        %v1400 = vld [vmem:[#allocation2 + $0x94] sm:$0xf]
        %v1401 = vld [vmem:[#allocation2 + $0x9c] sm:$0xf]
        %v1402 = vld [vmem:[#allocation2 + $0xa0] sm:$0xf]
        %v1403 = vld [vmem:[#allocation2 + $0xa8] sm:$0xf]
        %v1404 = vld [vmem:[#allocation2 + $0xac] sm:$0xf]
        %v1405 = vld [vmem:[#allocation2 + $0xb4] sm:$0xf]
        %v1406 = vld [vmem:[#allocation2 + $0xb8] sm:$0xf]
        %v1407 = vld [vmem:[#allocation2 + $0x8] sm:$0x1]
        %v1408 = vld [vmem:[#allocation2 + $0x14] sm:$0x1]
        %v1409 = vld [vmem:[#allocation2 + $0x20] sm:$0x1]
        %v1410 = vld [vmem:[#allocation2 + $0x2c] sm:$0x1]
        %v1411 = vld [vmem:[#allocation2 + $0x38] sm:$0x1]
        %v1412 = vld [vmem:[#allocation2 + $0x44] sm:$0x1]
        %v1413 = vld [vmem:[#allocation2 + $0x50] sm:$0x1]
        %v1414 = vld [vmem:[#allocation2 + $0x5c] sm:$0x1]
        %v1415 = vld [vmem:[#allocation2 + $0x68] sm:$0x1]
        %v1416 = vld [vmem:[#allocation2 + $0x74] sm:$0x1]
        %v1417 = vld [vmem:[#allocation2 + $0x80] sm:$0x1]
        %v1418 = vld [vmem:[#allocation2 + $0x8c] sm:$0x1]
        %v1419 = vld [vmem:[#allocation2 + $0x98] sm:$0x1]
        %v1420 = vld [vmem:[#allocation2 + $0xa4] sm:$0x1]
        %v1421 = vld [vmem:[#allocation2 + $0xb0] sm:$0x1]
        %v1422 = vld [vmem:[#allocation2 + $0xbc] sm:$0x1]
        %v1423 = vld [vmem:[#allocation2] sm:$0xe]
        %v1424 = vld [vmem:[#allocation2 + $0xc] sm:$0xe]
        %v1425 = vld [vmem:[#allocation2 + $0x18] sm:$0xe]
        %v1426 = vld [vmem:[#allocation2 + $0x24] sm:$0xe]
        %v1427 = vld [vmem:[#allocation2 + $0x30] sm:$0xe]
        %v1428 = vld [vmem:[#allocation2 + $0x3c] sm:$0xe]
        %v1429 = vld [vmem:[#allocation2 + $0x48] sm:$0xe]
        %v1430 = vld [vmem:[#allocation2 + $0x54] sm:$0xe]
        %v1431 = vld [vmem:[#allocation2 + $0x60] sm:$0xe]
        %v1432 = vld [vmem:[#allocation2 + $0x6c] sm:$0xe]
        %v1433 = vld [vmem:[#allocation2 + $0x78] sm:$0xe]
        %v1434 = vld [vmem:[#allocation2 + $0x84] sm:$0xe]
        %v1435 = vld [vmem:[#allocation2 + $0x90] sm:$0xe]
        %v1436 = vld [vmem:[#allocation2 + $0x9c] sm:$0xe]
        %v1437 = vld [vmem:[#allocation2 + $0xa8] sm:$0xe]
        %v1438 = vld [vmem:[#allocation2 + $0xb4] sm:$0xe]
        %v1471 = vunpack.c.l.b16 %v1375
        %v1472 = vunpack.c.l.b16 %v1376
        %v1473 = vunpack.c.l.b16 %v1377
        %v1474 = vunpack.c.l.b16 %v1378
        %v1475 = vunpack.c.l.b16 %v1379
        %v1476 = vunpack.c.l.b16 %v1380
        %v1477 = vunpack.c.l.b16 %v1381
        %v1478 = vunpack.c.l.b16 %v1382
        %v1479 = vunpack.c.l.b16 %v1383
        %v1480 = vunpack.c.l.b16 %v1384
        %v1481 = vunpack.c.l.b16 %v1385
        %v1482 = vunpack.c.l.b16 %v1386
        %v1483 = vunpack.c.l.b16 %v1387
        %v1484 = vunpack.c.l.b16 %v1388
        %v1485 = vunpack.c.l.b16 %v1389
        %v1486 = vunpack.c.l.b16 %v1390
        %v1487 = vunpack.c.l.b16 %v1391
        %v1488 = vunpack.c.l.b16 %v1392
        %v1489 = vunpack.c.l.b16 %v1393
        %v1490 = vunpack.c.l.b16 %v1394
        %v1491 = vunpack.c.l.b16 %v1395
        %v1492 = vunpack.c.l.b16 %v1396
        %v1493 = vunpack.c.l.b16 %v1397
        %v1494 = vunpack.c.l.b16 %v1398
        %v1495 = vunpack.c.l.b16 %v1399
        %v1496 = vunpack.c.l.b16 %v1400
        %v1497 = vunpack.c.l.b16 %v1401
        %v1498 = vunpack.c.l.b16 %v1402
        %v1499 = vunpack.c.l.b16 %v1403
        %v1500 = vunpack.c.l.b16 %v1404
        %v1501 = vunpack.c.l.b16 %v1405
        %v1502 = vunpack.c.l.b16 %v1406
        %v1503 = vpack.c.b16 %v1472, %v1471
        %v1504 = vpack.c.b16 %v1474, %v1473
        %v1505 = vpack.c.b16 %v1476, %v1475
        %v1506 = vpack.c.b16 %v1478, %v1477
        %v1507 = vpack.c.b16 %v1480, %v1479
        %v1508 = vpack.c.b16 %v1482, %v1481
        %v1509 = vpack.c.b16 %v1484, %v1483
        %v1510 = vpack.c.b16 %v1486, %v1485
        %v1511 = vpack.c.b16 %v1488, %v1487
        %v1512 = vpack.c.b16 %v1490, %v1489
        %v1513 = vpack.c.b16 %v1492, %v1491
        %v1514 = vpack.c.b16 %v1494, %v1493
        %v1515 = vpack.c.b16 %v1496, %v1495
        %v1516 = vpack.c.b16 %v1498, %v1497
        %v1517 = vpack.c.b16 %v1500, %v1499
        %v1518 = vpack.c.b16 %v1502, %v1501
        %v1551 = vunpack.c.l.b16 %v1407
        %v1552 = vunpack.c.l.b16 %v1408
        %v1553 = vunpack.c.l.b16 %v1409
        %v1554 = vunpack.c.l.b16 %v1410
        %v1555 = vunpack.c.l.b16 %v1411
        %v1556 = vunpack.c.l.b16 %v1412
        %v1557 = vunpack.c.l.b16 %v1413
        %v1558 = vunpack.c.l.b16 %v1414
        %v1559 = vunpack.c.l.b16 %v1415
        %v1560 = vunpack.c.l.b16 %v1416
        %v1561 = vunpack.c.l.b16 %v1417
        %v1562 = vunpack.c.l.b16 %v1418
        %v1563 = vunpack.c.l.b16 %v1419
        %v1564 = vunpack.c.l.b16 %v1420
        %v1565 = vunpack.c.l.b16 %v1421
        %v1566 = vunpack.c.l.b16 %v1422
        %v1567 = vpack.c.b16 %v1551, %v1551
        %v1568 = vpack.c.b16 %v1552, %v1552
        %v1569 = vpack.c.b16 %v1553, %v1553
        %v1570 = vpack.c.b16 %v1554, %v1554
        %v1571 = vpack.c.b16 %v1555, %v1555
        %v1572 = vpack.c.b16 %v1556, %v1556
        %v1573 = vpack.c.b16 %v1557, %v1557
        %v1574 = vpack.c.b16 %v1558, %v1558
        %v1575 = vpack.c.b16 %v1559, %v1559
        %v1576 = vpack.c.b16 %v1560, %v1560
        %v1577 = vpack.c.b16 %v1561, %v1561
        %v1578 = vpack.c.b16 %v1562, %v1562
        %v1579 = vpack.c.b16 %v1563, %v1563
        %v1580 = vpack.c.b16 %v1564, %v1564
        %v1581 = vpack.c.b16 %v1565, %v1565
        %v1582 = vpack.c.b16 %v1566, %v1566
        %vm1583 = vsmask.f32 7424
        %v1585 = vshrl.u32 %v1503, 16
        %v1587 = vshll.u32 %v1503, 16
        %v1589 = vrot.slane %v1587, 1
        %v1590 = vor.u32 %v1585, %v1589
        %v1592 = vshll.u32 %v1567, 16
        %v1594 = vrot.slane %v1592, 1
        %v1595 = vsel %vm1583, %v1590, %v1594
        %v1597 = vshrl.u32 %v1504, 16
        %v1599 = vshll.u32 %v1504, 16
        %v1601 = vrot.slane %v1599, 1
        %v1602 = vor.u32 %v1597, %v1601
        %v1604 = vshll.u32 %v1568, 16
        %v1606 = vrot.slane %v1604, 1
        %v1607 = vsel %vm1583, %v1602, %v1606
        %v1609 = vshrl.u32 %v1505, 16
        %v1611 = vshll.u32 %v1505, 16
        %v1613 = vrot.slane %v1611, 1
        %v1614 = vor.u32 %v1609, %v1613
        %v1616 = vshll.u32 %v1569, 16
        %v1618 = vrot.slane %v1616, 1
        %v1619 = vsel %vm1583, %v1614, %v1618
        %v1621 = vshrl.u32 %v1506, 16
        %v1623 = vshll.u32 %v1506, 16
        %v1625 = vrot.slane %v1623, 1
        %v1626 = vor.u32 %v1621, %v1625
        %v1628 = vshll.u32 %v1570, 16
        %v1630 = vrot.slane %v1628, 1
        %v1631 = vsel %vm1583, %v1626, %v1630
        %v1633 = vshrl.u32 %v1507, 16
        %v1635 = vshll.u32 %v1507, 16
        %v1637 = vrot.slane %v1635, 1
        %v1638 = vor.u32 %v1633, %v1637
        %v1640 = vshll.u32 %v1571, 16
        %v1642 = vrot.slane %v1640, 1
        %v1643 = vsel %vm1583, %v1638, %v1642
        %v1645 = vshrl.u32 %v1508, 16
        %v1647 = vshll.u32 %v1508, 16
        %v1649 = vrot.slane %v1647, 1
        %v1650 = vor.u32 %v1645, %v1649
        %v1652 = vshll.u32 %v1572, 16
        %v1654 = vrot.slane %v1652, 1
        %v1655 = vsel %vm1583, %v1650, %v1654
        %v1657 = vshrl.u32 %v1509, 16
        %v1659 = vshll.u32 %v1509, 16
        %v1661 = vrot.slane %v1659, 1
        %v1662 = vor.u32 %v1657, %v1661
        %v1664 = vshll.u32 %v1573, 16
        %v1666 = vrot.slane %v1664, 1
        %v1667 = vsel %vm1583, %v1662, %v1666
        %v1669 = vshrl.u32 %v1510, 16
        %v1671 = vshll.u32 %v1510, 16
        %v1673 = vrot.slane %v1671, 1
        %v1674 = vor.u32 %v1669, %v1673
        %v1676 = vshll.u32 %v1574, 16
        %v1678 = vrot.slane %v1676, 1
        %v1679 = vsel %vm1583, %v1674, %v1678
        %v1681 = vshrl.u32 %v1511, 16
        %v1683 = vshll.u32 %v1511, 16
        %v1685 = vrot.slane %v1683, 1
        %v1686 = vor.u32 %v1681, %v1685
        %v1688 = vshll.u32 %v1575, 16
        %v1690 = vrot.slane %v1688, 1
        %v1691 = vsel %vm1583, %v1686, %v1690
        %v1693 = vshrl.u32 %v1512, 16
        %v1695 = vshll.u32 %v1512, 16
        %v1697 = vrot.slane %v1695, 1
        %v1698 = vor.u32 %v1693, %v1697
        %v1700 = vshll.u32 %v1576, 16
        %v1702 = vrot.slane %v1700, 1
        %v1703 = vsel %vm1583, %v1698, %v1702
        %v1705 = vshrl.u32 %v1513, 16
        %v1707 = vshll.u32 %v1513, 16
        %v1709 = vrot.slane %v1707, 1
        %v1710 = vor.u32 %v1705, %v1709
        %v1712 = vshll.u32 %v1577, 16
        %v1714 = vrot.slane %v1712, 1
        %v1715 = vsel %vm1583, %v1710, %v1714
        %v1717 = vshrl.u32 %v1514, 16
        %v1719 = vshll.u32 %v1514, 16
        %v1721 = vrot.slane %v1719, 1
        %v1722 = vor.u32 %v1717, %v1721
        %v1724 = vshll.u32 %v1578, 16
        %v1726 = vrot.slane %v1724, 1
        %v1727 = vsel %vm1583, %v1722, %v1726
        %v1729 = vshrl.u32 %v1515, 16
        %v1731 = vshll.u32 %v1515, 16
        %v1733 = vrot.slane %v1731, 1
        %v1734 = vor.u32 %v1729, %v1733
        %v1736 = vshll.u32 %v1579, 16
        %v1738 = vrot.slane %v1736, 1
        %v1739 = vsel %vm1583, %v1734, %v1738
        %v1741 = vshrl.u32 %v1516, 16
        %v1743 = vshll.u32 %v1516, 16
        %v1745 = vrot.slane %v1743, 1
        %v1746 = vor.u32 %v1741, %v1745
        %v1748 = vshll.u32 %v1580, 16
        %v1750 = vrot.slane %v1748, 1
        %v1751 = vsel %vm1583, %v1746, %v1750
        %v1753 = vshrl.u32 %v1517, 16
        %v1755 = vshll.u32 %v1517, 16
        %v1757 = vrot.slane %v1755, 1
        %v1758 = vor.u32 %v1753, %v1757
        %v1760 = vshll.u32 %v1581, 16
        %v1762 = vrot.slane %v1760, 1
        %v1763 = vsel %vm1583, %v1758, %v1762
        %v1765 = vshrl.u32 %v1518, 16
        %v1767 = vshll.u32 %v1518, 16
        %v1769 = vrot.slane %v1767, 1
        %v1770 = vor.u32 %v1765, %v1769
        %v1772 = vshll.u32 %v1582, 16
        %v1774 = vrot.slane %v1772, 1
        %v1775 = vsel %vm1583, %v1770, %v1774
        %v1808 = vunpack.c.l.b16 %v1423
        %v1809 = vunpack.c.l.b16 %v1424
        %v1810 = vunpack.c.l.b16 %v1425
        %v1811 = vunpack.c.l.b16 %v1426
        %v1812 = vunpack.c.l.b16 %v1427
        %v1813 = vunpack.c.l.b16 %v1428
        %v1814 = vunpack.c.l.b16 %v1429
        %v1815 = vunpack.c.l.b16 %v1430
        %v1816 = vunpack.c.l.b16 %v1431
        %v1817 = vunpack.c.l.b16 %v1432
        %v1818 = vunpack.c.l.b16 %v1433
        %v1819 = vunpack.c.l.b16 %v1434
        %v1820 = vunpack.c.l.b16 %v1435
        %v1821 = vunpack.c.l.b16 %v1436
        %v1822 = vunpack.c.l.b16 %v1437
        %v1823 = vunpack.c.l.b16 %v1438
        %v1824 = vpack.c.b16 %v1472, %v1808
        %v1825 = vpack.c.b16 %v1474, %v1809
        %v1826 = vpack.c.b16 %v1476, %v1810
        %v1827 = vpack.c.b16 %v1478, %v1811
        %v1828 = vpack.c.b16 %v1480, %v1812
        %v1829 = vpack.c.b16 %v1482, %v1813
        %v1830 = vpack.c.b16 %v1484, %v1814
        %v1831 = vpack.c.b16 %v1486, %v1815
        %v1832 = vpack.c.b16 %v1488, %v1816
        %v1833 = vpack.c.b16 %v1490, %v1817
        %v1834 = vpack.c.b16 %v1492, %v1818
        %v1835 = vpack.c.b16 %v1494, %v1819
        %v1836 = vpack.c.b16 %v1496, %v1820
        %v1837 = vpack.c.b16 %v1498, %v1821
        %v1838 = vpack.c.b16 %v1500, %v1822
        %v1839 = vpack.c.b16 %v1502, %v1823
        %vm1840 = vcmask 1046528
        %v1841 = vrot.slane %v1824, 1
        %v1842 = vrot.slane %v1567, 1
        %v1843 = vsel %vm1840, %v1841, %v1842
        %v1844 = vrot.slane %v1825, 1
        %v1845 = vrot.slane %v1568, 1
        %v1846 = vsel %vm1840, %v1844, %v1845
        %v1847 = vrot.slane %v1826, 1
        %v1848 = vrot.slane %v1569, 1
        %v1849 = vsel %vm1840, %v1847, %v1848
        %v1850 = vrot.slane %v1827, 1
        %v1851 = vrot.slane %v1570, 1
        %v1852 = vsel %vm1840, %v1850, %v1851
        %v1853 = vrot.slane %v1828, 1
        %v1854 = vrot.slane %v1571, 1
        %v1855 = vsel %vm1840, %v1853, %v1854
        %v1856 = vrot.slane %v1829, 1
        %v1857 = vrot.slane %v1572, 1
        %v1858 = vsel %vm1840, %v1856, %v1857
        %v1859 = vrot.slane %v1830, 1
        %v1860 = vrot.slane %v1573, 1
        %v1861 = vsel %vm1840, %v1859, %v1860
        %v1862 = vrot.slane %v1831, 1
        %v1863 = vrot.slane %v1574, 1
        %v1864 = vsel %vm1840, %v1862, %v1863
        %v1865 = vrot.slane %v1832, 1
        %v1866 = vrot.slane %v1575, 1
        %v1867 = vsel %vm1840, %v1865, %v1866
        %v1868 = vrot.slane %v1833, 1
        %v1869 = vrot.slane %v1576, 1
        %v1870 = vsel %vm1840, %v1868, %v1869
        %v1871 = vrot.slane %v1834, 1
        %v1872 = vrot.slane %v1577, 1
        %v1873 = vsel %vm1840, %v1871, %v1872
        %v1874 = vrot.slane %v1835, 1
        %v1875 = vrot.slane %v1578, 1
        %v1876 = vsel %vm1840, %v1874, %v1875
        %v1877 = vrot.slane %v1836, 1
        %v1878 = vrot.slane %v1579, 1
        %v1879 = vsel %vm1840, %v1877, %v1878
        %v1880 = vrot.slane %v1837, 1
        %v1881 = vrot.slane %v1580, 1
        %v1882 = vsel %vm1840, %v1880, %v1881
        %v1883 = vrot.slane %v1838, 1
        %v1884 = vrot.slane %v1581, 1
        %v1885 = vsel %vm1840, %v1883, %v1884
        %v1886 = vrot.slane %v1839, 1
        %v1887 = vrot.slane %v1582, 1
        %v1888 = vsel %vm1840, %v1886, %v1887
        %v1905 = vld [vmem:[#allocation8] sm:$0xf]
        %v1906 = vld [vmem:[#allocation8 + $0x4] sm:$0xf]
        %v1907 = vld [vmem:[#allocation8 + $0x8] sm:$0xf]
        %v1908 = vld [vmem:[#allocation8 + $0xc] sm:$0xf]
        %v1909 = vld [vmem:[#allocation8 + $0x10] sm:$0xf]
        %v1910 = vld [vmem:[#allocation8 + $0x14] sm:$0xf]
        %v1911 = vld [vmem:[#allocation8 + $0x18] sm:$0xf]
        %v1912 = vld [vmem:[#allocation8 + $0x1c] sm:$0xf]
        %v1913 = vld [vmem:[#allocation8 + $0x20] sm:$0xf]
        %v1914 = vld [vmem:[#allocation8 + $0x24] sm:$0xf]
        %v1915 = vld [vmem:[#allocation8 + $0x28] sm:$0xf]
        %v1916 = vld [vmem:[#allocation8 + $0x2c] sm:$0xf]
        %v1917 = vld [vmem:[#allocation8 + $0x30] sm:$0xf]
        %v1918 = vld [vmem:[#allocation8 + $0x34] sm:$0xf]
        %v1919 = vld [vmem:[#allocation8 + $0x38] sm:$0xf]
        %v1920 = vld [vmem:[#allocation8 + $0x3c] sm:$0xf]
        %v1921 = vld [vmem:[#allocation8 + $0x40] sm:$0xf]
        %v1922 = vld [vmem:[#allocation8 + $0x44] sm:$0xf]
        %v1923 = vld [vmem:[#allocation8 + $0x48] sm:$0xf]
        %v1924 = vld [vmem:[#allocation8 + $0x4c] sm:$0xf]
        %v1925 = vld [vmem:[#allocation8 + $0x50] sm:$0xf]
        %v1926 = vld [vmem:[#allocation8 + $0x54] sm:$0xf]
        %v1927 = vld [vmem:[#allocation8 + $0x58] sm:$0xf]
        %v1928 = vld [vmem:[#allocation8 + $0x5c] sm:$0xf]
        %v1929 = vld [vmem:[#allocation8 + $0x60] sm:$0xf]
        %v1930 = vld [vmem:[#allocation8 + $0x64] sm:$0xf]
        %v1931 = vld [vmem:[#allocation8 + $0x68] sm:$0xf]
        %v1932 = vld [vmem:[#allocation8 + $0x6c] sm:$0xf]
        %v1933 = vld [vmem:[#allocation8 + $0x70] sm:$0xf]
        %v1934 = vld [vmem:[#allocation8 + $0x74] sm:$0xf]
        %v1935 = vld [vmem:[#allocation8 + $0x78] sm:$0xf]
        %v1936 = vld [vmem:[#allocation8 + $0x7c] sm:$0xf]
        %v1937 = vld [vmem:[#allocation8 + $0x80] sm:$0xf]
        %v1938 = vld [vmem:[#allocation8 + $0x84] sm:$0xf]
        %v1939 = vld [vmem:[#allocation8 + $0x88] sm:$0xf]
        %v1940 = vld [vmem:[#allocation8 + $0x8c] sm:$0xf]
        %v1941 = vld [vmem:[#allocation8 + $0x90] sm:$0xf]
        %v1942 = vld [vmem:[#allocation8 + $0x94] sm:$0xf]
        %v1943 = vld [vmem:[#allocation8 + $0x98] sm:$0xf]
        %v1944 = vld [vmem:[#allocation8 + $0x9c] sm:$0xf]
        %v1945 = vld [vmem:[#allocation8 + $0xa0] sm:$0xf]
        %v1946 = vld [vmem:[#allocation8 + $0xa4] sm:$0xf]
        %v1947 = vld [vmem:[#allocation8 + $0xa8] sm:$0xf]
        %v1948 = vld [vmem:[#allocation8 + $0xac] sm:$0xf]
        %v1949 = vld [vmem:[#allocation8 + $0xb0] sm:$0xf]
        %v1950 = vld [vmem:[#allocation8 + $0xb4] sm:$0xf]
        %v1951 = vld [vmem:[#allocation8 + $0xb8] sm:$0xf]
        %v1952 = vld [vmem:[#allocation8 + $0xbc] sm:$0xf]
        %v1953 = vld [vmem:[%s741] sm:$0xf]
        %v1954 = vld [vmem:[%s741 + $0x4] sm:$0xf]
        %v1955 = vld [vmem:[%s741 + $0xc] sm:$0xf]
        %v1956 = vld [vmem:[%s741 + $0x10] sm:$0xf]
        %v1957 = vld [vmem:[%s741 + $0x18] sm:$0xf]
        %v1958 = vld [vmem:[%s741 + $0x1c] sm:$0xf]
        %v1959 = vld [vmem:[%s741 + $0x24] sm:$0xf]
        %v1960 = vld [vmem:[%s741 + $0x28] sm:$0xf]
        %v1961 = vld [vmem:[%s741 + $0x30] sm:$0xf]
        %v1962 = vld [vmem:[%s741 + $0x34] sm:$0xf]
        %v1963 = vld [vmem:[%s741 + $0x3c] sm:$0xf]
        %v1964 = vld [vmem:[%s741 + $0x40] sm:$0xf]
        %v1965 = vld [vmem:[%s741 + $0x48] sm:$0xf]
        %v1966 = vld [vmem:[%s741 + $0x4c] sm:$0xf]
        %v1967 = vld [vmem:[%s741 + $0x54] sm:$0xf]
        %v1968 = vld [vmem:[%s741 + $0x58] sm:$0xf]
        %v1969 = vld [vmem:[%s741 + $0x60] sm:$0xf]
        %v1970 = vld [vmem:[%s741 + $0x64] sm:$0xf]
        %v1971 = vld [vmem:[%s741 + $0x6c] sm:$0xf]
        %v1972 = vld [vmem:[%s741 + $0x70] sm:$0xf]
        %v1973 = vld [vmem:[%s741 + $0x78] sm:$0xf]
        %v1974 = vld [vmem:[%s741 + $0x7c] sm:$0xf]
        %v1975 = vld [vmem:[%s741 + $0x84] sm:$0xf]
        %v1976 = vld [vmem:[%s741 + $0x88] sm:$0xf]
        %v1977 = vld [vmem:[%s741 + $0x90] sm:$0xf]
        %v1978 = vld [vmem:[%s741 + $0x94] sm:$0xf]
        %v1979 = vld [vmem:[%s741 + $0x9c] sm:$0xf]
        %v1980 = vld [vmem:[%s741 + $0xa0] sm:$0xf]
        %v1981 = vld [vmem:[%s741 + $0xa8] sm:$0xf]
        %v1982 = vld [vmem:[%s741 + $0xac] sm:$0xf]
        %v1983 = vld [vmem:[%s741 + $0xb4] sm:$0xf]
        %v1984 = vld [vmem:[%s741 + $0xb8] sm:$0xf]
        %v1985 = vld [vmem:[%s741 + $0x8] sm:$0x1]
        %v1986 = vld [vmem:[%s741 + $0x14] sm:$0x1]
        %v1987 = vld [vmem:[%s741 + $0x20] sm:$0x1]
        %v1988 = vld [vmem:[%s741 + $0x2c] sm:$0x1]
        %v1989 = vld [vmem:[%s741 + $0x38] sm:$0x1]
        %v1990 = vld [vmem:[%s741 + $0x44] sm:$0x1]
        %v1991 = vld [vmem:[%s741 + $0x50] sm:$0x1]
        %v1992 = vld [vmem:[%s741 + $0x5c] sm:$0x1]
        %v1993 = vld [vmem:[%s741 + $0x68] sm:$0x1]
        %v1994 = vld [vmem:[%s741 + $0x74] sm:$0x1]
        %v1995 = vld [vmem:[%s741 + $0x80] sm:$0x1]
        %v1996 = vld [vmem:[%s741 + $0x8c] sm:$0x1]
        %v1997 = vld [vmem:[%s741 + $0x98] sm:$0x1]
        %v1998 = vld [vmem:[%s741 + $0xa4] sm:$0x1]
        %v1999 = vld [vmem:[%s741 + $0xb0] sm:$0x1]
        %v2000 = vld [vmem:[%s741 + $0xbc] sm:$0x1]
        %v2001 = vld [vmem:[%s741] sm:$0xe]
        %v2002 = vld [vmem:[%s741 + $0xc] sm:$0xe]
        %v2003 = vld [vmem:[%s741 + $0x18] sm:$0xe]
        %v2004 = vld [vmem:[%s741 + $0x24] sm:$0xe]
        %v2005 = vld [vmem:[%s741 + $0x30] sm:$0xe]
        %v2006 = vld [vmem:[%s741 + $0x3c] sm:$0xe]
        %v2007 = vld [vmem:[%s741 + $0x48] sm:$0xe]
        %v2008 = vld [vmem:[%s741 + $0x54] sm:$0xe]
        %v2009 = vld [vmem:[%s741 + $0x60] sm:$0xe]
        %v2010 = vld [vmem:[%s741 + $0x6c] sm:$0xe]
        %v2011 = vld [vmem:[%s741 + $0x78] sm:$0xe]
        %v2012 = vld [vmem:[%s741 + $0x84] sm:$0xe]
        %v2013 = vld [vmem:[%s741 + $0x90] sm:$0xe]
        %v2014 = vld [vmem:[%s741 + $0x9c] sm:$0xe]
        %v2015 = vld [vmem:[%s741 + $0xa8] sm:$0xe]
        %v2016 = vld [vmem:[%s741 + $0xb4] sm:$0xe]
        %v2049 = vunpack.c.l.b16 %v1953
        %v2050 = vunpack.c.l.b16 %v1954
        %v2051 = vunpack.c.l.b16 %v1955
        %v2052 = vunpack.c.l.b16 %v1956
        %v2053 = vunpack.c.l.b16 %v1957
        %v2054 = vunpack.c.l.b16 %v1958
        %v2055 = vunpack.c.l.b16 %v1959
        %v2056 = vunpack.c.l.b16 %v1960
        %v2057 = vunpack.c.l.b16 %v1961
        %v2058 = vunpack.c.l.b16 %v1962
        %v2059 = vunpack.c.l.b16 %v1963
        %v2060 = vunpack.c.l.b16 %v1964
        %v2061 = vunpack.c.l.b16 %v1965
        %v2062 = vunpack.c.l.b16 %v1966
        %v2063 = vunpack.c.l.b16 %v1967
        %v2064 = vunpack.c.l.b16 %v1968
        %v2065 = vunpack.c.l.b16 %v1969
        %v2066 = vunpack.c.l.b16 %v1970
        %v2067 = vunpack.c.l.b16 %v1971
        %v2068 = vunpack.c.l.b16 %v1972
        %v2069 = vunpack.c.l.b16 %v1973
        %v2070 = vunpack.c.l.b16 %v1974
        %v2071 = vunpack.c.l.b16 %v1975
        %v2072 = vunpack.c.l.b16 %v1976
        %v2073 = vunpack.c.l.b16 %v1977
        %v2074 = vunpack.c.l.b16 %v1978
        %v2075 = vunpack.c.l.b16 %v1979
        %v2076 = vunpack.c.l.b16 %v1980
        %v2077 = vunpack.c.l.b16 %v1981
        %v2078 = vunpack.c.l.b16 %v1982
        %v2079 = vunpack.c.l.b16 %v1983
        %v2080 = vunpack.c.l.b16 %v1984
        %v2081 = vpack.c.b16 %v2050, %v2049
        %v2082 = vpack.c.b16 %v2052, %v2051
        %v2083 = vpack.c.b16 %v2054, %v2053
        %v2084 = vpack.c.b16 %v2056, %v2055
        %v2085 = vpack.c.b16 %v2058, %v2057
        %v2086 = vpack.c.b16 %v2060, %v2059
        %v2087 = vpack.c.b16 %v2062, %v2061
        %v2088 = vpack.c.b16 %v2064, %v2063
        %v2089 = vpack.c.b16 %v2066, %v2065
        %v2090 = vpack.c.b16 %v2068, %v2067
        %v2091 = vpack.c.b16 %v2070, %v2069
        %v2092 = vpack.c.b16 %v2072, %v2071
        %v2093 = vpack.c.b16 %v2074, %v2073
        %v2094 = vpack.c.b16 %v2076, %v2075
        %v2095 = vpack.c.b16 %v2078, %v2077
        %v2096 = vpack.c.b16 %v2080, %v2079
        %v2129 = vunpack.c.l.b16 %v1985
        %v2130 = vunpack.c.l.b16 %v1986
        %v2131 = vunpack.c.l.b16 %v1987
        %v2132 = vunpack.c.l.b16 %v1988
        %v2133 = vunpack.c.l.b16 %v1989
        %v2134 = vunpack.c.l.b16 %v1990
        %v2135 = vunpack.c.l.b16 %v1991
        %v2136 = vunpack.c.l.b16 %v1992
        %v2137 = vunpack.c.l.b16 %v1993
        %v2138 = vunpack.c.l.b16 %v1994
        %v2139 = vunpack.c.l.b16 %v1995
        %v2140 = vunpack.c.l.b16 %v1996
        %v2141 = vunpack.c.l.b16 %v1997
        %v2142 = vunpack.c.l.b16 %v1998
        %v2143 = vunpack.c.l.b16 %v1999
        %v2144 = vunpack.c.l.b16 %v2000
        %v2145 = vpack.c.b16 %v2129, %v2129
        %v2146 = vpack.c.b16 %v2130, %v2130
        %v2147 = vpack.c.b16 %v2131, %v2131
        %v2148 = vpack.c.b16 %v2132, %v2132
        %v2149 = vpack.c.b16 %v2133, %v2133
        %v2150 = vpack.c.b16 %v2134, %v2134
        %v2151 = vpack.c.b16 %v2135, %v2135
        %v2152 = vpack.c.b16 %v2136, %v2136
        %v2153 = vpack.c.b16 %v2137, %v2137
        %v2154 = vpack.c.b16 %v2138, %v2138
        %v2155 = vpack.c.b16 %v2139, %v2139
        %v2156 = vpack.c.b16 %v2140, %v2140
        %v2157 = vpack.c.b16 %v2141, %v2141
        %v2158 = vpack.c.b16 %v2142, %v2142
        %v2159 = vpack.c.b16 %v2143, %v2143
        %v2160 = vpack.c.b16 %v2144, %v2144
        %v2162 = vshrl.u32 %v2081, 16
        %v2164 = vshll.u32 %v2081, 16
        %v2166 = vrot.slane %v2164, 1
        %v2167 = vor.u32 %v2162, %v2166
        %v2169 = vshll.u32 %v2145, 16
        %v2171 = vrot.slane %v2169, 1
        %v2172 = vsel %vm1583, %v2167, %v2171
        %v2174 = vshrl.u32 %v2082, 16
        %v2176 = vshll.u32 %v2082, 16
        %v2178 = vrot.slane %v2176, 1
        %v2179 = vor.u32 %v2174, %v2178
        %v2181 = vshll.u32 %v2146, 16
        %v2183 = vrot.slane %v2181, 1
        %v2184 = vsel %vm1583, %v2179, %v2183
        %v2186 = vshrl.u32 %v2083, 16
        %v2188 = vshll.u32 %v2083, 16
        %v2190 = vrot.slane %v2188, 1
        %v2191 = vor.u32 %v2186, %v2190
        %v2193 = vshll.u32 %v2147, 16
        %v2195 = vrot.slane %v2193, 1
        %v2196 = vsel %vm1583, %v2191, %v2195
        %v2198 = vshrl.u32 %v2084, 16
        %v2200 = vshll.u32 %v2084, 16
        %v2202 = vrot.slane %v2200, 1
        %v2203 = vor.u32 %v2198, %v2202
        %v2205 = vshll.u32 %v2148, 16
        %v2207 = vrot.slane %v2205, 1
        %v2208 = vsel %vm1583, %v2203, %v2207
        %v2210 = vshrl.u32 %v2085, 16
        %v2212 = vshll.u32 %v2085, 16
        %v2214 = vrot.slane %v2212, 1
        %v2215 = vor.u32 %v2210, %v2214
        %v2217 = vshll.u32 %v2149, 16
        %v2219 = vrot.slane %v2217, 1
        %v2220 = vsel %vm1583, %v2215, %v2219
        %v2222 = vshrl.u32 %v2086, 16
        %v2224 = vshll.u32 %v2086, 16
        %v2226 = vrot.slane %v2224, 1
        %v2227 = vor.u32 %v2222, %v2226
        %v2229 = vshll.u32 %v2150, 16
        %v2231 = vrot.slane %v2229, 1
        %v2232 = vsel %vm1583, %v2227, %v2231
        %v2234 = vshrl.u32 %v2087, 16
        %v2236 = vshll.u32 %v2087, 16
        %v2238 = vrot.slane %v2236, 1
        %v2239 = vor.u32 %v2234, %v2238
        %v2241 = vshll.u32 %v2151, 16
        %v2243 = vrot.slane %v2241, 1
        %v2244 = vsel %vm1583, %v2239, %v2243
        %v2246 = vshrl.u32 %v2088, 16
        %v2248 = vshll.u32 %v2088, 16
        %v2250 = vrot.slane %v2248, 1
        %v2251 = vor.u32 %v2246, %v2250
        %v2253 = vshll.u32 %v2152, 16
        %v2255 = vrot.slane %v2253, 1
        %v2256 = vsel %vm1583, %v2251, %v2255
        %v2258 = vshrl.u32 %v2089, 16
        %v2260 = vshll.u32 %v2089, 16
        %v2262 = vrot.slane %v2260, 1
        %v2263 = vor.u32 %v2258, %v2262
        %v2265 = vshll.u32 %v2153, 16
        %v2267 = vrot.slane %v2265, 1
        %v2268 = vsel %vm1583, %v2263, %v2267
        %v2270 = vshrl.u32 %v2090, 16
        %v2272 = vshll.u32 %v2090, 16
        %v2274 = vrot.slane %v2272, 1
        %v2275 = vor.u32 %v2270, %v2274
        %v2277 = vshll.u32 %v2154, 16
        %v2279 = vrot.slane %v2277, 1
        %v2280 = vsel %vm1583, %v2275, %v2279
        %v2282 = vshrl.u32 %v2091, 16
        %v2284 = vshll.u32 %v2091, 16
        %v2286 = vrot.slane %v2284, 1
        %v2287 = vor.u32 %v2282, %v2286
        %v2289 = vshll.u32 %v2155, 16
        %v2291 = vrot.slane %v2289, 1
        %v2292 = vsel %vm1583, %v2287, %v2291
        %v2294 = vshrl.u32 %v2092, 16
        %v2296 = vshll.u32 %v2092, 16
        %v2298 = vrot.slane %v2296, 1
        %v2299 = vor.u32 %v2294, %v2298
        %v2301 = vshll.u32 %v2156, 16
        %v2303 = vrot.slane %v2301, 1
        %v2304 = vsel %vm1583, %v2299, %v2303
        %v2306 = vshrl.u32 %v2093, 16
        %v2308 = vshll.u32 %v2093, 16
        %v2310 = vrot.slane %v2308, 1
        %v2311 = vor.u32 %v2306, %v2310
        %v2313 = vshll.u32 %v2157, 16
        %v2315 = vrot.slane %v2313, 1
        %v2316 = vsel %vm1583, %v2311, %v2315
        %v2318 = vshrl.u32 %v2094, 16
        %v2320 = vshll.u32 %v2094, 16
        %v2322 = vrot.slane %v2320, 1
        %v2323 = vor.u32 %v2318, %v2322
        %v2325 = vshll.u32 %v2158, 16
        %v2327 = vrot.slane %v2325, 1
        %v2328 = vsel %vm1583, %v2323, %v2327
        %v2330 = vshrl.u32 %v2095, 16
        %v2332 = vshll.u32 %v2095, 16
        %v2334 = vrot.slane %v2332, 1
        %v2335 = vor.u32 %v2330, %v2334
        %v2337 = vshll.u32 %v2159, 16
        %v2339 = vrot.slane %v2337, 1
        %v2340 = vsel %vm1583, %v2335, %v2339
        %v2342 = vshrl.u32 %v2096, 16
        %v2344 = vshll.u32 %v2096, 16
        %v2346 = vrot.slane %v2344, 1
        %v2347 = vor.u32 %v2342, %v2346
        %v2349 = vshll.u32 %v2160, 16
        %v2351 = vrot.slane %v2349, 1
        %v2352 = vsel %vm1583, %v2347, %v2351
        %v2385 = vunpack.c.l.b16 %v2001
        %v2386 = vunpack.c.l.b16 %v2002
        %v2387 = vunpack.c.l.b16 %v2003
        %v2388 = vunpack.c.l.b16 %v2004
        %v2389 = vunpack.c.l.b16 %v2005
        %v2390 = vunpack.c.l.b16 %v2006
        %v2391 = vunpack.c.l.b16 %v2007
        %v2392 = vunpack.c.l.b16 %v2008
        %v2393 = vunpack.c.l.b16 %v2009
        %v2394 = vunpack.c.l.b16 %v2010
        %v2395 = vunpack.c.l.b16 %v2011
        %v2396 = vunpack.c.l.b16 %v2012
        %v2397 = vunpack.c.l.b16 %v2013
        %v2398 = vunpack.c.l.b16 %v2014
        %v2399 = vunpack.c.l.b16 %v2015
        %v2400 = vunpack.c.l.b16 %v2016
        %v2401 = vpack.c.b16 %v2050, %v2385
        %v2402 = vpack.c.b16 %v2052, %v2386
        %v2403 = vpack.c.b16 %v2054, %v2387
        %v2404 = vpack.c.b16 %v2056, %v2388
        %v2405 = vpack.c.b16 %v2058, %v2389
        %v2406 = vpack.c.b16 %v2060, %v2390
        %v2407 = vpack.c.b16 %v2062, %v2391
        %v2408 = vpack.c.b16 %v2064, %v2392
        %v2409 = vpack.c.b16 %v2066, %v2393
        %v2410 = vpack.c.b16 %v2068, %v2394
        %v2411 = vpack.c.b16 %v2070, %v2395
        %v2412 = vpack.c.b16 %v2072, %v2396
        %v2413 = vpack.c.b16 %v2074, %v2397
        %v2414 = vpack.c.b16 %v2076, %v2398
        %v2415 = vpack.c.b16 %v2078, %v2399
        %v2416 = vpack.c.b16 %v2080, %v2400
        %v2417 = vrot.slane %v2401, 1
        %v2418 = vrot.slane %v2145, 1
        %v2419 = vsel %vm1840, %v2417, %v2418
        %v2420 = vrot.slane %v2402, 1
        %v2421 = vrot.slane %v2146, 1
        %v2422 = vsel %vm1840, %v2420, %v2421
        %v2423 = vrot.slane %v2403, 1
        %v2424 = vrot.slane %v2147, 1
        %v2425 = vsel %vm1840, %v2423, %v2424
        %v2426 = vrot.slane %v2404, 1
        %v2427 = vrot.slane %v2148, 1
        %v2428 = vsel %vm1840, %v2426, %v2427
        %v2429 = vrot.slane %v2405, 1
        %v2430 = vrot.slane %v2149, 1
        %v2431 = vsel %vm1840, %v2429, %v2430
        %v2432 = vrot.slane %v2406, 1
        %v2433 = vrot.slane %v2150, 1
        %v2434 = vsel %vm1840, %v2432, %v2433
        %v2435 = vrot.slane %v2407, 1
        %v2436 = vrot.slane %v2151, 1
        %v2437 = vsel %vm1840, %v2435, %v2436
        %v2438 = vrot.slane %v2408, 1
        %v2439 = vrot.slane %v2152, 1
        %v2440 = vsel %vm1840, %v2438, %v2439
        %v2441 = vrot.slane %v2409, 1
        %v2442 = vrot.slane %v2153, 1
        %v2443 = vsel %vm1840, %v2441, %v2442
        %v2444 = vrot.slane %v2410, 1
        %v2445 = vrot.slane %v2154, 1
        %v2446 = vsel %vm1840, %v2444, %v2445
        %v2447 = vrot.slane %v2411, 1
        %v2448 = vrot.slane %v2155, 1
        %v2449 = vsel %vm1840, %v2447, %v2448
        %v2450 = vrot.slane %v2412, 1
        %v2451 = vrot.slane %v2156, 1
        %v2452 = vsel %vm1840, %v2450, %v2451
        %v2453 = vrot.slane %v2413, 1
        %v2454 = vrot.slane %v2157, 1
        %v2455 = vsel %vm1840, %v2453, %v2454
        %v2456 = vrot.slane %v2414, 1
        %v2457 = vrot.slane %v2158, 1
        %v2458 = vsel %vm1840, %v2456, %v2457
        %v2459 = vrot.slane %v2415, 1
        %v2460 = vrot.slane %v2159, 1
        %v2461 = vsel %vm1840, %v2459, %v2460
        %v2462 = vrot.slane %v2416, 1
        %v2463 = vrot.slane %v2160, 1
        %v2464 = vsel %vm1840, %v2462, %v2463
        %v2481 = vld [vmem:[#allocation8 + $0xc0] sm:$0xf]
        %v2482 = vld [vmem:[#allocation8 + $0xc4] sm:$0xf]
        %v2483 = vld [vmem:[#allocation8 + $0xc8] sm:$0xf]
        %v2484 = vld [vmem:[#allocation8 + $0xcc] sm:$0xf]
        %v2485 = vld [vmem:[#allocation8 + $0xd0] sm:$0xf]
        %v2486 = vld [vmem:[#allocation8 + $0xd4] sm:$0xf]
        %v2487 = vld [vmem:[#allocation8 + $0xd8] sm:$0xf]
        %v2488 = vld [vmem:[#allocation8 + $0xdc] sm:$0xf]
        %v2489 = vld [vmem:[#allocation8 + $0xe0] sm:$0xf]
        %v2490 = vld [vmem:[#allocation8 + $0xe4] sm:$0xf]
        %v2491 = vld [vmem:[#allocation8 + $0xe8] sm:$0xf]
        %v2492 = vld [vmem:[#allocation8 + $0xec] sm:$0xf]
        %v2493 = vld [vmem:[#allocation8 + $0xf0] sm:$0xf]
        %v2494 = vld [vmem:[#allocation8 + $0xf4] sm:$0xf]
        %v2495 = vld [vmem:[#allocation8 + $0xf8] sm:$0xf]
        %v2496 = vld [vmem:[#allocation8 + $0xfc] sm:$0xf]
        %v2497 = vld [vmem:[#allocation8 + $0x100] sm:$0xf]
        %v2498 = vld [vmem:[#allocation8 + $0x104] sm:$0xf]
        %v2499 = vld [vmem:[#allocation8 + $0x108] sm:$0xf]
        %v2500 = vld [vmem:[#allocation8 + $0x10c] sm:$0xf]
        %v2501 = vld [vmem:[#allocation8 + $0x110] sm:$0xf]
        %v2502 = vld [vmem:[#allocation8 + $0x114] sm:$0xf]
        %v2503 = vld [vmem:[#allocation8 + $0x118] sm:$0xf]
        %v2504 = vld [vmem:[#allocation8 + $0x11c] sm:$0xf]
        %v2505 = vld [vmem:[#allocation8 + $0x120] sm:$0xf]
        %v2506 = vld [vmem:[#allocation8 + $0x124] sm:$0xf]
        %v2507 = vld [vmem:[#allocation8 + $0x128] sm:$0xf]
        %v2508 = vld [vmem:[#allocation8 + $0x12c] sm:$0xf]
        %v2509 = vld [vmem:[#allocation8 + $0x130] sm:$0xf]
        %v2510 = vld [vmem:[#allocation8 + $0x134] sm:$0xf]
        %v2511 = vld [vmem:[#allocation8 + $0x138] sm:$0xf]
        %v2512 = vld [vmem:[#allocation8 + $0x13c] sm:$0xf]
        %v2513 = vld [vmem:[#allocation8 + $0x140] sm:$0xf]
        %v2514 = vld [vmem:[#allocation8 + $0x144] sm:$0xf]
        %v2515 = vld [vmem:[#allocation8 + $0x148] sm:$0xf]
        %v2516 = vld [vmem:[#allocation8 + $0x14c] sm:$0xf]
        %v2517 = vld [vmem:[#allocation8 + $0x150] sm:$0xf]
        %v2518 = vld [vmem:[#allocation8 + $0x154] sm:$0xf]
        %v2519 = vld [vmem:[#allocation8 + $0x158] sm:$0xf]
        %v2520 = vld [vmem:[#allocation8 + $0x15c] sm:$0xf]
        %v2521 = vld [vmem:[#allocation8 + $0x160] sm:$0xf]
        %v2522 = vld [vmem:[#allocation8 + $0x164] sm:$0xf]
        %v2523 = vld [vmem:[#allocation8 + $0x168] sm:$0xf]
        %v2524 = vld [vmem:[#allocation8 + $0x16c] sm:$0xf]
        %v2525 = vld [vmem:[#allocation8 + $0x170] sm:$0xf]
        %v2526 = vld [vmem:[#allocation8 + $0x174] sm:$0xf]
        %v2527 = vld [vmem:[#allocation8 + $0x178] sm:$0xf]
        %v2528 = vld [vmem:[#allocation8 + $0x17c] sm:$0xf]
        %v2577 = vunpack.c.l.b16 %v2481
        %v2578 = vunpack.c.l.b16 %v2482
        %v2579 = vunpack.c.l.b16 %v2483
        %v2580 = vunpack.c.l.b16 %v2484
        %v2581 = vunpack.c.l.b16 %v2485
        %v2582 = vunpack.c.l.b16 %v2486
        %v2583 = vunpack.c.l.b16 %v2487
        %v2584 = vunpack.c.l.b16 %v2488
        %v2585 = vunpack.c.l.b16 %v2489
        %v2586 = vunpack.c.l.b16 %v2490
        %v2587 = vunpack.c.l.b16 %v2491
        %v2588 = vunpack.c.l.b16 %v2492
        %v2589 = vunpack.c.l.b16 %v2493
        %v2590 = vunpack.c.l.b16 %v2494
        %v2591 = vunpack.c.l.b16 %v2495
        %v2592 = vunpack.c.l.b16 %v2496
        %v2593 = vunpack.c.l.b16 %v2497
        %v2594 = vunpack.c.l.b16 %v2498
        %v2595 = vunpack.c.l.b16 %v2499
        %v2596 = vunpack.c.l.b16 %v2500
        %v2597 = vunpack.c.l.b16 %v2501
        %v2598 = vunpack.c.l.b16 %v2502
        %v2599 = vunpack.c.l.b16 %v2503
        %v2600 = vunpack.c.l.b16 %v2504
        %v2601 = vunpack.c.l.b16 %v2505
        %v2602 = vunpack.c.l.b16 %v2506
        %v2603 = vunpack.c.l.b16 %v2507
        %v2604 = vunpack.c.l.b16 %v2508
        %v2605 = vunpack.c.l.b16 %v2509
        %v2606 = vunpack.c.l.b16 %v2510
        %v2607 = vunpack.c.l.b16 %v2511
        %v2608 = vunpack.c.l.b16 %v2512
        %v2609 = vunpack.c.l.b16 %v2513
        %v2610 = vunpack.c.l.b16 %v2514
        %v2611 = vunpack.c.l.b16 %v2515
        %v2612 = vunpack.c.l.b16 %v2516
        %v2613 = vunpack.c.l.b16 %v2517
        %v2614 = vunpack.c.l.b16 %v2518
        %v2615 = vunpack.c.l.b16 %v2519
        %v2616 = vunpack.c.l.b16 %v2520
        %v2617 = vunpack.c.l.b16 %v2521
        %v2618 = vunpack.c.l.b16 %v2522
        %v2619 = vunpack.c.l.b16 %v2523
        %v2620 = vunpack.c.l.b16 %v2524
        %v2621 = vunpack.c.l.b16 %v2525
        %v2622 = vunpack.c.l.b16 %v2526
        %v2623 = vunpack.c.l.b16 %v2527
        %v2624 = vunpack.c.l.b16 %v2528
        %v2625 = vpack.c.b16 %v2578, %v2577
        %v2626 = vpack.c.b16 %v2580, %v2579
        %v2627 = vpack.c.b16 %v2582, %v2581
        %v2628 = vpack.c.b16 %v2584, %v2583
        %v2629 = vpack.c.b16 %v2586, %v2585
        %v2630 = vpack.c.b16 %v2588, %v2587
        %v2631 = vpack.c.b16 %v2590, %v2589
        %v2632 = vpack.c.b16 %v2592, %v2591
        %v2633 = vpack.c.b16 %v2594, %v2593
        %v2634 = vpack.c.b16 %v2596, %v2595
        %v2635 = vpack.c.b16 %v2598, %v2597
        %v2636 = vpack.c.b16 %v2600, %v2599
        %v2637 = vpack.c.b16 %v2602, %v2601
        %v2638 = vpack.c.b16 %v2604, %v2603
        %v2639 = vpack.c.b16 %v2606, %v2605
        %v2640 = vpack.c.b16 %v2608, %v2607
        %v2641 = vpack.c.b16 %v2610, %v2609
        %v2642 = vpack.c.b16 %v2612, %v2611
        %v2643 = vpack.c.b16 %v2614, %v2613
        %v2644 = vpack.c.b16 %v2616, %v2615
        %v2645 = vpack.c.b16 %v2618, %v2617
        %v2646 = vpack.c.b16 %v2620, %v2619
        %v2647 = vpack.c.b16 %v2622, %v2621
        %v2648 = vpack.c.b16 %v2624, %v2623
        %2673 = vmatprep.subr.bf16.mxu0 0
        %2674 = vmatpush1.bf16.msra.mxu0 %v2625
        %2675 = vmatprep.subr.bf16.mxu0 0
        %2676 = vmatpush1.bf16.msra.mxu0 %v2626
        %2677 = vmatprep.subr.bf16.mxu0 0
        %2678 = vmatpush1.bf16.msra.mxu0 %v2627
        %2679 = vmatprep.subr.bf16.mxu0 0
        %2680 = vmatpush1.bf16.msra.mxu0 %v2628
        %2681 = vmatprep.subr.bf16.mxu0 0
        %2682 = vmatpush1.bf16.msra.mxu0 %v2629
        %2683 = vmatprep.subr.bf16.mxu0 0
        %2684 = vmatpush1.bf16.msra.mxu0 %v2630
        %2685 = vmatprep.subr.bf16.mxu0 0
        %2686 = vmatpush1.bf16.msra.mxu0 %v2631
        %2687 = vmatprep.subr.bf16.mxu0 0
        %2688 = vmatpush1.bf16.msra.mxu0 %v2632
        %2689 = vmatprep.subr.bf16.mxu0 0
        %2690 = vmatpush1.bf16.msra.mxu0 %v2633
        %2691 = vmatprep.subr.bf16.mxu0 0
        %2692 = vmatpush1.bf16.msra.mxu0 %v2634
        %2693 = vmatprep.subr.bf16.mxu0 0
        %2694 = vmatpush1.bf16.msra.mxu0 %v2635
        %2695 = vmatprep.subr.bf16.mxu0 0
        %2696 = vmatpush1.bf16.msra.mxu0 %v2636
        %2697 = vmatprep.subr.bf16.mxu0 0
        %2698 = vmatpush1.bf16.msra.mxu0 %v2637
        %2699 = vmatprep.subr.bf16.mxu0 0
        %2700 = vmatpush1.bf16.msra.mxu0 %v2638
        %2701 = vmatprep.subr.bf16.mxu0 0
        %2702 = vmatpush1.bf16.msra.mxu0 %v2639
        %2703 = vmatprep.subr.bf16.mxu0 0
        %2704 = vmatpush1.bf16.msra.mxu0 %v2640
        %2705 = vmatprep.mubr.bf16.mxu0 %v2172
        %2706 = vmatmul.mubr.bf16.gmra.mrb[0].mxu0 %v2081
        %v2707 = vpop.f32.mrb[0].mxu0
        %v2708 = vadd.f32 0.0, %v2707
        %v2709 = vpop.f32.mrb[0].mxu0
        %v2710 = vpop.f32.mrb[0].mxu0
        %v2711 = vadd.f32 0.0, %v2710
        %v2712 = vpop.f32.mrb[0].mxu0
        %2713 = vmatprep.mubr.bf16.mxu0 %v2184
        %2714 = vmatmul.mubr.bf16.gmra.mrb[0].mxu0 %v2082
        %v2715 = vpop.f32.mrb[0].mxu0
        %v2716 = vadd.f32 0.0, %v2715
        %v2717 = vpop.f32.mrb[0].mxu0
        %v2718 = vpop.f32.mrb[0].mxu0
        %v2719 = vadd.f32 0.0, %v2718
        %v2720 = vpop.f32.mrb[0].mxu0
        %2721 = vmatprep.mubr.bf16.mxu0 %v2196
        %2722 = vmatmul.mubr.bf16.gmra.mrb[0].mxu0 %v2083
        %v2723 = vpop.f32.mrb[0].mxu0
        %v2724 = vadd.f32 0.0, %v2723
        %v2725 = vpop.f32.mrb[0].mxu0
        %v2726 = vpop.f32.mrb[0].mxu0
        %v2727 = vadd.f32 0.0, %v2726
        %v2728 = vpop.f32.mrb[0].mxu0
        %2729 = vmatprep.mubr.bf16.mxu0 %v2208
        %2730 = vmatmul.mubr.bf16.gmra.mrb[0].mxu0 %v2084
        %v2731 = vpop.f32.mrb[0].mxu0
        %v2732 = vadd.f32 0.0, %v2731
        %v2733 = vpop.f32.mrb[0].mxu0
        %v2734 = vpop.f32.mrb[0].mxu0
        %v2735 = vadd.f32 0.0, %v2734
        %v2736 = vpop.f32.mrb[0].mxu0
        %2737 = vmatprep.mubr.bf16.mxu0 %v2220
        %2738 = vmatmul.mubr.bf16.gmra.mrb[0].mxu0 %v2085
        %v2739 = vpop.f32.mrb[0].mxu0
        %v2740 = vadd.f32 0.0, %v2739
        %v2741 = vpop.f32.mrb[0].mxu0
        %v2742 = vpop.f32.mrb[0].mxu0
        %v2743 = vadd.f32 0.0, %v2742
        %v2744 = vpop.f32.mrb[0].mxu0
        %2745 = vmatprep.mubr.bf16.mxu0 %v2232
        %2746 = vmatmul.mubr.bf16.gmra.mrb[0].mxu0 %v2086
        %v2747 = vpop.f32.mrb[0].mxu0
        %v2748 = vadd.f32 0.0, %v2747
        %v2749 = vpop.f32.mrb[0].mxu0
        %v2750 = vpop.f32.mrb[0].mxu0
        %v2751 = vadd.f32 0.0, %v2750
        %v2752 = vpop.f32.mrb[0].mxu0
        %2753 = vmatprep.mubr.bf16.mxu0 %v2244
        %2754 = vmatmul.mubr.bf16.gmra.mrb[0].mxu0 %v2087
        %v2755 = vpop.f32.mrb[0].mxu0
        %v2756 = vadd.f32 0.0, %v2755
        %v2757 = vpop.f32.mrb[0].mxu0
        %v2758 = vpop.f32.mrb[0].mxu0
        %v2759 = vadd.f32 0.0, %v2758
        %v2760 = vpop.f32.mrb[0].mxu0
        %2761 = vmatprep.mubr.bf16.mxu0 %v2256
        %2762 = vmatmul.mubr.bf16.gmra.mrb[0].mxu0 %v2088
        %v2763 = vpop.f32.mrb[0].mxu0
        %v2764 = vadd.f32 0.0, %v2763
        %v2765 = vpop.f32.mrb[0].mxu0
        %v2766 = vpop.f32.mrb[0].mxu0
        %v2767 = vadd.f32 0.0, %v2766
        %v2768 = vpop.f32.mrb[0].mxu0
        %2769 = vmatprep.mubr.bf16.mxu0 %v2268
        %2770 = vmatmul.mubr.bf16.gmra.mrb[0].mxu0 %v2089
        %v2771 = vpop.f32.mrb[0].mxu0
        %v2772 = vadd.f32 0.0, %v2771
        %v2773 = vpop.f32.mrb[0].mxu0
        %v2774 = vpop.f32.mrb[0].mxu0
        %v2775 = vadd.f32 0.0, %v2774
        %v2776 = vpop.f32.mrb[0].mxu0
        %2777 = vmatprep.mubr.bf16.mxu0 %v2280
        %2778 = vmatmul.mubr.bf16.gmra.mrb[0].mxu0 %v2090
        %v2779 = vpop.f32.mrb[0].mxu0
        %v2780 = vadd.f32 0.0, %v2779
        %v2781 = vpop.f32.mrb[0].mxu0
        %v2782 = vpop.f32.mrb[0].mxu0
        %v2783 = vadd.f32 0.0, %v2782
        %v2784 = vpop.f32.mrb[0].mxu0
        %2785 = vmatprep.mubr.bf16.mxu0 %v2292
        %2786 = vmatmul.mubr.bf16.gmra.mrb[0].mxu0 %v2091
        %v2787 = vpop.f32.mrb[0].mxu0
        %v2788 = vadd.f32 0.0, %v2787
        %v2789 = vpop.f32.mrb[0].mxu0
        %v2790 = vpop.f32.mrb[0].mxu0
        %v2791 = vadd.f32 0.0, %v2790
        %v2792 = vpop.f32.mrb[0].mxu0
        %2793 = vmatprep.mubr.bf16.mxu0 %v2304
        %2794 = vmatmul.mubr.bf16.gmra.mrb[0].mxu0 %v2092
        %v2795 = vpop.f32.mrb[0].mxu0
        %v2796 = vadd.f32 0.0, %v2795
        %v2797 = vpop.f32.mrb[0].mxu0
        %v2798 = vpop.f32.mrb[0].mxu0
        %v2799 = vadd.f32 0.0, %v2798
        %v2800 = vpop.f32.mrb[0].mxu0
        %2801 = vmatprep.mubr.bf16.mxu0 %v2316
        %2802 = vmatmul.mubr.bf16.gmra.mrb[0].mxu0 %v2093
        %v2803 = vpop.f32.mrb[0].mxu0
        %v2804 = vadd.f32 0.0, %v2803
        %v2805 = vpop.f32.mrb[0].mxu0
        %v2806 = vpop.f32.mrb[0].mxu0
        %v2807 = vadd.f32 0.0, %v2806
        %v2808 = vpop.f32.mrb[0].mxu0
        %2809 = vmatprep.mubr.bf16.mxu0 %v2328
        %2810 = vmatmul.mubr.bf16.gmra.mrb[0].mxu0 %v2094
        %v2811 = vpop.f32.mrb[0].mxu0
        %v2812 = vadd.f32 0.0, %v2811
        %v2813 = vpop.f32.mrb[0].mxu0
        %v2814 = vpop.f32.mrb[0].mxu0
        %v2815 = vadd.f32 0.0, %v2814
        %v2816 = vpop.f32.mrb[0].mxu0
        %2817 = vmatprep.mubr.bf16.mxu0 %v2340
        %2818 = vmatmul.mubr.bf16.gmra.mrb[0].mxu0 %v2095
        %v2819 = vpop.f32.mrb[0].mxu0
        %v2820 = vadd.f32 0.0, %v2819
        %v2821 = vpop.f32.mrb[0].mxu0
        %v2822 = vpop.f32.mrb[0].mxu0
        %v2823 = vadd.f32 0.0, %v2822
        %v2824 = vpop.f32.mrb[0].mxu0
        %2825 = vmatprep.mubr.bf16.mxu0 %v2352
        %2826 = vmatmul.mubr.bf16.gmra.mrb[0].mxu0 %v2096
        %v2827 = vpop.f32.mrb[0].mxu0
        %v2828 = vadd.f32 0.0, %v2827
        %v2829 = vpop.f32.mrb[0].mxu0
        %v2830 = vpop.f32.mrb[0].mxu0
        %v2831 = vadd.f32 0.0, %v2830
        %v2832 = vpop.f32.mrb[0].mxu0
        %2833 = vdwg.mxu0
        %2834 = vmatprep.subr.bf16.mxu0 0
        %2835 = vmatpush1.bf16.msra.mxu0 %v2641
        %2836 = vmatprep.subr.bf16.mxu0 0
        %2837 = vmatpush1.bf16.msra.mxu0 %v2642
        %2838 = vmatprep.subr.bf16.mxu0 0
        %2839 = vmatpush1.bf16.msra.mxu0 %v2643
        %2840 = vmatprep.subr.bf16.mxu0 0
        %2841 = vmatpush1.bf16.msra.mxu0 %v2644
        %2842 = vmatprep.subr.bf16.mxu0 0
        %2843 = vmatpush1.bf16.msra.mxu0 %v2645
        %2844 = vmatprep.subr.bf16.mxu0 0
        %2845 = vmatpush1.bf16.msra.mxu0 %v2646
        %2846 = vmatprep.subr.bf16.mxu0 0
        %2847 = vmatpush1.bf16.msra.mxu0 %v2647
        %2848 = vmatprep.subr.bf16.mxu0 0
        %2849 = vmatpush1.bf16.msra.mxu0 %v2648
        %2850 = vmatprep.subr.bf16.mxu0 0
        %2851 = vmatpush1.bf16.msra.mxu0 0
        %2852 = vmatprep.subr.bf16.mxu0 0
        %2853 = vmatpush1.bf16.msra.mxu0 0
        %2854 = vmatprep.subr.bf16.mxu0 0
        %2855 = vmatpush1.bf16.msra.mxu0 0
        %2856 = vmatprep.subr.bf16.mxu0 0
        %2857 = vmatpush1.bf16.msra.mxu0 0
        %2858 = vmatprep.subr.bf16.mxu0 0
        %2859 = vmatpush1.bf16.msra.mxu0 0
        %2860 = vmatprep.subr.bf16.mxu0 0
        %2861 = vmatpush1.bf16.msra.mxu0 0
        %2862 = vmatprep.subr.bf16.mxu0 0
        %2863 = vmatpush1.bf16.msra.mxu0 0
        %2864 = vmatprep.subr.bf16.mxu0 0
        %2865 = vmatpush1.bf16.msra.mxu0 0
        %2866 = vmatprep.mubr.bf16.mxu0 0
        %2867 = vmatmul.mubr.bf16.gmra.mrb[0].mxu0 %v2419
        %v2868 = vpop.f32.mrb[0].mxu0
        %v2869 = vadd.f32 %v2708, %v2868
        %v2870 = vpop.f32.mrb[0].mxu0
        %v2871 = vpop.f32.mrb[0].mxu0
        %v2872 = vadd.f32 %v2711, %v2871
        %v2873 = vpop.f32.mrb[0].mxu0
        %2874 = vmatprep.mubr.bf16.mxu0 0
        %2875 = vmatmul.mubr.bf16.gmra.mrb[0].mxu0 %v2422
        %v2876 = vpop.f32.mrb[0].mxu0
        %v2877 = vadd.f32 %v2716, %v2876
        %v2878 = vpop.f32.mrb[0].mxu0
        %v2879 = vpop.f32.mrb[0].mxu0
        %v2880 = vadd.f32 %v2719, %v2879
        %v2881 = vpop.f32.mrb[0].mxu0
        %2882 = vmatprep.mubr.bf16.mxu0 0
        %2883 = vmatmul.mubr.bf16.gmra.mrb[0].mxu0 %v2425
        %v2884 = vpop.f32.mrb[0].mxu0
        %v2885 = vadd.f32 %v2724, %v2884
        %v2886 = vpop.f32.mrb[0].mxu0
        %v2887 = vpop.f32.mrb[0].mxu0
        %v2888 = vadd.f32 %v2727, %v2887
        %v2889 = vpop.f32.mrb[0].mxu0
        %2890 = vmatprep.mubr.bf16.mxu0 0
        %2891 = vmatmul.mubr.bf16.gmra.mrb[0].mxu0 %v2428
        %v2892 = vpop.f32.mrb[0].mxu0
        %v2893 = vadd.f32 %v2732, %v2892
        %v2894 = vpop.f32.mrb[0].mxu0
        %v2895 = vpop.f32.mrb[0].mxu0
        %v2896 = vadd.f32 %v2735, %v2895
        %v2897 = vpop.f32.mrb[0].mxu0
        %2898 = vmatprep.mubr.bf16.mxu0 0
        %2899 = vmatmul.mubr.bf16.gmra.mrb[0].mxu0 %v2431
        %v2900 = vpop.f32.mrb[0].mxu0
        %v2901 = vadd.f32 %v2740, %v2900
        %v2902 = vpop.f32.mrb[0].mxu0
        %v2903 = vpop.f32.mrb[0].mxu0
        %v2904 = vadd.f32 %v2743, %v2903
        %v2905 = vpop.f32.mrb[0].mxu0
        %2906 = vmatprep.mubr.bf16.mxu0 0
        %2907 = vmatmul.mubr.bf16.gmra.mrb[0].mxu0 %v2434
        %v2908 = vpop.f32.mrb[0].mxu0
        %v2909 = vadd.f32 %v2748, %v2908
        %v2910 = vpop.f32.mrb[0].mxu0
        %v2911 = vpop.f32.mrb[0].mxu0
        %v2912 = vadd.f32 %v2751, %v2911
        %v2913 = vpop.f32.mrb[0].mxu0
        %2914 = vmatprep.mubr.bf16.mxu0 0
        %2915 = vmatmul.mubr.bf16.gmra.mrb[0].mxu0 %v2437
        %v2916 = vpop.f32.mrb[0].mxu0
        %v2917 = vadd.f32 %v2756, %v2916
        %v2918 = vpop.f32.mrb[0].mxu0
        %v2919 = vpop.f32.mrb[0].mxu0
        %v2920 = vadd.f32 %v2759, %v2919
        %v2921 = vpop.f32.mrb[0].mxu0
        %2922 = vmatprep.mubr.bf16.mxu0 0
        %2923 = vmatmul.mubr.bf16.gmra.mrb[0].mxu0 %v2440
        %v2924 = vpop.f32.mrb[0].mxu0
        %v2925 = vadd.f32 %v2764, %v2924
        %v2926 = vpop.f32.mrb[0].mxu0
        %v2927 = vpop.f32.mrb[0].mxu0
        %v2928 = vadd.f32 %v2767, %v2927
        %v2929 = vpop.f32.mrb[0].mxu0
        %2930 = vmatprep.mubr.bf16.mxu0 0
        %2931 = vmatmul.mubr.bf16.gmra.mrb[0].mxu0 %v2443
        %v2932 = vpop.f32.mrb[0].mxu0
        %v2933 = vadd.f32 %v2772, %v2932
        %v2934 = vpop.f32.mrb[0].mxu0
        %v2935 = vpop.f32.mrb[0].mxu0
        %v2936 = vadd.f32 %v2775, %v2935
        %v2937 = vpop.f32.mrb[0].mxu0
        %2938 = vmatprep.mubr.bf16.mxu0 0
        %2939 = vmatmul.mubr.bf16.gmra.mrb[0].mxu0 %v2446
        %v2940 = vpop.f32.mrb[0].mxu0
        %v2941 = vadd.f32 %v2780, %v2940
        %v2942 = vpop.f32.mrb[0].mxu0
        %v2943 = vpop.f32.mrb[0].mxu0
        %v2944 = vadd.f32 %v2783, %v2943
        %v2945 = vpop.f32.mrb[0].mxu0
        %2946 = vmatprep.mubr.bf16.mxu0 0
        %2947 = vmatmul.mubr.bf16.gmra.mrb[0].mxu0 %v2449
        %v2948 = vpop.f32.mrb[0].mxu0
        %v2949 = vadd.f32 %v2788, %v2948
        %v2950 = vpop.f32.mrb[0].mxu0
        %v2951 = vpop.f32.mrb[0].mxu0
        %v2952 = vadd.f32 %v2791, %v2951
        %v2953 = vpop.f32.mrb[0].mxu0
        %2954 = vmatprep.mubr.bf16.mxu0 0
        %2955 = vmatmul.mubr.bf16.gmra.mrb[0].mxu0 %v2452
        %v2956 = vpop.f32.mrb[0].mxu0
        %v2957 = vadd.f32 %v2796, %v2956
        %v2958 = vpop.f32.mrb[0].mxu0
        %v2959 = vpop.f32.mrb[0].mxu0
        %v2960 = vadd.f32 %v2799, %v2959
        %v2961 = vpop.f32.mrb[0].mxu0
        %2962 = vmatprep.mubr.bf16.mxu0 0
        %2963 = vmatmul.mubr.bf16.gmra.mrb[0].mxu0 %v2455
        %v2964 = vpop.f32.mrb[0].mxu0
        %v2965 = vadd.f32 %v2804, %v2964
        %v2966 = vpop.f32.mrb[0].mxu0
        %v2967 = vpop.f32.mrb[0].mxu0
        %v2968 = vadd.f32 %v2807, %v2967
        %v2969 = vpop.f32.mrb[0].mxu0
        %2970 = vmatprep.mubr.bf16.mxu0 0
        %2971 = vmatmul.mubr.bf16.gmra.mrb[0].mxu0 %v2458
        %v2972 = vpop.f32.mrb[0].mxu0
        %v2973 = vadd.f32 %v2812, %v2972
        %v2974 = vpop.f32.mrb[0].mxu0
        %v2975 = vpop.f32.mrb[0].mxu0
        %v2976 = vadd.f32 %v2815, %v2975
        %v2977 = vpop.f32.mrb[0].mxu0
        %2978 = vmatprep.mubr.bf16.mxu0 0
        %2979 = vmatmul.mubr.bf16.gmra.mrb[0].mxu0 %v2461
        %v2980 = vpop.f32.mrb[0].mxu0
        %v2981 = vadd.f32 %v2820, %v2980
        %v2982 = vpop.f32.mrb[0].mxu0
        %v2983 = vpop.f32.mrb[0].mxu0
        %v2984 = vadd.f32 %v2823, %v2983
        %v2985 = vpop.f32.mrb[0].mxu0
        %2986 = vmatprep.mubr.bf16.mxu0 0
        %2987 = vmatmul.mubr.bf16.gmra.mrb[0].mxu0 %v2464
        %v2988 = vpop.f32.mrb[0].mxu0
        %v2989 = vadd.f32 %v2828, %v2988
        %v2990 = vpop.f32.mrb[0].mxu0
        %v2991 = vpop.f32.mrb[0].mxu0
        %v2992 = vadd.f32 %v2831, %v2991
        %v2993 = vpop.f32.mrb[0].mxu0
        %2994 = vdwg.mxu0
        %v3043 = vunpack.c.l.b16 %v1905
        %v3044 = vunpack.c.l.b16 %v1906
        %v3045 = vunpack.c.l.b16 %v1907
        %v3046 = vunpack.c.l.b16 %v1908
        %v3047 = vunpack.c.l.b16 %v1909
        %v3048 = vunpack.c.l.b16 %v1910
        %v3049 = vunpack.c.l.b16 %v1911
        %v3050 = vunpack.c.l.b16 %v1912
        %v3051 = vunpack.c.l.b16 %v1913
        %v3052 = vunpack.c.l.b16 %v1914
        %v3053 = vunpack.c.l.b16 %v1915
        %v3054 = vunpack.c.l.b16 %v1916
        %v3055 = vunpack.c.l.b16 %v1917
        %v3056 = vunpack.c.l.b16 %v1918
        %v3057 = vunpack.c.l.b16 %v1919
        %v3058 = vunpack.c.l.b16 %v1920
        %v3059 = vunpack.c.l.b16 %v1921
        %v3060 = vunpack.c.l.b16 %v1922
        %v3061 = vunpack.c.l.b16 %v1923
        %v3062 = vunpack.c.l.b16 %v1924
        %v3063 = vunpack.c.l.b16 %v1925
        %v3064 = vunpack.c.l.b16 %v1926
        %v3065 = vunpack.c.l.b16 %v1927
        %v3066 = vunpack.c.l.b16 %v1928
        %v3067 = vunpack.c.l.b16 %v1929
        %v3068 = vunpack.c.l.b16 %v1930
        %v3069 = vunpack.c.l.b16 %v1931
        %v3070 = vunpack.c.l.b16 %v1932
        %v3071 = vunpack.c.l.b16 %v1933
        %v3072 = vunpack.c.l.b16 %v1934
        %v3073 = vunpack.c.l.b16 %v1935
        %v3074 = vunpack.c.l.b16 %v1936
        %v3075 = vunpack.c.l.b16 %v1937
        %v3076 = vunpack.c.l.b16 %v1938
        %v3077 = vunpack.c.l.b16 %v1939
        %v3078 = vunpack.c.l.b16 %v1940
        %v3079 = vunpack.c.l.b16 %v1941
        %v3080 = vunpack.c.l.b16 %v1942
        %v3081 = vunpack.c.l.b16 %v1943
        %v3082 = vunpack.c.l.b16 %v1944
        %v3083 = vunpack.c.l.b16 %v1945
        %v3084 = vunpack.c.l.b16 %v1946
        %v3085 = vunpack.c.l.b16 %v1947
        %v3086 = vunpack.c.l.b16 %v1948
        %v3087 = vunpack.c.l.b16 %v1949
        %v3088 = vunpack.c.l.b16 %v1950
        %v3089 = vunpack.c.l.b16 %v1951
        %v3090 = vunpack.c.l.b16 %v1952
        %v3091 = vpack.c.b16 %v3044, %v3043
        %v3092 = vpack.c.b16 %v3046, %v3045
        %v3093 = vpack.c.b16 %v3048, %v3047
        %v3094 = vpack.c.b16 %v3050, %v3049
        %v3095 = vpack.c.b16 %v3052, %v3051
        %v3096 = vpack.c.b16 %v3054, %v3053
        %v3097 = vpack.c.b16 %v3056, %v3055
        %v3098 = vpack.c.b16 %v3058, %v3057
        %v3099 = vpack.c.b16 %v3060, %v3059
        %v3100 = vpack.c.b16 %v3062, %v3061
        %v3101 = vpack.c.b16 %v3064, %v3063
        %v3102 = vpack.c.b16 %v3066, %v3065
        %v3103 = vpack.c.b16 %v3068, %v3067
        %v3104 = vpack.c.b16 %v3070, %v3069
        %v3105 = vpack.c.b16 %v3072, %v3071
        %v3106 = vpack.c.b16 %v3074, %v3073
        %v3107 = vpack.c.b16 %v3076, %v3075
        %v3108 = vpack.c.b16 %v3078, %v3077
        %v3109 = vpack.c.b16 %v3080, %v3079
        %v3110 = vpack.c.b16 %v3082, %v3081
        %v3111 = vpack.c.b16 %v3084, %v3083
        %v3112 = vpack.c.b16 %v3086, %v3085
        %v3113 = vpack.c.b16 %v3088, %v3087
        %v3114 = vpack.c.b16 %v3090, %v3089
        %3139 = vmatprep.subr.bf16.mxu0 0
        %3140 = vmatpush1.bf16.msra.mxu0 %v3091
        %3141 = vmatprep.subr.bf16.mxu0 0
        %3142 = vmatpush1.bf16.msra.mxu0 %v3092
        %3143 = vmatprep.subr.bf16.mxu0 0
        %3144 = vmatpush1.bf16.msra.mxu0 %v3093
        %3145 = vmatprep.subr.bf16.mxu0 0
        %3146 = vmatpush1.bf16.msra.mxu0 %v3094
        %3147 = vmatprep.subr.bf16.mxu0 0
        %3148 = vmatpush1.bf16.msra.mxu0 %v3095
        %3149 = vmatprep.subr.bf16.mxu0 0
        %3150 = vmatpush1.bf16.msra.mxu0 %v3096
        %3151 = vmatprep.subr.bf16.mxu0 0
        %3152 = vmatpush1.bf16.msra.mxu0 %v3097
        %3153 = vmatprep.subr.bf16.mxu0 0
        %3154 = vmatpush1.bf16.msra.mxu0 %v3098
        %3155 = vmatprep.subr.bf16.mxu0 0
        %3156 = vmatpush1.bf16.msra.mxu0 %v3099
        %3157 = vmatprep.subr.bf16.mxu0 0
        %3158 = vmatpush1.bf16.msra.mxu0 %v3100
        %3159 = vmatprep.subr.bf16.mxu0 0
        %3160 = vmatpush1.bf16.msra.mxu0 %v3101
        %3161 = vmatprep.subr.bf16.mxu0 0
        %3162 = vmatpush1.bf16.msra.mxu0 %v3102
        %3163 = vmatprep.subr.bf16.mxu0 0
        %3164 = vmatpush1.bf16.msra.mxu0 %v3103
        %3165 = vmatprep.subr.bf16.mxu0 0
        %3166 = vmatpush1.bf16.msra.mxu0 %v3104
        %3167 = vmatprep.subr.bf16.mxu0 0
        %3168 = vmatpush1.bf16.msra.mxu0 %v3105
        %3169 = vmatprep.subr.bf16.mxu0 0
        %3170 = vmatpush1.bf16.msra.mxu0 %v3106
        %3171 = vmatprep.mubr.bf16.mxu0 %v1595
        %3172 = vmatmul.mubr.bf16.gmra.mrb[0].mxu0 %v1503
        %v3173 = vpop.f32.mrb[0].mxu0
        %v3174 = vadd.f32 %v2869, %v3173
        %v3175 = vpop.f32.mrb[0].mxu0
        %v3176 = vpop.f32.mrb[0].mxu0
        %v3177 = vadd.f32 %v2872, %v3176
        %v3178 = vpop.f32.mrb[0].mxu0
        %3179 = vmatprep.mubr.bf16.mxu0 %v1607
        %3180 = vmatmul.mubr.bf16.gmra.mrb[0].mxu0 %v1504
        %v3181 = vpop.f32.mrb[0].mxu0
        %v3182 = vadd.f32 %v2877, %v3181
        %v3183 = vpop.f32.mrb[0].mxu0
        %v3184 = vpop.f32.mrb[0].mxu0
        %v3185 = vadd.f32 %v2880, %v3184
        %v3186 = vpop.f32.mrb[0].mxu0
        %3187 = vmatprep.mubr.bf16.mxu0 %v1619
        %3188 = vmatmul.mubr.bf16.gmra.mrb[0].mxu0 %v1505
        %v3189 = vpop.f32.mrb[0].mxu0
        %v3190 = vadd.f32 %v2885, %v3189
        %v3191 = vpop.f32.mrb[0].mxu0
        %v3192 = vpop.f32.mrb[0].mxu0
        %v3193 = vadd.f32 %v2888, %v3192
        %v3194 = vpop.f32.mrb[0].mxu0
        %3195 = vmatprep.mubr.bf16.mxu0 %v1631
        %3196 = vmatmul.mubr.bf16.gmra.mrb[0].mxu0 %v1506
        %v3197 = vpop.f32.mrb[0].mxu0
        %v3198 = vadd.f32 %v2893, %v3197
        %v3199 = vpop.f32.mrb[0].mxu0
        %v3200 = vpop.f32.mrb[0].mxu0
        %v3201 = vadd.f32 %v2896, %v3200
        %v3202 = vpop.f32.mrb[0].mxu0
        %3203 = vmatprep.mubr.bf16.mxu0 %v1643
        %3204 = vmatmul.mubr.bf16.gmra.mrb[0].mxu0 %v1507
        %v3205 = vpop.f32.mrb[0].mxu0
        %v3206 = vadd.f32 %v2901, %v3205
        %v3207 = vpop.f32.mrb[0].mxu0
        %v3208 = vpop.f32.mrb[0].mxu0
        %v3209 = vadd.f32 %v2904, %v3208
        %v3210 = vpop.f32.mrb[0].mxu0
        %3211 = vmatprep.mubr.bf16.mxu0 %v1655
        %3212 = vmatmul.mubr.bf16.gmra.mrb[0].mxu0 %v1508
        %v3213 = vpop.f32.mrb[0].mxu0
        %v3214 = vadd.f32 %v2909, %v3213
        %v3215 = vpop.f32.mrb[0].mxu0
        %v3216 = vpop.f32.mrb[0].mxu0
        %v3217 = vadd.f32 %v2912, %v3216
        %v3218 = vpop.f32.mrb[0].mxu0
        %3219 = vmatprep.mubr.bf16.mxu0 %v1667
        %3220 = vmatmul.mubr.bf16.gmra.mrb[0].mxu0 %v1509
        %v3221 = vpop.f32.mrb[0].mxu0
        %v3222 = vadd.f32 %v2917, %v3221
        %v3223 = vpop.f32.mrb[0].mxu0
        %v3224 = vpop.f32.mrb[0].mxu0
        %v3225 = vadd.f32 %v2920, %v3224
        %v3226 = vpop.f32.mrb[0].mxu0
        %3227 = vmatprep.mubr.bf16.mxu0 %v1679
        %3228 = vmatmul.mubr.bf16.gmra.mrb[0].mxu0 %v1510
        %v3229 = vpop.f32.mrb[0].mxu0
        %v3230 = vadd.f32 %v2925, %v3229
        %v3231 = vpop.f32.mrb[0].mxu0
        %v3232 = vpop.f32.mrb[0].mxu0
        %v3233 = vadd.f32 %v2928, %v3232
        %v3234 = vpop.f32.mrb[0].mxu0
        %3235 = vmatprep.mubr.bf16.mxu0 %v1691
        %3236 = vmatmul.mubr.bf16.gmra.mrb[0].mxu0 %v1511
        %v3237 = vpop.f32.mrb[0].mxu0
        %v3238 = vadd.f32 %v2933, %v3237
        %v3239 = vpop.f32.mrb[0].mxu0
        %v3240 = vpop.f32.mrb[0].mxu0
        %v3241 = vadd.f32 %v2936, %v3240
        %v3242 = vpop.f32.mrb[0].mxu0
        %3243 = vmatprep.mubr.bf16.mxu0 %v1703
        %3244 = vmatmul.mubr.bf16.gmra.mrb[0].mxu0 %v1512
        %v3245 = vpop.f32.mrb[0].mxu0
        %v3246 = vadd.f32 %v2941, %v3245
        %v3247 = vpop.f32.mrb[0].mxu0
        %v3248 = vpop.f32.mrb[0].mxu0
        %v3249 = vadd.f32 %v2944, %v3248
        %v3250 = vpop.f32.mrb[0].mxu0
        %3251 = vmatprep.mubr.bf16.mxu0 %v1715
        %3252 = vmatmul.mubr.bf16.gmra.mrb[0].mxu0 %v1513
        %v3253 = vpop.f32.mrb[0].mxu0
        %v3254 = vadd.f32 %v2949, %v3253
        %v3255 = vpop.f32.mrb[0].mxu0
        %v3256 = vpop.f32.mrb[0].mxu0
        %v3257 = vadd.f32 %v2952, %v3256
        %v3258 = vpop.f32.mrb[0].mxu0
        %3259 = vmatprep.mubr.bf16.mxu0 %v1727
        %3260 = vmatmul.mubr.bf16.gmra.mrb[0].mxu0 %v1514
        %v3261 = vpop.f32.mrb[0].mxu0
        %v3262 = vadd.f32 %v2957, %v3261
        %v3263 = vpop.f32.mrb[0].mxu0
        %v3264 = vpop.f32.mrb[0].mxu0
        %v3265 = vadd.f32 %v2960, %v3264
        %v3266 = vpop.f32.mrb[0].mxu0
        %3267 = vmatprep.mubr.bf16.mxu0 %v1739
        %3268 = vmatmul.mubr.bf16.gmra.mrb[0].mxu0 %v1515
        %v3269 = vpop.f32.mrb[0].mxu0
        %v3270 = vadd.f32 %v2965, %v3269
        %v3271 = vpop.f32.mrb[0].mxu0
        %v3272 = vpop.f32.mrb[0].mxu0
        %v3273 = vadd.f32 %v2968, %v3272
        %v3274 = vpop.f32.mrb[0].mxu0
        %3275 = vmatprep.mubr.bf16.mxu0 %v1751
        %3276 = vmatmul.mubr.bf16.gmra.mrb[0].mxu0 %v1516
        %v3277 = vpop.f32.mrb[0].mxu0
        %v3278 = vadd.f32 %v2973, %v3277
        %v3279 = vpop.f32.mrb[0].mxu0
        %v3280 = vpop.f32.mrb[0].mxu0
        %v3281 = vadd.f32 %v2976, %v3280
        %v3282 = vpop.f32.mrb[0].mxu0
        %3283 = vmatprep.mubr.bf16.mxu0 %v1763
        %3284 = vmatmul.mubr.bf16.gmra.mrb[0].mxu0 %v1517
        %v3285 = vpop.f32.mrb[0].mxu0
        %v3286 = vadd.f32 %v2981, %v3285
        %v3287 = vpop.f32.mrb[0].mxu0
        %v3288 = vpop.f32.mrb[0].mxu0
        %v3289 = vadd.f32 %v2984, %v3288
        %v3290 = vpop.f32.mrb[0].mxu0
        %3291 = vmatprep.mubr.bf16.mxu0 %v1775
        %3292 = vmatmul.mubr.bf16.gmra.mrb[0].mxu0 %v1518
        %v3293 = vpop.f32.mrb[0].mxu0
        %v3294 = vadd.f32 %v2989, %v3293
        %v3295 = vpop.f32.mrb[0].mxu0
        %v3296 = vpop.f32.mrb[0].mxu0
        %v3297 = vadd.f32 %v2992, %v3296
        %v3298 = vpop.f32.mrb[0].mxu0
        %3299 = vdwg.mxu0
        %3300 = vmatprep.subr.bf16.mxu0 0
        %3301 = vmatpush1.bf16.msra.mxu0 %v3107
        %3302 = vmatprep.subr.bf16.mxu0 0
        %3303 = vmatpush1.bf16.msra.mxu0 %v3108
        %3304 = vmatprep.subr.bf16.mxu0 0
        %3305 = vmatpush1.bf16.msra.mxu0 %v3109
        %3306 = vmatprep.subr.bf16.mxu0 0
        %3307 = vmatpush1.bf16.msra.mxu0 %v3110
        %3308 = vmatprep.subr.bf16.mxu0 0
        %3309 = vmatpush1.bf16.msra.mxu0 %v3111
        %3310 = vmatprep.subr.bf16.mxu0 0
        %3311 = vmatpush1.bf16.msra.mxu0 %v3112
        %3312 = vmatprep.subr.bf16.mxu0 0
        %3313 = vmatpush1.bf16.msra.mxu0 %v3113
        %3314 = vmatprep.subr.bf16.mxu0 0
        %3315 = vmatpush1.bf16.msra.mxu0 %v3114
        %3316 = vmatprep.subr.bf16.mxu0 0
        %3317 = vmatpush1.bf16.msra.mxu0 0
        %3318 = vmatprep.subr.bf16.mxu0 0
        %3319 = vmatpush1.bf16.msra.mxu0 0
        %3320 = vmatprep.subr.bf16.mxu0 0
        %3321 = vmatpush1.bf16.msra.mxu0 0
        %3322 = vmatprep.subr.bf16.mxu0 0
        %3323 = vmatpush1.bf16.msra.mxu0 0
        %3324 = vmatprep.subr.bf16.mxu0 0
        %3325 = vmatpush1.bf16.msra.mxu0 0
        %3326 = vmatprep.subr.bf16.mxu0 0
        %3327 = vmatpush1.bf16.msra.mxu0 0
        %3328 = vmatprep.subr.bf16.mxu0 0
        %3329 = vmatpush1.bf16.msra.mxu0 0
        %3330 = vmatprep.subr.bf16.mxu0 0
        %3331 = vmatpush1.bf16.msra.mxu0 0
        %3332 = vmatprep.mubr.bf16.mxu0 0
        %3333 = vmatmul.mubr.bf16.gmra.mrb[0].mxu0 %v1843
        %v3334 = vpop.f32.mrb[0].mxu0
        %v3335 = vadd.f32 %v3174, %v3334
        %v3336 = vpop.f32.mrb[0].mxu0
        %v3337 = vpop.f32.mrb[0].mxu0
        %v3338 = vadd.f32 %v3177, %v3337
        %v3339 = vpop.f32.mrb[0].mxu0
        %3340 = vmatprep.mubr.bf16.mxu0 0
        %3341 = vmatmul.mubr.bf16.gmra.mrb[0].mxu0 %v1846
        %v3342 = vpop.f32.mrb[0].mxu0
        %v3343 = vadd.f32 %v3182, %v3342
        %v3344 = vpop.f32.mrb[0].mxu0
        %v3345 = vpop.f32.mrb[0].mxu0
        %v3346 = vadd.f32 %v3185, %v3345
        %v3347 = vpop.f32.mrb[0].mxu0
        %3348 = vmatprep.mubr.bf16.mxu0 0
        %3349 = vmatmul.mubr.bf16.gmra.mrb[0].mxu0 %v1849
        %v3350 = vpop.f32.mrb[0].mxu0
        %v3351 = vadd.f32 %v3190, %v3350
        %v3352 = vpop.f32.mrb[0].mxu0
        %v3353 = vpop.f32.mrb[0].mxu0
        %v3354 = vadd.f32 %v3193, %v3353
        %v3355 = vpop.f32.mrb[0].mxu0
        %3356 = vmatprep.mubr.bf16.mxu0 0
        %3357 = vmatmul.mubr.bf16.gmra.mrb[0].mxu0 %v1852
        %v3358 = vpop.f32.mrb[0].mxu0
        %v3359 = vadd.f32 %v3198, %v3358
        %v3360 = vpop.f32.mrb[0].mxu0
        %v3361 = vpop.f32.mrb[0].mxu0
        %v3362 = vadd.f32 %v3201, %v3361
        %v3363 = vpop.f32.mrb[0].mxu0
        %3364 = vmatprep.mubr.bf16.mxu0 0
        %3365 = vmatmul.mubr.bf16.gmra.mrb[0].mxu0 %v1855
        %v3366 = vpop.f32.mrb[0].mxu0
        %v3367 = vadd.f32 %v3206, %v3366
        %v3368 = vpop.f32.mrb[0].mxu0
        %v3369 = vpop.f32.mrb[0].mxu0
        %v3370 = vadd.f32 %v3209, %v3369
        %v3371 = vpop.f32.mrb[0].mxu0
        %3372 = vmatprep.mubr.bf16.mxu0 0
        %3373 = vmatmul.mubr.bf16.gmra.mrb[0].mxu0 %v1858
        %v3374 = vpop.f32.mrb[0].mxu0
        %v3375 = vadd.f32 %v3214, %v3374
        %v3376 = vpop.f32.mrb[0].mxu0
        %v3377 = vpop.f32.mrb[0].mxu0
        %v3378 = vadd.f32 %v3217, %v3377
        %v3379 = vpop.f32.mrb[0].mxu0
        %3380 = vmatprep.mubr.bf16.mxu0 0
        %3381 = vmatmul.mubr.bf16.gmra.mrb[0].mxu0 %v1861
        %v3382 = vpop.f32.mrb[0].mxu0
        %v3383 = vadd.f32 %v3222, %v3382
        %v3384 = vpop.f32.mrb[0].mxu0
        %v3385 = vpop.f32.mrb[0].mxu0
        %v3386 = vadd.f32 %v3225, %v3385
        %v3387 = vpop.f32.mrb[0].mxu0
        %3388 = vmatprep.mubr.bf16.mxu0 0
        %3389 = vmatmul.mubr.bf16.gmra.mrb[0].mxu0 %v1864
        %v3390 = vpop.f32.mrb[0].mxu0
        %v3391 = vadd.f32 %v3230, %v3390
        %v3392 = vpop.f32.mrb[0].mxu0
        %v3393 = vpop.f32.mrb[0].mxu0
        %v3394 = vadd.f32 %v3233, %v3393
        %v3395 = vpop.f32.mrb[0].mxu0
        %3396 = vmatprep.mubr.bf16.mxu0 0
        %3397 = vmatmul.mubr.bf16.gmra.mrb[0].mxu0 %v1867
        %v3398 = vpop.f32.mrb[0].mxu0
        %v3399 = vadd.f32 %v3238, %v3398
        %v3400 = vpop.f32.mrb[0].mxu0
        %v3401 = vpop.f32.mrb[0].mxu0
        %v3402 = vadd.f32 %v3241, %v3401
        %v3403 = vpop.f32.mrb[0].mxu0
        %3404 = vmatprep.mubr.bf16.mxu0 0
        %3405 = vmatmul.mubr.bf16.gmra.mrb[0].mxu0 %v1870
        %v3406 = vpop.f32.mrb[0].mxu0
        %v3407 = vadd.f32 %v3246, %v3406
        %v3408 = vpop.f32.mrb[0].mxu0
        %v3409 = vpop.f32.mrb[0].mxu0
        %v3410 = vadd.f32 %v3249, %v3409
        %v3411 = vpop.f32.mrb[0].mxu0
        %3412 = vmatprep.mubr.bf16.mxu0 0
        %3413 = vmatmul.mubr.bf16.gmra.mrb[0].mxu0 %v1873
        %v3414 = vpop.f32.mrb[0].mxu0
        %v3415 = vadd.f32 %v3254, %v3414
        %v3416 = vpop.f32.mrb[0].mxu0
        %v3417 = vpop.f32.mrb[0].mxu0
        %v3418 = vadd.f32 %v3257, %v3417
        %v3419 = vpop.f32.mrb[0].mxu0
        %3420 = vmatprep.mubr.bf16.mxu0 0
        %3421 = vmatmul.mubr.bf16.gmra.mrb[0].mxu0 %v1876
        %v3422 = vpop.f32.mrb[0].mxu0
        %v3423 = vadd.f32 %v3262, %v3422
        %v3424 = vpop.f32.mrb[0].mxu0
        %v3425 = vpop.f32.mrb[0].mxu0
        %v3426 = vadd.f32 %v3265, %v3425
        %v3427 = vpop.f32.mrb[0].mxu0
        %3428 = vmatprep.mubr.bf16.mxu0 0
        %3429 = vmatmul.mubr.bf16.gmra.mrb[0].mxu0 %v1879
        %v3430 = vpop.f32.mrb[0].mxu0
        %v3431 = vadd.f32 %v3270, %v3430
        %v3432 = vpop.f32.mrb[0].mxu0
        %v3433 = vpop.f32.mrb[0].mxu0
        %v3434 = vadd.f32 %v3273, %v3433
        %v3435 = vpop.f32.mrb[0].mxu0
        %3436 = vmatprep.mubr.bf16.mxu0 0
        %3437 = vmatmul.mubr.bf16.gmra.mrb[0].mxu0 %v1882
        %v3438 = vpop.f32.mrb[0].mxu0
        %v3439 = vadd.f32 %v3278, %v3438
        %v3440 = vpop.f32.mrb[0].mxu0
        %v3441 = vpop.f32.mrb[0].mxu0
        %v3442 = vadd.f32 %v3281, %v3441
        %v3443 = vpop.f32.mrb[0].mxu0
        %3444 = vmatprep.mubr.bf16.mxu0 0
        %3445 = vmatmul.mubr.bf16.gmra.mrb[0].mxu0 %v1885
        %v3446 = vpop.f32.mrb[0].mxu0
        %v3447 = vadd.f32 %v3286, %v3446
        %v3448 = vpop.f32.mrb[0].mxu0
        %v3449 = vpop.f32.mrb[0].mxu0
        %v3450 = vadd.f32 %v3289, %v3449
        %v3451 = vpop.f32.mrb[0].mxu0
        %3452 = vmatprep.mubr.bf16.mxu0 0
        %3453 = vmatmul.mubr.bf16.gmra.mrb[0].mxu0 %v1888
        %v3454 = vpop.f32.mrb[0].mxu0
        %v3455 = vadd.f32 %v3294, %v3454
        %v3456 = vpop.f32.mrb[0].mxu0
        %v3457 = vpop.f32.mrb[0].mxu0
        %v3458 = vadd.f32 %v3297, %v3457
        %v3459 = vpop.f32.mrb[0].mxu0
        %3460 = vdwg.mxu0
        %s3461 = scalar_lea.vmem [#allocation2], 24
        %v3462 = vld [vmem:[%s3461] sm:$0xf]
        %v3463 = vld [vmem:[%s3461 + $0x4] sm:$0xf]
        %v3464 = vld [vmem:[%s3461 + $0xc] sm:$0xf]
        %v3465 = vld [vmem:[%s3461 + $0x10] sm:$0xf]
        %v3466 = vld [vmem:[%s3461 + $0x18] sm:$0xf]
        %v3467 = vld [vmem:[%s3461 + $0x1c] sm:$0xf]
        %v3468 = vld [vmem:[%s3461 + $0x24] sm:$0xf]
        %v3469 = vld [vmem:[%s3461 + $0x28] sm:$0xf]
        %v3470 = vld [vmem:[%s3461 + $0x30] sm:$0xf]
        %v3471 = vld [vmem:[%s3461 + $0x34] sm:$0xf]
        %v3472 = vld [vmem:[%s3461 + $0x3c] sm:$0xf]
        %v3473 = vld [vmem:[%s3461 + $0x40] sm:$0xf]
        %v3474 = vld [vmem:[%s3461 + $0x48] sm:$0xf]
        %v3475 = vld [vmem:[%s3461 + $0x4c] sm:$0xf]
        %v3476 = vld [vmem:[%s3461 + $0x54] sm:$0xf]
        %v3477 = vld [vmem:[%s3461 + $0x58] sm:$0xf]
        %v3478 = vld [vmem:[%s3461 + $0x60] sm:$0xf]
        %v3479 = vld [vmem:[%s3461 + $0x64] sm:$0xf]
        %v3480 = vld [vmem:[%s3461 + $0x6c] sm:$0xf]
        %v3481 = vld [vmem:[%s3461 + $0x70] sm:$0xf]
        %v3482 = vld [vmem:[%s3461 + $0x78] sm:$0xf]
        %v3483 = vld [vmem:[%s3461 + $0x7c] sm:$0xf]
        %v3484 = vld [vmem:[%s3461 + $0x84] sm:$0xf]
        %v3485 = vld [vmem:[%s3461 + $0x88] sm:$0xf]
        %v3486 = vld [vmem:[%s3461 + $0x90] sm:$0xf]
        %v3487 = vld [vmem:[%s3461 + $0x94] sm:$0xf]
        %v3488 = vld [vmem:[%s3461 + $0x9c] sm:$0xf]
        %v3489 = vld [vmem:[%s3461 + $0xa0] sm:$0xf]
        %v3490 = vld [vmem:[%s3461 + $0xa8] sm:$0xf]
        %v3491 = vld [vmem:[%s3461 + $0xac] sm:$0xf]
        %v3492 = vld [vmem:[%s3461 + $0xb4] sm:$0xf]
        %v3493 = vld [vmem:[%s3461 + $0xb8] sm:$0xf]
        %v3494 = vld [vmem:[%s3461 + $0x8] sm:$0x1]
        %v3495 = vld [vmem:[%s3461 + $0x14] sm:$0x1]
        %v3496 = vld [vmem:[%s3461 + $0x20] sm:$0x1]
        %v3497 = vld [vmem:[%s3461 + $0x2c] sm:$0x1]
        %v3498 = vld [vmem:[%s3461 + $0x38] sm:$0x1]
        %v3499 = vld [vmem:[%s3461 + $0x44] sm:$0x1]
        %v3500 = vld [vmem:[%s3461 + $0x50] sm:$0x1]
        %v3501 = vld [vmem:[%s3461 + $0x5c] sm:$0x1]
        %v3502 = vld [vmem:[%s3461 + $0x68] sm:$0x1]
        %v3503 = vld [vmem:[%s3461 + $0x74] sm:$0x1]
        %v3504 = vld [vmem:[%s3461 + $0x80] sm:$0x1]
        %v3505 = vld [vmem:[%s3461 + $0x8c] sm:$0x1]
        %v3506 = vld [vmem:[%s3461 + $0x98] sm:$0x1]
        %v3507 = vld [vmem:[%s3461 + $0xa4] sm:$0x1]
        %v3508 = vld [vmem:[%s3461 + $0xb0] sm:$0x1]
        %v3509 = vld [vmem:[%s3461 + $0xbc] sm:$0x1]
        %v3510 = vld [vmem:[%s3461] sm:$0xe]
        %v3511 = vld [vmem:[%s3461 + $0xc] sm:$0xe]
        %v3512 = vld [vmem:[%s3461 + $0x18] sm:$0xe]
        %v3513 = vld [vmem:[%s3461 + $0x24] sm:$0xe]
        %v3514 = vld [vmem:[%s3461 + $0x30] sm:$0xe]
        %v3515 = vld [vmem:[%s3461 + $0x3c] sm:$0xe]
        %v3516 = vld [vmem:[%s3461 + $0x48] sm:$0xe]
        %v3517 = vld [vmem:[%s3461 + $0x54] sm:$0xe]
        %v3518 = vld [vmem:[%s3461 + $0x60] sm:$0xe]
        %v3519 = vld [vmem:[%s3461 + $0x6c] sm:$0xe]
        %v3520 = vld [vmem:[%s3461 + $0x78] sm:$0xe]
        %v3521 = vld [vmem:[%s3461 + $0x84] sm:$0xe]
        %v3522 = vld [vmem:[%s3461 + $0x90] sm:$0xe]
        %v3523 = vld [vmem:[%s3461 + $0x9c] sm:$0xe]
        %v3524 = vld [vmem:[%s3461 + $0xa8] sm:$0xe]
        %v3525 = vld [vmem:[%s3461 + $0xb4] sm:$0xe]
        %v3558 = vunpack.c.l.b16 %v3462
        %v3559 = vunpack.c.l.b16 %v3463
        %v3560 = vunpack.c.l.b16 %v3464
        %v3561 = vunpack.c.l.b16 %v3465
        %v3562 = vunpack.c.l.b16 %v3466
        %v3563 = vunpack.c.l.b16 %v3467
        %v3564 = vunpack.c.l.b16 %v3468
        %v3565 = vunpack.c.l.b16 %v3469
        %v3566 = vunpack.c.l.b16 %v3470
        %v3567 = vunpack.c.l.b16 %v3471
        %v3568 = vunpack.c.l.b16 %v3472
        %v3569 = vunpack.c.l.b16 %v3473
        %v3570 = vunpack.c.l.b16 %v3474
        %v3571 = vunpack.c.l.b16 %v3475
        %v3572 = vunpack.c.l.b16 %v3476
        %v3573 = vunpack.c.l.b16 %v3477
        %v3574 = vunpack.c.l.b16 %v3478
        %v3575 = vunpack.c.l.b16 %v3479
        %v3576 = vunpack.c.l.b16 %v3480
        %v3577 = vunpack.c.l.b16 %v3481
        %v3578 = vunpack.c.l.b16 %v3482
        %v3579 = vunpack.c.l.b16 %v3483
        %v3580 = vunpack.c.l.b16 %v3484
        %v3581 = vunpack.c.l.b16 %v3485
        %v3582 = vunpack.c.l.b16 %v3486
        %v3583 = vunpack.c.l.b16 %v3487
        %v3584 = vunpack.c.l.b16 %v3488
        %v3585 = vunpack.c.l.b16 %v3489
        %v3586 = vunpack.c.l.b16 %v3490
        %v3587 = vunpack.c.l.b16 %v3491
        %v3588 = vunpack.c.l.b16 %v3492
        %v3589 = vunpack.c.l.b16 %v3493
        %v3590 = vpack.c.b16 %v3559, %v3558
        %v3591 = vpack.c.b16 %v3561, %v3560
        %v3592 = vpack.c.b16 %v3563, %v3562
        %v3593 = vpack.c.b16 %v3565, %v3564
        %v3594 = vpack.c.b16 %v3567, %v3566
        %v3595 = vpack.c.b16 %v3569, %v3568
        %v3596 = vpack.c.b16 %v3571, %v3570
        %v3597 = vpack.c.b16 %v3573, %v3572
        %v3598 = vpack.c.b16 %v3575, %v3574
        %v3599 = vpack.c.b16 %v3577, %v3576
        %v3600 = vpack.c.b16 %v3579, %v3578
        %v3601 = vpack.c.b16 %v3581, %v3580
        %v3602 = vpack.c.b16 %v3583, %v3582
        %v3603 = vpack.c.b16 %v3585, %v3584
        %v3604 = vpack.c.b16 %v3587, %v3586
        %v3605 = vpack.c.b16 %v3589, %v3588
        %v3638 = vunpack.c.l.b16 %v3494
        %v3639 = vunpack.c.l.b16 %v3495
        %v3640 = vunpack.c.l.b16 %v3496
        %v3641 = vunpack.c.l.b16 %v3497
        %v3642 = vunpack.c.l.b16 %v3498
        %v3643 = vunpack.c.l.b16 %v3499
        %v3644 = vunpack.c.l.b16 %v3500
        %v3645 = vunpack.c.l.b16 %v3501
        %v3646 = vunpack.c.l.b16 %v3502
        %v3647 = vunpack.c.l.b16 %v3503
        %v3648 = vunpack.c.l.b16 %v3504
        %v3649 = vunpack.c.l.b16 %v3505
        %v3650 = vunpack.c.l.b16 %v3506
        %v3651 = vunpack.c.l.b16 %v3507
        %v3652 = vunpack.c.l.b16 %v3508
        %v3653 = vunpack.c.l.b16 %v3509
        %v3654 = vpack.c.b16 %v3638, %v3638
        %v3655 = vpack.c.b16 %v3639, %v3639
        %v3656 = vpack.c.b16 %v3640, %v3640
        %v3657 = vpack.c.b16 %v3641, %v3641
        %v3658 = vpack.c.b16 %v3642, %v3642
        %v3659 = vpack.c.b16 %v3643, %v3643
        %v3660 = vpack.c.b16 %v3644, %v3644
        %v3661 = vpack.c.b16 %v3645, %v3645
        %v3662 = vpack.c.b16 %v3646, %v3646
        %v3663 = vpack.c.b16 %v3647, %v3647
        %v3664 = vpack.c.b16 %v3648, %v3648
        %v3665 = vpack.c.b16 %v3649, %v3649
        %v3666 = vpack.c.b16 %v3650, %v3650
        %v3667 = vpack.c.b16 %v3651, %v3651
        %v3668 = vpack.c.b16 %v3652, %v3652
        %v3669 = vpack.c.b16 %v3653, %v3653
        %v3671 = vshrl.u32 %v3590, 16
        %v3673 = vshll.u32 %v3590, 16
        %v3675 = vrot.slane %v3673, 1
        %v3676 = vor.u32 %v3671, %v3675
        %v3678 = vshll.u32 %v3654, 16
        %v3680 = vrot.slane %v3678, 1
        %v3681 = vsel %vm1583, %v3676, %v3680
        %v3683 = vshrl.u32 %v3591, 16
        %v3685 = vshll.u32 %v3591, 16
        %v3687 = vrot.slane %v3685, 1
        %v3688 = vor.u32 %v3683, %v3687
        %v3690 = vshll.u32 %v3655, 16
        %v3692 = vrot.slane %v3690, 1
        %v3693 = vsel %vm1583, %v3688, %v3692
        %v3695 = vshrl.u32 %v3592, 16
        %v3697 = vshll.u32 %v3592, 16
        %v3699 = vrot.slane %v3697, 1
        %v3700 = vor.u32 %v3695, %v3699
        %v3702 = vshll.u32 %v3656, 16
        %v3704 = vrot.slane %v3702, 1
        %v3705 = vsel %vm1583, %v3700, %v3704
        %v3707 = vshrl.u32 %v3593, 16
        %v3709 = vshll.u32 %v3593, 16
        %v3711 = vrot.slane %v3709, 1
        %v3712 = vor.u32 %v3707, %v3711
        %v3714 = vshll.u32 %v3657, 16
        %v3716 = vrot.slane %v3714, 1
        %v3717 = vsel %vm1583, %v3712, %v3716
        %v3719 = vshrl.u32 %v3594, 16
        %v3721 = vshll.u32 %v3594, 16
        %v3723 = vrot.slane %v3721, 1
        %v3724 = vor.u32 %v3719, %v3723
        %v3726 = vshll.u32 %v3658, 16
        %v3728 = vrot.slane %v3726, 1
        %v3729 = vsel %vm1583, %v3724, %v3728
        %v3731 = vshrl.u32 %v3595, 16
        %v3733 = vshll.u32 %v3595, 16
        %v3735 = vrot.slane %v3733, 1
        %v3736 = vor.u32 %v3731, %v3735
        %v3738 = vshll.u32 %v3659, 16
        %v3740 = vrot.slane %v3738, 1
        %v3741 = vsel %vm1583, %v3736, %v3740
        %v3743 = vshrl.u32 %v3596, 16
        %v3745 = vshll.u32 %v3596, 16
        %v3747 = vrot.slane %v3745, 1
        %v3748 = vor.u32 %v3743, %v3747
        %v3750 = vshll.u32 %v3660, 16
        %v3752 = vrot.slane %v3750, 1
        %v3753 = vsel %vm1583, %v3748, %v3752
        %v3755 = vshrl.u32 %v3597, 16
        %v3757 = vshll.u32 %v3597, 16
        %v3759 = vrot.slane %v3757, 1
        %v3760 = vor.u32 %v3755, %v3759
        %v3762 = vshll.u32 %v3661, 16
        %v3764 = vrot.slane %v3762, 1
        %v3765 = vsel %vm1583, %v3760, %v3764
        %v3767 = vshrl.u32 %v3598, 16
        %v3769 = vshll.u32 %v3598, 16
        %v3771 = vrot.slane %v3769, 1
        %v3772 = vor.u32 %v3767, %v3771
        %v3774 = vshll.u32 %v3662, 16
        %v3776 = vrot.slane %v3774, 1
        %v3777 = vsel %vm1583, %v3772, %v3776
        %v3779 = vshrl.u32 %v3599, 16
        %v3781 = vshll.u32 %v3599, 16
        %v3783 = vrot.slane %v3781, 1
        %v3784 = vor.u32 %v3779, %v3783
        %v3786 = vshll.u32 %v3663, 16
        %v3788 = vrot.slane %v3786, 1
        %v3789 = vsel %vm1583, %v3784, %v3788
        %v3791 = vshrl.u32 %v3600, 16
        %v3793 = vshll.u32 %v3600, 16
        %v3795 = vrot.slane %v3793, 1
        %v3796 = vor.u32 %v3791, %v3795
        %v3798 = vshll.u32 %v3664, 16
        %v3800 = vrot.slane %v3798, 1
        %v3801 = vsel %vm1583, %v3796, %v3800
        %v3803 = vshrl.u32 %v3601, 16
        %v3805 = vshll.u32 %v3601, 16
        %v3807 = vrot.slane %v3805, 1
        %v3808 = vor.u32 %v3803, %v3807
        %v3810 = vshll.u32 %v3665, 16
        %v3812 = vrot.slane %v3810, 1
        %v3813 = vsel %vm1583, %v3808, %v3812
        %v3815 = vshrl.u32 %v3602, 16
        %v3817 = vshll.u32 %v3602, 16
        %v3819 = vrot.slane %v3817, 1
        %v3820 = vor.u32 %v3815, %v3819
        %v3822 = vshll.u32 %v3666, 16
        %v3824 = vrot.slane %v3822, 1
        %v3825 = vsel %vm1583, %v3820, %v3824
        %v3827 = vshrl.u32 %v3603, 16
        %v3829 = vshll.u32 %v3603, 16
        %v3831 = vrot.slane %v3829, 1
        %v3832 = vor.u32 %v3827, %v3831
        %v3834 = vshll.u32 %v3667, 16
        %v3836 = vrot.slane %v3834, 1
        %v3837 = vsel %vm1583, %v3832, %v3836
        %v3839 = vshrl.u32 %v3604, 16
        %v3841 = vshll.u32 %v3604, 16
        %v3843 = vrot.slane %v3841, 1
        %v3844 = vor.u32 %v3839, %v3843
        %v3846 = vshll.u32 %v3668, 16
        %v3848 = vrot.slane %v3846, 1
        %v3849 = vsel %vm1583, %v3844, %v3848
        %v3851 = vshrl.u32 %v3605, 16
        %v3853 = vshll.u32 %v3605, 16
        %v3855 = vrot.slane %v3853, 1
        %v3856 = vor.u32 %v3851, %v3855
        %v3858 = vshll.u32 %v3669, 16
        %v3860 = vrot.slane %v3858, 1
        %v3861 = vsel %vm1583, %v3856, %v3860
        %v3894 = vunpack.c.l.b16 %v3510
        %v3895 = vunpack.c.l.b16 %v3511
        %v3896 = vunpack.c.l.b16 %v3512
        %v3897 = vunpack.c.l.b16 %v3513
        %v3898 = vunpack.c.l.b16 %v3514
        %v3899 = vunpack.c.l.b16 %v3515
        %v3900 = vunpack.c.l.b16 %v3516
        %v3901 = vunpack.c.l.b16 %v3517
        %v3902 = vunpack.c.l.b16 %v3518
        %v3903 = vunpack.c.l.b16 %v3519
        %v3904 = vunpack.c.l.b16 %v3520
        %v3905 = vunpack.c.l.b16 %v3521
        %v3906 = vunpack.c.l.b16 %v3522
        %v3907 = vunpack.c.l.b16 %v3523
        %v3908 = vunpack.c.l.b16 %v3524
        %v3909 = vunpack.c.l.b16 %v3525
        %v3910 = vpack.c.b16 %v3559, %v3894
        %v3911 = vpack.c.b16 %v3561, %v3895
        %v3912 = vpack.c.b16 %v3563, %v3896
        %v3913 = vpack.c.b16 %v3565, %v3897
        %v3914 = vpack.c.b16 %v3567, %v3898
        %v3915 = vpack.c.b16 %v3569, %v3899
        %v3916 = vpack.c.b16 %v3571, %v3900
        %v3917 = vpack.c.b16 %v3573, %v3901
        %v3918 = vpack.c.b16 %v3575, %v3902
        %v3919 = vpack.c.b16 %v3577, %v3903
        %v3920 = vpack.c.b16 %v3579, %v3904
        %v3921 = vpack.c.b16 %v3581, %v3905
        %v3922 = vpack.c.b16 %v3583, %v3906
        %v3923 = vpack.c.b16 %v3585, %v3907
        %v3924 = vpack.c.b16 %v3587, %v3908
        %v3925 = vpack.c.b16 %v3589, %v3909
        %v3926 = vrot.slane %v3910, 1
        %v3927 = vrot.slane %v3654, 1
        %v3928 = vsel %vm1840, %v3926, %v3927
        %v3929 = vrot.slane %v3911, 1
        %v3930 = vrot.slane %v3655, 1
        %v3931 = vsel %vm1840, %v3929, %v3930
        %v3932 = vrot.slane %v3912, 1
        %v3933 = vrot.slane %v3656, 1
        %v3934 = vsel %vm1840, %v3932, %v3933
        %v3935 = vrot.slane %v3913, 1
        %v3936 = vrot.slane %v3657, 1
        %v3937 = vsel %vm1840, %v3935, %v3936
        %v3938 = vrot.slane %v3914, 1
        %v3939 = vrot.slane %v3658, 1
        %v3940 = vsel %vm1840, %v3938, %v3939
        %v3941 = vrot.slane %v3915, 1
        %v3942 = vrot.slane %v3659, 1
        %v3943 = vsel %vm1840, %v3941, %v3942
        %v3944 = vrot.slane %v3916, 1
        %v3945 = vrot.slane %v3660, 1
        %v3946 = vsel %vm1840, %v3944, %v3945
        %v3947 = vrot.slane %v3917, 1
        %v3948 = vrot.slane %v3661, 1
        %v3949 = vsel %vm1840, %v3947, %v3948
        %v3950 = vrot.slane %v3918, 1
        %v3951 = vrot.slane %v3662, 1
        %v3952 = vsel %vm1840, %v3950, %v3951
        %v3953 = vrot.slane %v3919, 1
        %v3954 = vrot.slane %v3663, 1
        %v3955 = vsel %vm1840, %v3953, %v3954
        %v3956 = vrot.slane %v3920, 1
        %v3957 = vrot.slane %v3664, 1
        %v3958 = vsel %vm1840, %v3956, %v3957
        %v3959 = vrot.slane %v3921, 1
        %v3960 = vrot.slane %v3665, 1
        %v3961 = vsel %vm1840, %v3959, %v3960
        %v3962 = vrot.slane %v3922, 1
        %v3963 = vrot.slane %v3666, 1
        %v3964 = vsel %vm1840, %v3962, %v3963
        %v3965 = vrot.slane %v3923, 1
        %v3966 = vrot.slane %v3667, 1
        %v3967 = vsel %vm1840, %v3965, %v3966
        %v3968 = vrot.slane %v3924, 1
        %v3969 = vrot.slane %v3668, 1
        %v3970 = vsel %vm1840, %v3968, %v3969
        %v3971 = vrot.slane %v3925, 1
        %v3972 = vrot.slane %v3669, 1
        %v3973 = vsel %vm1840, %v3971, %v3972
        %v3990 = vld [vmem:[#allocation8 + $0x180] sm:$0xf]
        %v3991 = vld [vmem:[#allocation8 + $0x184] sm:$0xf]
        %v3992 = vld [vmem:[#allocation8 + $0x188] sm:$0xf]
        %v3993 = vld [vmem:[#allocation8 + $0x18c] sm:$0xf]
        %v3994 = vld [vmem:[#allocation8 + $0x190] sm:$0xf]
        %v3995 = vld [vmem:[#allocation8 + $0x194] sm:$0xf]
        %v3996 = vld [vmem:[#allocation8 + $0x198] sm:$0xf]
        %v3997 = vld [vmem:[#allocation8 + $0x19c] sm:$0xf]
        %v3998 = vld [vmem:[#allocation8 + $0x1a0] sm:$0xf]
        %v3999 = vld [vmem:[#allocation8 + $0x1a4] sm:$0xf]
        %v4000 = vld [vmem:[#allocation8 + $0x1a8] sm:$0xf]
        %v4001 = vld [vmem:[#allocation8 + $0x1ac] sm:$0xf]
        %v4002 = vld [vmem:[#allocation8 + $0x1b0] sm:$0xf]
        %v4003 = vld [vmem:[#allocation8 + $0x1b4] sm:$0xf]
        %v4004 = vld [vmem:[#allocation8 + $0x1b8] sm:$0xf]
        %v4005 = vld [vmem:[#allocation8 + $0x1bc] sm:$0xf]
        %v4006 = vld [vmem:[#allocation8 + $0x1c0] sm:$0xf]
        %v4007 = vld [vmem:[#allocation8 + $0x1c4] sm:$0xf]
        %v4008 = vld [vmem:[#allocation8 + $0x1c8] sm:$0xf]
        %v4009 = vld [vmem:[#allocation8 + $0x1cc] sm:$0xf]
        %v4010 = vld [vmem:[#allocation8 + $0x1d0] sm:$0xf]
        %v4011 = vld [vmem:[#allocation8 + $0x1d4] sm:$0xf]
        %v4012 = vld [vmem:[#allocation8 + $0x1d8] sm:$0xf]
        %v4013 = vld [vmem:[#allocation8 + $0x1dc] sm:$0xf]
        %v4014 = vld [vmem:[#allocation8 + $0x1e0] sm:$0xf]
        %v4015 = vld [vmem:[#allocation8 + $0x1e4] sm:$0xf]
        %v4016 = vld [vmem:[#allocation8 + $0x1e8] sm:$0xf]
        %v4017 = vld [vmem:[#allocation8 + $0x1ec] sm:$0xf]
        %v4018 = vld [vmem:[#allocation8 + $0x1f0] sm:$0xf]
        %v4019 = vld [vmem:[#allocation8 + $0x1f4] sm:$0xf]
        %v4020 = vld [vmem:[#allocation8 + $0x1f8] sm:$0xf]
        %v4021 = vld [vmem:[#allocation8 + $0x1fc] sm:$0xf]
        %v4022 = vld [vmem:[#allocation8 + $0x200] sm:$0xf]
        %v4023 = vld [vmem:[#allocation8 + $0x204] sm:$0xf]
        %v4024 = vld [vmem:[#allocation8 + $0x208] sm:$0xf]
        %v4025 = vld [vmem:[#allocation8 + $0x20c] sm:$0xf]
        %v4026 = vld [vmem:[#allocation8 + $0x210] sm:$0xf]
        %v4027 = vld [vmem:[#allocation8 + $0x214] sm:$0xf]
        %v4028 = vld [vmem:[#allocation8 + $0x218] sm:$0xf]
        %v4029 = vld [vmem:[#allocation8 + $0x21c] sm:$0xf]
        %v4030 = vld [vmem:[#allocation8 + $0x220] sm:$0xf]
        %v4031 = vld [vmem:[#allocation8 + $0x224] sm:$0xf]
        %v4032 = vld [vmem:[#allocation8 + $0x228] sm:$0xf]
        %v4033 = vld [vmem:[#allocation8 + $0x22c] sm:$0xf]
        %v4034 = vld [vmem:[#allocation8 + $0x230] sm:$0xf]
        %v4035 = vld [vmem:[#allocation8 + $0x234] sm:$0xf]
        %v4036 = vld [vmem:[#allocation8 + $0x238] sm:$0xf]
        %v4037 = vld [vmem:[#allocation8 + $0x23c] sm:$0xf]
        %v4086 = vunpack.c.l.b16 %v3990
        %v4087 = vunpack.c.l.b16 %v3991
        %v4088 = vunpack.c.l.b16 %v3992
        %v4089 = vunpack.c.l.b16 %v3993
        %v4090 = vunpack.c.l.b16 %v3994
        %v4091 = vunpack.c.l.b16 %v3995
        %v4092 = vunpack.c.l.b16 %v3996
        %v4093 = vunpack.c.l.b16 %v3997
        %v4094 = vunpack.c.l.b16 %v3998
        %v4095 = vunpack.c.l.b16 %v3999
        %v4096 = vunpack.c.l.b16 %v4000
        %v4097 = vunpack.c.l.b16 %v4001
        %v4098 = vunpack.c.l.b16 %v4002
        %v4099 = vunpack.c.l.b16 %v4003
        %v4100 = vunpack.c.l.b16 %v4004
        %v4101 = vunpack.c.l.b16 %v4005
        %v4102 = vunpack.c.l.b16 %v4006
        %v4103 = vunpack.c.l.b16 %v4007
        %v4104 = vunpack.c.l.b16 %v4008
        %v4105 = vunpack.c.l.b16 %v4009
        %v4106 = vunpack.c.l.b16 %v4010
        %v4107 = vunpack.c.l.b16 %v4011
        %v4108 = vunpack.c.l.b16 %v4012
        %v4109 = vunpack.c.l.b16 %v4013
        %v4110 = vunpack.c.l.b16 %v4014
        %v4111 = vunpack.c.l.b16 %v4015
        %v4112 = vunpack.c.l.b16 %v4016
        %v4113 = vunpack.c.l.b16 %v4017
        %v4114 = vunpack.c.l.b16 %v4018
        %v4115 = vunpack.c.l.b16 %v4019
        %v4116 = vunpack.c.l.b16 %v4020
        %v4117 = vunpack.c.l.b16 %v4021
        %v4118 = vunpack.c.l.b16 %v4022
        %v4119 = vunpack.c.l.b16 %v4023
        %v4120 = vunpack.c.l.b16 %v4024
        %v4121 = vunpack.c.l.b16 %v4025
        %v4122 = vunpack.c.l.b16 %v4026
        %v4123 = vunpack.c.l.b16 %v4027
        %v4124 = vunpack.c.l.b16 %v4028
        %v4125 = vunpack.c.l.b16 %v4029
        %v4126 = vunpack.c.l.b16 %v4030
        %v4127 = vunpack.c.l.b16 %v4031
        %v4128 = vunpack.c.l.b16 %v4032
        %v4129 = vunpack.c.l.b16 %v4033
        %v4130 = vunpack.c.l.b16 %v4034
        %v4131 = vunpack.c.l.b16 %v4035
        %v4132 = vunpack.c.l.b16 %v4036
        %v4133 = vunpack.c.l.b16 %v4037
        %v4134 = vpack.c.b16 %v4087, %v4086
        %v4135 = vpack.c.b16 %v4089, %v4088
        %v4136 = vpack.c.b16 %v4091, %v4090
        %v4137 = vpack.c.b16 %v4093, %v4092
        %v4138 = vpack.c.b16 %v4095, %v4094
        %v4139 = vpack.c.b16 %v4097, %v4096
        %v4140 = vpack.c.b16 %v4099, %v4098
        %v4141 = vpack.c.b16 %v4101, %v4100
        %v4142 = vpack.c.b16 %v4103, %v4102
        %v4143 = vpack.c.b16 %v4105, %v4104
        %v4144 = vpack.c.b16 %v4107, %v4106
        %v4145 = vpack.c.b16 %v4109, %v4108
        %v4146 = vpack.c.b16 %v4111, %v4110
        %v4147 = vpack.c.b16 %v4113, %v4112
        %v4148 = vpack.c.b16 %v4115, %v4114
        %v4149 = vpack.c.b16 %v4117, %v4116
        %v4150 = vpack.c.b16 %v4119, %v4118
        %v4151 = vpack.c.b16 %v4121, %v4120
        %v4152 = vpack.c.b16 %v4123, %v4122
        %v4153 = vpack.c.b16 %v4125, %v4124
        %v4154 = vpack.c.b16 %v4127, %v4126
        %v4155 = vpack.c.b16 %v4129, %v4128
        %v4156 = vpack.c.b16 %v4131, %v4130
        %v4157 = vpack.c.b16 %v4133, %v4132
        %4182 = vmatprep.subr.bf16.mxu0 0
        %4183 = vmatpush1.bf16.msra.mxu0 %v4134
        %4184 = vmatprep.subr.bf16.mxu0 0
        %4185 = vmatpush1.bf16.msra.mxu0 %v4135
        %4186 = vmatprep.subr.bf16.mxu0 0
        %4187 = vmatpush1.bf16.msra.mxu0 %v4136
        %4188 = vmatprep.subr.bf16.mxu0 0
        %4189 = vmatpush1.bf16.msra.mxu0 %v4137
        %4190 = vmatprep.subr.bf16.mxu0 0
        %4191 = vmatpush1.bf16.msra.mxu0 %v4138
        %4192 = vmatprep.subr.bf16.mxu0 0
        %4193 = vmatpush1.bf16.msra.mxu0 %v4139
        %4194 = vmatprep.subr.bf16.mxu0 0
        %4195 = vmatpush1.bf16.msra.mxu0 %v4140
        %4196 = vmatprep.subr.bf16.mxu0 0
        %4197 = vmatpush1.bf16.msra.mxu0 %v4141
        %4198 = vmatprep.subr.bf16.mxu0 0
        %4199 = vmatpush1.bf16.msra.mxu0 %v4142
        %4200 = vmatprep.subr.bf16.mxu0 0
        %4201 = vmatpush1.bf16.msra.mxu0 %v4143
        %4202 = vmatprep.subr.bf16.mxu0 0
        %4203 = vmatpush1.bf16.msra.mxu0 %v4144
        %4204 = vmatprep.subr.bf16.mxu0 0
        %4205 = vmatpush1.bf16.msra.mxu0 %v4145
        %4206 = vmatprep.subr.bf16.mxu0 0
        %4207 = vmatpush1.bf16.msra.mxu0 %v4146
        %4208 = vmatprep.subr.bf16.mxu0 0
        %4209 = vmatpush1.bf16.msra.mxu0 %v4147
        %4210 = vmatprep.subr.bf16.mxu0 0
        %4211 = vmatpush1.bf16.msra.mxu0 %v4148
        %4212 = vmatprep.subr.bf16.mxu0 0
        %4213 = vmatpush1.bf16.msra.mxu0 %v4149
        %4214 = vmatprep.mubr.bf16.mxu0 %v3681
        %4215 = vmatmul.mubr.bf16.gmra.mrb[0].mxu0 %v3590
        %v4216 = vpop.f32.mrb[0].mxu0
        %v4217 = vadd.f32 0.0, %v4216
        %v4218 = vpop.f32.mrb[0].mxu0
        %v4219 = vpop.f32.mrb[0].mxu0
        %v4220 = vadd.f32 0.0, %v4219
        %v4221 = vpop.f32.mrb[0].mxu0
        %4222 = vmatprep.mubr.bf16.mxu0 %v3693
        %4223 = vmatmul.mubr.bf16.gmra.mrb[0].mxu0 %v3591
        %v4224 = vpop.f32.mrb[0].mxu0
        %v4225 = vadd.f32 0.0, %v4224
        %v4226 = vpop.f32.mrb[0].mxu0
        %v4227 = vpop.f32.mrb[0].mxu0
        %v4228 = vadd.f32 0.0, %v4227
        %v4229 = vpop.f32.mrb[0].mxu0
        %4230 = vmatprep.mubr.bf16.mxu0 %v3705
        %4231 = vmatmul.mubr.bf16.gmra.mrb[0].mxu0 %v3592
        %v4232 = vpop.f32.mrb[0].mxu0
        %v4233 = vadd.f32 0.0, %v4232
        %v4234 = vpop.f32.mrb[0].mxu0
        %v4235 = vpop.f32.mrb[0].mxu0
        %v4236 = vadd.f32 0.0, %v4235
        %v4237 = vpop.f32.mrb[0].mxu0
        %4238 = vmatprep.mubr.bf16.mxu0 %v3717
        %4239 = vmatmul.mubr.bf16.gmra.mrb[0].mxu0 %v3593
        %v4240 = vpop.f32.mrb[0].mxu0
        %v4241 = vadd.f32 0.0, %v4240
        %v4242 = vpop.f32.mrb[0].mxu0
        %v4243 = vpop.f32.mrb[0].mxu0
        %v4244 = vadd.f32 0.0, %v4243
        %v4245 = vpop.f32.mrb[0].mxu0
        %4246 = vmatprep.mubr.bf16.mxu0 %v3729
        %4247 = vmatmul.mubr.bf16.gmra.mrb[0].mxu0 %v3594
        %v4248 = vpop.f32.mrb[0].mxu0
        %v4249 = vadd.f32 0.0, %v4248
        %v4250 = vpop.f32.mrb[0].mxu0
        %v4251 = vpop.f32.mrb[0].mxu0
        %v4252 = vadd.f32 0.0, %v4251
        %v4253 = vpop.f32.mrb[0].mxu0
        %4254 = vmatprep.mubr.bf16.mxu0 %v3741
        %4255 = vmatmul.mubr.bf16.gmra.mrb[0].mxu0 %v3595
        %v4256 = vpop.f32.mrb[0].mxu0
        %v4257 = vadd.f32 0.0, %v4256
        %v4258 = vpop.f32.mrb[0].mxu0
        %v4259 = vpop.f32.mrb[0].mxu0
        %v4260 = vadd.f32 0.0, %v4259
        %v4261 = vpop.f32.mrb[0].mxu0
        %4262 = vmatprep.mubr.bf16.mxu0 %v3753
        %4263 = vmatmul.mubr.bf16.gmra.mrb[0].mxu0 %v3596
        %v4264 = vpop.f32.mrb[0].mxu0
        %v4265 = vadd.f32 0.0, %v4264
        %v4266 = vpop.f32.mrb[0].mxu0
        %v4267 = vpop.f32.mrb[0].mxu0
        %v4268 = vadd.f32 0.0, %v4267
        %v4269 = vpop.f32.mrb[0].mxu0
        %4270 = vmatprep.mubr.bf16.mxu0 %v3765
        %4271 = vmatmul.mubr.bf16.gmra.mrb[0].mxu0 %v3597
        %v4272 = vpop.f32.mrb[0].mxu0
        %v4273 = vadd.f32 0.0, %v4272
        %v4274 = vpop.f32.mrb[0].mxu0
        %v4275 = vpop.f32.mrb[0].mxu0
        %v4276 = vadd.f32 0.0, %v4275
        %v4277 = vpop.f32.mrb[0].mxu0
        %4278 = vmatprep.mubr.bf16.mxu0 %v3777
        %4279 = vmatmul.mubr.bf16.gmra.mrb[0].mxu0 %v3598
        %v4280 = vpop.f32.mrb[0].mxu0
        %v4281 = vadd.f32 0.0, %v4280
        %v4282 = vpop.f32.mrb[0].mxu0
        %v4283 = vpop.f32.mrb[0].mxu0
        %v4284 = vadd.f32 0.0, %v4283
        %v4285 = vpop.f32.mrb[0].mxu0
        %4286 = vmatprep.mubr.bf16.mxu0 %v3789
        %4287 = vmatmul.mubr.bf16.gmra.mrb[0].mxu0 %v3599
        %v4288 = vpop.f32.mrb[0].mxu0
        %v4289 = vadd.f32 0.0, %v4288
        %v4290 = vpop.f32.mrb[0].mxu0
        %v4291 = vpop.f32.mrb[0].mxu0
        %v4292 = vadd.f32 0.0, %v4291
        %v4293 = vpop.f32.mrb[0].mxu0
        %4294 = vmatprep.mubr.bf16.mxu0 %v3801
        %4295 = vmatmul.mubr.bf16.gmra.mrb[0].mxu0 %v3600
        %v4296 = vpop.f32.mrb[0].mxu0
        %v4297 = vadd.f32 0.0, %v4296
        %v4298 = vpop.f32.mrb[0].mxu0
        %v4299 = vpop.f32.mrb[0].mxu0
        %v4300 = vadd.f32 0.0, %v4299
        %v4301 = vpop.f32.mrb[0].mxu0
        %4302 = vmatprep.mubr.bf16.mxu0 %v3813
        %4303 = vmatmul.mubr.bf16.gmra.mrb[0].mxu0 %v3601
        %v4304 = vpop.f32.mrb[0].mxu0
        %v4305 = vadd.f32 0.0, %v4304
        %v4306 = vpop.f32.mrb[0].mxu0
        %v4307 = vpop.f32.mrb[0].mxu0
        %v4308 = vadd.f32 0.0, %v4307
        %v4309 = vpop.f32.mrb[0].mxu0
        %4310 = vmatprep.mubr.bf16.mxu0 %v3825
        %4311 = vmatmul.mubr.bf16.gmra.mrb[0].mxu0 %v3602
        %v4312 = vpop.f32.mrb[0].mxu0
        %v4313 = vadd.f32 0.0, %v4312
        %v4314 = vpop.f32.mrb[0].mxu0
        %v4315 = vpop.f32.mrb[0].mxu0
        %v4316 = vadd.f32 0.0, %v4315
        %v4317 = vpop.f32.mrb[0].mxu0
        %4318 = vmatprep.mubr.bf16.mxu0 %v3837
        %4319 = vmatmul.mubr.bf16.gmra.mrb[0].mxu0 %v3603
        %v4320 = vpop.f32.mrb[0].mxu0
        %v4321 = vadd.f32 0.0, %v4320
        %v4322 = vpop.f32.mrb[0].mxu0
        %v4323 = vpop.f32.mrb[0].mxu0
        %v4324 = vadd.f32 0.0, %v4323
        %v4325 = vpop.f32.mrb[0].mxu0
        %4326 = vmatprep.mubr.bf16.mxu0 %v3849
        %4327 = vmatmul.mubr.bf16.gmra.mrb[0].mxu0 %v3604
        %v4328 = vpop.f32.mrb[0].mxu0
        %v4329 = vadd.f32 0.0, %v4328
        %v4330 = vpop.f32.mrb[0].mxu0
        %v4331 = vpop.f32.mrb[0].mxu0
        %v4332 = vadd.f32 0.0, %v4331
        %v4333 = vpop.f32.mrb[0].mxu0
        %4334 = vmatprep.mubr.bf16.mxu0 %v3861
        %4335 = vmatmul.mubr.bf16.gmra.mrb[0].mxu0 %v3605
        %v4336 = vpop.f32.mrb[0].mxu0
        %v4337 = vadd.f32 0.0, %v4336
        %v4338 = vpop.f32.mrb[0].mxu0
        %v4339 = vpop.f32.mrb[0].mxu0
        %v4340 = vadd.f32 0.0, %v4339
        %v4341 = vpop.f32.mrb[0].mxu0
        %4342 = vdwg.mxu0
        %4343 = vmatprep.subr.bf16.mxu0 0
        %4344 = vmatpush1.bf16.msra.mxu0 %v4150
        %4345 = vmatprep.subr.bf16.mxu0 0
        %4346 = vmatpush1.bf16.msra.mxu0 %v4151
        %4347 = vmatprep.subr.bf16.mxu0 0
        %4348 = vmatpush1.bf16.msra.mxu0 %v4152
        %4349 = vmatprep.subr.bf16.mxu0 0
        %4350 = vmatpush1.bf16.msra.mxu0 %v4153
        %4351 = vmatprep.subr.bf16.mxu0 0
        %4352 = vmatpush1.bf16.msra.mxu0 %v4154
        %4353 = vmatprep.subr.bf16.mxu0 0
        %4354 = vmatpush1.bf16.msra.mxu0 %v4155
        %4355 = vmatprep.subr.bf16.mxu0 0
        %4356 = vmatpush1.bf16.msra.mxu0 %v4156
        %4357 = vmatprep.subr.bf16.mxu0 0
        %4358 = vmatpush1.bf16.msra.mxu0 %v4157
        %4359 = vmatprep.subr.bf16.mxu0 0
        %4360 = vmatpush1.bf16.msra.mxu0 0
        %4361 = vmatprep.subr.bf16.mxu0 0
        %4362 = vmatpush1.bf16.msra.mxu0 0
        %4363 = vmatprep.subr.bf16.mxu0 0
        %4364 = vmatpush1.bf16.msra.mxu0 0
        %4365 = vmatprep.subr.bf16.mxu0 0
        %4366 = vmatpush1.bf16.msra.mxu0 0
        %4367 = vmatprep.subr.bf16.mxu0 0
        %4368 = vmatpush1.bf16.msra.mxu0 0
        %4369 = vmatprep.subr.bf16.mxu0 0
        %4370 = vmatpush1.bf16.msra.mxu0 0
        %4371 = vmatprep.subr.bf16.mxu0 0
        %4372 = vmatpush1.bf16.msra.mxu0 0
        %4373 = vmatprep.subr.bf16.mxu0 0
        %4374 = vmatpush1.bf16.msra.mxu0 0
        %4375 = vmatprep.mubr.bf16.mxu0 0
        %4376 = vmatmul.mubr.bf16.gmra.mrb[0].mxu0 %v3928
        %v4377 = vpop.f32.mrb[0].mxu0
        %v4378 = vadd.f32 %v4217, %v4377
        %v4379 = vpop.f32.mrb[0].mxu0
        %v4380 = vpop.f32.mrb[0].mxu0
        %v4381 = vadd.f32 %v4220, %v4380
        %v4382 = vpop.f32.mrb[0].mxu0
        %4383 = vmatprep.mubr.bf16.mxu0 0
        %4384 = vmatmul.mubr.bf16.gmra.mrb[0].mxu0 %v3931
        %v4385 = vpop.f32.mrb[0].mxu0
        %v4386 = vadd.f32 %v4225, %v4385
        %v4387 = vpop.f32.mrb[0].mxu0
        %v4388 = vpop.f32.mrb[0].mxu0
        %v4389 = vadd.f32 %v4228, %v4388
        %v4390 = vpop.f32.mrb[0].mxu0
        %4391 = vmatprep.mubr.bf16.mxu0 0
        %4392 = vmatmul.mubr.bf16.gmra.mrb[0].mxu0 %v3934
        %v4393 = vpop.f32.mrb[0].mxu0
        %v4394 = vadd.f32 %v4233, %v4393
        %v4395 = vpop.f32.mrb[0].mxu0
        %v4396 = vpop.f32.mrb[0].mxu0
        %v4397 = vadd.f32 %v4236, %v4396
        %v4398 = vpop.f32.mrb[0].mxu0
        %4399 = vmatprep.mubr.bf16.mxu0 0
        %4400 = vmatmul.mubr.bf16.gmra.mrb[0].mxu0 %v3937
        %v4401 = vpop.f32.mrb[0].mxu0
        %v4402 = vadd.f32 %v4241, %v4401
        %v4403 = vpop.f32.mrb[0].mxu0
        %v4404 = vpop.f32.mrb[0].mxu0
        %v4405 = vadd.f32 %v4244, %v4404
        %v4406 = vpop.f32.mrb[0].mxu0
        %4407 = vmatprep.mubr.bf16.mxu0 0
        %4408 = vmatmul.mubr.bf16.gmra.mrb[0].mxu0 %v3940
        %v4409 = vpop.f32.mrb[0].mxu0
        %v4410 = vadd.f32 %v4249, %v4409
        %v4411 = vpop.f32.mrb[0].mxu0
        %v4412 = vpop.f32.mrb[0].mxu0
        %v4413 = vadd.f32 %v4252, %v4412
        %v4414 = vpop.f32.mrb[0].mxu0
        %4415 = vmatprep.mubr.bf16.mxu0 0
        %4416 = vmatmul.mubr.bf16.gmra.mrb[0].mxu0 %v3943
        %v4417 = vpop.f32.mrb[0].mxu0
        %v4418 = vadd.f32 %v4257, %v4417
        %v4419 = vpop.f32.mrb[0].mxu0
        %v4420 = vpop.f32.mrb[0].mxu0
        %v4421 = vadd.f32 %v4260, %v4420
        %v4422 = vpop.f32.mrb[0].mxu0
        %4423 = vmatprep.mubr.bf16.mxu0 0
        %4424 = vmatmul.mubr.bf16.gmra.mrb[0].mxu0 %v3946
        %v4425 = vpop.f32.mrb[0].mxu0
        %v4426 = vadd.f32 %v4265, %v4425
        %v4427 = vpop.f32.mrb[0].mxu0
        %v4428 = vpop.f32.mrb[0].mxu0
        %v4429 = vadd.f32 %v4268, %v4428
        %v4430 = vpop.f32.mrb[0].mxu0
        %4431 = vmatprep.mubr.bf16.mxu0 0
        %4432 = vmatmul.mubr.bf16.gmra.mrb[0].mxu0 %v3949
        %v4433 = vpop.f32.mrb[0].mxu0
        %v4434 = vadd.f32 %v4273, %v4433
        %v4435 = vpop.f32.mrb[0].mxu0
        %v4436 = vpop.f32.mrb[0].mxu0
        %v4437 = vadd.f32 %v4276, %v4436
        %v4438 = vpop.f32.mrb[0].mxu0
        %4439 = vmatprep.mubr.bf16.mxu0 0
        %4440 = vmatmul.mubr.bf16.gmra.mrb[0].mxu0 %v3952
        %v4441 = vpop.f32.mrb[0].mxu0
        %v4442 = vadd.f32 %v4281, %v4441
        %v4443 = vpop.f32.mrb[0].mxu0
        %v4444 = vpop.f32.mrb[0].mxu0
        %v4445 = vadd.f32 %v4284, %v4444
        %v4446 = vpop.f32.mrb[0].mxu0
        %4447 = vmatprep.mubr.bf16.mxu0 0
        %4448 = vmatmul.mubr.bf16.gmra.mrb[0].mxu0 %v3955
        %v4449 = vpop.f32.mrb[0].mxu0
        %v4450 = vadd.f32 %v4289, %v4449
        %v4451 = vpop.f32.mrb[0].mxu0
        %v4452 = vpop.f32.mrb[0].mxu0
        %v4453 = vadd.f32 %v4292, %v4452
        %v4454 = vpop.f32.mrb[0].mxu0
        %4455 = vmatprep.mubr.bf16.mxu0 0
        %4456 = vmatmul.mubr.bf16.gmra.mrb[0].mxu0 %v3958
        %v4457 = vpop.f32.mrb[0].mxu0
        %v4458 = vadd.f32 %v4297, %v4457
        %v4459 = vpop.f32.mrb[0].mxu0
        %v4460 = vpop.f32.mrb[0].mxu0
        %v4461 = vadd.f32 %v4300, %v4460
        %v4462 = vpop.f32.mrb[0].mxu0
        %4463 = vmatprep.mubr.bf16.mxu0 0
        %4464 = vmatmul.mubr.bf16.gmra.mrb[0].mxu0 %v3961
        %v4465 = vpop.f32.mrb[0].mxu0
        %v4466 = vadd.f32 %v4305, %v4465
        %v4467 = vpop.f32.mrb[0].mxu0
        %v4468 = vpop.f32.mrb[0].mxu0
        %v4469 = vadd.f32 %v4308, %v4468
        %v4470 = vpop.f32.mrb[0].mxu0
        %4471 = vmatprep.mubr.bf16.mxu0 0
        %4472 = vmatmul.mubr.bf16.gmra.mrb[0].mxu0 %v3964
        %v4473 = vpop.f32.mrb[0].mxu0
        %v4474 = vadd.f32 %v4313, %v4473
        %v4475 = vpop.f32.mrb[0].mxu0
        %v4476 = vpop.f32.mrb[0].mxu0
        %v4477 = vadd.f32 %v4316, %v4476
        %v4478 = vpop.f32.mrb[0].mxu0
        %4479 = vmatprep.mubr.bf16.mxu0 0
        %4480 = vmatmul.mubr.bf16.gmra.mrb[0].mxu0 %v3967
        %v4481 = vpop.f32.mrb[0].mxu0
        %v4482 = vadd.f32 %v4321, %v4481
        %v4483 = vpop.f32.mrb[0].mxu0
        %v4484 = vpop.f32.mrb[0].mxu0
        %v4485 = vadd.f32 %v4324, %v4484
        %v4486 = vpop.f32.mrb[0].mxu0
        %4487 = vmatprep.mubr.bf16.mxu0 0
        %4488 = vmatmul.mubr.bf16.gmra.mrb[0].mxu0 %v3970
        %v4489 = vpop.f32.mrb[0].mxu0
        %v4490 = vadd.f32 %v4329, %v4489
        %v4491 = vpop.f32.mrb[0].mxu0
        %v4492 = vpop.f32.mrb[0].mxu0
        %v4493 = vadd.f32 %v4332, %v4492
        %v4494 = vpop.f32.mrb[0].mxu0
        %4495 = vmatprep.mubr.bf16.mxu0 0
        %4496 = vmatmul.mubr.bf16.gmra.mrb[0].mxu0 %v3973
        %v4497 = vpop.f32.mrb[0].mxu0
        %v4498 = vadd.f32 %v4337, %v4497
        %v4499 = vpop.f32.mrb[0].mxu0
        %v4500 = vpop.f32.mrb[0].mxu0
        %v4501 = vadd.f32 %v4340, %v4500
        %v4502 = vpop.f32.mrb[0].mxu0
        %4503 = vdwg.mxu0
        %v4504 = vadd.f32 %v3335, %v4378
        %v4505 = vadd.f32 %v3338, %v4381
        %v4506 = vadd.f32 %v3343, %v4386
        %v4507 = vadd.f32 %v3346, %v4389
        %v4508 = vadd.f32 %v3351, %v4394
        %v4509 = vadd.f32 %v3354, %v4397
        %v4510 = vadd.f32 %v3359, %v4402
        %v4511 = vadd.f32 %v3362, %v4405
        %v4512 = vadd.f32 %v3367, %v4410
        %v4513 = vadd.f32 %v3370, %v4413
        %v4514 = vadd.f32 %v3375, %v4418
        %v4515 = vadd.f32 %v3378, %v4421
        %v4516 = vadd.f32 %v3383, %v4426
        %v4517 = vadd.f32 %v3386, %v4429
        %v4518 = vadd.f32 %v3391, %v4434
        %v4519 = vadd.f32 %v3394, %v4437
        %v4520 = vadd.f32 %v3399, %v4442
        %v4521 = vadd.f32 %v3402, %v4445
        %v4522 = vadd.f32 %v3407, %v4450
        %v4523 = vadd.f32 %v3410, %v4453
        %v4524 = vadd.f32 %v3415, %v4458
        %v4525 = vadd.f32 %v3418, %v4461
        %v4526 = vadd.f32 %v3423, %v4466
        %v4527 = vadd.f32 %v3426, %v4469
        %v4528 = vadd.f32 %v3431, %v4474
        %v4529 = vadd.f32 %v3434, %v4477
        %v4530 = vadd.f32 %v3439, %v4482
        %v4531 = vadd.f32 %v3442, %v4485
        %v4532 = vadd.f32 %v3447, %v4490
        %v4533 = vadd.f32 %v3450, %v4493
        %v4534 = vadd.f32 %v3455, %v4498
        %v4535 = vadd.f32 %v3458, %v4501
        %v4536 = vld [vmem:[%s4] sm:$0x1]
        %v4538 = vlaneseq
        %v4539 = vshrl.u32 %v4538, 7
        %v4540 = vsub.s32 0, %v4539
        %v4541 = vrot.slane %v4536, %v4540
        %v4543 = vadd.f32 %v4504, %v4541
        %v4544 = vadd.f32 %v4505, %v4541
        %v4545 = vadd.f32 %v4506, %v4541
        %v4546 = vadd.f32 %v4507, %v4541
        %v4547 = vadd.f32 %v4508, %v4541
        %v4548 = vadd.f32 %v4509, %v4541
        %v4549 = vadd.f32 %v4510, %v4541
        %v4550 = vadd.f32 %v4511, %v4541
        %v4551 = vadd.f32 %v4512, %v4541
        %v4552 = vadd.f32 %v4513, %v4541
        %v4553 = vadd.f32 %v4514, %v4541
        %v4554 = vadd.f32 %v4515, %v4541
        %v4555 = vadd.f32 %v4516, %v4541
        %v4556 = vadd.f32 %v4517, %v4541
        %v4557 = vadd.f32 %v4518, %v4541
        %v4558 = vadd.f32 %v4519, %v4541
        %v4559 = vadd.f32 %v4520, %v4541
        %v4560 = vadd.f32 %v4521, %v4541
        %v4561 = vadd.f32 %v4522, %v4541
        %v4562 = vadd.f32 %v4523, %v4541
        %v4563 = vadd.f32 %v4524, %v4541
        %v4564 = vadd.f32 %v4525, %v4541
        %v4565 = vadd.f32 %v4526, %v4541
        %v4566 = vadd.f32 %v4527, %v4541
        %v4567 = vadd.f32 %v4528, %v4541
        %v4568 = vadd.f32 %v4529, %v4541
        %v4569 = vadd.f32 %v4530, %v4541
        %v4570 = vadd.f32 %v4531, %v4541
        %v4571 = vadd.f32 %v4532, %v4541
        %v4572 = vadd.f32 %v4533, %v4541
        %v4573 = vadd.f32 %v4534, %v4541
        %v4574 = vadd.f32 %v4535, %v4541
        %v4575 = vmax.f32 %v4543, 0.0
        %v4576 = vmax.f32 %v4544, 0.0
        %v4577 = vmax.f32 %v4545, 0.0
        %v4578 = vmax.f32 %v4546, 0.0
        %v4579 = vmax.f32 %v4547, 0.0
        %v4580 = vmax.f32 %v4548, 0.0
        %v4581 = vmax.f32 %v4549, 0.0
        %v4582 = vmax.f32 %v4550, 0.0
        %v4583 = vmax.f32 %v4551, 0.0
        %v4584 = vmax.f32 %v4552, 0.0
        %v4585 = vmax.f32 %v4553, 0.0
        %v4586 = vmax.f32 %v4554, 0.0
        %v4587 = vmax.f32 %v4555, 0.0
        %v4588 = vmax.f32 %v4556, 0.0
        %v4589 = vmax.f32 %v4557, 0.0
        %v4590 = vmax.f32 %v4558, 0.0
        %v4591 = vmax.f32 %v4559, 0.0
        %v4592 = vmax.f32 %v4560, 0.0
        %v4593 = vmax.f32 %v4561, 0.0
        %v4594 = vmax.f32 %v4562, 0.0
        %v4595 = vmax.f32 %v4563, 0.0
        %v4596 = vmax.f32 %v4564, 0.0
        %v4597 = vmax.f32 %v4565, 0.0
        %v4598 = vmax.f32 %v4566, 0.0
        %v4599 = vmax.f32 %v4567, 0.0
        %v4600 = vmax.f32 %v4568, 0.0
        %v4601 = vmax.f32 %v4569, 0.0
        %v4602 = vmax.f32 %v4570, 0.0
        %v4603 = vmax.f32 %v4571, 0.0
        %v4604 = vmax.f32 %v4572, 0.0
        %v4605 = vmax.f32 %v4573, 0.0
        %v4606 = vmax.f32 %v4574, 0.0
        %v4607 = vpack.c.bf16 %v4576, %v4575
        %v4608 = vpack.c.bf16 %v4578, %v4577
        %v4609 = vpack.c.bf16 %v4580, %v4579
        %v4610 = vpack.c.bf16 %v4582, %v4581
        %v4611 = vpack.c.bf16 %v4584, %v4583
        %v4612 = vpack.c.bf16 %v4586, %v4585
        %v4613 = vpack.c.bf16 %v4588, %v4587
        %v4614 = vpack.c.bf16 %v4590, %v4589
        %v4615 = vpack.c.bf16 %v4592, %v4591
        %v4616 = vpack.c.bf16 %v4594, %v4593
        %v4617 = vpack.c.bf16 %v4596, %v4595
        %v4618 = vpack.c.bf16 %v4598, %v4597
        %v4619 = vpack.c.bf16 %v4600, %v4599
        %v4620 = vpack.c.bf16 %v4602, %v4601
        %v4621 = vpack.c.bf16 %v4604, %v4603
        %v4622 = vpack.c.bf16 %v4606, %v4605
        %v4623 = vld [vmem:[#allocation9] sm:$0xf]
        %v4624 = vld [vmem:[#allocation9 + $0x4] sm:$0xf]
        %v4625 = vld [vmem:[#allocation9 + $0x8] sm:$0xf]
        %v4626 = vld [vmem:[#allocation9 + $0xc] sm:$0xf]
        %v4627 = vld [vmem:[#allocation9 + $0x10] sm:$0xf]
        %v4628 = vld [vmem:[#allocation9 + $0x14] sm:$0xf]
        %v4629 = vld [vmem:[#allocation9 + $0x18] sm:$0xf]
        %v4630 = vld [vmem:[#allocation9 + $0x1c] sm:$0xf]
        %v4631 = vld [vmem:[#allocation9 + $0x20] sm:$0xf]
        %v4632 = vld [vmem:[#allocation9 + $0x24] sm:$0xf]
        %v4633 = vld [vmem:[#allocation9 + $0x28] sm:$0xf]
        %v4634 = vld [vmem:[#allocation9 + $0x2c] sm:$0xf]
        %v4635 = vld [vmem:[#allocation9 + $0x30] sm:$0xf]
        %v4636 = vld [vmem:[#allocation9 + $0x34] sm:$0xf]
        %v4637 = vld [vmem:[#allocation9 + $0x38] sm:$0xf]
        %v4638 = vld [vmem:[#allocation9 + $0x3c] sm:$0xf]
        %v4639 = vld [vmem:[%s6] sm:$0x1]
        %v4641 = vlaneseq
        %v4642 = vshrl.u32 %v4641, 7
        %v4643 = vsub.s32 0, %v4642
        %v4644 = vrot.slane %v4639, %v4643
        %v4662 = vunpack.c.l.b16 %v4623
        %v4663 = vunpack.c.l.b16 %v4624
        %v4664 = vunpack.c.l.b16 %v4625
        %v4665 = vunpack.c.l.b16 %v4626
        %v4666 = vunpack.c.l.b16 %v4627
        %v4667 = vunpack.c.l.b16 %v4628
        %v4668 = vunpack.c.l.b16 %v4629
        %v4669 = vunpack.c.l.b16 %v4630
        %v4670 = vunpack.c.l.b16 %v4631
        %v4671 = vunpack.c.l.b16 %v4632
        %v4672 = vunpack.c.l.b16 %v4633
        %v4673 = vunpack.c.l.b16 %v4634
        %v4674 = vunpack.c.l.b16 %v4635
        %v4675 = vunpack.c.l.b16 %v4636
        %v4676 = vunpack.c.l.b16 %v4637
        %v4677 = vunpack.c.l.b16 %v4638
        %v4678 = vpack.c.b16 %v4663, %v4662
        %v4679 = vpack.c.b16 %v4665, %v4664
        %v4680 = vpack.c.b16 %v4667, %v4666
        %v4681 = vpack.c.b16 %v4669, %v4668
        %v4682 = vpack.c.b16 %v4671, %v4670
        %v4683 = vpack.c.b16 %v4673, %v4672
        %v4684 = vpack.c.b16 %v4675, %v4674
        %v4685 = vpack.c.b16 %v4677, %v4676
        %4694 = vmatprep.subr.bf16.mxu0 0
        %4695 = vmatpush1.bf16.msra.mxu0 %v4678
        %4696 = vmatprep.subr.bf16.mxu0 0
        %4697 = vmatpush1.bf16.msra.mxu0 %v4679
        %4698 = vmatprep.subr.bf16.mxu0 0
        %4699 = vmatpush1.bf16.msra.mxu0 %v4680
        %4700 = vmatprep.subr.bf16.mxu0 0
        %4701 = vmatpush1.bf16.msra.mxu0 %v4681
        %4702 = vmatprep.subr.bf16.mxu0 0
        %4703 = vmatpush1.bf16.msra.mxu0 %v4682
        %4704 = vmatprep.subr.bf16.mxu0 0
        %4705 = vmatpush1.bf16.msra.mxu0 %v4683
        %4706 = vmatprep.subr.bf16.mxu0 0
        %4707 = vmatpush1.bf16.msra.mxu0 %v4684
        %4708 = vmatprep.subr.bf16.mxu0 0
        %4709 = vmatpush1.bf16.msra.mxu0 %v4685
        %4710 = vmatprep.subr.bf16.mxu0 0
        %4711 = vmatpush1.bf16.msra.mxu0 0
        %4712 = vmatprep.subr.bf16.mxu0 0
        %4713 = vmatpush1.bf16.msra.mxu0 0
        %4714 = vmatprep.subr.bf16.mxu0 0
        %4715 = vmatpush1.bf16.msra.mxu0 0
        %4716 = vmatprep.subr.bf16.mxu0 0
        %4717 = vmatpush1.bf16.msra.mxu0 0
        %4718 = vmatprep.subr.bf16.mxu0 0
        %4719 = vmatpush1.bf16.msra.mxu0 0
        %4720 = vmatprep.subr.bf16.mxu0 0
        %4721 = vmatpush1.bf16.msra.mxu0 0
        %4722 = vmatprep.subr.bf16.mxu0 0
        %4723 = vmatpush1.bf16.msra.mxu0 0
        %4724 = vmatprep.subr.bf16.mxu0 0
        %4725 = vmatpush1.bf16.msra.mxu0 0
        %4726 = vmatprep.mubr.bf16.mxu0 0
        %4727 = vmatmul.mubr.bf16.gmra.mrb[0].mxu0 %v4607
        %v4728 = vpop.f32.mrb[0].mxu0
        %v4729 = vadd.f32 %v4644, %v4728
        %v4730 = vpop.f32.mrb[0].mxu0
        %v4731 = vpop.f32.mrb[0].mxu0
        %v4732 = vadd.f32 %v4644, %v4731
        %v4733 = vpop.f32.mrb[0].mxu0
        %4734 = vmatprep.mubr.bf16.mxu0 0
        %4735 = vmatmul.mubr.bf16.gmra.mrb[0].mxu0 %v4608
        %v4736 = vpop.f32.mrb[0].mxu0
        %v4737 = vadd.f32 %v4644, %v4736
        %v4738 = vpop.f32.mrb[0].mxu0
        %v4739 = vpop.f32.mrb[0].mxu0
        %v4740 = vadd.f32 %v4644, %v4739
        %v4741 = vpop.f32.mrb[0].mxu0
        %4742 = vmatprep.mubr.bf16.mxu0 0
        %4743 = vmatmul.mubr.bf16.gmra.mrb[0].mxu0 %v4609
        %v4744 = vpop.f32.mrb[0].mxu0
        %v4745 = vadd.f32 %v4644, %v4744
        %v4746 = vpop.f32.mrb[0].mxu0
        %v4747 = vpop.f32.mrb[0].mxu0
        %v4748 = vadd.f32 %v4644, %v4747
        %v4749 = vpop.f32.mrb[0].mxu0
        %4750 = vmatprep.mubr.bf16.mxu0 0
        %4751 = vmatmul.mubr.bf16.gmra.mrb[0].mxu0 %v4610
        %v4752 = vpop.f32.mrb[0].mxu0
        %v4753 = vadd.f32 %v4644, %v4752
        %v4754 = vpop.f32.mrb[0].mxu0
        %v4755 = vpop.f32.mrb[0].mxu0
        %v4756 = vadd.f32 %v4644, %v4755
        %v4757 = vpop.f32.mrb[0].mxu0
        %4758 = vmatprep.mubr.bf16.mxu0 0
        %4759 = vmatmul.mubr.bf16.gmra.mrb[0].mxu0 %v4611
        %v4760 = vpop.f32.mrb[0].mxu0
        %v4761 = vadd.f32 %v4644, %v4760
        %v4762 = vpop.f32.mrb[0].mxu0
        %v4763 = vpop.f32.mrb[0].mxu0
        %v4764 = vadd.f32 %v4644, %v4763
        %v4765 = vpop.f32.mrb[0].mxu0
        %4766 = vmatprep.mubr.bf16.mxu0 0
        %4767 = vmatmul.mubr.bf16.gmra.mrb[0].mxu0 %v4612
        %v4768 = vpop.f32.mrb[0].mxu0
        %v4769 = vadd.f32 %v4644, %v4768
        %v4770 = vpop.f32.mrb[0].mxu0
        %v4771 = vpop.f32.mrb[0].mxu0
        %v4772 = vadd.f32 %v4644, %v4771
        %v4773 = vpop.f32.mrb[0].mxu0
        %4774 = vmatprep.mubr.bf16.mxu0 0
        %4775 = vmatmul.mubr.bf16.gmra.mrb[0].mxu0 %v4613
        %v4776 = vpop.f32.mrb[0].mxu0
        %v4777 = vadd.f32 %v4644, %v4776
        %v4778 = vpop.f32.mrb[0].mxu0
        %v4779 = vpop.f32.mrb[0].mxu0
        %v4780 = vadd.f32 %v4644, %v4779
        %v4781 = vpop.f32.mrb[0].mxu0
        %4782 = vmatprep.mubr.bf16.mxu0 0
        %4783 = vmatmul.mubr.bf16.gmra.mrb[0].mxu0 %v4614
        %v4784 = vpop.f32.mrb[0].mxu0
        %v4785 = vadd.f32 %v4644, %v4784
        %v4786 = vpop.f32.mrb[0].mxu0
        %v4787 = vpop.f32.mrb[0].mxu0
        %v4788 = vadd.f32 %v4644, %v4787
        %v4789 = vpop.f32.mrb[0].mxu0
        %4790 = vmatprep.mubr.bf16.mxu0 0
        %4791 = vmatmul.mubr.bf16.gmra.mrb[0].mxu0 %v4615
        %v4792 = vpop.f32.mrb[0].mxu0
        %v4793 = vadd.f32 %v4644, %v4792
        %v4794 = vpop.f32.mrb[0].mxu0
        %v4795 = vpop.f32.mrb[0].mxu0
        %v4796 = vadd.f32 %v4644, %v4795
        %v4797 = vpop.f32.mrb[0].mxu0
        %4798 = vmatprep.mubr.bf16.mxu0 0
        %4799 = vmatmul.mubr.bf16.gmra.mrb[0].mxu0 %v4616
        %v4800 = vpop.f32.mrb[0].mxu0
        %v4801 = vadd.f32 %v4644, %v4800
        %v4802 = vpop.f32.mrb[0].mxu0
        %v4803 = vpop.f32.mrb[0].mxu0
        %v4804 = vadd.f32 %v4644, %v4803
        %v4805 = vpop.f32.mrb[0].mxu0
        %4806 = vmatprep.mubr.bf16.mxu0 0
        %4807 = vmatmul.mubr.bf16.gmra.mrb[0].mxu0 %v4617
        %v4808 = vpop.f32.mrb[0].mxu0
        %v4809 = vadd.f32 %v4644, %v4808
        %v4810 = vpop.f32.mrb[0].mxu0
        %v4811 = vpop.f32.mrb[0].mxu0
        %v4812 = vadd.f32 %v4644, %v4811
        %v4813 = vpop.f32.mrb[0].mxu0
        %4814 = vmatprep.mubr.bf16.mxu0 0
        %4815 = vmatmul.mubr.bf16.gmra.mrb[0].mxu0 %v4618
        %v4816 = vpop.f32.mrb[0].mxu0
        %v4817 = vadd.f32 %v4644, %v4816
        %v4818 = vpop.f32.mrb[0].mxu0
        %v4819 = vpop.f32.mrb[0].mxu0
        %v4820 = vadd.f32 %v4644, %v4819
        %v4821 = vpop.f32.mrb[0].mxu0
        %4822 = vmatprep.mubr.bf16.mxu0 0
        %4823 = vmatmul.mubr.bf16.gmra.mrb[0].mxu0 %v4619
        %v4824 = vpop.f32.mrb[0].mxu0
        %v4825 = vadd.f32 %v4644, %v4824
        %v4826 = vpop.f32.mrb[0].mxu0
        %v4827 = vpop.f32.mrb[0].mxu0
        %v4828 = vadd.f32 %v4644, %v4827
        %v4829 = vpop.f32.mrb[0].mxu0
        %4830 = vmatprep.mubr.bf16.mxu0 0
        %4831 = vmatmul.mubr.bf16.gmra.mrb[0].mxu0 %v4620
        %v4832 = vpop.f32.mrb[0].mxu0
        %v4833 = vadd.f32 %v4644, %v4832
        %v4834 = vpop.f32.mrb[0].mxu0
        %v4835 = vpop.f32.mrb[0].mxu0
        %v4836 = vadd.f32 %v4644, %v4835
        %v4837 = vpop.f32.mrb[0].mxu0
        %4838 = vmatprep.mubr.bf16.mxu0 0
        %4839 = vmatmul.mubr.bf16.gmra.mrb[0].mxu0 %v4621
        %v4840 = vpop.f32.mrb[0].mxu0
        %v4841 = vadd.f32 %v4644, %v4840
        %v4842 = vpop.f32.mrb[0].mxu0
        %v4843 = vpop.f32.mrb[0].mxu0
        %v4844 = vadd.f32 %v4644, %v4843
        %v4845 = vpop.f32.mrb[0].mxu0
        %4846 = vmatprep.mubr.bf16.mxu0 0
        %4847 = vmatmul.mubr.bf16.gmra.mrb[0].mxu0 %v4622
        %v4848 = vpop.f32.mrb[0].mxu0
        %v4849 = vadd.f32 %v4644, %v4848
        %v4850 = vpop.f32.mrb[0].mxu0
        %v4851 = vpop.f32.mrb[0].mxu0
        %v4852 = vadd.f32 %v4644, %v4851
        %v4853 = vpop.f32.mrb[0].mxu0
        %4854 = vdwg.mxu0
        %v4855 = vld [vmem:[%s298] sm:$0xf]
        %v4856 = vld [vmem:[%s298 + $0x4] sm:$0xf]
        %v4857 = vld [vmem:[%s298 + $0x8] sm:$0xf]
        %v4858 = vld [vmem:[%s298 + $0xc] sm:$0xf]
        %v4859 = vld [vmem:[%s298 + $0x10] sm:$0xf]
        %v4860 = vld [vmem:[%s298 + $0x14] sm:$0xf]
        %v4861 = vld [vmem:[%s298 + $0x18] sm:$0xf]
        %v4862 = vld [vmem:[%s298 + $0x1c] sm:$0xf]
        %v4863 = vld [vmem:[%s298 + $0x20] sm:$0xf]
        %v4864 = vld [vmem:[%s298 + $0x24] sm:$0xf]
        %v4865 = vld [vmem:[%s298 + $0x28] sm:$0xf]
        %v4866 = vld [vmem:[%s298 + $0x2c] sm:$0xf]
        %v4867 = vld [vmem:[%s298 + $0x30] sm:$0xf]
        %v4868 = vld [vmem:[%s298 + $0x34] sm:$0xf]
        %v4869 = vld [vmem:[%s298 + $0x38] sm:$0xf]
        %v4870 = vld [vmem:[%s298 + $0x3c] sm:$0xf]
        %v4871 = vld [vmem:[%s298 + $0x40] sm:$0xf]
        %v4872 = vld [vmem:[%s298 + $0x44] sm:$0xf]
        %v4873 = vld [vmem:[%s298 + $0x48] sm:$0xf]
        %v4874 = vld [vmem:[%s298 + $0x4c] sm:$0xf]
        %v4875 = vld [vmem:[%s298 + $0x50] sm:$0xf]
        %v4876 = vld [vmem:[%s298 + $0x54] sm:$0xf]
        %v4877 = vld [vmem:[%s298 + $0x58] sm:$0xf]
        %v4878 = vld [vmem:[%s298 + $0x5c] sm:$0xf]
        %v4879 = vld [vmem:[%s298 + $0x60] sm:$0xf]
        %v4880 = vld [vmem:[%s298 + $0x64] sm:$0xf]
        %v4881 = vld [vmem:[%s298 + $0x68] sm:$0xf]
        %v4882 = vld [vmem:[%s298 + $0x6c] sm:$0xf]
        %v4883 = vld [vmem:[%s298 + $0x70] sm:$0xf]
        %v4884 = vld [vmem:[%s298 + $0x74] sm:$0xf]
        %v4885 = vld [vmem:[%s298 + $0x78] sm:$0xf]
        %v4886 = vld [vmem:[%s298 + $0x7c] sm:$0xf]
        %v4887 = vunpack.c.l.bf16 %v4855
        %v4888 = vunpack.c.l.bf16 %v4856
        %v4889 = vunpack.c.l.bf16 %v4857
        %v4890 = vunpack.c.l.bf16 %v4858
        %v4891 = vunpack.c.l.bf16 %v4859
        %v4892 = vunpack.c.l.bf16 %v4860
        %v4893 = vunpack.c.l.bf16 %v4861
        %v4894 = vunpack.c.l.bf16 %v4862
        %v4895 = vunpack.c.l.bf16 %v4863
        %v4896 = vunpack.c.l.bf16 %v4864
        %v4897 = vunpack.c.l.bf16 %v4865
        %v4898 = vunpack.c.l.bf16 %v4866
        %v4899 = vunpack.c.l.bf16 %v4867
        %v4900 = vunpack.c.l.bf16 %v4868
        %v4901 = vunpack.c.l.bf16 %v4869
        %v4902 = vunpack.c.l.bf16 %v4870
        %v4903 = vunpack.c.l.bf16 %v4871
        %v4904 = vunpack.c.l.bf16 %v4872
        %v4905 = vunpack.c.l.bf16 %v4873
        %v4906 = vunpack.c.l.bf16 %v4874
        %v4907 = vunpack.c.l.bf16 %v4875
        %v4908 = vunpack.c.l.bf16 %v4876
        %v4909 = vunpack.c.l.bf16 %v4877
        %v4910 = vunpack.c.l.bf16 %v4878
        %v4911 = vunpack.c.l.bf16 %v4879
        %v4912 = vunpack.c.l.bf16 %v4880
        %v4913 = vunpack.c.l.bf16 %v4881
        %v4914 = vunpack.c.l.bf16 %v4882
        %v4915 = vunpack.c.l.bf16 %v4883
        %v4916 = vunpack.c.l.bf16 %v4884
        %v4917 = vunpack.c.l.bf16 %v4885
        %v4918 = vunpack.c.l.bf16 %v4886
        %v4919 = vadd.f32 %v4729, %v4887
        %v4920 = vadd.f32 %v4732, %v4888
        %v4921 = vadd.f32 %v4737, %v4889
        %v4922 = vadd.f32 %v4740, %v4890
        %v4923 = vadd.f32 %v4745, %v4891
        %v4924 = vadd.f32 %v4748, %v4892
        %v4925 = vadd.f32 %v4753, %v4893
        %v4926 = vadd.f32 %v4756, %v4894
        %v4927 = vadd.f32 %v4761, %v4895
        %v4928 = vadd.f32 %v4764, %v4896
        %v4929 = vadd.f32 %v4769, %v4897
        %v4930 = vadd.f32 %v4772, %v4898
        %v4931 = vadd.f32 %v4777, %v4899
        %v4932 = vadd.f32 %v4780, %v4900
        %v4933 = vadd.f32 %v4785, %v4901
        %v4934 = vadd.f32 %v4788, %v4902
        %v4935 = vadd.f32 %v4793, %v4903
        %v4936 = vadd.f32 %v4796, %v4904
        %v4937 = vadd.f32 %v4801, %v4905
        %v4938 = vadd.f32 %v4804, %v4906
        %v4939 = vadd.f32 %v4809, %v4907
        %v4940 = vadd.f32 %v4812, %v4908
        %v4941 = vadd.f32 %v4817, %v4909
        %v4942 = vadd.f32 %v4820, %v4910
        %v4943 = vadd.f32 %v4825, %v4911
        %v4944 = vadd.f32 %v4828, %v4912
        %v4945 = vadd.f32 %v4833, %v4913
        %v4946 = vadd.f32 %v4836, %v4914
        %v4947 = vadd.f32 %v4841, %v4915
        %v4948 = vadd.f32 %v4844, %v4916
        %v4949 = vadd.f32 %v4849, %v4917
        %v4950 = vadd.f32 %v4852, %v4918
        %v4951 = vmax.f32 %v4919, 0.0
        %v4952 = vmax.f32 %v4920, 0.0
        %v4953 = vmax.f32 %v4921, 0.0
        %v4954 = vmax.f32 %v4922, 0.0
        %v4955 = vmax.f32 %v4923, 0.0
        %v4956 = vmax.f32 %v4924, 0.0
        %v4957 = vmax.f32 %v4925, 0.0
        %v4958 = vmax.f32 %v4926, 0.0
        %v4959 = vmax.f32 %v4927, 0.0
        %v4960 = vmax.f32 %v4928, 0.0
        %v4961 = vmax.f32 %v4929, 0.0
        %v4962 = vmax.f32 %v4930, 0.0
        %v4963 = vmax.f32 %v4931, 0.0
        %v4964 = vmax.f32 %v4932, 0.0
        %v4965 = vmax.f32 %v4933, 0.0
        %v4966 = vmax.f32 %v4934, 0.0
        %v4967 = vmax.f32 %v4935, 0.0
        %v4968 = vmax.f32 %v4936, 0.0
        %v4969 = vmax.f32 %v4937, 0.0
        %v4970 = vmax.f32 %v4938, 0.0
        %v4971 = vmax.f32 %v4939, 0.0
        %v4972 = vmax.f32 %v4940, 0.0
        %v4973 = vmax.f32 %v4941, 0.0
        %v4974 = vmax.f32 %v4942, 0.0
        %v4975 = vmax.f32 %v4943, 0.0
        %v4976 = vmax.f32 %v4944, 0.0
        %v4977 = vmax.f32 %v4945, 0.0
        %v4978 = vmax.f32 %v4946, 0.0
        %v4979 = vmax.f32 %v4947, 0.0
        %v4980 = vmax.f32 %v4948, 0.0
        %v4981 = vmax.f32 %v4949, 0.0
        %v4982 = vmax.f32 %v4950, 0.0
        %v4983 = vpack.c.bf16 %v4952, %v4951
        %v4984 = vpack.c.bf16 %v4954, %v4953
        %v4985 = vpack.c.bf16 %v4956, %v4955
        %v4986 = vpack.c.bf16 %v4958, %v4957
        %v4987 = vpack.c.bf16 %v4960, %v4959
        %v4988 = vpack.c.bf16 %v4962, %v4961
        %v4989 = vpack.c.bf16 %v4964, %v4963
        %v4990 = vpack.c.bf16 %v4966, %v4965
        %v4991 = vpack.c.bf16 %v4968, %v4967
        %v4992 = vpack.c.bf16 %v4970, %v4969
        %v4993 = vpack.c.bf16 %v4972, %v4971
        %v4994 = vpack.c.bf16 %v4974, %v4973
        %v4995 = vpack.c.bf16 %v4976, %v4975
        %v4996 = vpack.c.bf16 %v4978, %v4977
        %v4997 = vpack.c.bf16 %v4980, %v4979
        %v4998 = vpack.c.bf16 %v4982, %v4981
        %v5015 = vunpack.c.l.b16 %v4983
        %v5016 = vunpack.c.h.b16 %v4983
        %v5017 = vunpack.c.l.b16 %v4984
        %v5018 = vunpack.c.h.b16 %v4984
        %v5019 = vunpack.c.l.b16 %v4985
        %v5020 = vunpack.c.h.b16 %v4985
        %v5021 = vunpack.c.l.b16 %v4986
        %v5022 = vunpack.c.h.b16 %v4986
        %v5023 = vunpack.c.l.b16 %v4987
        %v5024 = vunpack.c.h.b16 %v4987
        %v5025 = vunpack.c.l.b16 %v4988
        %v5026 = vunpack.c.h.b16 %v4988
        %v5027 = vunpack.c.l.b16 %v4989
        %v5028 = vunpack.c.h.b16 %v4989
        %v5029 = vunpack.c.l.b16 %v4990
        %v5030 = vunpack.c.h.b16 %v4990
        %v5031 = vunpack.c.l.b16 %v4991
        %v5032 = vunpack.c.h.b16 %v4991
        %v5033 = vunpack.c.l.b16 %v4992
        %v5034 = vunpack.c.h.b16 %v4992
        %v5035 = vunpack.c.l.b16 %v4993
        %v5036 = vunpack.c.h.b16 %v4993
        %v5037 = vunpack.c.l.b16 %v4994
        %v5038 = vunpack.c.h.b16 %v4994
        %v5039 = vunpack.c.l.b16 %v4995
        %v5040 = vunpack.c.h.b16 %v4995
        %v5041 = vunpack.c.l.b16 %v4996
        %v5042 = vunpack.c.h.b16 %v4996
        %v5043 = vunpack.c.l.b16 %v4997
        %v5044 = vunpack.c.h.b16 %v4997
        %v5045 = vunpack.c.l.b16 %v4998
        %v5046 = vunpack.c.h.b16 %v4998
        %v5047 = vpack.c.b16 %v5015, %v5015
        %v5048 = vpack.c.b16 %v5016, %v5016
        %v5049 = vpack.c.b16 %v5017, %v5017
        %v5050 = vpack.c.b16 %v5018, %v5018
        %v5051 = vpack.c.b16 %v5019, %v5019
        %v5052 = vpack.c.b16 %v5020, %v5020
        %v5053 = vpack.c.b16 %v5021, %v5021
        %v5054 = vpack.c.b16 %v5022, %v5022
        %v5055 = vpack.c.b16 %v5023, %v5023
        %v5056 = vpack.c.b16 %v5024, %v5024
        %v5057 = vpack.c.b16 %v5025, %v5025
        %v5058 = vpack.c.b16 %v5026, %v5026
        %v5059 = vpack.c.b16 %v5027, %v5027
        %v5060 = vpack.c.b16 %v5028, %v5028
        %v5061 = vpack.c.b16 %v5029, %v5029
        %v5062 = vpack.c.b16 %v5030, %v5030
        %v5063 = vpack.c.b16 %v5031, %v5031
        %v5064 = vpack.c.b16 %v5032, %v5032
        %v5065 = vpack.c.b16 %v5033, %v5033
        %v5066 = vpack.c.b16 %v5034, %v5034
        %v5067 = vpack.c.b16 %v5035, %v5035
        %v5068 = vpack.c.b16 %v5036, %v5036
        %v5069 = vpack.c.b16 %v5037, %v5037
        %v5070 = vpack.c.b16 %v5038, %v5038
        %v5071 = vpack.c.b16 %v5039, %v5039
        %v5072 = vpack.c.b16 %v5040, %v5040
        %v5073 = vpack.c.b16 %v5041, %v5041
        %v5074 = vpack.c.b16 %v5042, %v5042
        %v5075 = vpack.c.b16 %v5043, %v5043
        %v5076 = vpack.c.b16 %v5044, %v5044
        %v5077 = vpack.c.b16 %v5045, %v5045
        %v5078 = vpack.c.b16 %v5046, %v5046
        %5111 = vst [vmem:[%s340] sm:$0xf] %v5047
        %5112 = vst [vmem:[%s340 + $0x4] sm:$0xf] %v5048
        %5113 = vst [vmem:[%s340 + $0x8] sm:$0xf] %v5049
        %5114 = vst [vmem:[%s340 + $0xc] sm:$0xf] %v5050
        %5115 = vst [vmem:[%s340 + $0x10] sm:$0xf] %v5051
        %5116 = vst [vmem:[%s340 + $0x14] sm:$0xf] %v5052
        %5117 = vst [vmem:[%s340 + $0x18] sm:$0xf] %v5053
        %5118 = vst [vmem:[%s340 + $0x1c] sm:$0xf] %v5054
        %5119 = vst [vmem:[%s340 + $0x20] sm:$0xf] %v5055
        %5120 = vst [vmem:[%s340 + $0x24] sm:$0xf] %v5056
        %5121 = vst [vmem:[%s340 + $0x28] sm:$0xf] %v5057
        %5122 = vst [vmem:[%s340 + $0x2c] sm:$0xf] %v5058
        %5123 = vst [vmem:[%s340 + $0x30] sm:$0xf] %v5059
        %5124 = vst [vmem:[%s340 + $0x34] sm:$0xf] %v5060
        %5125 = vst [vmem:[%s340 + $0x38] sm:$0xf] %v5061
        %5126 = vst [vmem:[%s340 + $0x3c] sm:$0xf] %v5062
        %5127 = vst [vmem:[%s340 + $0x40] sm:$0xf] %v5063
        %5128 = vst [vmem:[%s340 + $0x44] sm:$0xf] %v5064
        %5129 = vst [vmem:[%s340 + $0x48] sm:$0xf] %v5065
        %5130 = vst [vmem:[%s340 + $0x4c] sm:$0xf] %v5066
        %5131 = vst [vmem:[%s340 + $0x50] sm:$0xf] %v5067
        %5132 = vst [vmem:[%s340 + $0x54] sm:$0xf] %v5068
        %5133 = vst [vmem:[%s340 + $0x58] sm:$0xf] %v5069
        %5134 = vst [vmem:[%s340 + $0x5c] sm:$0xf] %v5070
        %5135 = vst [vmem:[%s340 + $0x60] sm:$0xf] %v5071
        %5136 = vst [vmem:[%s340 + $0x64] sm:$0xf] %v5072
        %5137 = vst [vmem:[%s340 + $0x68] sm:$0xf] %v5073
        %5138 = vst [vmem:[%s340 + $0x6c] sm:$0xf] %v5074
        %5139 = vst [vmem:[%s340 + $0x70] sm:$0xf] %v5075
        %5140 = vst [vmem:[%s340 + $0x74] sm:$0xf] %v5076
        %5141 = vst [vmem:[%s340 + $0x78] sm:$0xf] %v5077
        %5142 = vst [vmem:[%s340 + $0x7c] sm:$0xf] %v5078
        %s5143 = sand.u32 %s186, 1
        %s5144 = scalar_lea.sflag [#allocation5], %s5143
        %s5145 = sand.u32 %s186, 1
        %s5146 = smul.addr %s5145, 128
        %s5147 = scalar_lea.vmem [#allocation11], %s5146
        // Predicated region
        $region65: #{tpu_custom_call.1} parent=47 // pred_check
          %p5148 = pneg %p196
        $region66: #{tpu_custom_call.1} parent=47 // pred_check_branch
          %5150 = sbr.rel (%p5148) target = $region68
        $region67: #{tpu_custom_call.1} parent=47 // pred_region
          %s5152 = ssub.s32 2048, 2048
          %5153 = vsyncadd %s5144, %s5152
          %s5154 = smul.addr %s26, 32
          %s5155 = smul.addr %s5154, 64
          %s5156 = scalar_lea.hbm %s7, %s5155
          %s5157 = sshll.u32 %s5147, 4
          %s5158 = int_to_ptr.vmem [resolvable:$true] %s5157
          %5163 = dma.vmem_to_hbm [thread:$0]  %s5158, 2048, %s5156, %s5144, 64, 64, 4
        $region68: #{tpu_custom_call.1} parent=47 // pred_fallthru
          _
      $region48: #{tpu_custom_call.1} parent=5 // pred_fallthru
        _
      %p5164 = scmp.le.s32.totalorder 2, %s21
      // Predicated region
      $region69: #{tpu_custom_call.1} parent=5 // pred_check
        %p5165 = pneg %p5164
      $region70: #{tpu_custom_call.1} parent=5 // pred_check_branch
        %5167 = sbr.rel (%p5165) target = $region72
      $region71: #{tpu_custom_call.1} parent=5 // pred_region
        %s5168 = ssub.s32 %s21, 2
        // Predicated region
        $region73: #{tpu_custom_call.1} parent=71 // pred_check
          %p5169 = pneg %p202
        $region74: #{tpu_custom_call.1} parent=71 // pred_check_branch
          %5171 = sbr.rel (%p5169) target = $region76
        $region75: #{tpu_custom_call.1} parent=71 // pred_region
          %s5172 = sand.u32 %s187, 1
          %s5173 = scalar_lea.sflag [#allocation5], %s5172
          %s5174 = sand.u32 %s187, 1
          %s5175 = smul.addr %s5174, 128
          %s5176 = scalar_lea.vmem [#allocation11], %s5175
          %5177 = dma.done %s5173, 2048
        $region76: #{tpu_custom_call.1} parent=71 // pred_fallthru
          _
      $region72: #{tpu_custom_call.1} parent=5 // pred_fallthru
        _
    $region6: #{tpu_custom_call.1} parent=1 // loop_footer
      %s25 = sadd.s32 1, %s21
    $region7: #{tpu_custom_call.1} parent=1 // loop_footer_branch
      %20 = sbr.rel target = $region3
    $region8: #{tpu_custom_call.1} parent=1 // loop_exit
      _
    %5178 = vsyncpa [#allocation4], 1
    %s5179 = scalar_lea.sflag [#allocation4], 1
    %5180 = vsyncpa %s5179, 1
    %5181 = vsyncpa [#allocation7], 1
    %5182 = vsyncpa [#allocation10], 1
    %5183 = vsyncpa [#allocation5], 1
    %s5184 = scalar_lea.sflag [#allocation5], 1
    %5185 = vsyncpa %s5184, 1

// kernel: tpu_custom_call.1
$region0: #{tpu_custom_call.1}
  #allocation0 [shape = 'u32[]', space=smem, size = 0x4, offset = 0x4, fixed_abs, tag = 'smem constant byte address 0x4 - core index']
  #allocation1 [shape = 'u32[144,128]{1,0:T(1,128)}', space=vmem, size = 0x12000, scoped, tag = 'internal scratch']
  #allocation2 [shape = 'bf16[1,18,18,128]{3,2,1,0:T(8,128)(2,1)}', space=vmem, size = 0x1b000, scoped, tag = 'scratch operand']
  %s0 = inlined_call_operand.hbm [shape: bf16[2,256,128], index: 0, kind: input, shape index: {}]
  %s1 = inlined_call_operand.hbm [shape: bf16[128,128], index: 1, kind: input, shape index: {}]
  %s2 = inlined_call_operand.vmem [shape: f32[1,128], index: 2, kind: input, shape index: {}]
  %s3 = inlined_call_operand.hbm [shape: bf16[1152,128], index: 3, kind: input, shape index: {}]
  %s4 = inlined_call_operand.vmem [shape: f32[1,128], index: 4, kind: input, shape index: {}]
  %s5 = inlined_call_operand.hbm [shape: bf16[128,128], index: 5, kind: input, shape index: {}]
  %s6 = inlined_call_operand.vmem [shape: f32[1,128], index: 6, kind: input, shape index: {}]
  %s7 = inlined_call_operand.hbm [shape: bf16[2,256,128], index: 7, kind: output, shape index: {}]
  %s8 = sld [smem:[#allocation0]]
  $region77: #{tpu_custom_call.1} parent=0
    _
  %s10 = ssub.s32 1, %s8
  %s11 = scalar_select 0, %s10, %s8
  $region1: #{tpu_custom_call.1} parent=0
    #allocation3 [shape = 'u8[131072]{0}', space=vmem, size = 0x20000, scoped, tag = 'input window, operand 0']
    #allocation4 [shape = 's32[2]{0}', space=sflag, size = 0x8, scoped, tag = 'scoped memory for tpu_custom_call.1']
    #allocation5 [shape = 's32[2]{0}', space=sflag, size = 0x8, scoped, tag = 'scoped memory for tpu_custom_call.1']
    #allocation6 [shape = 'u8[32768]{0}', space=vmem, size = 0x8000, scoped, tag = 'input window, operand 1, single buffered']
    #allocation7 [shape = 's32[1]{0}', space=sflag, size = 0x4, scoped, tag = 'scoped memory for tpu_custom_call.1']
    #allocation8 [shape = 'u8[294912]{0}', space=vmem, size = 0x48000, scoped, tag = 'input window, operand 3, single buffered']
    #allocation9 [shape = 'u8[32768]{0}', space=vmem, size = 0x8000, scoped, tag = 'input window, operand 5, single buffered']
    #allocation10 [shape = 's32[1]{0}', space=sflag, size = 0x4, scoped, tag = 'scoped memory for tpu_custom_call.1']
    #allocation11 [shape = 'u8[131072]{0}', space=vmem, size = 0x20000, scoped, tag = 'output window, operand 0']
    %12 = vsyncpa [#allocation4], 0
    %s13 = scalar_lea.sflag [#allocation4], 1
    %14 = vsyncpa %s13, 0
    %15 = vsyncpa [#allocation7], 0
    %16 = vsyncpa [#allocation10], 0
    %17 = vsyncpa [#allocation5], 0
    %s18 = scalar_lea.sflag [#allocation5], 1
    %19 = vsyncpa %s18, 0
    loop: start=0, step=1, limit=4
    $region2: #{tpu_custom_call.1} parent=1 // loop_pre_header
      _
    $region3: #{tpu_custom_call.1} parent=1 // loop_header
      %s21 = sphi 0, %s25
      %p22 = scmp.ge.s32.totalorder %s21, 4
      %s31 = sphi 0, %s33
      %s34 = sphi 0, %s31
      %s35 = sphi 0, %s34
      %s51 = sphi 0, %s35
      %s55 = sphi 0, %s55
      %s57 = sphi 0, %s55
      %s58 = sphi 0, %s57
      %s72 = sphi 0, %s58
      %s76 = sphi 0, %s76
      %s78 = sphi 0, %s76
      %s79 = sphi 0, %s78
      %s93 = sphi 0, %s79
      %s97 = sphi 0, %s97
      %s99 = sphi 0, %s97
      %s100 = sphi 0, %s99
      %s114 = sphi 0, %s100
      %s118 = sphi 0, %s118
      %s120 = sphi 0, %s118
      %s121 = sphi 0, %s120
      %s135 = sphi 0, %s121
      %s139 = sphi 0, %s139
      %s141 = sphi 0, %s139
      %s142 = sphi 0, %s141
      %s156 = sphi 0, %s142
      %s160 = sphi 0, %s160
      %s162 = sphi 0, %s160
      %s163 = sphi 0, %s162
      %s177 = sphi 0, %s163
      %s183 = sphi 0, %s185
      %s186 = sphi 0, %s183
      %s187 = sphi 0, %s186
      %s203 = sphi 0, %s187
    $region4: #{tpu_custom_call.1} parent=1 // loop_header_branch
      %24 = sbr.rel (%p22) target = $region8
    $region5: #{tpu_custom_call.1} parent=1 // loop_body
      %s26 = ssub.s32 %s21, 1
      %s27 = ssub.s32 %s21, 2
      %s28 = sadd.s32 %s21, 1
      %s29 = ssub.s32 %s21, %s28
      %p30 = scmp.eq.s32.totalorder %s29, 0
      %s32 = sadd.s32 %s31, 1
      %s33 = scalar_select %p30, %s31, %s32
      %p36 = pneg %p30
      %p37 = scmp.eq.s32.totalorder %s21, 1
      %p38 = por %p36, %p37
      %p39 = scmp.ne.s32.totalorder %s31, %s34
      %p40 = scmp.eq.s32.totalorder %s21, 0
      %p41 = por %p39, %p40
      %p42 = scmp.ne.s32.totalorder %s31, %s34
      %p43 = scmp.eq.s32.totalorder %s26, 1
      %p44 = por %p42, %p43
      %p45 = scmp.ne.s32.totalorder %s34, %s35
      %p46 = scmp.eq.s32.totalorder %s26, 0
      %p47 = por %p45, %p46
      %p48 = scmp.ne.s32.totalorder %s34, %s35
      %p49 = scmp.eq.s32.totalorder %s27, 1
      %p50 = por %p48, %p49
      %p52 = scmp.ne.s32.totalorder %s35, %s51
      %p53 = scmp.eq.s32.totalorder %s27, 0
      %p54 = por %p52, %p53
      %s56 = sadd.s32 %s55, 1
      %p59 = scmp.eq.s32.totalorder %s21, 1
      %p60 = scmp.ne.s32.totalorder %s55, %s57
      %p61 = scmp.eq.s32.totalorder %s21, 0
      %p62 = por %p60, %p61
      %p63 = scmp.ne.s32.totalorder %s55, %s57
      %p64 = scmp.eq.s32.totalorder %s26, 1
      %p65 = por %p63, %p64
      %p66 = scmp.ne.s32.totalorder %s57, %s58
      %p67 = scmp.eq.s32.totalorder %s26, 0
      %p68 = por %p66, %p67
      %p69 = scmp.ne.s32.totalorder %s57, %s58
      %p70 = scmp.eq.s32.totalorder %s27, 1
      %p71 = por %p69, %p70
      %p73 = scmp.ne.s32.totalorder %s58, %s72
      %p74 = scmp.eq.s32.totalorder %s27, 0
      %p75 = por %p73, %p74
      %s77 = sadd.s32 %s76, 1
      %p80 = scmp.eq.s32.totalorder %s21, 1
      %p81 = scmp.ne.s32.totalorder %s76, %s78
      %p82 = scmp.eq.s32.totalorder %s21, 0
      %p83 = por %p81, %p82
      %p84 = scmp.ne.s32.totalorder %s76, %s78
      %p85 = scmp.eq.s32.totalorder %s26, 1
      %p86 = por %p84, %p85
      %p87 = scmp.ne.s32.totalorder %s78, %s79
      %p88 = scmp.eq.s32.totalorder %s26, 0
      %p89 = por %p87, %p88
      %p90 = scmp.ne.s32.totalorder %s78, %s79
      %p91 = scmp.eq.s32.totalorder %s27, 1
      %p92 = por %p90, %p91
      %p94 = scmp.ne.s32.totalorder %s79, %s93
      %p95 = scmp.eq.s32.totalorder %s27, 0
      %p96 = por %p94, %p95
      %s98 = sadd.s32 %s97, 1
      %p101 = scmp.eq.s32.totalorder %s21, 1
      %p102 = scmp.ne.s32.totalorder %s97, %s99
      %p103 = scmp.eq.s32.totalorder %s21, 0
      %p104 = por %p102, %p103
      %p105 = scmp.ne.s32.totalorder %s97, %s99
      %p106 = scmp.eq.s32.totalorder %s26, 1
      %p107 = por %p105, %p106
      %p108 = scmp.ne.s32.totalorder %s99, %s100
      %p109 = scmp.eq.s32.totalorder %s26, 0
      %p110 = por %p108, %p109
      %p111 = scmp.ne.s32.totalorder %s99, %s100
      %p112 = scmp.eq.s32.totalorder %s27, 1
      %p113 = por %p111, %p112
      %p115 = scmp.ne.s32.totalorder %s100, %s114
      %p116 = scmp.eq.s32.totalorder %s27, 0
      %p117 = por %p115, %p116
      %s119 = sadd.s32 %s118, 1
      %p122 = scmp.eq.s32.totalorder %s21, 1
      %p123 = scmp.ne.s32.totalorder %s118, %s120
      %p124 = scmp.eq.s32.totalorder %s21, 0
      %p125 = por %p123, %p124
      %p126 = scmp.ne.s32.totalorder %s118, %s120
      %p127 = scmp.eq.s32.totalorder %s26, 1
      %p128 = por %p126, %p127
      %p129 = scmp.ne.s32.totalorder %s120, %s121
      %p130 = scmp.eq.s32.totalorder %s26, 0
      %p131 = por %p129, %p130
      %p132 = scmp.ne.s32.totalorder %s120, %s121
      %p133 = scmp.eq.s32.totalorder %s27, 1
      %p134 = por %p132, %p133
      %p136 = scmp.ne.s32.totalorder %s121, %s135
      %p137 = scmp.eq.s32.totalorder %s27, 0
      %p138 = por %p136, %p137
      %s140 = sadd.s32 %s139, 1
      %p143 = scmp.eq.s32.totalorder %s21, 1
      %p144 = scmp.ne.s32.totalorder %s139, %s141
      %p145 = scmp.eq.s32.totalorder %s21, 0
      %p146 = por %p144, %p145
      %p147 = scmp.ne.s32.totalorder %s139, %s141
      %p148 = scmp.eq.s32.totalorder %s26, 1
      %p149 = por %p147, %p148
      %p150 = scmp.ne.s32.totalorder %s141, %s142
      %p151 = scmp.eq.s32.totalorder %s26, 0
      %p152 = por %p150, %p151
      %p153 = scmp.ne.s32.totalorder %s141, %s142
      %p154 = scmp.eq.s32.totalorder %s27, 1
      %p155 = por %p153, %p154
      %p157 = scmp.ne.s32.totalorder %s142, %s156
      %p158 = scmp.eq.s32.totalorder %s27, 0
      %p159 = por %p157, %p158
      %s161 = sadd.s32 %s160, 1
      %p164 = scmp.eq.s32.totalorder %s21, 1
      %p165 = scmp.ne.s32.totalorder %s160, %s162
      %p166 = scmp.eq.s32.totalorder %s21, 0
      %p167 = por %p165, %p166
      %p168 = scmp.ne.s32.totalorder %s160, %s162
      %p169 = scmp.eq.s32.totalorder %s26, 1
      %p170 = por %p168, %p169
      %p171 = scmp.ne.s32.totalorder %s162, %s163
      %p172 = scmp.eq.s32.totalorder %s26, 0
      %p173 = por %p171, %p172
      %p174 = scmp.ne.s32.totalorder %s162, %s163
      %p175 = scmp.eq.s32.totalorder %s27, 1
      %p176 = por %p174, %p175
      %p178 = scmp.ne.s32.totalorder %s163, %s177
      %p179 = scmp.eq.s32.totalorder %s27, 0
      %p180 = por %p178, %p179
      %s181 = ssub.s32 %s21, %s28
      %p182 = scmp.eq.s32.totalorder %s181, 0
      %s184 = sadd.s32 %s183, 1
      %s185 = scalar_select %p182, %s183, %s184
      %p188 = pneg %p182
      %p189 = scmp.eq.s32.totalorder %s21, 1
      %p190 = por %p188, %p189
      %p191 = scmp.ne.s32.totalorder %s183, %s186
      %p192 = scmp.eq.s32.totalorder %s21, 0
      %p193 = por %p191, %p192
      %p194 = scmp.ne.s32.totalorder %s183, %s186
      %p195 = scmp.eq.s32.totalorder %s26, 1
      %p196 = por %p194, %p195
      %p197 = scmp.ne.s32.totalorder %s186, %s187
      %p198 = scmp.eq.s32.totalorder %s26, 0
      %p199 = por %p197, %p198
      %p200 = scmp.ne.s32.totalorder %s186, %s187
      %p201 = scmp.eq.s32.totalorder %s27, 1
      %p202 = por %p200, %p201
      %p204 = scmp.ne.s32.totalorder %s187, %s203
      %p205 = scmp.eq.s32.totalorder %s27, 0
      %p206 = por %p204, %p205
      %p207 = scmp.le.s32.totalorder 1, %s21
      %p208 = scmp.lt.s32.totalorder %s21, 3
      %p209 = pnand %p207, %p208
      %p210 = pneg %p209
      // Predicated region
      $region9: #{tpu_custom_call.1} parent=5 // pred_check
        _
      $region10: #{tpu_custom_call.1} parent=5 // pred_check_branch
        %212 = sbr.rel (%p209) target = $region12
      $region11: #{tpu_custom_call.1} parent=5 // pred_region
        %s213 = ssub.s32 %s21, 1
        // Predicated region
        $region13: #{tpu_custom_call.1} parent=11 // pred_check
          %p214 = pneg %p68
        $region14: #{tpu_custom_call.1} parent=11 // pred_check_branch
          %216 = sbr.rel (%p214) target = $region16
        $region15: #{tpu_custom_call.1} parent=11 // pred_region
          %s218 = ssub.s32 1024, 1024
          %219 = vsyncadd [#allocation7], %s218
          %s220 = sshll.u32 [#allocation6], 4
          %s221 = int_to_ptr.vmem [resolvable:$true] %s220
          %226 = dma.hbm_to_vmem [thread:$0]  %s1, 1024, %s221, [#allocation7], 64, 64, 4
        $region16: #{tpu_custom_call.1} parent=11 // pred_fallthru
          _
        // Predicated region
        $region17: #{tpu_custom_call.1} parent=11 // pred_check
          %p227 = pneg %p89
        $region18: #{tpu_custom_call.1} parent=11 // pred_check_branch
          %229 = sbr.rel (%p227) target = $region20
        $region19: #{tpu_custom_call.1} parent=11 // pred_region
          _
        $region20: #{tpu_custom_call.1} parent=11 // pred_fallthru
          _
        // Predicated region
        $region21: #{tpu_custom_call.1} parent=11 // pred_check
          %p230 = pneg %p110
        $region22: #{tpu_custom_call.1} parent=11 // pred_check_branch
          %232 = sbr.rel (%p230) target = $region24
        $region23: #{tpu_custom_call.1} parent=11 // pred_region
          %s234 = ssub.s32 9216, 9216
          %235 = vsyncadd [#allocation7], %s234
          %s236 = sshll.u32 [#allocation8], 4
          %s237 = int_to_ptr.vmem [resolvable:$true] %s236
          %242 = dma.hbm_to_vmem [thread:$0]  %s3, 9216, %s237, [#allocation7], 64, 64, 4
        $region24: #{tpu_custom_call.1} parent=11 // pred_fallthru
          _
        // Predicated region
        $region25: #{tpu_custom_call.1} parent=11 // pred_check
          %p243 = pneg %p131
        $region26: #{tpu_custom_call.1} parent=11 // pred_check_branch
          %245 = sbr.rel (%p243) target = $region28
        $region27: #{tpu_custom_call.1} parent=11 // pred_region
          _
        $region28: #{tpu_custom_call.1} parent=11 // pred_fallthru
          _
        // Predicated region
        $region29: #{tpu_custom_call.1} parent=11 // pred_check
          %p246 = pneg %p152
        $region30: #{tpu_custom_call.1} parent=11 // pred_check_branch
          %248 = sbr.rel (%p246) target = $region32
        $region31: #{tpu_custom_call.1} parent=11 // pred_region
          %s250 = ssub.s32 1024, 1024
          %251 = vsyncadd [#allocation10], %s250
          %s252 = sshll.u32 [#allocation9], 4
          %s253 = int_to_ptr.vmem [resolvable:$true] %s252
          %258 = dma.hbm_to_vmem [thread:$0]  %s5, 1024, %s253, [#allocation10], 64, 64, 4
        $region32: #{tpu_custom_call.1} parent=11 // pred_fallthru
          _
        // Predicated region
        $region33: #{tpu_custom_call.1} parent=11 // pred_check
          %p259 = pneg %p173
        $region34: #{tpu_custom_call.1} parent=11 // pred_check_branch
          %261 = sbr.rel (%p259) target = $region36
        $region35: #{tpu_custom_call.1} parent=11 // pred_region
          _
        $region36: #{tpu_custom_call.1} parent=11 // pred_fallthru
          _
      $region12: #{tpu_custom_call.1} parent=5 // pred_fallthru
        _
      %p262 = scmp.lt.s32.totalorder %s21, 2
      // Predicated region
      $region37: #{tpu_custom_call.1} parent=5 // pred_check
        %p263 = pneg %p262
      $region38: #{tpu_custom_call.1} parent=5 // pred_check_branch
        %265 = sbr.rel (%p263) target = $region40
      $region39: #{tpu_custom_call.1} parent=5 // pred_region
        // Predicated region
        $region41: #{tpu_custom_call.1} parent=39 // pred_check
          %p266 = pneg %p41
        $region42: #{tpu_custom_call.1} parent=39 // pred_check_branch
          %268 = sbr.rel (%p266) target = $region44
        $region43: #{tpu_custom_call.1} parent=39 // pred_region
          %s269 = sand.u32 %s31, 1
          %s270 = scalar_lea.sflag [#allocation4], %s269
          %s271 = sand.u32 %s31, 1
          %s272 = smul.addr %s271, 128
          %s273 = scalar_lea.vmem [#allocation3], %s272
          %s275 = ssub.s32 2048, 2048
          %276 = vsyncadd %s270, %s275
          %s277 = smul.addr %s21, 32
          %s278 = smul.addr %s277, 64
          %s279 = scalar_lea.hbm %s0, %s278
          %s280 = sshll.u32 %s273, 4
          %s281 = int_to_ptr.vmem [resolvable:$true] %s280
          %286 = dma.hbm_to_vmem [thread:$0]  %s279, 2048, %s281, %s270, 64, 64, 4
        $region44: #{tpu_custom_call.1} parent=39 // pred_fallthru
          _
      $region40: #{tpu_custom_call.1} parent=5 // pred_fallthru
        _
      %p287 = scmp.le.s32.totalorder 1, %s21
      %p288 = scmp.lt.s32.totalorder %s21, 3
      %p289 = pnand %p287, %p288
      %p290 = pneg %p289
      // Predicated region
      $region45: #{tpu_custom_call.1} parent=5 // pred_check
        _
      $region46: #{tpu_custom_call.1} parent=5 // pred_check_branch
        %292 = sbr.rel (%p289) target = $region48
      $region47: #{tpu_custom_call.1} parent=5 // pred_region
        %s293 = ssub.s32 %s21, 1
        %s294 = sand.u32 %s34, 1
        %s295 = scalar_lea.sflag [#allocation4], %s294
        %s296 = sand.u32 %s34, 1
        %s297 = smul.addr %s296, 128
        %s298 = scalar_lea.vmem [#allocation3], %s297
        // Predicated region
        $region49: #{tpu_custom_call.1} parent=47 // pred_check
          %p299 = pneg %p47
        $region50: #{tpu_custom_call.1} parent=47 // pred_check_branch
          %301 = sbr.rel (%p299) target = $region52
        $region51: #{tpu_custom_call.1} parent=47 // pred_region
          %302 = dma.done %s295, 2048
        $region52: #{tpu_custom_call.1} parent=47 // pred_fallthru
          _
        // Predicated region
        $region53: #{tpu_custom_call.1} parent=47 // pred_check
          %p303 = pneg %p68
        $region54: #{tpu_custom_call.1} parent=47 // pred_check_branch
          %305 = sbr.rel (%p303) target = $region56
        $region55: #{tpu_custom_call.1} parent=47 // pred_region
          %306 = dma.done [#allocation7], 1024
        $region56: #{tpu_custom_call.1} parent=47 // pred_fallthru
          _
        // Predicated region
        $region57: #{tpu_custom_call.1} parent=47 // pred_check
          %p307 = pneg %p110
        $region58: #{tpu_custom_call.1} parent=47 // pred_check_branch
          %309 = sbr.rel (%p307) target = $region60
        $region59: #{tpu_custom_call.1} parent=47 // pred_region
          %310 = dma.done [#allocation7], 9216
        $region60: #{tpu_custom_call.1} parent=47 // pred_fallthru
          _
        // Predicated region
        $region61: #{tpu_custom_call.1} parent=47 // pred_check
          %p311 = pneg %p152
        $region62: #{tpu_custom_call.1} parent=47 // pred_check_branch
          %313 = sbr.rel (%p311) target = $region64
        $region63: #{tpu_custom_call.1} parent=47 // pred_region
          %314 = dma.done [#allocation10], 1024
        $region64: #{tpu_custom_call.1} parent=47 // pred_fallthru
          _
        %s315 = sand.u32 %s34, 1
        %s316 = scalar_lea.sflag [#allocation4], %s315
        %s317 = sand.u32 %s34, 1
        %s318 = smul.addr %s317, 128
        %s319 = scalar_lea.vmem [#allocation3], %s318
        %p320 = pneg %p47
        %p321 = pneg %p44
        %p322 = pneg %p68
        %p323 = pneg %p65
        %p324 = pneg %p89
        %p325 = pneg %p86
        %p326 = pneg %p110
        %p327 = pneg %p107
        %p328 = pneg %p131
        %p329 = pneg %p128
        %p330 = pneg %p152
        %p331 = pneg %p149
        %p332 = pneg %p173
        %p333 = pneg %p170
        %p334 = pneg %p199
        %p335 = pneg %p196
        %s336 = sand.u32 %s186, 1
        %s337 = scalar_lea.sflag [#allocation5], %s336
        %s338 = sand.u32 %s186, 1
        %s339 = smul.addr %s338, 128
        %s340 = scalar_lea.vmem [#allocation11], %s339
        %v342 = vld [vmem:[%s298] sm:$0xf]
        %v343 = vld [vmem:[%s298 + $0x4] sm:$0xf]
        %v344 = vld [vmem:[%s298 + $0x8] sm:$0xf]
        %v345 = vld [vmem:[%s298 + $0xc] sm:$0xf]
        %v346 = vld [vmem:[%s298 + $0x10] sm:$0xf]
        %v347 = vld [vmem:[%s298 + $0x14] sm:$0xf]
        %v348 = vld [vmem:[%s298 + $0x18] sm:$0xf]
        %v349 = vld [vmem:[%s298 + $0x1c] sm:$0xf]
        %v350 = vld [vmem:[%s298 + $0x20] sm:$0xf]
        %v351 = vld [vmem:[%s298 + $0x24] sm:$0xf]
        %v352 = vld [vmem:[%s298 + $0x28] sm:$0xf]
        %v353 = vld [vmem:[%s298 + $0x2c] sm:$0xf]
        %v354 = vld [vmem:[%s298 + $0x30] sm:$0xf]
        %v355 = vld [vmem:[%s298 + $0x34] sm:$0xf]
        %v356 = vld [vmem:[%s298 + $0x38] sm:$0xf]
        %v357 = vld [vmem:[%s298 + $0x3c] sm:$0xf]
        %v358 = vld [vmem:[%s298 + $0x40] sm:$0xf]
        %v359 = vld [vmem:[%s298 + $0x44] sm:$0xf]
        %v360 = vld [vmem:[%s298 + $0x48] sm:$0xf]
        %v361 = vld [vmem:[%s298 + $0x4c] sm:$0xf]
        %v362 = vld [vmem:[%s298 + $0x50] sm:$0xf]
        %v363 = vld [vmem:[%s298 + $0x54] sm:$0xf]
        %v364 = vld [vmem:[%s298 + $0x58] sm:$0xf]
        %v365 = vld [vmem:[%s298 + $0x5c] sm:$0xf]
        %v366 = vld [vmem:[%s298 + $0x60] sm:$0xf]
        %v367 = vld [vmem:[%s298 + $0x64] sm:$0xf]
        %v368 = vld [vmem:[%s298 + $0x68] sm:$0xf]
        %v369 = vld [vmem:[%s298 + $0x6c] sm:$0xf]
        %v370 = vld [vmem:[%s298 + $0x70] sm:$0xf]
        %v371 = vld [vmem:[%s298 + $0x74] sm:$0xf]
        %v372 = vld [vmem:[%s298 + $0x78] sm:$0xf]
        %v373 = vld [vmem:[%s298 + $0x7c] sm:$0xf]
        %v374 = vld [vmem:[#allocation6] sm:$0xf]
        %v375 = vld [vmem:[#allocation6 + $0x4] sm:$0xf]
        %v376 = vld [vmem:[#allocation6 + $0x8] sm:$0xf]
        %v377 = vld [vmem:[#allocation6 + $0xc] sm:$0xf]
        %v378 = vld [vmem:[#allocation6 + $0x10] sm:$0xf]
        %v379 = vld [vmem:[#allocation6 + $0x14] sm:$0xf]
        %v380 = vld [vmem:[#allocation6 + $0x18] sm:$0xf]
        %v381 = vld [vmem:[#allocation6 + $0x1c] sm:$0xf]
        %v382 = vld [vmem:[#allocation6 + $0x20] sm:$0xf]
        %v383 = vld [vmem:[#allocation6 + $0x24] sm:$0xf]
        %v384 = vld [vmem:[#allocation6 + $0x28] sm:$0xf]
        %v385 = vld [vmem:[#allocation6 + $0x2c] sm:$0xf]
        %v386 = vld [vmem:[#allocation6 + $0x30] sm:$0xf]
        %v387 = vld [vmem:[#allocation6 + $0x34] sm:$0xf]
        %v388 = vld [vmem:[#allocation6 + $0x38] sm:$0xf]
        %v389 = vld [vmem:[#allocation6 + $0x3c] sm:$0xf]
        %v390 = vld [vmem:[%s2] sm:$0x1]
        %v392 = vlaneseq
        %v393 = vshrl.u32 %v392, 7
        %v394 = vsub.s32 0, %v393
        %v395 = vrot.slane %v390, %v394
        %v429 = vunpack.c.l.b16 %v342
        %v430 = vunpack.c.l.b16 %v343
        %v431 = vunpack.c.l.b16 %v344
        %v432 = vunpack.c.l.b16 %v345
        %v433 = vunpack.c.l.b16 %v346
        %v434 = vunpack.c.l.b16 %v347
        %v435 = vunpack.c.l.b16 %v348
        %v436 = vunpack.c.l.b16 %v349
        %v437 = vunpack.c.l.b16 %v350
        %v438 = vunpack.c.l.b16 %v351
        %v439 = vunpack.c.l.b16 %v352
        %v440 = vunpack.c.l.b16 %v353
        %v441 = vunpack.c.l.b16 %v354
        %v442 = vunpack.c.l.b16 %v355
        %v443 = vunpack.c.l.b16 %v356
        %v444 = vunpack.c.l.b16 %v357
        %v445 = vunpack.c.l.b16 %v358
        %v446 = vunpack.c.l.b16 %v359
        %v447 = vunpack.c.l.b16 %v360
        %v448 = vunpack.c.l.b16 %v361
        %v449 = vunpack.c.l.b16 %v362
        %v450 = vunpack.c.l.b16 %v363
        %v451 = vunpack.c.l.b16 %v364
        %v452 = vunpack.c.l.b16 %v365
        %v453 = vunpack.c.l.b16 %v366
        %v454 = vunpack.c.l.b16 %v367
        %v455 = vunpack.c.l.b16 %v368
        %v456 = vunpack.c.l.b16 %v369
        %v457 = vunpack.c.l.b16 %v370
        %v458 = vunpack.c.l.b16 %v371
        %v459 = vunpack.c.l.b16 %v372
        %v460 = vunpack.c.l.b16 %v373
        %v461 = vpack.c.b16 %v430, %v429
        %v462 = vpack.c.b16 %v432, %v431
        %v463 = vpack.c.b16 %v434, %v433
        %v464 = vpack.c.b16 %v436, %v435
        %v465 = vpack.c.b16 %v438, %v437
        %v466 = vpack.c.b16 %v440, %v439
        %v467 = vpack.c.b16 %v442, %v441
        %v468 = vpack.c.b16 %v444, %v443
        %v469 = vpack.c.b16 %v446, %v445
        %v470 = vpack.c.b16 %v448, %v447
        %v471 = vpack.c.b16 %v450, %v449
        %v472 = vpack.c.b16 %v452, %v451
        %v473 = vpack.c.b16 %v454, %v453
        %v474 = vpack.c.b16 %v456, %v455
        %v475 = vpack.c.b16 %v458, %v457
        %v476 = vpack.c.b16 %v460, %v459
        %v509 = vunpack.c.l.b16 %v374
        %v510 = vunpack.c.l.b16 %v375
        %v511 = vunpack.c.l.b16 %v376
        %v512 = vunpack.c.l.b16 %v377
        %v513 = vunpack.c.l.b16 %v378
        %v514 = vunpack.c.l.b16 %v379
        %v515 = vunpack.c.l.b16 %v380
        %v516 = vunpack.c.l.b16 %v381
        %v517 = vunpack.c.l.b16 %v382
        %v518 = vunpack.c.l.b16 %v383
        %v519 = vunpack.c.l.b16 %v384
        %v520 = vunpack.c.l.b16 %v385
        %v521 = vunpack.c.l.b16 %v386
        %v522 = vunpack.c.l.b16 %v387
        %v523 = vunpack.c.l.b16 %v388
        %v524 = vunpack.c.l.b16 %v389
        %v525 = vpack.c.b16 %v510, %v509
        %v526 = vpack.c.b16 %v512, %v511
        %v527 = vpack.c.b16 %v514, %v513
        %v528 = vpack.c.b16 %v516, %v515
        %v529 = vpack.c.b16 %v518, %v517
        %v530 = vpack.c.b16 %v520, %v519
        %v531 = vpack.c.b16 %v522, %v521
        %v532 = vpack.c.b16 %v524, %v523
        %541 = vmatprep.subr.bf16.mxu0 0
        %542 = vmatpush1.bf16.msra.mxu0 %v525
        %543 = vmatprep.subr.bf16.mxu0 0
        %544 = vmatpush1.bf16.msra.mxu0 %v526
        %545 = vmatprep.subr.bf16.mxu0 0
        %546 = vmatpush1.bf16.msra.mxu0 %v527
        %547 = vmatprep.subr.bf16.mxu0 0
        %548 = vmatpush1.bf16.msra.mxu0 %v528
        %549 = vmatprep.subr.bf16.mxu0 0
        %550 = vmatpush1.bf16.msra.mxu0 %v529
        %551 = vmatprep.subr.bf16.mxu0 0
        %552 = vmatpush1.bf16.msra.mxu0 %v530
        %553 = vmatprep.subr.bf16.mxu0 0
        %554 = vmatpush1.bf16.msra.mxu0 %v531
        %555 = vmatprep.subr.bf16.mxu0 0
        %556 = vmatpush1.bf16.msra.mxu0 %v532
        %557 = vmatprep.subr.bf16.mxu0 0
        %558 = vmatpush1.bf16.msra.mxu0 0
        %559 = vmatprep.subr.bf16.mxu0 0
        %560 = vmatpush1.bf16.msra.mxu0 0
        %561 = vmatprep.subr.bf16.mxu0 0
        %562 = vmatpush1.bf16.msra.mxu0 0
        %563 = vmatprep.subr.bf16.mxu0 0
        %564 = vmatpush1.bf16.msra.mxu0 0
        %565 = vmatprep.subr.bf16.mxu0 0
        %566 = vmatpush1.bf16.msra.mxu0 0
        %567 = vmatprep.subr.bf16.mxu0 0
        %568 = vmatpush1.bf16.msra.mxu0 0
        %569 = vmatprep.subr.bf16.mxu0 0
        %570 = vmatpush1.bf16.msra.mxu0 0
        %571 = vmatprep.subr.bf16.mxu0 0
        %572 = vmatpush1.bf16.msra.mxu0 0
        %573 = vmatprep.mubr.bf16.mxu0 0
        %574 = vmatmul.mubr.bf16.gmra.mrb[0].mxu0 %v461
        %v575 = vpop.f32.mrb[0].mxu0
        %v576 = vadd.f32 %v395, %v575
        %v577 = vpop.f32.mrb[0].mxu0
        %v578 = vpop.f32.mrb[0].mxu0
        %v579 = vadd.f32 %v395, %v578
        %v580 = vpop.f32.mrb[0].mxu0
        %581 = vmatprep.mubr.bf16.mxu0 0
        %582 = vmatmul.mubr.bf16.gmra.mrb[0].mxu0 %v462
        %v583 = vpop.f32.mrb[0].mxu0
        %v584 = vadd.f32 %v395, %v583
        %v585 = vpop.f32.mrb[0].mxu0
        %v586 = vpop.f32.mrb[0].mxu0
        %v587 = vadd.f32 %v395, %v586
        %v588 = vpop.f32.mrb[0].mxu0
        %589 = vmatprep.mubr.bf16.mxu0 0
        %590 = vmatmul.mubr.bf16.gmra.mrb[0].mxu0 %v463
        %v591 = vpop.f32.mrb[0].mxu0
        %v592 = vadd.f32 %v395, %v591
        %v593 = vpop.f32.mrb[0].mxu0
        %v594 = vpop.f32.mrb[0].mxu0
        %v595 = vadd.f32 %v395, %v594
        %v596 = vpop.f32.mrb[0].mxu0
        %597 = vmatprep.mubr.bf16.mxu0 0
        %598 = vmatmul.mubr.bf16.gmra.mrb[0].mxu0 %v464
        %v599 = vpop.f32.mrb[0].mxu0
        %v600 = vadd.f32 %v395, %v599
        %v601 = vpop.f32.mrb[0].mxu0
        %v602 = vpop.f32.mrb[0].mxu0
        %v603 = vadd.f32 %v395, %v602
        %v604 = vpop.f32.mrb[0].mxu0
        %605 = vmatprep.mubr.bf16.mxu0 0
        %606 = vmatmul.mubr.bf16.gmra.mrb[0].mxu0 %v465
        %v607 = vpop.f32.mrb[0].mxu0
        %v608 = vadd.f32 %v395, %v607
        %v609 = vpop.f32.mrb[0].mxu0
        %v610 = vpop.f32.mrb[0].mxu0
        %v611 = vadd.f32 %v395, %v610
        %v612 = vpop.f32.mrb[0].mxu0
        %613 = vmatprep.mubr.bf16.mxu0 0
        %614 = vmatmul.mubr.bf16.gmra.mrb[0].mxu0 %v466
        %v615 = vpop.f32.mrb[0].mxu0
        %v616 = vadd.f32 %v395, %v615
        %v617 = vpop.f32.mrb[0].mxu0
        %v618 = vpop.f32.mrb[0].mxu0
        %v619 = vadd.f32 %v395, %v618
        %v620 = vpop.f32.mrb[0].mxu0
        %621 = vmatprep.mubr.bf16.mxu0 0
        %622 = vmatmul.mubr.bf16.gmra.mrb[0].mxu0 %v467
        %v623 = vpop.f32.mrb[0].mxu0
        %v624 = vadd.f32 %v395, %v623
        %v625 = vpop.f32.mrb[0].mxu0
        %v626 = vpop.f32.mrb[0].mxu0
        %v627 = vadd.f32 %v395, %v626
        %v628 = vpop.f32.mrb[0].mxu0
        %629 = vmatprep.mubr.bf16.mxu0 0
        %630 = vmatmul.mubr.bf16.gmra.mrb[0].mxu0 %v468
        %v631 = vpop.f32.mrb[0].mxu0
        %v632 = vadd.f32 %v395, %v631
        %v633 = vpop.f32.mrb[0].mxu0
        %v634 = vpop.f32.mrb[0].mxu0
        %v635 = vadd.f32 %v395, %v634
        %v636 = vpop.f32.mrb[0].mxu0
        %637 = vmatprep.mubr.bf16.mxu0 0
        %638 = vmatmul.mubr.bf16.gmra.mrb[0].mxu0 %v469
        %v639 = vpop.f32.mrb[0].mxu0
        %v640 = vadd.f32 %v395, %v639
        %v641 = vpop.f32.mrb[0].mxu0
        %v642 = vpop.f32.mrb[0].mxu0
        %v643 = vadd.f32 %v395, %v642
        %v644 = vpop.f32.mrb[0].mxu0
        %645 = vmatprep.mubr.bf16.mxu0 0
        %646 = vmatmul.mubr.bf16.gmra.mrb[0].mxu0 %v470
        %v647 = vpop.f32.mrb[0].mxu0
        %v648 = vadd.f32 %v395, %v647
        %v649 = vpop.f32.mrb[0].mxu0
        %v650 = vpop.f32.mrb[0].mxu0
        %v651 = vadd.f32 %v395, %v650
        %v652 = vpop.f32.mrb[0].mxu0
        %653 = vmatprep.mubr.bf16.mxu0 0
        %654 = vmatmul.mubr.bf16.gmra.mrb[0].mxu0 %v471
        %v655 = vpop.f32.mrb[0].mxu0
        %v656 = vadd.f32 %v395, %v655
        %v657 = vpop.f32.mrb[0].mxu0
        %v658 = vpop.f32.mrb[0].mxu0
        %v659 = vadd.f32 %v395, %v658
        %v660 = vpop.f32.mrb[0].mxu0
        %661 = vmatprep.mubr.bf16.mxu0 0
        %662 = vmatmul.mubr.bf16.gmra.mrb[0].mxu0 %v472
        %v663 = vpop.f32.mrb[0].mxu0
        %v664 = vadd.f32 %v395, %v663
        %v665 = vpop.f32.mrb[0].mxu0
        %v666 = vpop.f32.mrb[0].mxu0
        %v667 = vadd.f32 %v395, %v666
        %v668 = vpop.f32.mrb[0].mxu0
        %669 = vmatprep.mubr.bf16.mxu0 0
        %670 = vmatmul.mubr.bf16.gmra.mrb[0].mxu0 %v473
        %v671 = vpop.f32.mrb[0].mxu0
        %v672 = vadd.f32 %v395, %v671
        %v673 = vpop.f32.mrb[0].mxu0
        %v674 = vpop.f32.mrb[0].mxu0
        %v675 = vadd.f32 %v395, %v674
        %v676 = vpop.f32.mrb[0].mxu0
        %677 = vmatprep.mubr.bf16.mxu0 0
        %678 = vmatmul.mubr.bf16.gmra.mrb[0].mxu0 %v474
        %v679 = vpop.f32.mrb[0].mxu0
        %v680 = vadd.f32 %v395, %v679
        %v681 = vpop.f32.mrb[0].mxu0
        %v682 = vpop.f32.mrb[0].mxu0
        %v683 = vadd.f32 %v395, %v682
        %v684 = vpop.f32.mrb[0].mxu0
        %685 = vmatprep.mubr.bf16.mxu0 0
        %686 = vmatmul.mubr.bf16.gmra.mrb[0].mxu0 %v475
        %v687 = vpop.f32.mrb[0].mxu0
        %v688 = vadd.f32 %v395, %v687
        %v689 = vpop.f32.mrb[0].mxu0
        %v690 = vpop.f32.mrb[0].mxu0
        %v691 = vadd.f32 %v395, %v690
        %v692 = vpop.f32.mrb[0].mxu0
        %693 = vmatprep.mubr.bf16.mxu0 0
        %694 = vmatmul.mubr.bf16.gmra.mrb[0].mxu0 %v476
        %v695 = vpop.f32.mrb[0].mxu0
        %v696 = vadd.f32 %v395, %v695
        %v697 = vpop.f32.mrb[0].mxu0
        %v698 = vpop.f32.mrb[0].mxu0
        %v699 = vadd.f32 %v395, %v698
        %v700 = vpop.f32.mrb[0].mxu0
        %701 = vdwg.mxu0
        %v702 = vmax.f32 %v576, 0.0
        %v703 = vmax.f32 %v579, 0.0
        %v704 = vmax.f32 %v584, 0.0
        %v705 = vmax.f32 %v587, 0.0
        %v706 = vmax.f32 %v592, 0.0
        %v707 = vmax.f32 %v595, 0.0
        %v708 = vmax.f32 %v600, 0.0
        %v709 = vmax.f32 %v603, 0.0
        %v710 = vmax.f32 %v608, 0.0
        %v711 = vmax.f32 %v611, 0.0
        %v712 = vmax.f32 %v616, 0.0
        %v713 = vmax.f32 %v619, 0.0
        %v714 = vmax.f32 %v624, 0.0
        %v715 = vmax.f32 %v627, 0.0
        %v716 = vmax.f32 %v632, 0.0
        %v717 = vmax.f32 %v635, 0.0
        %v718 = vmax.f32 %v640, 0.0
        %v719 = vmax.f32 %v643, 0.0
        %v720 = vmax.f32 %v648, 0.0
        %v721 = vmax.f32 %v651, 0.0
        %v722 = vmax.f32 %v656, 0.0
        %v723 = vmax.f32 %v659, 0.0
        %v724 = vmax.f32 %v664, 0.0
        %v725 = vmax.f32 %v667, 0.0
        %v726 = vmax.f32 %v672, 0.0
        %v727 = vmax.f32 %v675, 0.0
        %v728 = vmax.f32 %v680, 0.0
        %v729 = vmax.f32 %v683, 0.0
        %v730 = vmax.f32 %v688, 0.0
        %v731 = vmax.f32 %v691, 0.0
        %v732 = vmax.f32 %v696, 0.0
        %v733 = vmax.f32 %v699, 0.0
        %734 = vst [vmem:[#allocation2] sm:$0xf] 0
        %735 = vst [vmem:[#allocation2 + $0x4] sm:$0xf] 0
        %736 = vst [vmem:[#allocation2 + $0x8] sm:$0x1] 0
        %s737 = scalar_lea.vmem [#allocation2], 204
        %738 = vst [vmem:[%s737] sm:$0xf] 0
        %739 = vst [vmem:[%s737 + $0x4] sm:$0xf] 0
        %740 = vst [vmem:[%s737 + $0x8] sm:$0x1] 0
        %s741 = scalar_lea.vmem [#allocation2], 12
        %vm742 = vcmask 1040384
        %vm743 = vsmask.f32 256
        %vm744 = vmand %vm742, %vm743
        %v745 = vld [vmem:[%s741] sm:$0x1]
        %v746 = vsel %vm744, 0, %v745
        %747 = vst [vmem:[%s741] sm:$0x1] %v746
        %v748 = vld [vmem:[%s741 + $0xc] sm:$0x1]
        %v749 = vsel %vm744, 0, %v748
        %750 = vst [vmem:[%s741 + $0xc] sm:$0x1] %v749
        %v751 = vld [vmem:[%s741 + $0x18] sm:$0x1]
        %v752 = vsel %vm744, 0, %v751
        %753 = vst [vmem:[%s741 + $0x18] sm:$0x1] %v752
        %v754 = vld [vmem:[%s741 + $0x24] sm:$0x1]
        %v755 = vsel %vm744, 0, %v754
        %756 = vst [vmem:[%s741 + $0x24] sm:$0x1] %v755
        %v757 = vld [vmem:[%s741 + $0x30] sm:$0x1]
        %v758 = vsel %vm744, 0, %v757
        %759 = vst [vmem:[%s741 + $0x30] sm:$0x1] %v758
        %v760 = vld [vmem:[%s741 + $0x3c] sm:$0x1]
        %v761 = vsel %vm744, 0, %v760
        %762 = vst [vmem:[%s741 + $0x3c] sm:$0x1] %v761
        %v763 = vld [vmem:[%s741 + $0x48] sm:$0x1]
        %v764 = vsel %vm744, 0, %v763
        %765 = vst [vmem:[%s741 + $0x48] sm:$0x1] %v764
        %v766 = vld [vmem:[%s741 + $0x54] sm:$0x1]
        %v767 = vsel %vm744, 0, %v766
        %768 = vst [vmem:[%s741 + $0x54] sm:$0x1] %v767
        %v769 = vld [vmem:[%s741 + $0x60] sm:$0x1]
        %v770 = vsel %vm744, 0, %v769
        %771 = vst [vmem:[%s741 + $0x60] sm:$0x1] %v770
        %v772 = vld [vmem:[%s741 + $0x6c] sm:$0x1]
        %v773 = vsel %vm744, 0, %v772
        %774 = vst [vmem:[%s741 + $0x6c] sm:$0x1] %v773
        %v775 = vld [vmem:[%s741 + $0x78] sm:$0x1]
        %v776 = vsel %vm744, 0, %v775
        %777 = vst [vmem:[%s741 + $0x78] sm:$0x1] %v776
        %v778 = vld [vmem:[%s741 + $0x84] sm:$0x1]
        %v779 = vsel %vm744, 0, %v778
        %780 = vst [vmem:[%s741 + $0x84] sm:$0x1] %v779
        %v781 = vld [vmem:[%s741 + $0x90] sm:$0x1]
        %v782 = vsel %vm744, 0, %v781
        %783 = vst [vmem:[%s741 + $0x90] sm:$0x1] %v782
        %v784 = vld [vmem:[%s741 + $0x9c] sm:$0x1]
        %v785 = vsel %vm744, 0, %v784
        %786 = vst [vmem:[%s741 + $0x9c] sm:$0x1] %v785
        %v787 = vld [vmem:[%s741 + $0xa8] sm:$0x1]
        %v788 = vsel %vm744, 0, %v787
        %789 = vst [vmem:[%s741 + $0xa8] sm:$0x1] %v788
        %v790 = vld [vmem:[%s741 + $0xb4] sm:$0x1]
        %v791 = vsel %vm744, 0, %v790
        %792 = vst [vmem:[%s741 + $0xb4] sm:$0x1] %v791
        %vm793 = vsmask.f32 7938
        %vm794 = vmand %vm742, %vm793
        %v795 = vld [vmem:[%s741 + $0x8] sm:$0x1]
        %v796 = vsel %vm794, 0, %v795
        %797 = vst [vmem:[%s741 + $0x8] sm:$0x1] %v796
        %v798 = vld [vmem:[%s741 + $0x14] sm:$0x1]
        %v799 = vsel %vm794, 0, %v798
        %800 = vst [vmem:[%s741 + $0x14] sm:$0x1] %v799
        %v801 = vld [vmem:[%s741 + $0x20] sm:$0x1]
        %v802 = vsel %vm794, 0, %v801
        %803 = vst [vmem:[%s741 + $0x20] sm:$0x1] %v802
        %v804 = vld [vmem:[%s741 + $0x2c] sm:$0x1]
        %v805 = vsel %vm794, 0, %v804
        %806 = vst [vmem:[%s741 + $0x2c] sm:$0x1] %v805
        %v807 = vld [vmem:[%s741 + $0x38] sm:$0x1]
        %v808 = vsel %vm794, 0, %v807
        %809 = vst [vmem:[%s741 + $0x38] sm:$0x1] %v808
        %v810 = vld [vmem:[%s741 + $0x44] sm:$0x1]
        %v811 = vsel %vm794, 0, %v810
        %812 = vst [vmem:[%s741 + $0x44] sm:$0x1] %v811
        %v813 = vld [vmem:[%s741 + $0x50] sm:$0x1]
        %v814 = vsel %vm794, 0, %v813
        %815 = vst [vmem:[%s741 + $0x50] sm:$0x1] %v814
        %v816 = vld [vmem:[%s741 + $0x5c] sm:$0x1]
        %v817 = vsel %vm794, 0, %v816
        %818 = vst [vmem:[%s741 + $0x5c] sm:$0x1] %v817
        %v819 = vld [vmem:[%s741 + $0x68] sm:$0x1]
        %v820 = vsel %vm794, 0, %v819
        %821 = vst [vmem:[%s741 + $0x68] sm:$0x1] %v820
        %v822 = vld [vmem:[%s741 + $0x74] sm:$0x1]
        %v823 = vsel %vm794, 0, %v822
        %824 = vst [vmem:[%s741 + $0x74] sm:$0x1] %v823
        %v825 = vld [vmem:[%s741 + $0x80] sm:$0x1]
        %v826 = vsel %vm794, 0, %v825
        %827 = vst [vmem:[%s741 + $0x80] sm:$0x1] %v826
        %v828 = vld [vmem:[%s741 + $0x8c] sm:$0x1]
        %v829 = vsel %vm794, 0, %v828
        %830 = vst [vmem:[%s741 + $0x8c] sm:$0x1] %v829
        %v831 = vld [vmem:[%s741 + $0x98] sm:$0x1]
        %v832 = vsel %vm794, 0, %v831
        %833 = vst [vmem:[%s741 + $0x98] sm:$0x1] %v832
        %v834 = vld [vmem:[%s741 + $0xa4] sm:$0x1]
        %v835 = vsel %vm794, 0, %v834
        %836 = vst [vmem:[%s741 + $0xa4] sm:$0x1] %v835
        %v837 = vld [vmem:[%s741 + $0xb0] sm:$0x1]
        %v838 = vsel %vm794, 0, %v837
        %839 = vst [vmem:[%s741 + $0xb0] sm:$0x1] %v838
        %v840 = vld [vmem:[%s741 + $0xbc] sm:$0x1]
        %v841 = vsel %vm794, 0, %v840
        %842 = vst [vmem:[%s741 + $0xbc] sm:$0x1] %v841
        %v843 = vpack.c.bf16 %v703, %v702
        %v844 = vpack.c.bf16 %v705, %v704
        %v845 = vpack.c.bf16 %v707, %v706
        %v846 = vpack.c.bf16 %v709, %v708
        %v847 = vpack.c.bf16 %v711, %v710
        %v848 = vpack.c.bf16 %v713, %v712
        %v849 = vpack.c.bf16 %v715, %v714
        %v850 = vpack.c.bf16 %v717, %v716
        %v851 = vpack.c.bf16 %v719, %v718
        %v852 = vpack.c.bf16 %v721, %v720
        %v853 = vpack.c.bf16 %v723, %v722
        %v854 = vpack.c.bf16 %v725, %v724
        %v855 = vpack.c.bf16 %v727, %v726
        %v856 = vpack.c.bf16 %v729, %v728
        %v857 = vpack.c.bf16 %v731, %v730
        %v858 = vpack.c.bf16 %v733, %v732
        %v875 = vunpack.c.l.b16 %v843
        %v876 = vunpack.c.h.b16 %v843
        %v877 = vunpack.c.l.b16 %v844
        %v878 = vunpack.c.h.b16 %v844
        %v879 = vunpack.c.l.b16 %v845
        %v880 = vunpack.c.h.b16 %v845
        %v881 = vunpack.c.l.b16 %v846
        %v882 = vunpack.c.h.b16 %v846
        %v883 = vunpack.c.l.b16 %v847
        %v884 = vunpack.c.h.b16 %v847
        %v885 = vunpack.c.l.b16 %v848
        %v886 = vunpack.c.h.b16 %v848
        %v887 = vunpack.c.l.b16 %v849
        %v888 = vunpack.c.h.b16 %v849
        %v889 = vunpack.c.l.b16 %v850
        %v890 = vunpack.c.h.b16 %v850
        %v891 = vunpack.c.l.b16 %v851
        %v892 = vunpack.c.h.b16 %v851
        %v893 = vunpack.c.l.b16 %v852
        %v894 = vunpack.c.h.b16 %v852
        %v895 = vunpack.c.l.b16 %v853
        %v896 = vunpack.c.h.b16 %v853
        %v897 = vunpack.c.l.b16 %v854
        %v898 = vunpack.c.h.b16 %v854
        %v899 = vunpack.c.l.b16 %v855
        %v900 = vunpack.c.h.b16 %v855
        %v901 = vunpack.c.l.b16 %v856
        %v902 = vunpack.c.h.b16 %v856
        %v903 = vunpack.c.l.b16 %v857
        %v904 = vunpack.c.h.b16 %v857
        %v905 = vunpack.c.l.b16 %v858
        %v906 = vunpack.c.h.b16 %v858
        %v907 = vpack.c.b16 %v875, %v875
        %v908 = vpack.c.b16 %v876, %v876
        %v909 = vpack.c.b16 %v877, %v877
        %v910 = vpack.c.b16 %v878, %v878
        %v911 = vpack.c.b16 %v879, %v879
        %v912 = vpack.c.b16 %v880, %v880
        %v913 = vpack.c.b16 %v881, %v881
        %v914 = vpack.c.b16 %v882, %v882
        %v915 = vpack.c.b16 %v883, %v883
        %v916 = vpack.c.b16 %v884, %v884
        %v917 = vpack.c.b16 %v885, %v885
        %v918 = vpack.c.b16 %v886, %v886
        %v919 = vpack.c.b16 %v887, %v887
        %v920 = vpack.c.b16 %v888, %v888
        %v921 = vpack.c.b16 %v889, %v889
        %v922 = vpack.c.b16 %v890, %v890
        %v923 = vpack.c.b16 %v891, %v891
        %v924 = vpack.c.b16 %v892, %v892
        %v925 = vpack.c.b16 %v893, %v893
        %v926 = vpack.c.b16 %v894, %v894
        %v927 = vpack.c.b16 %v895, %v895
        %v928 = vpack.c.b16 %v896, %v896
        %v929 = vpack.c.b16 %v897, %v897
        %v930 = vpack.c.b16 %v898, %v898
        %v931 = vpack.c.b16 %v899, %v899
        %v932 = vpack.c.b16 %v900, %v900
        %v933 = vpack.c.b16 %v901, %v901
        %v934 = vpack.c.b16 %v902, %v902
        %v935 = vpack.c.b16 %v903, %v903
        %v936 = vpack.c.b16 %v904, %v904
        %v937 = vpack.c.b16 %v905, %v905
        %v938 = vpack.c.b16 %v906, %v906
        %vm939 = vsmask.f32 4368
        %vm940 = vmor %vm743, %vm939
        %v942 = vshrl.u32 %v907, 16
        %v944 = vrot.slane %v942, 7
        %v945 = vshll.u32 %v907, 16
        %v947 = vor.u32 %v944, %v945
        %v948 = vrot.slane %v944, 4
        %v950 = vshrl.u32 %v908, 16
        %v952 = vrot.slane %v950, 7
        %v953 = vshll.u32 %v908, 16
        %v955 = vor.u32 %v952, %v953
        %v956 = vsel %vm940, %v948, %v955
        %v957 = vrot.slane %v952, 4
        %v959 = vshrl.u32 %v909, 16
        %v961 = vrot.slane %v959, 7
        %v962 = vshll.u32 %v909, 16
        %v964 = vor.u32 %v961, %v962
        %v965 = vrot.slane %v961, 4
        %v967 = vshrl.u32 %v910, 16
        %v969 = vrot.slane %v967, 7
        %v970 = vshll.u32 %v910, 16
        %v972 = vor.u32 %v969, %v970
        %v973 = vsel %vm940, %v965, %v972
        %v974 = vrot.slane %v969, 4
        %v976 = vshrl.u32 %v911, 16
        %v978 = vrot.slane %v976, 7
        %v979 = vshll.u32 %v911, 16
        %v981 = vor.u32 %v978, %v979
        %v982 = vrot.slane %v978, 4
        %v984 = vshrl.u32 %v912, 16
        %v986 = vrot.slane %v984, 7
        %v987 = vshll.u32 %v912, 16
        %v989 = vor.u32 %v986, %v987
        %v990 = vsel %vm940, %v982, %v989
        %v991 = vrot.slane %v986, 4
        %v993 = vshrl.u32 %v913, 16
        %v995 = vrot.slane %v993, 7
        %v996 = vshll.u32 %v913, 16
        %v998 = vor.u32 %v995, %v996
        %v999 = vrot.slane %v995, 4
        %v1001 = vshrl.u32 %v914, 16
        %v1003 = vrot.slane %v1001, 7
        %v1004 = vshll.u32 %v914, 16
        %v1006 = vor.u32 %v1003, %v1004
        %v1007 = vsel %vm940, %v999, %v1006
        %v1008 = vrot.slane %v1003, 4
        %v1010 = vshrl.u32 %v915, 16
        %v1012 = vrot.slane %v1010, 7
        %v1013 = vshll.u32 %v915, 16
        %v1015 = vor.u32 %v1012, %v1013
        %v1016 = vrot.slane %v1012, 4
        %v1018 = vshrl.u32 %v916, 16
        %v1020 = vrot.slane %v1018, 7
        %v1021 = vshll.u32 %v916, 16
        %v1023 = vor.u32 %v1020, %v1021
        %v1024 = vsel %vm940, %v1016, %v1023
        %v1025 = vrot.slane %v1020, 4
        %v1027 = vshrl.u32 %v917, 16
        %v1029 = vrot.slane %v1027, 7
        %v1030 = vshll.u32 %v917, 16
        %v1032 = vor.u32 %v1029, %v1030
        %v1033 = vrot.slane %v1029, 4
        %v1035 = vshrl.u32 %v918, 16
        %v1037 = vrot.slane %v1035, 7
        %v1038 = vshll.u32 %v918, 16
        %v1040 = vor.u32 %v1037, %v1038
        %v1041 = vsel %vm940, %v1033, %v1040
        %v1042 = vrot.slane %v1037, 4
        %v1044 = vshrl.u32 %v919, 16
        %v1046 = vrot.slane %v1044, 7
        %v1047 = vshll.u32 %v919, 16
        %v1049 = vor.u32 %v1046, %v1047
        %v1050 = vrot.slane %v1046, 4
        %v1052 = vshrl.u32 %v920, 16
        %v1054 = vrot.slane %v1052, 7
        %v1055 = vshll.u32 %v920, 16
        %v1057 = vor.u32 %v1054, %v1055
        %v1058 = vsel %vm940, %v1050, %v1057
        %v1059 = vrot.slane %v1054, 4
        %v1061 = vshrl.u32 %v921, 16
        %v1063 = vrot.slane %v1061, 7
        %v1064 = vshll.u32 %v921, 16
        %v1066 = vor.u32 %v1063, %v1064
        %v1067 = vrot.slane %v1063, 4
        %v1069 = vshrl.u32 %v922, 16
        %v1071 = vrot.slane %v1069, 7
        %v1072 = vshll.u32 %v922, 16
        %v1074 = vor.u32 %v1071, %v1072
        %v1075 = vsel %vm940, %v1067, %v1074
        %v1076 = vrot.slane %v1071, 4
        %v1078 = vshrl.u32 %v923, 16
        %v1080 = vrot.slane %v1078, 7
        %v1081 = vshll.u32 %v923, 16
        %v1083 = vor.u32 %v1080, %v1081
        %v1084 = vrot.slane %v1080, 4
        %v1086 = vshrl.u32 %v924, 16
        %v1088 = vrot.slane %v1086, 7
        %v1089 = vshll.u32 %v924, 16
        %v1091 = vor.u32 %v1088, %v1089
        %v1092 = vsel %vm940, %v1084, %v1091
        %v1093 = vrot.slane %v1088, 4
        %v1095 = vshrl.u32 %v925, 16
        %v1097 = vrot.slane %v1095, 7
        %v1098 = vshll.u32 %v925, 16
        %v1100 = vor.u32 %v1097, %v1098
        %v1101 = vrot.slane %v1097, 4
        %v1103 = vshrl.u32 %v926, 16
        %v1105 = vrot.slane %v1103, 7
        %v1106 = vshll.u32 %v926, 16
        %v1108 = vor.u32 %v1105, %v1106
        %v1109 = vsel %vm940, %v1101, %v1108
        %v1110 = vrot.slane %v1105, 4
        %v1112 = vshrl.u32 %v927, 16
        %v1114 = vrot.slane %v1112, 7
        %v1115 = vshll.u32 %v927, 16
        %v1117 = vor.u32 %v1114, %v1115
        %v1118 = vrot.slane %v1114, 4
        %v1120 = vshrl.u32 %v928, 16
        %v1122 = vrot.slane %v1120, 7
        %v1123 = vshll.u32 %v928, 16
        %v1125 = vor.u32 %v1122, %v1123
        %v1126 = vsel %vm940, %v1118, %v1125
        %v1127 = vrot.slane %v1122, 4
        %v1129 = vshrl.u32 %v929, 16
        %v1131 = vrot.slane %v1129, 7
        %v1132 = vshll.u32 %v929, 16
        %v1134 = vor.u32 %v1131, %v1132
        %v1135 = vrot.slane %v1131, 4
        %v1137 = vshrl.u32 %v930, 16
        %v1139 = vrot.slane %v1137, 7
        %v1140 = vshll.u32 %v930, 16
        %v1142 = vor.u32 %v1139, %v1140
        %v1143 = vsel %vm940, %v1135, %v1142
        %v1144 = vrot.slane %v1139, 4
        %v1146 = vshrl.u32 %v931, 16
        %v1148 = vrot.slane %v1146, 7
        %v1149 = vshll.u32 %v931, 16
        %v1151 = vor.u32 %v1148, %v1149
        %v1152 = vrot.slane %v1148, 4
        %v1154 = vshrl.u32 %v932, 16
        %v1156 = vrot.slane %v1154, 7
        %v1157 = vshll.u32 %v932, 16
        %v1159 = vor.u32 %v1156, %v1157
        %v1160 = vsel %vm940, %v1152, %v1159
        %v1161 = vrot.slane %v1156, 4
        %v1163 = vshrl.u32 %v933, 16
        %v1165 = vrot.slane %v1163, 7
        %v1166 = vshll.u32 %v933, 16
        %v1168 = vor.u32 %v1165, %v1166
        %v1169 = vrot.slane %v1165, 4
        %v1171 = vshrl.u32 %v934, 16
        %v1173 = vrot.slane %v1171, 7
        %v1174 = vshll.u32 %v934, 16
        %v1176 = vor.u32 %v1173, %v1174
        %v1177 = vsel %vm940, %v1169, %v1176
        %v1178 = vrot.slane %v1173, 4
        %v1180 = vshrl.u32 %v935, 16
        %v1182 = vrot.slane %v1180, 7
        %v1183 = vshll.u32 %v935, 16
        %v1185 = vor.u32 %v1182, %v1183
        %v1186 = vrot.slane %v1182, 4
        %v1188 = vshrl.u32 %v936, 16
        %v1190 = vrot.slane %v1188, 7
        %v1191 = vshll.u32 %v936, 16
        %v1193 = vor.u32 %v1190, %v1191
        %v1194 = vsel %vm940, %v1186, %v1193
        %v1195 = vrot.slane %v1190, 4
        %v1197 = vshrl.u32 %v937, 16
        %v1199 = vrot.slane %v1197, 7
        %v1200 = vshll.u32 %v937, 16
        %v1202 = vor.u32 %v1199, %v1200
        %v1203 = vrot.slane %v1199, 4
        %v1205 = vshrl.u32 %v938, 16
        %v1207 = vrot.slane %v1205, 7
        %v1208 = vshll.u32 %v938, 16
        %v1210 = vor.u32 %v1207, %v1208
        %v1211 = vsel %vm940, %v1203, %v1210
        %v1212 = vrot.slane %v1207, 4
        %vm1261 = vcmask 1043456
        %vm1262 = vmand %vm1261, %vm793
        %v1263 = vld [vmem:[%s741] sm:$0xf]
        %v1264 = vsel %vm1262, %v947, %v1263
        %1265 = vst [vmem:[%s741] sm:$0xf] %v1264
        %1266 = vst [vmem:[%s741 + $0x4] sm:$0xf] %v956
        %v1267 = vld [vmem:[%s741 + $0x8] sm:$0x1]
        %v1268 = vsel %vm744, %v957, %v1267
        %1269 = vst [vmem:[%s741 + $0x8] sm:$0x1] %v1268
        %v1270 = vld [vmem:[%s741 + $0xc] sm:$0xf]
        %v1271 = vsel %vm1262, %v964, %v1270
        %1272 = vst [vmem:[%s741 + $0xc] sm:$0xf] %v1271
        %1273 = vst [vmem:[%s741 + $0x10] sm:$0xf] %v973
        %v1274 = vld [vmem:[%s741 + $0x14] sm:$0x1]
        %v1275 = vsel %vm744, %v974, %v1274
        %1276 = vst [vmem:[%s741 + $0x14] sm:$0x1] %v1275
        %v1277 = vld [vmem:[%s741 + $0x18] sm:$0xf]
        %v1278 = vsel %vm1262, %v981, %v1277
        %1279 = vst [vmem:[%s741 + $0x18] sm:$0xf] %v1278
        %1280 = vst [vmem:[%s741 + $0x1c] sm:$0xf] %v990
        %v1281 = vld [vmem:[%s741 + $0x20] sm:$0x1]
        %v1282 = vsel %vm744, %v991, %v1281
        %1283 = vst [vmem:[%s741 + $0x20] sm:$0x1] %v1282
        %v1284 = vld [vmem:[%s741 + $0x24] sm:$0xf]
        %v1285 = vsel %vm1262, %v998, %v1284
        %1286 = vst [vmem:[%s741 + $0x24] sm:$0xf] %v1285
        %1287 = vst [vmem:[%s741 + $0x28] sm:$0xf] %v1007
        %v1288 = vld [vmem:[%s741 + $0x2c] sm:$0x1]
        %v1289 = vsel %vm744, %v1008, %v1288
        %1290 = vst [vmem:[%s741 + $0x2c] sm:$0x1] %v1289
        %v1291 = vld [vmem:[%s741 + $0x30] sm:$0xf]
        %v1292 = vsel %vm1262, %v1015, %v1291
        %1293 = vst [vmem:[%s741 + $0x30] sm:$0xf] %v1292
        %1294 = vst [vmem:[%s741 + $0x34] sm:$0xf] %v1024
        %v1295 = vld [vmem:[%s741 + $0x38] sm:$0x1]
        %v1296 = vsel %vm744, %v1025, %v1295
        %1297 = vst [vmem:[%s741 + $0x38] sm:$0x1] %v1296
        %v1298 = vld [vmem:[%s741 + $0x3c] sm:$0xf]
        %v1299 = vsel %vm1262, %v1032, %v1298
        %1300 = vst [vmem:[%s741 + $0x3c] sm:$0xf] %v1299
        %1301 = vst [vmem:[%s741 + $0x40] sm:$0xf] %v1041
        %v1302 = vld [vmem:[%s741 + $0x44] sm:$0x1]
        %v1303 = vsel %vm744, %v1042, %v1302
        %1304 = vst [vmem:[%s741 + $0x44] sm:$0x1] %v1303
        %v1305 = vld [vmem:[%s741 + $0x48] sm:$0xf]
        %v1306 = vsel %vm1262, %v1049, %v1305
        %1307 = vst [vmem:[%s741 + $0x48] sm:$0xf] %v1306
        %1308 = vst [vmem:[%s741 + $0x4c] sm:$0xf] %v1058
        %v1309 = vld [vmem:[%s741 + $0x50] sm:$0x1]
        %v1310 = vsel %vm744, %v1059, %v1309
        %1311 = vst [vmem:[%s741 + $0x50] sm:$0x1] %v1310
        %v1312 = vld [vmem:[%s741 + $0x54] sm:$0xf]
        %v1313 = vsel %vm1262, %v1066, %v1312
        %1314 = vst [vmem:[%s741 + $0x54] sm:$0xf] %v1313
        %1315 = vst [vmem:[%s741 + $0x58] sm:$0xf] %v1075
        %v1316 = vld [vmem:[%s741 + $0x5c] sm:$0x1]
        %v1317 = vsel %vm744, %v1076, %v1316
        %1318 = vst [vmem:[%s741 + $0x5c] sm:$0x1] %v1317
        %v1319 = vld [vmem:[%s741 + $0x60] sm:$0xf]
        %v1320 = vsel %vm1262, %v1083, %v1319
        %1321 = vst [vmem:[%s741 + $0x60] sm:$0xf] %v1320
        %1322 = vst [vmem:[%s741 + $0x64] sm:$0xf] %v1092
        %v1323 = vld [vmem:[%s741 + $0x68] sm:$0x1]
        %v1324 = vsel %vm744, %v1093, %v1323
        %1325 = vst [vmem:[%s741 + $0x68] sm:$0x1] %v1324
        %v1326 = vld [vmem:[%s741 + $0x6c] sm:$0xf]
        %v1327 = vsel %vm1262, %v1100, %v1326
        %1328 = vst [vmem:[%s741 + $0x6c] sm:$0xf] %v1327
        %1329 = vst [vmem:[%s741 + $0x70] sm:$0xf] %v1109
        %v1330 = vld [vmem:[%s741 + $0x74] sm:$0x1]
        %v1331 = vsel %vm744, %v1110, %v1330
        %1332 = vst [vmem:[%s741 + $0x74] sm:$0x1] %v1331
        %v1333 = vld [vmem:[%s741 + $0x78] sm:$0xf]
        %v1334 = vsel %vm1262, %v1117, %v1333
        %1335 = vst [vmem:[%s741 + $0x78] sm:$0xf] %v1334
        %1336 = vst [vmem:[%s741 + $0x7c] sm:$0xf] %v1126
        %v1337 = vld [vmem:[%s741 + $0x80] sm:$0x1]
        %v1338 = vsel %vm744, %v1127, %v1337
        %1339 = vst [vmem:[%s741 + $0x80] sm:$0x1] %v1338
        %v1340 = vld [vmem:[%s741 + $0x84] sm:$0xf]
        %v1341 = vsel %vm1262, %v1134, %v1340
        %1342 = vst [vmem:[%s741 + $0x84] sm:$0xf] %v1341
        %1343 = vst [vmem:[%s741 + $0x88] sm:$0xf] %v1143
        %v1344 = vld [vmem:[%s741 + $0x8c] sm:$0x1]
        %v1345 = vsel %vm744, %v1144, %v1344
        %1346 = vst [vmem:[%s741 + $0x8c] sm:$0x1] %v1345
        %v1347 = vld [vmem:[%s741 + $0x90] sm:$0xf]
        %v1348 = vsel %vm1262, %v1151, %v1347
        %1349 = vst [vmem:[%s741 + $0x90] sm:$0xf] %v1348
        %1350 = vst [vmem:[%s741 + $0x94] sm:$0xf] %v1160
        %v1351 = vld [vmem:[%s741 + $0x98] sm:$0x1]
        %v1352 = vsel %vm744, %v1161, %v1351
        %1353 = vst [vmem:[%s741 + $0x98] sm:$0x1] %v1352
        %v1354 = vld [vmem:[%s741 + $0x9c] sm:$0xf]
        %v1355 = vsel %vm1262, %v1168, %v1354
        %1356 = vst [vmem:[%s741 + $0x9c] sm:$0xf] %v1355
        %1357 = vst [vmem:[%s741 + $0xa0] sm:$0xf] %v1177
        %v1358 = vld [vmem:[%s741 + $0xa4] sm:$0x1]
        %v1359 = vsel %vm744, %v1178, %v1358
        %1360 = vst [vmem:[%s741 + $0xa4] sm:$0x1] %v1359
        %v1361 = vld [vmem:[%s741 + $0xa8] sm:$0xf]
        %v1362 = vsel %vm1262, %v1185, %v1361
        %1363 = vst [vmem:[%s741 + $0xa8] sm:$0xf] %v1362
        %1364 = vst [vmem:[%s741 + $0xac] sm:$0xf] %v1194
        %v1365 = vld [vmem:[%s741 + $0xb0] sm:$0x1]
        %v1366 = vsel %vm744, %v1195, %v1365
        %1367 = vst [vmem:[%s741 + $0xb0] sm:$0x1] %v1366
        %v1368 = vld [vmem:[%s741 + $0xb4] sm:$0xf]
        %v1369 = vsel %vm1262, %v1202, %v1368
        %1370 = vst [vmem:[%s741 + $0xb4] sm:$0xf] %v1369
        %1371 = vst [vmem:[%s741 + $0xb8] sm:$0xf] %v1211
        %v1372 = vld [vmem:[%s741 + $0xbc] sm:$0x1]
        %v1373 = vsel %vm744, %v1212, %v1372
        %1374 = vst [vmem:[%s741 + $0xbc] sm:$0x1] %v1373
        %v1375 = vld [vmem:[#allocation2] sm:$0xf]
        %v1376 = vld [vmem:[#allocation2 + $0x4] sm:$0xf]
        %v1377 = vld [vmem:[#allocation2 + $0xc] sm:$0xf]
        %v1378 = vld [vmem:[#allocation2 + $0x10] sm:$0xf]
        %v1379 = vld [vmem:[#allocation2 + $0x18] sm:$0xf]
        %v1380 = vld [vmem:[#allocation2 + $0x1c] sm:$0xf]
        %v1381 = vld [vmem:[#allocation2 + $0x24] sm:$0xf]
        %v1382 = vld [vmem:[#allocation2 + $0x28] sm:$0xf]
        %v1383 = vld [vmem:[#allocation2 + $0x30] sm:$0xf]
        %v1384 = vld [vmem:[#allocation2 + $0x34] sm:$0xf]
        %v1385 = vld [vmem:[#allocation2 + $0x3c] sm:$0xf]
        %v1386 = vld [vmem:[#allocation2 + $0x40] sm:$0xf]
        %v1387 = vld [vmem:[#allocation2 + $0x48] sm:$0xf]
        %v1388 = vld [vmem:[#allocation2 + $0x4c] sm:$0xf]
        %v1389 = vld [vmem:[#allocation2 + $0x54] sm:$0xf]
        %v1390 = vld [vmem:[#allocation2 + $0x58] sm:$0xf]
        %v1391 = vld [vmem:[#allocation2 + $0x60] sm:$0xf]
        %v1392 = vld [vmem:[#allocation2 + $0x64] sm:$0xf]
        %v1393 = vld [vmem:[#allocation2 + $0x6c] sm:$0xf]
        %v1394 = vld [vmem:[#allocation2 + $0x70] sm:$0xf]
        %v1395 = vld [vmem:[#allocation2 + $0x78] sm:$0xf]
        %v1396 = vld [vmem:[#allocation2 + $0x7c] sm:$0xf]
        %v1397 = vld [vmem:[#allocation2 + $0x84] sm:$0xf]
        %v1398 = vld [vmem:[#allocation2 + $0x88] sm:$0xf]
        %v1399 = vld [vmem:[#allocation2 + $0x90] sm:$0xf]
        %v1400 = vld [vmem:[#allocation2 + $0x94] sm:$0xf]
        %v1401 = vld [vmem:[#allocation2 + $0x9c] sm:$0xf]
        %v1402 = vld [vmem:[#allocation2 + $0xa0] sm:$0xf]
        %v1403 = vld [vmem:[#allocation2 + $0xa8] sm:$0xf]
        %v1404 = vld [vmem:[#allocation2 + $0xac] sm:$0xf]
        %v1405 = vld [vmem:[#allocation2 + $0xb4] sm:$0xf]
        %v1406 = vld [vmem:[#allocation2 + $0xb8] sm:$0xf]
        %v1407 = vld [vmem:[#allocation2 + $0x8] sm:$0x1]
        %v1408 = vld [vmem:[#allocation2 + $0x14] sm:$0x1]
        %v1409 = vld [vmem:[#allocation2 + $0x20] sm:$0x1]
        %v1410 = vld [vmem:[#allocation2 + $0x2c] sm:$0x1]
        %v1411 = vld [vmem:[#allocation2 + $0x38] sm:$0x1]
        %v1412 = vld [vmem:[#allocation2 + $0x44] sm:$0x1]
        %v1413 = vld [vmem:[#allocation2 + $0x50] sm:$0x1]
        %v1414 = vld [vmem:[#allocation2 + $0x5c] sm:$0x1]
        %v1415 = vld [vmem:[#allocation2 + $0x68] sm:$0x1]
        %v1416 = vld [vmem:[#allocation2 + $0x74] sm:$0x1]
        %v1417 = vld [vmem:[#allocation2 + $0x80] sm:$0x1]
        %v1418 = vld [vmem:[#allocation2 + $0x8c] sm:$0x1]
        %v1419 = vld [vmem:[#allocation2 + $0x98] sm:$0x1]
        %v1420 = vld [vmem:[#allocation2 + $0xa4] sm:$0x1]
        %v1421 = vld [vmem:[#allocation2 + $0xb0] sm:$0x1]
        %v1422 = vld [vmem:[#allocation2 + $0xbc] sm:$0x1]
        %v1423 = vld [vmem:[#allocation2] sm:$0xe]
        %v1424 = vld [vmem:[#allocation2 + $0xc] sm:$0xe]
        %v1425 = vld [vmem:[#allocation2 + $0x18] sm:$0xe]
        %v1426 = vld [vmem:[#allocation2 + $0x24] sm:$0xe]
        %v1427 = vld [vmem:[#allocation2 + $0x30] sm:$0xe]
        %v1428 = vld [vmem:[#allocation2 + $0x3c] sm:$0xe]
        %v1429 = vld [vmem:[#allocation2 + $0x48] sm:$0xe]
        %v1430 = vld [vmem:[#allocation2 + $0x54] sm:$0xe]
        %v1431 = vld [vmem:[#allocation2 + $0x60] sm:$0xe]
        %v1432 = vld [vmem:[#allocation2 + $0x6c] sm:$0xe]
        %v1433 = vld [vmem:[#allocation2 + $0x78] sm:$0xe]
        %v1434 = vld [vmem:[#allocation2 + $0x84] sm:$0xe]
        %v1435 = vld [vmem:[#allocation2 + $0x90] sm:$0xe]
        %v1436 = vld [vmem:[#allocation2 + $0x9c] sm:$0xe]
        %v1437 = vld [vmem:[#allocation2 + $0xa8] sm:$0xe]
        %v1438 = vld [vmem:[#allocation2 + $0xb4] sm:$0xe]
        %v1471 = vunpack.c.l.b16 %v1375
        %v1472 = vunpack.c.l.b16 %v1376
        %v1473 = vunpack.c.l.b16 %v1377
        %v1474 = vunpack.c.l.b16 %v1378
        %v1475 = vunpack.c.l.b16 %v1379
        %v1476 = vunpack.c.l.b16 %v1380
        %v1477 = vunpack.c.l.b16 %v1381
        %v1478 = vunpack.c.l.b16 %v1382
        %v1479 = vunpack.c.l.b16 %v1383
        %v1480 = vunpack.c.l.b16 %v1384
        %v1481 = vunpack.c.l.b16 %v1385
        %v1482 = vunpack.c.l.b16 %v1386
        %v1483 = vunpack.c.l.b16 %v1387
        %v1484 = vunpack.c.l.b16 %v1388
        %v1485 = vunpack.c.l.b16 %v1389
        %v1486 = vunpack.c.l.b16 %v1390
        %v1487 = vunpack.c.l.b16 %v1391
        %v1488 = vunpack.c.l.b16 %v1392
        %v1489 = vunpack.c.l.b16 %v1393
        %v1490 = vunpack.c.l.b16 %v1394
        %v1491 = vunpack.c.l.b16 %v1395
        %v1492 = vunpack.c.l.b16 %v1396
        %v1493 = vunpack.c.l.b16 %v1397
        %v1494 = vunpack.c.l.b16 %v1398
        %v1495 = vunpack.c.l.b16 %v1399
        %v1496 = vunpack.c.l.b16 %v1400
        %v1497 = vunpack.c.l.b16 %v1401
        %v1498 = vunpack.c.l.b16 %v1402
        %v1499 = vunpack.c.l.b16 %v1403
        %v1500 = vunpack.c.l.b16 %v1404
        %v1501 = vunpack.c.l.b16 %v1405
        %v1502 = vunpack.c.l.b16 %v1406
        %v1503 = vpack.c.b16 %v1472, %v1471
        %v1504 = vpack.c.b16 %v1474, %v1473
        %v1505 = vpack.c.b16 %v1476, %v1475
        %v1506 = vpack.c.b16 %v1478, %v1477
        %v1507 = vpack.c.b16 %v1480, %v1479
        %v1508 = vpack.c.b16 %v1482, %v1481
        %v1509 = vpack.c.b16 %v1484, %v1483
        %v1510 = vpack.c.b16 %v1486, %v1485
        %v1511 = vpack.c.b16 %v1488, %v1487
        %v1512 = vpack.c.b16 %v1490, %v1489
        %v1513 = vpack.c.b16 %v1492, %v1491
        %v1514 = vpack.c.b16 %v1494, %v1493
        %v1515 = vpack.c.b16 %v1496, %v1495
        %v1516 = vpack.c.b16 %v1498, %v1497
        %v1517 = vpack.c.b16 %v1500, %v1499
        %v1518 = vpack.c.b16 %v1502, %v1501
        %v1551 = vunpack.c.l.b16 %v1407
        %v1552 = vunpack.c.l.b16 %v1408
        %v1553 = vunpack.c.l.b16 %v1409
        %v1554 = vunpack.c.l.b16 %v1410
        %v1555 = vunpack.c.l.b16 %v1411
        %v1556 = vunpack.c.l.b16 %v1412
        %v1557 = vunpack.c.l.b16 %v1413
        %v1558 = vunpack.c.l.b16 %v1414
        %v1559 = vunpack.c.l.b16 %v1415
        %v1560 = vunpack.c.l.b16 %v1416
        %v1561 = vunpack.c.l.b16 %v1417
        %v1562 = vunpack.c.l.b16 %v1418
        %v1563 = vunpack.c.l.b16 %v1419
        %v1564 = vunpack.c.l.b16 %v1420
        %v1565 = vunpack.c.l.b16 %v1421
        %v1566 = vunpack.c.l.b16 %v1422
        %v1567 = vpack.c.b16 %v1551, %v1551
        %v1568 = vpack.c.b16 %v1552, %v1552
        %v1569 = vpack.c.b16 %v1553, %v1553
        %v1570 = vpack.c.b16 %v1554, %v1554
        %v1571 = vpack.c.b16 %v1555, %v1555
        %v1572 = vpack.c.b16 %v1556, %v1556
        %v1573 = vpack.c.b16 %v1557, %v1557
        %v1574 = vpack.c.b16 %v1558, %v1558
        %v1575 = vpack.c.b16 %v1559, %v1559
        %v1576 = vpack.c.b16 %v1560, %v1560
        %v1577 = vpack.c.b16 %v1561, %v1561
        %v1578 = vpack.c.b16 %v1562, %v1562
        %v1579 = vpack.c.b16 %v1563, %v1563
        %v1580 = vpack.c.b16 %v1564, %v1564
        %v1581 = vpack.c.b16 %v1565, %v1565
        %v1582 = vpack.c.b16 %v1566, %v1566
        %vm1583 = vsmask.f32 7424
        %v1585 = vshrl.u32 %v1503, 16
        %v1587 = vshll.u32 %v1503, 16
        %v1589 = vrot.slane %v1587, 1
        %v1590 = vor.u32 %v1585, %v1589
        %v1592 = vshll.u32 %v1567, 16
        %v1594 = vrot.slane %v1592, 1
        %v1595 = vsel %vm1583, %v1590, %v1594
        %v1597 = vshrl.u32 %v1504, 16
        %v1599 = vshll.u32 %v1504, 16
        %v1601 = vrot.slane %v1599, 1
        %v1602 = vor.u32 %v1597, %v1601
        %v1604 = vshll.u32 %v1568, 16
        %v1606 = vrot.slane %v1604, 1
        %v1607 = vsel %vm1583, %v1602, %v1606
        %v1609 = vshrl.u32 %v1505, 16
        %v1611 = vshll.u32 %v1505, 16
        %v1613 = vrot.slane %v1611, 1
        %v1614 = vor.u32 %v1609, %v1613
        %v1616 = vshll.u32 %v1569, 16
        %v1618 = vrot.slane %v1616, 1
        %v1619 = vsel %vm1583, %v1614, %v1618
        %v1621 = vshrl.u32 %v1506, 16
        %v1623 = vshll.u32 %v1506, 16
        %v1625 = vrot.slane %v1623, 1
        %v1626 = vor.u32 %v1621, %v1625
        %v1628 = vshll.u32 %v1570, 16
        %v1630 = vrot.slane %v1628, 1
        %v1631 = vsel %vm1583, %v1626, %v1630
        %v1633 = vshrl.u32 %v1507, 16
        %v1635 = vshll.u32 %v1507, 16
        %v1637 = vrot.slane %v1635, 1
        %v1638 = vor.u32 %v1633, %v1637
        %v1640 = vshll.u32 %v1571, 16
        %v1642 = vrot.slane %v1640, 1
        %v1643 = vsel %vm1583, %v1638, %v1642
        %v1645 = vshrl.u32 %v1508, 16
        %v1647 = vshll.u32 %v1508, 16
        %v1649 = vrot.slane %v1647, 1
        %v1650 = vor.u32 %v1645, %v1649
        %v1652 = vshll.u32 %v1572, 16
        %v1654 = vrot.slane %v1652, 1
        %v1655 = vsel %vm1583, %v1650, %v1654
        %v1657 = vshrl.u32 %v1509, 16
        %v1659 = vshll.u32 %v1509, 16
        %v1661 = vrot.slane %v1659, 1
        %v1662 = vor.u32 %v1657, %v1661
        %v1664 = vshll.u32 %v1573, 16
        %v1666 = vrot.slane %v1664, 1
        %v1667 = vsel %vm1583, %v1662, %v1666
        %v1669 = vshrl.u32 %v1510, 16
        %v1671 = vshll.u32 %v1510, 16
        %v1673 = vrot.slane %v1671, 1
        %v1674 = vor.u32 %v1669, %v1673
        %v1676 = vshll.u32 %v1574, 16
        %v1678 = vrot.slane %v1676, 1
        %v1679 = vsel %vm1583, %v1674, %v1678
        %v1681 = vshrl.u32 %v1511, 16
        %v1683 = vshll.u32 %v1511, 16
        %v1685 = vrot.slane %v1683, 1
        %v1686 = vor.u32 %v1681, %v1685
        %v1688 = vshll.u32 %v1575, 16
        %v1690 = vrot.slane %v1688, 1
        %v1691 = vsel %vm1583, %v1686, %v1690
        %v1693 = vshrl.u32 %v1512, 16
        %v1695 = vshll.u32 %v1512, 16
        %v1697 = vrot.slane %v1695, 1
        %v1698 = vor.u32 %v1693, %v1697
        %v1700 = vshll.u32 %v1576, 16
        %v1702 = vrot.slane %v1700, 1
        %v1703 = vsel %vm1583, %v1698, %v1702
        %v1705 = vshrl.u32 %v1513, 16
        %v1707 = vshll.u32 %v1513, 16
        %v1709 = vrot.slane %v1707, 1
        %v1710 = vor.u32 %v1705, %v1709
        %v1712 = vshll.u32 %v1577, 16
        %v1714 = vrot.slane %v1712, 1
        %v1715 = vsel %vm1583, %v1710, %v1714
        %v1717 = vshrl.u32 %v1514, 16
        %v1719 = vshll.u32 %v1514, 16
        %v1721 = vrot.slane %v1719, 1
        %v1722 = vor.u32 %v1717, %v1721
        %v1724 = vshll.u32 %v1578, 16
        %v1726 = vrot.slane %v1724, 1
        %v1727 = vsel %vm1583, %v1722, %v1726
        %v1729 = vshrl.u32 %v1515, 16
        %v1731 = vshll.u32 %v1515, 16
        %v1733 = vrot.slane %v1731, 1
        %v1734 = vor.u32 %v1729, %v1733
        %v1736 = vshll.u32 %v1579, 16
        %v1738 = vrot.slane %v1736, 1
        %v1739 = vsel %vm1583, %v1734, %v1738
        %v1741 = vshrl.u32 %v1516, 16
        %v1743 = vshll.u32 %v1516, 16
        %v1745 = vrot.slane %v1743, 1
        %v1746 = vor.u32 %v1741, %v1745
        %v1748 = vshll.u32 %v1580, 16
        %v1750 = vrot.slane %v1748, 1
        %v1751 = vsel %vm1583, %v1746, %v1750
        %v1753 = vshrl.u32 %v1517, 16
        %v1755 = vshll.u32 %v1517, 16
        %v1757 = vrot.slane %v1755, 1
        %v1758 = vor.u32 %v1753, %v1757
        %v1760 = vshll.u32 %v1581, 16
        %v1762 = vrot.slane %v1760, 1
        %v1763 = vsel %vm1583, %v1758, %v1762
        %v1765 = vshrl.u32 %v1518, 16
        %v1767 = vshll.u32 %v1518, 16
        %v1769 = vrot.slane %v1767, 1
        %v1770 = vor.u32 %v1765, %v1769
        %v1772 = vshll.u32 %v1582, 16
        %v1774 = vrot.slane %v1772, 1
        %v1775 = vsel %vm1583, %v1770, %v1774
        %v1808 = vunpack.c.l.b16 %v1423
        %v1809 = vunpack.c.l.b16 %v1424
        %v1810 = vunpack.c.l.b16 %v1425
        %v1811 = vunpack.c.l.b16 %v1426
        %v1812 = vunpack.c.l.b16 %v1427
        %v1813 = vunpack.c.l.b16 %v1428
        %v1814 = vunpack.c.l.b16 %v1429
        %v1815 = vunpack.c.l.b16 %v1430
        %v1816 = vunpack.c.l.b16 %v1431
        %v1817 = vunpack.c.l.b16 %v1432
        %v1818 = vunpack.c.l.b16 %v1433
        %v1819 = vunpack.c.l.b16 %v1434
        %v1820 = vunpack.c.l.b16 %v1435
        %v1821 = vunpack.c.l.b16 %v1436
        %v1822 = vunpack.c.l.b16 %v1437
        %v1823 = vunpack.c.l.b16 %v1438
        %v1824 = vpack.c.b16 %v1472, %v1808
        %v1825 = vpack.c.b16 %v1474, %v1809
        %v1826 = vpack.c.b16 %v1476, %v1810
        %v1827 = vpack.c.b16 %v1478, %v1811
        %v1828 = vpack.c.b16 %v1480, %v1812
        %v1829 = vpack.c.b16 %v1482, %v1813
        %v1830 = vpack.c.b16 %v1484, %v1814
        %v1831 = vpack.c.b16 %v1486, %v1815
        %v1832 = vpack.c.b16 %v1488, %v1816
        %v1833 = vpack.c.b16 %v1490, %v1817
        %v1834 = vpack.c.b16 %v1492, %v1818
        %v1835 = vpack.c.b16 %v1494, %v1819
        %v1836 = vpack.c.b16 %v1496, %v1820
        %v1837 = vpack.c.b16 %v1498, %v1821
        %v1838 = vpack.c.b16 %v1500, %v1822
        %v1839 = vpack.c.b16 %v1502, %v1823
        %vm1840 = vcmask 1046528
        %v1841 = vrot.slane %v1824, 1
        %v1842 = vrot.slane %v1567, 1
        %v1843 = vsel %vm1840, %v1841, %v1842
        %v1844 = vrot.slane %v1825, 1
        %v1845 = vrot.slane %v1568, 1
        %v1846 = vsel %vm1840, %v1844, %v1845
        %v1847 = vrot.slane %v1826, 1
        %v1848 = vrot.slane %v1569, 1
        %v1849 = vsel %vm1840, %v1847, %v1848
        %v1850 = vrot.slane %v1827, 1
        %v1851 = vrot.slane %v1570, 1
        %v1852 = vsel %vm1840, %v1850, %v1851
        %v1853 = vrot.slane %v1828, 1
        %v1854 = vrot.slane %v1571, 1
        %v1855 = vsel %vm1840, %v1853, %v1854
        %v1856 = vrot.slane %v1829, 1
        %v1857 = vrot.slane %v1572, 1
        %v1858 = vsel %vm1840, %v1856, %v1857
        %v1859 = vrot.slane %v1830, 1
        %v1860 = vrot.slane %v1573, 1
        %v1861 = vsel %vm1840, %v1859, %v1860
        %v1862 = vrot.slane %v1831, 1
        %v1863 = vrot.slane %v1574, 1
        %v1864 = vsel %vm1840, %v1862, %v1863
        %v1865 = vrot.slane %v1832, 1
        %v1866 = vrot.slane %v1575, 1
        %v1867 = vsel %vm1840, %v1865, %v1866
        %v1868 = vrot.slane %v1833, 1
        %v1869 = vrot.slane %v1576, 1
        %v1870 = vsel %vm1840, %v1868, %v1869
        %v1871 = vrot.slane %v1834, 1
        %v1872 = vrot.slane %v1577, 1
        %v1873 = vsel %vm1840, %v1871, %v1872
        %v1874 = vrot.slane %v1835, 1
        %v1875 = vrot.slane %v1578, 1
        %v1876 = vsel %vm1840, %v1874, %v1875
        %v1877 = vrot.slane %v1836, 1
        %v1878 = vrot.slane %v1579, 1
        %v1879 = vsel %vm1840, %v1877, %v1878
        %v1880 = vrot.slane %v1837, 1
        %v1881 = vrot.slane %v1580, 1
        %v1882 = vsel %vm1840, %v1880, %v1881
        %v1883 = vrot.slane %v1838, 1
        %v1884 = vrot.slane %v1581, 1
        %v1885 = vsel %vm1840, %v1883, %v1884
        %v1886 = vrot.slane %v1839, 1
        %v1887 = vrot.slane %v1582, 1
        %v1888 = vsel %vm1840, %v1886, %v1887
        %v1905 = vld [vmem:[#allocation8] sm:$0xf]
        %v1906 = vld [vmem:[#allocation8 + $0x4] sm:$0xf]
        %v1907 = vld [vmem:[#allocation8 + $0x8] sm:$0xf]
        %v1908 = vld [vmem:[#allocation8 + $0xc] sm:$0xf]
        %v1909 = vld [vmem:[#allocation8 + $0x10] sm:$0xf]
        %v1910 = vld [vmem:[#allocation8 + $0x14] sm:$0xf]
        %v1911 = vld [vmem:[#allocation8 + $0x18] sm:$0xf]
        %v1912 = vld [vmem:[#allocation8 + $0x1c] sm:$0xf]
        %v1913 = vld [vmem:[#allocation8 + $0x20] sm:$0xf]
        %v1914 = vld [vmem:[#allocation8 + $0x24] sm:$0xf]
        %v1915 = vld [vmem:[#allocation8 + $0x28] sm:$0xf]
        %v1916 = vld [vmem:[#allocation8 + $0x2c] sm:$0xf]
        %v1917 = vld [vmem:[#allocation8 + $0x30] sm:$0xf]
        %v1918 = vld [vmem:[#allocation8 + $0x34] sm:$0xf]
        %v1919 = vld [vmem:[#allocation8 + $0x38] sm:$0xf]
        %v1920 = vld [vmem:[#allocation8 + $0x3c] sm:$0xf]
        %v1921 = vld [vmem:[#allocation8 + $0x40] sm:$0xf]
        %v1922 = vld [vmem:[#allocation8 + $0x44] sm:$0xf]
        %v1923 = vld [vmem:[#allocation8 + $0x48] sm:$0xf]
        %v1924 = vld [vmem:[#allocation8 + $0x4c] sm:$0xf]
        %v1925 = vld [vmem:[#allocation8 + $0x50] sm:$0xf]
        %v1926 = vld [vmem:[#allocation8 + $0x54] sm:$0xf]
        %v1927 = vld [vmem:[#allocation8 + $0x58] sm:$0xf]
        %v1928 = vld [vmem:[#allocation8 + $0x5c] sm:$0xf]
        %v1929 = vld [vmem:[#allocation8 + $0x60] sm:$0xf]
        %v1930 = vld [vmem:[#allocation8 + $0x64] sm:$0xf]
        %v1931 = vld [vmem:[#allocation8 + $0x68] sm:$0xf]
        %v1932 = vld [vmem:[#allocation8 + $0x6c] sm:$0xf]
        %v1933 = vld [vmem:[#allocation8 + $0x70] sm:$0xf]
        %v1934 = vld [vmem:[#allocation8 + $0x74] sm:$0xf]
        %v1935 = vld [vmem:[#allocation8 + $0x78] sm:$0xf]
        %v1936 = vld [vmem:[#allocation8 + $0x7c] sm:$0xf]
        %v1937 = vld [vmem:[#allocation8 + $0x80] sm:$0xf]
        %v1938 = vld [vmem:[#allocation8 + $0x84] sm:$0xf]
        %v1939 = vld [vmem:[#allocation8 + $0x88] sm:$0xf]
        %v1940 = vld [vmem:[#allocation8 + $0x8c] sm:$0xf]
        %v1941 = vld [vmem:[#allocation8 + $0x90] sm:$0xf]
        %v1942 = vld [vmem:[#allocation8 + $0x94] sm:$0xf]
        %v1943 = vld [vmem:[#allocation8 + $0x98] sm:$0xf]
        %v1944 = vld [vmem:[#allocation8 + $0x9c] sm:$0xf]
        %v1945 = vld [vmem:[#allocation8 + $0xa0] sm:$0xf]
        %v1946 = vld [vmem:[#allocation8 + $0xa4] sm:$0xf]
        %v1947 = vld [vmem:[#allocation8 + $0xa8] sm:$0xf]
        %v1948 = vld [vmem:[#allocation8 + $0xac] sm:$0xf]
        %v1949 = vld [vmem:[#allocation8 + $0xb0] sm:$0xf]
        %v1950 = vld [vmem:[#allocation8 + $0xb4] sm:$0xf]
        %v1951 = vld [vmem:[#allocation8 + $0xb8] sm:$0xf]
        %v1952 = vld [vmem:[#allocation8 + $0xbc] sm:$0xf]
        %v1953 = vld [vmem:[%s741] sm:$0xf]
        %v1954 = vld [vmem:[%s741 + $0x4] sm:$0xf]
        %v1955 = vld [vmem:[%s741 + $0xc] sm:$0xf]
        %v1956 = vld [vmem:[%s741 + $0x10] sm:$0xf]
        %v1957 = vld [vmem:[%s741 + $0x18] sm:$0xf]
        %v1958 = vld [vmem:[%s741 + $0x1c] sm:$0xf]
        %v1959 = vld [vmem:[%s741 + $0x24] sm:$0xf]
        %v1960 = vld [vmem:[%s741 + $0x28] sm:$0xf]
        %v1961 = vld [vmem:[%s741 + $0x30] sm:$0xf]
        %v1962 = vld [vmem:[%s741 + $0x34] sm:$0xf]
        %v1963 = vld [vmem:[%s741 + $0x3c] sm:$0xf]
        %v1964 = vld [vmem:[%s741 + $0x40] sm:$0xf]
        %v1965 = vld [vmem:[%s741 + $0x48] sm:$0xf]
        %v1966 = vld [vmem:[%s741 + $0x4c] sm:$0xf]
        %v1967 = vld [vmem:[%s741 + $0x54] sm:$0xf]
        %v1968 = vld [vmem:[%s741 + $0x58] sm:$0xf]
        %v1969 = vld [vmem:[%s741 + $0x60] sm:$0xf]
        %v1970 = vld [vmem:[%s741 + $0x64] sm:$0xf]
        %v1971 = vld [vmem:[%s741 + $0x6c] sm:$0xf]
        %v1972 = vld [vmem:[%s741 + $0x70] sm:$0xf]
        %v1973 = vld [vmem:[%s741 + $0x78] sm:$0xf]
        %v1974 = vld [vmem:[%s741 + $0x7c] sm:$0xf]
        %v1975 = vld [vmem:[%s741 + $0x84] sm:$0xf]
        %v1976 = vld [vmem:[%s741 + $0x88] sm:$0xf]
        %v1977 = vld [vmem:[%s741 + $0x90] sm:$0xf]
        %v1978 = vld [vmem:[%s741 + $0x94] sm:$0xf]
        %v1979 = vld [vmem:[%s741 + $0x9c] sm:$0xf]
        %v1980 = vld [vmem:[%s741 + $0xa0] sm:$0xf]
        %v1981 = vld [vmem:[%s741 + $0xa8] sm:$0xf]
        %v1982 = vld [vmem:[%s741 + $0xac] sm:$0xf]
        %v1983 = vld [vmem:[%s741 + $0xb4] sm:$0xf]
        %v1984 = vld [vmem:[%s741 + $0xb8] sm:$0xf]
        %v1985 = vld [vmem:[%s741 + $0x8] sm:$0x1]
        %v1986 = vld [vmem:[%s741 + $0x14] sm:$0x1]
        %v1987 = vld [vmem:[%s741 + $0x20] sm:$0x1]
        %v1988 = vld [vmem:[%s741 + $0x2c] sm:$0x1]
        %v1989 = vld [vmem:[%s741 + $0x38] sm:$0x1]
        %v1990 = vld [vmem:[%s741 + $0x44] sm:$0x1]
        %v1991 = vld [vmem:[%s741 + $0x50] sm:$0x1]
        %v1992 = vld [vmem:[%s741 + $0x5c] sm:$0x1]
        %v1993 = vld [vmem:[%s741 + $0x68] sm:$0x1]
        %v1994 = vld [vmem:[%s741 + $0x74] sm:$0x1]
        %v1995 = vld [vmem:[%s741 + $0x80] sm:$0x1]
        %v1996 = vld [vmem:[%s741 + $0x8c] sm:$0x1]
        %v1997 = vld [vmem:[%s741 + $0x98] sm:$0x1]
        %v1998 = vld [vmem:[%s741 + $0xa4] sm:$0x1]
        %v1999 = vld [vmem:[%s741 + $0xb0] sm:$0x1]
        %v2000 = vld [vmem:[%s741 + $0xbc] sm:$0x1]
        %v2001 = vld [vmem:[%s741] sm:$0xe]
        %v2002 = vld [vmem:[%s741 + $0xc] sm:$0xe]
        %v2003 = vld [vmem:[%s741 + $0x18] sm:$0xe]
        %v2004 = vld [vmem:[%s741 + $0x24] sm:$0xe]
        %v2005 = vld [vmem:[%s741 + $0x30] sm:$0xe]
        %v2006 = vld [vmem:[%s741 + $0x3c] sm:$0xe]
        %v2007 = vld [vmem:[%s741 + $0x48] sm:$0xe]
        %v2008 = vld [vmem:[%s741 + $0x54] sm:$0xe]
        %v2009 = vld [vmem:[%s741 + $0x60] sm:$0xe]
        %v2010 = vld [vmem:[%s741 + $0x6c] sm:$0xe]
        %v2011 = vld [vmem:[%s741 + $0x78] sm:$0xe]
        %v2012 = vld [vmem:[%s741 + $0x84] sm:$0xe]
        %v2013 = vld [vmem:[%s741 + $0x90] sm:$0xe]
        %v2014 = vld [vmem:[%s741 + $0x9c] sm:$0xe]
        %v2015 = vld [vmem:[%s741 + $0xa8] sm:$0xe]
        %v2016 = vld [vmem:[%s741 + $0xb4] sm:$0xe]
        %v2049 = vunpack.c.l.b16 %v1953
        %v2050 = vunpack.c.l.b16 %v1954
        %v2051 = vunpack.c.l.b16 %v1955
        %v2052 = vunpack.c.l.b16 %v1956
        %v2053 = vunpack.c.l.b16 %v1957
        %v2054 = vunpack.c.l.b16 %v1958
        %v2055 = vunpack.c.l.b16 %v1959
        %v2056 = vunpack.c.l.b16 %v1960
        %v2057 = vunpack.c.l.b16 %v1961
        %v2058 = vunpack.c.l.b16 %v1962
        %v2059 = vunpack.c.l.b16 %v1963
        %v2060 = vunpack.c.l.b16 %v1964
        %v2061 = vunpack.c.l.b16 %v1965
        %v2062 = vunpack.c.l.b16 %v1966
        %v2063 = vunpack.c.l.b16 %v1967
        %v2064 = vunpack.c.l.b16 %v1968
        %v2065 = vunpack.c.l.b16 %v1969
        %v2066 = vunpack.c.l.b16 %v1970
        %v2067 = vunpack.c.l.b16 %v1971
        %v2068 = vunpack.c.l.b16 %v1972
        %v2069 = vunpack.c.l.b16 %v1973
        %v2070 = vunpack.c.l.b16 %v1974
        %v2071 = vunpack.c.l.b16 %v1975
        %v2072 = vunpack.c.l.b16 %v1976
        %v2073 = vunpack.c.l.b16 %v1977
        %v2074 = vunpack.c.l.b16 %v1978
        %v2075 = vunpack.c.l.b16 %v1979
        %v2076 = vunpack.c.l.b16 %v1980
        %v2077 = vunpack.c.l.b16 %v1981
        %v2078 = vunpack.c.l.b16 %v1982
        %v2079 = vunpack.c.l.b16 %v1983
        %v2080 = vunpack.c.l.b16 %v1984
        %v2081 = vpack.c.b16 %v2050, %v2049
        %v2082 = vpack.c.b16 %v2052, %v2051
        %v2083 = vpack.c.b16 %v2054, %v2053
        %v2084 = vpack.c.b16 %v2056, %v2055
        %v2085 = vpack.c.b16 %v2058, %v2057
        %v2086 = vpack.c.b16 %v2060, %v2059
        %v2087 = vpack.c.b16 %v2062, %v2061
        %v2088 = vpack.c.b16 %v2064, %v2063
        %v2089 = vpack.c.b16 %v2066, %v2065
        %v2090 = vpack.c.b16 %v2068, %v2067
        %v2091 = vpack.c.b16 %v2070, %v2069
        %v2092 = vpack.c.b16 %v2072, %v2071
        %v2093 = vpack.c.b16 %v2074, %v2073
        %v2094 = vpack.c.b16 %v2076, %v2075
        %v2095 = vpack.c.b16 %v2078, %v2077
        %v2096 = vpack.c.b16 %v2080, %v2079
        %v2129 = vunpack.c.l.b16 %v1985
        %v2130 = vunpack.c.l.b16 %v1986
        %v2131 = vunpack.c.l.b16 %v1987
        %v2132 = vunpack.c.l.b16 %v1988
        %v2133 = vunpack.c.l.b16 %v1989
        %v2134 = vunpack.c.l.b16 %v1990
        %v2135 = vunpack.c.l.b16 %v1991
        %v2136 = vunpack.c.l.b16 %v1992
        %v2137 = vunpack.c.l.b16 %v1993
        %v2138 = vunpack.c.l.b16 %v1994
        %v2139 = vunpack.c.l.b16 %v1995
        %v2140 = vunpack.c.l.b16 %v1996
        %v2141 = vunpack.c.l.b16 %v1997
        %v2142 = vunpack.c.l.b16 %v1998
        %v2143 = vunpack.c.l.b16 %v1999
        %v2144 = vunpack.c.l.b16 %v2000
        %v2145 = vpack.c.b16 %v2129, %v2129
        %v2146 = vpack.c.b16 %v2130, %v2130
        %v2147 = vpack.c.b16 %v2131, %v2131
        %v2148 = vpack.c.b16 %v2132, %v2132
        %v2149 = vpack.c.b16 %v2133, %v2133
        %v2150 = vpack.c.b16 %v2134, %v2134
        %v2151 = vpack.c.b16 %v2135, %v2135
        %v2152 = vpack.c.b16 %v2136, %v2136
        %v2153 = vpack.c.b16 %v2137, %v2137
        %v2154 = vpack.c.b16 %v2138, %v2138
        %v2155 = vpack.c.b16 %v2139, %v2139
        %v2156 = vpack.c.b16 %v2140, %v2140
        %v2157 = vpack.c.b16 %v2141, %v2141
        %v2158 = vpack.c.b16 %v2142, %v2142
        %v2159 = vpack.c.b16 %v2143, %v2143
        %v2160 = vpack.c.b16 %v2144, %v2144
        %v2162 = vshrl.u32 %v2081, 16
        %v2164 = vshll.u32 %v2081, 16
        %v2166 = vrot.slane %v2164, 1
        %v2167 = vor.u32 %v2162, %v2166
        %v2169 = vshll.u32 %v2145, 16
        %v2171 = vrot.slane %v2169, 1
        %v2172 = vsel %vm1583, %v2167, %v2171
        %v2174 = vshrl.u32 %v2082, 16
        %v2176 = vshll.u32 %v2082, 16
        %v2178 = vrot.slane %v2176, 1
        %v2179 = vor.u32 %v2174, %v2178
        %v2181 = vshll.u32 %v2146, 16
        %v2183 = vrot.slane %v2181, 1
        %v2184 = vsel %vm1583, %v2179, %v2183
        %v2186 = vshrl.u32 %v2083, 16
        %v2188 = vshll.u32 %v2083, 16
        %v2190 = vrot.slane %v2188, 1
        %v2191 = vor.u32 %v2186, %v2190
        %v2193 = vshll.u32 %v2147, 16
        %v2195 = vrot.slane %v2193, 1
        %v2196 = vsel %vm1583, %v2191, %v2195
        %v2198 = vshrl.u32 %v2084, 16
        %v2200 = vshll.u32 %v2084, 16
        %v2202 = vrot.slane %v2200, 1
        %v2203 = vor.u32 %v2198, %v2202
        %v2205 = vshll.u32 %v2148, 16
        %v2207 = vrot.slane %v2205, 1
        %v2208 = vsel %vm1583, %v2203, %v2207
        %v2210 = vshrl.u32 %v2085, 16
        %v2212 = vshll.u32 %v2085, 16
        %v2214 = vrot.slane %v2212, 1
        %v2215 = vor.u32 %v2210, %v2214
        %v2217 = vshll.u32 %v2149, 16
        %v2219 = vrot.slane %v2217, 1
        %v2220 = vsel %vm1583, %v2215, %v2219
        %v2222 = vshrl.u32 %v2086, 16
        %v2224 = vshll.u32 %v2086, 16
        %v2226 = vrot.slane %v2224, 1
        %v2227 = vor.u32 %v2222, %v2226
        %v2229 = vshll.u32 %v2150, 16
        %v2231 = vrot.slane %v2229, 1
        %v2232 = vsel %vm1583, %v2227, %v2231
        %v2234 = vshrl.u32 %v2087, 16
        %v2236 = vshll.u32 %v2087, 16
        %v2238 = vrot.slane %v2236, 1
        %v2239 = vor.u32 %v2234, %v2238
        %v2241 = vshll.u32 %v2151, 16
        %v2243 = vrot.slane %v2241, 1
        %v2244 = vsel %vm1583, %v2239, %v2243
        %v2246 = vshrl.u32 %v2088, 16
        %v2248 = vshll.u32 %v2088, 16
        %v2250 = vrot.slane %v2248, 1
        %v2251 = vor.u32 %v2246, %v2250
        %v2253 = vshll.u32 %v2152, 16
        %v2255 = vrot.slane %v2253, 1
        %v2256 = vsel %vm1583, %v2251, %v2255
        %v2258 = vshrl.u32 %v2089, 16
        %v2260 = vshll.u32 %v2089, 16
        %v2262 = vrot.slane %v2260, 1
        %v2263 = vor.u32 %v2258, %v2262
        %v2265 = vshll.u32 %v2153, 16
        %v2267 = vrot.slane %v2265, 1
        %v2268 = vsel %vm1583, %v2263, %v2267
        %v2270 = vshrl.u32 %v2090, 16
        %v2272 = vshll.u32 %v2090, 16
        %v2274 = vrot.slane %v2272, 1
        %v2275 = vor.u32 %v2270, %v2274
        %v2277 = vshll.u32 %v2154, 16
        %v2279 = vrot.slane %v2277, 1
        %v2280 = vsel %vm1583, %v2275, %v2279
        %v2282 = vshrl.u32 %v2091, 16
        %v2284 = vshll.u32 %v2091, 16
        %v2286 = vrot.slane %v2284, 1
        %v2287 = vor.u32 %v2282, %v2286
        %v2289 = vshll.u32 %v2155, 16
        %v2291 = vrot.slane %v2289, 1
        %v2292 = vsel %vm1583, %v2287, %v2291
        %v2294 = vshrl.u32 %v2092, 16
        %v2296 = vshll.u32 %v2092, 16
        %v2298 = vrot.slane %v2296, 1
        %v2299 = vor.u32 %v2294, %v2298
        %v2301 = vshll.u32 %v2156, 16
        %v2303 = vrot.slane %v2301, 1
        %v2304 = vsel %vm1583, %v2299, %v2303
        %v2306 = vshrl.u32 %v2093, 16
        %v2308 = vshll.u32 %v2093, 16
        %v2310 = vrot.slane %v2308, 1
        %v2311 = vor.u32 %v2306, %v2310
        %v2313 = vshll.u32 %v2157, 16
        %v2315 = vrot.slane %v2313, 1
        %v2316 = vsel %vm1583, %v2311, %v2315
        %v2318 = vshrl.u32 %v2094, 16
        %v2320 = vshll.u32 %v2094, 16
        %v2322 = vrot.slane %v2320, 1
        %v2323 = vor.u32 %v2318, %v2322
        %v2325 = vshll.u32 %v2158, 16
        %v2327 = vrot.slane %v2325, 1
        %v2328 = vsel %vm1583, %v2323, %v2327
        %v2330 = vshrl.u32 %v2095, 16
        %v2332 = vshll.u32 %v2095, 16
        %v2334 = vrot.slane %v2332, 1
        %v2335 = vor.u32 %v2330, %v2334
        %v2337 = vshll.u32 %v2159, 16
        %v2339 = vrot.slane %v2337, 1
        %v2340 = vsel %vm1583, %v2335, %v2339
        %v2342 = vshrl.u32 %v2096, 16
        %v2344 = vshll.u32 %v2096, 16
        %v2346 = vrot.slane %v2344, 1
        %v2347 = vor.u32 %v2342, %v2346
        %v2349 = vshll.u32 %v2160, 16
        %v2351 = vrot.slane %v2349, 1
        %v2352 = vsel %vm1583, %v2347, %v2351
        %v2385 = vunpack.c.l.b16 %v2001
        %v2386 = vunpack.c.l.b16 %v2002
        %v2387 = vunpack.c.l.b16 %v2003
        %v2388 = vunpack.c.l.b16 %v2004
        %v2389 = vunpack.c.l.b16 %v2005
        %v2390 = vunpack.c.l.b16 %v2006
        %v2391 = vunpack.c.l.b16 %v2007
        %v2392 = vunpack.c.l.b16 %v2008
        %v2393 = vunpack.c.l.b16 %v2009
        %v2394 = vunpack.c.l.b16 %v2010
        %v2395 = vunpack.c.l.b16 %v2011
        %v2396 = vunpack.c.l.b16 %v2012
        %v2397 = vunpack.c.l.b16 %v2013
        %v2398 = vunpack.c.l.b16 %v2014
        %v2399 = vunpack.c.l.b16 %v2015
        %v2400 = vunpack.c.l.b16 %v2016
        %v2401 = vpack.c.b16 %v2050, %v2385
        %v2402 = vpack.c.b16 %v2052, %v2386
        %v2403 = vpack.c.b16 %v2054, %v2387
        %v2404 = vpack.c.b16 %v2056, %v2388
        %v2405 = vpack.c.b16 %v2058, %v2389
        %v2406 = vpack.c.b16 %v2060, %v2390
        %v2407 = vpack.c.b16 %v2062, %v2391
        %v2408 = vpack.c.b16 %v2064, %v2392
        %v2409 = vpack.c.b16 %v2066, %v2393
        %v2410 = vpack.c.b16 %v2068, %v2394
        %v2411 = vpack.c.b16 %v2070, %v2395
        %v2412 = vpack.c.b16 %v2072, %v2396
        %v2413 = vpack.c.b16 %v2074, %v2397
        %v2414 = vpack.c.b16 %v2076, %v2398
        %v2415 = vpack.c.b16 %v2078, %v2399
        %v2416 = vpack.c.b16 %v2080, %v2400
        %v2417 = vrot.slane %v2401, 1
        %v2418 = vrot.slane %v2145, 1
        %v2419 = vsel %vm1840, %v2417, %v2418
        %v2420 = vrot.slane %v2402, 1
        %v2421 = vrot.slane %v2146, 1
        %v2422 = vsel %vm1840, %v2420, %v2421
        %v2423 = vrot.slane %v2403, 1
        %v2424 = vrot.slane %v2147, 1
        %v2425 = vsel %vm1840, %v2423, %v2424
        %v2426 = vrot.slane %v2404, 1
        %v2427 = vrot.slane %v2148, 1
        %v2428 = vsel %vm1840, %v2426, %v2427
        %v2429 = vrot.slane %v2405, 1
        %v2430 = vrot.slane %v2149, 1
        %v2431 = vsel %vm1840, %v2429, %v2430
        %v2432 = vrot.slane %v2406, 1
        %v2433 = vrot.slane %v2150, 1
        %v2434 = vsel %vm1840, %v2432, %v2433
        %v2435 = vrot.slane %v2407, 1
        %v2436 = vrot.slane %v2151, 1
        %v2437 = vsel %vm1840, %v2435, %v2436
        %v2438 = vrot.slane %v2408, 1
        %v2439 = vrot.slane %v2152, 1
        %v2440 = vsel %vm1840, %v2438, %v2439
        %v2441 = vrot.slane %v2409, 1
        %v2442 = vrot.slane %v2153, 1
        %v2443 = vsel %vm1840, %v2441, %v2442
        %v2444 = vrot.slane %v2410, 1
        %v2445 = vrot.slane %v2154, 1
        %v2446 = vsel %vm1840, %v2444, %v2445
        %v2447 = vrot.slane %v2411, 1
        %v2448 = vrot.slane %v2155, 1
        %v2449 = vsel %vm1840, %v2447, %v2448
        %v2450 = vrot.slane %v2412, 1
        %v2451 = vrot.slane %v2156, 1
        %v2452 = vsel %vm1840, %v2450, %v2451
        %v2453 = vrot.slane %v2413, 1
        %v2454 = vrot.slane %v2157, 1
        %v2455 = vsel %vm1840, %v2453, %v2454
        %v2456 = vrot.slane %v2414, 1
        %v2457 = vrot.slane %v2158, 1
        %v2458 = vsel %vm1840, %v2456, %v2457
        %v2459 = vrot.slane %v2415, 1
        %v2460 = vrot.slane %v2159, 1
        %v2461 = vsel %vm1840, %v2459, %v2460
        %v2462 = vrot.slane %v2416, 1
        %v2463 = vrot.slane %v2160, 1
        %v2464 = vsel %vm1840, %v2462, %v2463
        %v2481 = vld [vmem:[#allocation8 + $0xc0] sm:$0xf]
        %v2482 = vld [vmem:[#allocation8 + $0xc4] sm:$0xf]
        %v2483 = vld [vmem:[#allocation8 + $0xc8] sm:$0xf]
        %v2484 = vld [vmem:[#allocation8 + $0xcc] sm:$0xf]
        %v2485 = vld [vmem:[#allocation8 + $0xd0] sm:$0xf]
        %v2486 = vld [vmem:[#allocation8 + $0xd4] sm:$0xf]
        %v2487 = vld [vmem:[#allocation8 + $0xd8] sm:$0xf]
        %v2488 = vld [vmem:[#allocation8 + $0xdc] sm:$0xf]
        %v2489 = vld [vmem:[#allocation8 + $0xe0] sm:$0xf]
        %v2490 = vld [vmem:[#allocation8 + $0xe4] sm:$0xf]
        %v2491 = vld [vmem:[#allocation8 + $0xe8] sm:$0xf]
        %v2492 = vld [vmem:[#allocation8 + $0xec] sm:$0xf]
        %v2493 = vld [vmem:[#allocation8 + $0xf0] sm:$0xf]
        %v2494 = vld [vmem:[#allocation8 + $0xf4] sm:$0xf]
        %v2495 = vld [vmem:[#allocation8 + $0xf8] sm:$0xf]
        %v2496 = vld [vmem:[#allocation8 + $0xfc] sm:$0xf]
        %v2497 = vld [vmem:[#allocation8 + $0x100] sm:$0xf]
        %v2498 = vld [vmem:[#allocation8 + $0x104] sm:$0xf]
        %v2499 = vld [vmem:[#allocation8 + $0x108] sm:$0xf]
        %v2500 = vld [vmem:[#allocation8 + $0x10c] sm:$0xf]
        %v2501 = vld [vmem:[#allocation8 + $0x110] sm:$0xf]
        %v2502 = vld [vmem:[#allocation8 + $0x114] sm:$0xf]
        %v2503 = vld [vmem:[#allocation8 + $0x118] sm:$0xf]
        %v2504 = vld [vmem:[#allocation8 + $0x11c] sm:$0xf]
        %v2505 = vld [vmem:[#allocation8 + $0x120] sm:$0xf]
        %v2506 = vld [vmem:[#allocation8 + $0x124] sm:$0xf]
        %v2507 = vld [vmem:[#allocation8 + $0x128] sm:$0xf]
        %v2508 = vld [vmem:[#allocation8 + $0x12c] sm:$0xf]
        %v2509 = vld [vmem:[#allocation8 + $0x130] sm:$0xf]
        %v2510 = vld [vmem:[#allocation8 + $0x134] sm:$0xf]
        %v2511 = vld [vmem:[#allocation8 + $0x138] sm:$0xf]
        %v2512 = vld [vmem:[#allocation8 + $0x13c] sm:$0xf]
        %v2513 = vld [vmem:[#allocation8 + $0x140] sm:$0xf]
        %v2514 = vld [vmem:[#allocation8 + $0x144] sm:$0xf]
        %v2515 = vld [vmem:[#allocation8 + $0x148] sm:$0xf]
        %v2516 = vld [vmem:[#allocation8 + $0x14c] sm:$0xf]
        %v2517 = vld [vmem:[#allocation8 + $0x150] sm:$0xf]
        %v2518 = vld [vmem:[#allocation8 + $0x154] sm:$0xf]
        %v2519 = vld [vmem:[#allocation8 + $0x158] sm:$0xf]
        %v2520 = vld [vmem:[#allocation8 + $0x15c] sm:$0xf]
        %v2521 = vld [vmem:[#allocation8 + $0x160] sm:$0xf]
        %v2522 = vld [vmem:[#allocation8 + $0x164] sm:$0xf]
        %v2523 = vld [vmem:[#allocation8 + $0x168] sm:$0xf]
        %v2524 = vld [vmem:[#allocation8 + $0x16c] sm:$0xf]
        %v2525 = vld [vmem:[#allocation8 + $0x170] sm:$0xf]
        %v2526 = vld [vmem:[#allocation8 + $0x174] sm:$0xf]
        %v2527 = vld [vmem:[#allocation8 + $0x178] sm:$0xf]
        %v2528 = vld [vmem:[#allocation8 + $0x17c] sm:$0xf]
        %v2577 = vunpack.c.l.b16 %v2481
        %v2578 = vunpack.c.l.b16 %v2482
        %v2579 = vunpack.c.l.b16 %v2483
        %v2580 = vunpack.c.l.b16 %v2484
        %v2581 = vunpack.c.l.b16 %v2485
        %v2582 = vunpack.c.l.b16 %v2486
        %v2583 = vunpack.c.l.b16 %v2487
        %v2584 = vunpack.c.l.b16 %v2488
        %v2585 = vunpack.c.l.b16 %v2489
        %v2586 = vunpack.c.l.b16 %v2490
        %v2587 = vunpack.c.l.b16 %v2491
        %v2588 = vunpack.c.l.b16 %v2492
        %v2589 = vunpack.c.l.b16 %v2493
        %v2590 = vunpack.c.l.b16 %v2494
        %v2591 = vunpack.c.l.b16 %v2495
        %v2592 = vunpack.c.l.b16 %v2496
        %v2593 = vunpack.c.l.b16 %v2497
        %v2594 = vunpack.c.l.b16 %v2498
        %v2595 = vunpack.c.l.b16 %v2499
        %v2596 = vunpack.c.l.b16 %v2500
        %v2597 = vunpack.c.l.b16 %v2501
        %v2598 = vunpack.c.l.b16 %v2502
        %v2599 = vunpack.c.l.b16 %v2503
        %v2600 = vunpack.c.l.b16 %v2504
        %v2601 = vunpack.c.l.b16 %v2505
        %v2602 = vunpack.c.l.b16 %v2506
        %v2603 = vunpack.c.l.b16 %v2507
        %v2604 = vunpack.c.l.b16 %v2508
        %v2605 = vunpack.c.l.b16 %v2509
        %v2606 = vunpack.c.l.b16 %v2510
        %v2607 = vunpack.c.l.b16 %v2511
        %v2608 = vunpack.c.l.b16 %v2512
        %v2609 = vunpack.c.l.b16 %v2513
        %v2610 = vunpack.c.l.b16 %v2514
        %v2611 = vunpack.c.l.b16 %v2515
        %v2612 = vunpack.c.l.b16 %v2516
        %v2613 = vunpack.c.l.b16 %v2517
        %v2614 = vunpack.c.l.b16 %v2518
        %v2615 = vunpack.c.l.b16 %v2519
        %v2616 = vunpack.c.l.b16 %v2520
        %v2617 = vunpack.c.l.b16 %v2521
        %v2618 = vunpack.c.l.b16 %v2522
        %v2619 = vunpack.c.l.b16 %v2523
        %v2620 = vunpack.c.l.b16 %v2524
        %v2621 = vunpack.c.l.b16 %v2525
        %v2622 = vunpack.c.l.b16 %v2526
        %v2623 = vunpack.c.l.b16 %v2527
        %v2624 = vunpack.c.l.b16 %v2528
        %v2625 = vpack.c.b16 %v2578, %v2577
        %v2626 = vpack.c.b16 %v2580, %v2579
        %v2627 = vpack.c.b16 %v2582, %v2581
        %v2628 = vpack.c.b16 %v2584, %v2583
        %v2629 = vpack.c.b16 %v2586, %v2585
        %v2630 = vpack.c.b16 %v2588, %v2587
        %v2631 = vpack.c.b16 %v2590, %v2589
        %v2632 = vpack.c.b16 %v2592, %v2591
        %v2633 = vpack.c.b16 %v2594, %v2593
        %v2634 = vpack.c.b16 %v2596, %v2595
        %v2635 = vpack.c.b16 %v2598, %v2597
        %v2636 = vpack.c.b16 %v2600, %v2599
        %v2637 = vpack.c.b16 %v2602, %v2601
        %v2638 = vpack.c.b16 %v2604, %v2603
        %v2639 = vpack.c.b16 %v2606, %v2605
        %v2640 = vpack.c.b16 %v2608, %v2607
        %v2641 = vpack.c.b16 %v2610, %v2609
        %v2642 = vpack.c.b16 %v2612, %v2611
        %v2643 = vpack.c.b16 %v2614, %v2613
        %v2644 = vpack.c.b16 %v2616, %v2615
        %v2645 = vpack.c.b16 %v2618, %v2617
        %v2646 = vpack.c.b16 %v2620, %v2619
        %v2647 = vpack.c.b16 %v2622, %v2621
        %v2648 = vpack.c.b16 %v2624, %v2623
        %2673 = vmatprep.subr.bf16.mxu0 0
        %2674 = vmatpush1.bf16.msra.mxu0 %v2625
        %2675 = vmatprep.subr.bf16.mxu0 0
        %2676 = vmatpush1.bf16.msra.mxu0 %v2626
        %2677 = vmatprep.subr.bf16.mxu0 0
        %2678 = vmatpush1.bf16.msra.mxu0 %v2627
        %2679 = vmatprep.subr.bf16.mxu0 0
        %2680 = vmatpush1.bf16.msra.mxu0 %v2628
        %2681 = vmatprep.subr.bf16.mxu0 0
        %2682 = vmatpush1.bf16.msra.mxu0 %v2629
        %2683 = vmatprep.subr.bf16.mxu0 0
        %2684 = vmatpush1.bf16.msra.mxu0 %v2630
        %2685 = vmatprep.subr.bf16.mxu0 0
        %2686 = vmatpush1.bf16.msra.mxu0 %v2631
        %2687 = vmatprep.subr.bf16.mxu0 0
        %2688 = vmatpush1.bf16.msra.mxu0 %v2632
        %2689 = vmatprep.subr.bf16.mxu0 0
        %2690 = vmatpush1.bf16.msra.mxu0 %v2633
        %2691 = vmatprep.subr.bf16.mxu0 0
        %2692 = vmatpush1.bf16.msra.mxu0 %v2634
        %2693 = vmatprep.subr.bf16.mxu0 0
        %2694 = vmatpush1.bf16.msra.mxu0 %v2635
        %2695 = vmatprep.subr.bf16.mxu0 0
        %2696 = vmatpush1.bf16.msra.mxu0 %v2636
        %2697 = vmatprep.subr.bf16.mxu0 0
        %2698 = vmatpush1.bf16.msra.mxu0 %v2637
        %2699 = vmatprep.subr.bf16.mxu0 0
        %2700 = vmatpush1.bf16.msra.mxu0 %v2638
        %2701 = vmatprep.subr.bf16.mxu0 0
        %2702 = vmatpush1.bf16.msra.mxu0 %v2639
        %2703 = vmatprep.subr.bf16.mxu0 0
        %2704 = vmatpush1.bf16.msra.mxu0 %v2640
        %2705 = vmatprep.mubr.bf16.mxu0 %v2172
        %2706 = vmatmul.mubr.bf16.gmra.mrb[0].mxu0 %v2081
        %v2707 = vpop.f32.mrb[0].mxu0
        %v2708 = vadd.f32 0.0, %v2707
        %v2709 = vpop.f32.mrb[0].mxu0
        %v2710 = vpop.f32.mrb[0].mxu0
        %v2711 = vadd.f32 0.0, %v2710
        %v2712 = vpop.f32.mrb[0].mxu0
        %2713 = vmatprep.mubr.bf16.mxu0 %v2184
        %2714 = vmatmul.mubr.bf16.gmra.mrb[0].mxu0 %v2082
        %v2715 = vpop.f32.mrb[0].mxu0
        %v2716 = vadd.f32 0.0, %v2715
        %v2717 = vpop.f32.mrb[0].mxu0
        %v2718 = vpop.f32.mrb[0].mxu0
        %v2719 = vadd.f32 0.0, %v2718
        %v2720 = vpop.f32.mrb[0].mxu0
        %2721 = vmatprep.mubr.bf16.mxu0 %v2196
        %2722 = vmatmul.mubr.bf16.gmra.mrb[0].mxu0 %v2083
        %v2723 = vpop.f32.mrb[0].mxu0
        %v2724 = vadd.f32 0.0, %v2723
        %v2725 = vpop.f32.mrb[0].mxu0
        %v2726 = vpop.f32.mrb[0].mxu0
        %v2727 = vadd.f32 0.0, %v2726
        %v2728 = vpop.f32.mrb[0].mxu0
        %2729 = vmatprep.mubr.bf16.mxu0 %v2208
        %2730 = vmatmul.mubr.bf16.gmra.mrb[0].mxu0 %v2084
        %v2731 = vpop.f32.mrb[0].mxu0
        %v2732 = vadd.f32 0.0, %v2731
        %v2733 = vpop.f32.mrb[0].mxu0
        %v2734 = vpop.f32.mrb[0].mxu0
        %v2735 = vadd.f32 0.0, %v2734
        %v2736 = vpop.f32.mrb[0].mxu0
        %2737 = vmatprep.mubr.bf16.mxu0 %v2220
        %2738 = vmatmul.mubr.bf16.gmra.mrb[0].mxu0 %v2085
        %v2739 = vpop.f32.mrb[0].mxu0
        %v2740 = vadd.f32 0.0, %v2739
        %v2741 = vpop.f32.mrb[0].mxu0
        %v2742 = vpop.f32.mrb[0].mxu0
        %v2743 = vadd.f32 0.0, %v2742
        %v2744 = vpop.f32.mrb[0].mxu0
        %2745 = vmatprep.mubr.bf16.mxu0 %v2232
        %2746 = vmatmul.mubr.bf16.gmra.mrb[0].mxu0 %v2086
        %v2747 = vpop.f32.mrb[0].mxu0
        %v2748 = vadd.f32 0.0, %v2747
        %v2749 = vpop.f32.mrb[0].mxu0
        %v2750 = vpop.f32.mrb[0].mxu0
        %v2751 = vadd.f32 0.0, %v2750
        %v2752 = vpop.f32.mrb[0].mxu0
        %2753 = vmatprep.mubr.bf16.mxu0 %v2244
        %2754 = vmatmul.mubr.bf16.gmra.mrb[0].mxu0 %v2087
        %v2755 = vpop.f32.mrb[0].mxu0
        %v2756 = vadd.f32 0.0, %v2755
        %v2757 = vpop.f32.mrb[0].mxu0
        %v2758 = vpop.f32.mrb[0].mxu0
        %v2759 = vadd.f32 0.0, %v2758
        %v2760 = vpop.f32.mrb[0].mxu0
        %2761 = vmatprep.mubr.bf16.mxu0 %v2256
        %2762 = vmatmul.mubr.bf16.gmra.mrb[0].mxu0 %v2088
        %v2763 = vpop.f32.mrb[0].mxu0
        %v2764 = vadd.f32 0.0, %v2763
        %v2765 = vpop.f32.mrb[0].mxu0
        %v2766 = vpop.f32.mrb[0].mxu0
        %v2767 = vadd.f32 0.0, %v2766
        %v2768 = vpop.f32.mrb[0].mxu0
        %2769 = vmatprep.mubr.bf16.mxu0 %v2268
        %2770 = vmatmul.mubr.bf16.gmra.mrb[0].mxu0 %v2089
        %v2771 = vpop.f32.mrb[0].mxu0
        %v2772 = vadd.f32 0.0, %v2771
        %v2773 = vpop.f32.mrb[0].mxu0
        %v2774 = vpop.f32.mrb[0].mxu0
        %v2775 = vadd.f32 0.0, %v2774
        %v2776 = vpop.f32.mrb[0].mxu0
        %2777 = vmatprep.mubr.bf16.mxu0 %v2280
        %2778 = vmatmul.mubr.bf16.gmra.mrb[0].mxu0 %v2090
        %v2779 = vpop.f32.mrb[0].mxu0
        %v2780 = vadd.f32 0.0, %v2779
        %v2781 = vpop.f32.mrb[0].mxu0
        %v2782 = vpop.f32.mrb[0].mxu0
        %v2783 = vadd.f32 0.0, %v2782
        %v2784 = vpop.f32.mrb[0].mxu0
        %2785 = vmatprep.mubr.bf16.mxu0 %v2292
        %2786 = vmatmul.mubr.bf16.gmra.mrb[0].mxu0 %v2091
        %v2787 = vpop.f32.mrb[0].mxu0
        %v2788 = vadd.f32 0.0, %v2787
        %v2789 = vpop.f32.mrb[0].mxu0
        %v2790 = vpop.f32.mrb[0].mxu0
        %v2791 = vadd.f32 0.0, %v2790
        %v2792 = vpop.f32.mrb[0].mxu0
        %2793 = vmatprep.mubr.bf16.mxu0 %v2304
        %2794 = vmatmul.mubr.bf16.gmra.mrb[0].mxu0 %v2092
        %v2795 = vpop.f32.mrb[0].mxu0
        %v2796 = vadd.f32 0.0, %v2795
        %v2797 = vpop.f32.mrb[0].mxu0
        %v2798 = vpop.f32.mrb[0].mxu0
        %v2799 = vadd.f32 0.0, %v2798
        %v2800 = vpop.f32.mrb[0].mxu0
        %2801 = vmatprep.mubr.bf16.mxu0 %v2316
        %2802 = vmatmul.mubr.bf16.gmra.mrb[0].mxu0 %v2093
        %v2803 = vpop.f32.mrb[0].mxu0
        %v2804 = vadd.f32 0.0, %v2803
        %v2805 = vpop.f32.mrb[0].mxu0
        %v2806 = vpop.f32.mrb[0].mxu0
        %v2807 = vadd.f32 0.0, %v2806
        %v2808 = vpop.f32.mrb[0].mxu0
        %2809 = vmatprep.mubr.bf16.mxu0 %v2328
        %2810 = vmatmul.mubr.bf16.gmra.mrb[0].mxu0 %v2094
        %v2811 = vpop.f32.mrb[0].mxu0
        %v2812 = vadd.f32 0.0, %v2811
        %v2813 = vpop.f32.mrb[0].mxu0
        %v2814 = vpop.f32.mrb[0].mxu0
        %v2815 = vadd.f32 0.0, %v2814
        %v2816 = vpop.f32.mrb[0].mxu0
        %2817 = vmatprep.mubr.bf16.mxu0 %v2340
        %2818 = vmatmul.mubr.bf16.gmra.mrb[0].mxu0 %v2095
        %v2819 = vpop.f32.mrb[0].mxu0
        %v2820 = vadd.f32 0.0, %v2819
        %v2821 = vpop.f32.mrb[0].mxu0
        %v2822 = vpop.f32.mrb[0].mxu0
        %v2823 = vadd.f32 0.0, %v2822
        %v2824 = vpop.f32.mrb[0].mxu0
        %2825 = vmatprep.mubr.bf16.mxu0 %v2352
        %2826 = vmatmul.mubr.bf16.gmra.mrb[0].mxu0 %v2096
        %v2827 = vpop.f32.mrb[0].mxu0
        %v2828 = vadd.f32 0.0, %v2827
        %v2829 = vpop.f32.mrb[0].mxu0
        %v2830 = vpop.f32.mrb[0].mxu0
        %v2831 = vadd.f32 0.0, %v2830
        %v2832 = vpop.f32.mrb[0].mxu0
        %2833 = vdwg.mxu0
        %2834 = vmatprep.subr.bf16.mxu0 0
        %2835 = vmatpush1.bf16.msra.mxu0 %v2641
        %2836 = vmatprep.subr.bf16.mxu0 0
        %2837 = vmatpush1.bf16.msra.mxu0 %v2642
        %2838 = vmatprep.subr.bf16.mxu0 0
        %2839 = vmatpush1.bf16.msra.mxu0 %v2643
        %2840 = vmatprep.subr.bf16.mxu0 0
        %2841 = vmatpush1.bf16.msra.mxu0 %v2644
        %2842 = vmatprep.subr.bf16.mxu0 0
        %2843 = vmatpush1.bf16.msra.mxu0 %v2645
        %2844 = vmatprep.subr.bf16.mxu0 0
        %2845 = vmatpush1.bf16.msra.mxu0 %v2646
        %2846 = vmatprep.subr.bf16.mxu0 0
        %2847 = vmatpush1.bf16.msra.mxu0 %v2647
        %2848 = vmatprep.subr.bf16.mxu0 0
        %2849 = vmatpush1.bf16.msra.mxu0 %v2648
        %2850 = vmatprep.subr.bf16.mxu0 0
        %2851 = vmatpush1.bf16.msra.mxu0 0
        %2852 = vmatprep.subr.bf16.mxu0 0
        %2853 = vmatpush1.bf16.msra.mxu0 0
        %2854 = vmatprep.subr.bf16.mxu0 0
        %2855 = vmatpush1.bf16.msra.mxu0 0
        %2856 = vmatprep.subr.bf16.mxu0 0
        %2857 = vmatpush1.bf16.msra.mxu0 0
        %2858 = vmatprep.subr.bf16.mxu0 0
        %2859 = vmatpush1.bf16.msra.mxu0 0
        %2860 = vmatprep.subr.bf16.mxu0 0
        %2861 = vmatpush1.bf16.msra.mxu0 0
        %2862 = vmatprep.subr.bf16.mxu0 0
        %2863 = vmatpush1.bf16.msra.mxu0 0
        %2864 = vmatprep.subr.bf16.mxu0 0
        %2865 = vmatpush1.bf16.msra.mxu0 0
        %2866 = vmatprep.mubr.bf16.mxu0 0
        %2867 = vmatmul.mubr.bf16.gmra.mrb[0].mxu0 %v2419
        %v2868 = vpop.f32.mrb[0].mxu0
        %v2869 = vadd.f32 %v2708, %v2868
        %v2870 = vpop.f32.mrb[0].mxu0
        %v2871 = vpop.f32.mrb[0].mxu0
        %v2872 = vadd.f32 %v2711, %v2871
        %v2873 = vpop.f32.mrb[0].mxu0
        %2874 = vmatprep.mubr.bf16.mxu0 0
        %2875 = vmatmul.mubr.bf16.gmra.mrb[0].mxu0 %v2422
        %v2876 = vpop.f32.mrb[0].mxu0
        %v2877 = vadd.f32 %v2716, %v2876
        %v2878 = vpop.f32.mrb[0].mxu0
        %v2879 = vpop.f32.mrb[0].mxu0
        %v2880 = vadd.f32 %v2719, %v2879
        %v2881 = vpop.f32.mrb[0].mxu0
        %2882 = vmatprep.mubr.bf16.mxu0 0
        %2883 = vmatmul.mubr.bf16.gmra.mrb[0].mxu0 %v2425
        %v2884 = vpop.f32.mrb[0].mxu0
        %v2885 = vadd.f32 %v2724, %v2884
        %v2886 = vpop.f32.mrb[0].mxu0
        %v2887 = vpop.f32.mrb[0].mxu0
        %v2888 = vadd.f32 %v2727, %v2887
        %v2889 = vpop.f32.mrb[0].mxu0
        %2890 = vmatprep.mubr.bf16.mxu0 0
        %2891 = vmatmul.mubr.bf16.gmra.mrb[0].mxu0 %v2428
        %v2892 = vpop.f32.mrb[0].mxu0
        %v2893 = vadd.f32 %v2732, %v2892
        %v2894 = vpop.f32.mrb[0].mxu0
        %v2895 = vpop.f32.mrb[0].mxu0
        %v2896 = vadd.f32 %v2735, %v2895
        %v2897 = vpop.f32.mrb[0].mxu0
        %2898 = vmatprep.mubr.bf16.mxu0 0
        %2899 = vmatmul.mubr.bf16.gmra.mrb[0].mxu0 %v2431
        %v2900 = vpop.f32.mrb[0].mxu0
        %v2901 = vadd.f32 %v2740, %v2900
        %v2902 = vpop.f32.mrb[0].mxu0
        %v2903 = vpop.f32.mrb[0].mxu0
        %v2904 = vadd.f32 %v2743, %v2903
        %v2905 = vpop.f32.mrb[0].mxu0
        %2906 = vmatprep.mubr.bf16.mxu0 0
        %2907 = vmatmul.mubr.bf16.gmra.mrb[0].mxu0 %v2434
        %v2908 = vpop.f32.mrb[0].mxu0
        %v2909 = vadd.f32 %v2748, %v2908
        %v2910 = vpop.f32.mrb[0].mxu0
        %v2911 = vpop.f32.mrb[0].mxu0
        %v2912 = vadd.f32 %v2751, %v2911
        %v2913 = vpop.f32.mrb[0].mxu0
        %2914 = vmatprep.mubr.bf16.mxu0 0
        %2915 = vmatmul.mubr.bf16.gmra.mrb[0].mxu0 %v2437
        %v2916 = vpop.f32.mrb[0].mxu0
        %v2917 = vadd.f32 %v2756, %v2916
        %v2918 = vpop.f32.mrb[0].mxu0
        %v2919 = vpop.f32.mrb[0].mxu0
        %v2920 = vadd.f32 %v2759, %v2919
        %v2921 = vpop.f32.mrb[0].mxu0
        %2922 = vmatprep.mubr.bf16.mxu0 0
        %2923 = vmatmul.mubr.bf16.gmra.mrb[0].mxu0 %v2440
        %v2924 = vpop.f32.mrb[0].mxu0
        %v2925 = vadd.f32 %v2764, %v2924
        %v2926 = vpop.f32.mrb[0].mxu0
        %v2927 = vpop.f32.mrb[0].mxu0
        %v2928 = vadd.f32 %v2767, %v2927
        %v2929 = vpop.f32.mrb[0].mxu0
        %2930 = vmatprep.mubr.bf16.mxu0 0
        %2931 = vmatmul.mubr.bf16.gmra.mrb[0].mxu0 %v2443
        %v2932 = vpop.f32.mrb[0].mxu0
        %v2933 = vadd.f32 %v2772, %v2932
        %v2934 = vpop.f32.mrb[0].mxu0
        %v2935 = vpop.f32.mrb[0].mxu0
        %v2936 = vadd.f32 %v2775, %v2935
        %v2937 = vpop.f32.mrb[0].mxu0
        %2938 = vmatprep.mubr.bf16.mxu0 0
        %2939 = vmatmul.mubr.bf16.gmra.mrb[0].mxu0 %v2446
        %v2940 = vpop.f32.mrb[0].mxu0
        %v2941 = vadd.f32 %v2780, %v2940
        %v2942 = vpop.f32.mrb[0].mxu0
        %v2943 = vpop.f32.mrb[0].mxu0
        %v2944 = vadd.f32 %v2783, %v2943
        %v2945 = vpop.f32.mrb[0].mxu0
        %2946 = vmatprep.mubr.bf16.mxu0 0
        %2947 = vmatmul.mubr.bf16.gmra.mrb[0].mxu0 %v2449
        %v2948 = vpop.f32.mrb[0].mxu0
        %v2949 = vadd.f32 %v2788, %v2948
        %v2950 = vpop.f32.mrb[0].mxu0
        %v2951 = vpop.f32.mrb[0].mxu0
        %v2952 = vadd.f32 %v2791, %v2951
        %v2953 = vpop.f32.mrb[0].mxu0
        %2954 = vmatprep.mubr.bf16.mxu0 0
        %2955 = vmatmul.mubr.bf16.gmra.mrb[0].mxu0 %v2452
        %v2956 = vpop.f32.mrb[0].mxu0
        %v2957 = vadd.f32 %v2796, %v2956
        %v2958 = vpop.f32.mrb[0].mxu0
        %v2959 = vpop.f32.mrb[0].mxu0
        %v2960 = vadd.f32 %v2799, %v2959
        %v2961 = vpop.f32.mrb[0].mxu0
        %2962 = vmatprep.mubr.bf16.mxu0 0
        %2963 = vmatmul.mubr.bf16.gmra.mrb[0].mxu0 %v2455
        %v2964 = vpop.f32.mrb[0].mxu0
        %v2965 = vadd.f32 %v2804, %v2964
        %v2966 = vpop.f32.mrb[0].mxu0
        %v2967 = vpop.f32.mrb[0].mxu0
        %v2968 = vadd.f32 %v2807, %v2967
        %v2969 = vpop.f32.mrb[0].mxu0
        %2970 = vmatprep.mubr.bf16.mxu0 0
        %2971 = vmatmul.mubr.bf16.gmra.mrb[0].mxu0 %v2458
        %v2972 = vpop.f32.mrb[0].mxu0
        %v2973 = vadd.f32 %v2812, %v2972
        %v2974 = vpop.f32.mrb[0].mxu0
        %v2975 = vpop.f32.mrb[0].mxu0
        %v2976 = vadd.f32 %v2815, %v2975
        %v2977 = vpop.f32.mrb[0].mxu0
        %2978 = vmatprep.mubr.bf16.mxu0 0
        %2979 = vmatmul.mubr.bf16.gmra.mrb[0].mxu0 %v2461
        %v2980 = vpop.f32.mrb[0].mxu0
        %v2981 = vadd.f32 %v2820, %v2980
        %v2982 = vpop.f32.mrb[0].mxu0
        %v2983 = vpop.f32.mrb[0].mxu0
        %v2984 = vadd.f32 %v2823, %v2983
        %v2985 = vpop.f32.mrb[0].mxu0
        %2986 = vmatprep.mubr.bf16.mxu0 0
        %2987 = vmatmul.mubr.bf16.gmra.mrb[0].mxu0 %v2464
        %v2988 = vpop.f32.mrb[0].mxu0
        %v2989 = vadd.f32 %v2828, %v2988
        %v2990 = vpop.f32.mrb[0].mxu0
        %v2991 = vpop.f32.mrb[0].mxu0
        %v2992 = vadd.f32 %v2831, %v2991
        %v2993 = vpop.f32.mrb[0].mxu0
        %2994 = vdwg.mxu0
        %v3043 = vunpack.c.l.b16 %v1905
        %v3044 = vunpack.c.l.b16 %v1906
        %v3045 = vunpack.c.l.b16 %v1907
        %v3046 = vunpack.c.l.b16 %v1908
        %v3047 = vunpack.c.l.b16 %v1909
        %v3048 = vunpack.c.l.b16 %v1910
        %v3049 = vunpack.c.l.b16 %v1911
        %v3050 = vunpack.c.l.b16 %v1912
        %v3051 = vunpack.c.l.b16 %v1913
        %v3052 = vunpack.c.l.b16 %v1914
        %v3053 = vunpack.c.l.b16 %v1915
        %v3054 = vunpack.c.l.b16 %v1916
        %v3055 = vunpack.c.l.b16 %v1917
        %v3056 = vunpack.c.l.b16 %v1918
        %v3057 = vunpack.c.l.b16 %v1919
        %v3058 = vunpack.c.l.b16 %v1920
        %v3059 = vunpack.c.l.b16 %v1921
        %v3060 = vunpack.c.l.b16 %v1922
        %v3061 = vunpack.c.l.b16 %v1923
        %v3062 = vunpack.c.l.b16 %v1924
        %v3063 = vunpack.c.l.b16 %v1925
        %v3064 = vunpack.c.l.b16 %v1926
        %v3065 = vunpack.c.l.b16 %v1927
        %v3066 = vunpack.c.l.b16 %v1928
        %v3067 = vunpack.c.l.b16 %v1929
        %v3068 = vunpack.c.l.b16 %v1930
        %v3069 = vunpack.c.l.b16 %v1931
        %v3070 = vunpack.c.l.b16 %v1932
        %v3071 = vunpack.c.l.b16 %v1933
        %v3072 = vunpack.c.l.b16 %v1934
        %v3073 = vunpack.c.l.b16 %v1935
        %v3074 = vunpack.c.l.b16 %v1936
        %v3075 = vunpack.c.l.b16 %v1937
        %v3076 = vunpack.c.l.b16 %v1938
        %v3077 = vunpack.c.l.b16 %v1939
        %v3078 = vunpack.c.l.b16 %v1940
        %v3079 = vunpack.c.l.b16 %v1941
        %v3080 = vunpack.c.l.b16 %v1942
        %v3081 = vunpack.c.l.b16 %v1943
        %v3082 = vunpack.c.l.b16 %v1944
        %v3083 = vunpack.c.l.b16 %v1945
        %v3084 = vunpack.c.l.b16 %v1946
        %v3085 = vunpack.c.l.b16 %v1947
        %v3086 = vunpack.c.l.b16 %v1948
        %v3087 = vunpack.c.l.b16 %v1949
        %v3088 = vunpack.c.l.b16 %v1950
        %v3089 = vunpack.c.l.b16 %v1951
        %v3090 = vunpack.c.l.b16 %v1952
        %v3091 = vpack.c.b16 %v3044, %v3043
        %v3092 = vpack.c.b16 %v3046, %v3045
        %v3093 = vpack.c.b16 %v3048, %v3047
        %v3094 = vpack.c.b16 %v3050, %v3049
        %v3095 = vpack.c.b16 %v3052, %v3051
        %v3096 = vpack.c.b16 %v3054, %v3053
        %v3097 = vpack.c.b16 %v3056, %v3055
        %v3098 = vpack.c.b16 %v3058, %v3057
        %v3099 = vpack.c.b16 %v3060, %v3059
        %v3100 = vpack.c.b16 %v3062, %v3061
        %v3101 = vpack.c.b16 %v3064, %v3063
        %v3102 = vpack.c.b16 %v3066, %v3065
        %v3103 = vpack.c.b16 %v3068, %v3067
        %v3104 = vpack.c.b16 %v3070, %v3069
        %v3105 = vpack.c.b16 %v3072, %v3071
        %v3106 = vpack.c.b16 %v3074, %v3073
        %v3107 = vpack.c.b16 %v3076, %v3075
        %v3108 = vpack.c.b16 %v3078, %v3077
        %v3109 = vpack.c.b16 %v3080, %v3079
        %v3110 = vpack.c.b16 %v3082, %v3081
        %v3111 = vpack.c.b16 %v3084, %v3083
        %v3112 = vpack.c.b16 %v3086, %v3085
        %v3113 = vpack.c.b16 %v3088, %v3087
        %v3114 = vpack.c.b16 %v3090, %v3089
        %3139 = vmatprep.subr.bf16.mxu0 0
        %3140 = vmatpush1.bf16.msra.mxu0 %v3091
        %3141 = vmatprep.subr.bf16.mxu0 0
        %3142 = vmatpush1.bf16.msra.mxu0 %v3092
        %3143 = vmatprep.subr.bf16.mxu0 0
        %3144 = vmatpush1.bf16.msra.mxu0 %v3093
        %3145 = vmatprep.subr.bf16.mxu0 0
        %3146 = vmatpush1.bf16.msra.mxu0 %v3094
        %3147 = vmatprep.subr.bf16.mxu0 0
        %3148 = vmatpush1.bf16.msra.mxu0 %v3095
        %3149 = vmatprep.subr.bf16.mxu0 0
        %3150 = vmatpush1.bf16.msra.mxu0 %v3096
        %3151 = vmatprep.subr.bf16.mxu0 0
        %3152 = vmatpush1.bf16.msra.mxu0 %v3097
        %3153 = vmatprep.subr.bf16.mxu0 0
        %3154 = vmatpush1.bf16.msra.mxu0 %v3098
        %3155 = vmatprep.subr.bf16.mxu0 0
        %3156 = vmatpush1.bf16.msra.mxu0 %v3099
        %3157 = vmatprep.subr.bf16.mxu0 0
        %3158 = vmatpush1.bf16.msra.mxu0 %v3100
        %3159 = vmatprep.subr.bf16.mxu0 0
        %3160 = vmatpush1.bf16.msra.mxu0 %v3101
        %3161 = vmatprep.subr.bf16.mxu0 0
        %3162 = vmatpush1.bf16.msra.mxu0 %v3102
        %3163 = vmatprep.subr.bf16.mxu0 0
        %3164 = vmatpush1.bf16.msra.mxu0 %v3103
        %3165 = vmatprep.subr.bf16.mxu0 0
        %3166 = vmatpush1.bf16.msra.mxu0 %v3104
        %3167 = vmatprep.subr.bf16.mxu0 0
        %3168 = vmatpush1.bf16.msra.mxu0 %v3105
        %3169 = vmatprep.subr.bf16.mxu0 0
        %3170 = vmatpush1.bf16.msra.mxu0 %v3106
        %3171 = vmatprep.mubr.bf16.mxu0 %v1595
        %3172 = vmatmul.mubr.bf16.gmra.mrb[0].mxu0 %v1503
        %v3173 = vpop.f32.mrb[0].mxu0
        %v3174 = vadd.f32 %v2869, %v3173
        %v3175 = vpop.f32.mrb[0].mxu0
        %v3176 = vpop.f32.mrb[0].mxu0
        %v3177 = vadd.f32 %v2872, %v3176
        %v3178 = vpop.f32.mrb[0].mxu0
        %3179 = vmatprep.mubr.bf16.mxu0 %v1607
        %3180 = vmatmul.mubr.bf16.gmra.mrb[0].mxu0 %v1504
        %v3181 = vpop.f32.mrb[0].mxu0
        %v3182 = vadd.f32 %v2877, %v3181
        %v3183 = vpop.f32.mrb[0].mxu0
        %v3184 = vpop.f32.mrb[0].mxu0
        %v3185 = vadd.f32 %v2880, %v3184
        %v3186 = vpop.f32.mrb[0].mxu0
        %3187 = vmatprep.mubr.bf16.mxu0 %v1619
        %3188 = vmatmul.mubr.bf16.gmra.mrb[0].mxu0 %v1505
        %v3189 = vpop.f32.mrb[0].mxu0
        %v3190 = vadd.f32 %v2885, %v3189
        %v3191 = vpop.f32.mrb[0].mxu0
        %v3192 = vpop.f32.mrb[0].mxu0
        %v3193 = vadd.f32 %v2888, %v3192
        %v3194 = vpop.f32.mrb[0].mxu0
        %3195 = vmatprep.mubr.bf16.mxu0 %v1631
        %3196 = vmatmul.mubr.bf16.gmra.mrb[0].mxu0 %v1506
        %v3197 = vpop.f32.mrb[0].mxu0
        %v3198 = vadd.f32 %v2893, %v3197
        %v3199 = vpop.f32.mrb[0].mxu0
        %v3200 = vpop.f32.mrb[0].mxu0
        %v3201 = vadd.f32 %v2896, %v3200
        %v3202 = vpop.f32.mrb[0].mxu0
        %3203 = vmatprep.mubr.bf16.mxu0 %v1643
        %3204 = vmatmul.mubr.bf16.gmra.mrb[0].mxu0 %v1507
        %v3205 = vpop.f32.mrb[0].mxu0
        %v3206 = vadd.f32 %v2901, %v3205
        %v3207 = vpop.f32.mrb[0].mxu0
        %v3208 = vpop.f32.mrb[0].mxu0
        %v3209 = vadd.f32 %v2904, %v3208
        %v3210 = vpop.f32.mrb[0].mxu0
        %3211 = vmatprep.mubr.bf16.mxu0 %v1655
        %3212 = vmatmul.mubr.bf16.gmra.mrb[0].mxu0 %v1508
        %v3213 = vpop.f32.mrb[0].mxu0
        %v3214 = vadd.f32 %v2909, %v3213
        %v3215 = vpop.f32.mrb[0].mxu0
        %v3216 = vpop.f32.mrb[0].mxu0
        %v3217 = vadd.f32 %v2912, %v3216
        %v3218 = vpop.f32.mrb[0].mxu0
        %3219 = vmatprep.mubr.bf16.mxu0 %v1667
        %3220 = vmatmul.mubr.bf16.gmra.mrb[0].mxu0 %v1509
        %v3221 = vpop.f32.mrb[0].mxu0
        %v3222 = vadd.f32 %v2917, %v3221
        %v3223 = vpop.f32.mrb[0].mxu0
        %v3224 = vpop.f32.mrb[0].mxu0
        %v3225 = vadd.f32 %v2920, %v3224
        %v3226 = vpop.f32.mrb[0].mxu0
        %3227 = vmatprep.mubr.bf16.mxu0 %v1679
        %3228 = vmatmul.mubr.bf16.gmra.mrb[0].mxu0 %v1510
        %v3229 = vpop.f32.mrb[0].mxu0
        %v3230 = vadd.f32 %v2925, %v3229
        %v3231 = vpop.f32.mrb[0].mxu0
        %v3232 = vpop.f32.mrb[0].mxu0
        %v3233 = vadd.f32 %v2928, %v3232
        %v3234 = vpop.f32.mrb[0].mxu0
        %3235 = vmatprep.mubr.bf16.mxu0 %v1691
        %3236 = vmatmul.mubr.bf16.gmra.mrb[0].mxu0 %v1511
        %v3237 = vpop.f32.mrb[0].mxu0
        %v3238 = vadd.f32 %v2933, %v3237
        %v3239 = vpop.f32.mrb[0].mxu0
        %v3240 = vpop.f32.mrb[0].mxu0
        %v3241 = vadd.f32 %v2936, %v3240
        %v3242 = vpop.f32.mrb[0].mxu0
        %3243 = vmatprep.mubr.bf16.mxu0 %v1703
        %3244 = vmatmul.mubr.bf16.gmra.mrb[0].mxu0 %v1512
        %v3245 = vpop.f32.mrb[0].mxu0
        %v3246 = vadd.f32 %v2941, %v3245
        %v3247 = vpop.f32.mrb[0].mxu0
        %v3248 = vpop.f32.mrb[0].mxu0
        %v3249 = vadd.f32 %v2944, %v3248
        %v3250 = vpop.f32.mrb[0].mxu0
        %3251 = vmatprep.mubr.bf16.mxu0 %v1715
        %3252 = vmatmul.mubr.bf16.gmra.mrb[0].mxu0 %v1513
        %v3253 = vpop.f32.mrb[0].mxu0
        %v3254 = vadd.f32 %v2949, %v3253
        %v3255 = vpop.f32.mrb[0].mxu0
        %v3256 = vpop.f32.mrb[0].mxu0
        %v3257 = vadd.f32 %v2952, %v3256
        %v3258 = vpop.f32.mrb[0].mxu0
        %3259 = vmatprep.mubr.bf16.mxu0 %v1727
        %3260 = vmatmul.mubr.bf16.gmra.mrb[0].mxu0 %v1514
        %v3261 = vpop.f32.mrb[0].mxu0
        %v3262 = vadd.f32 %v2957, %v3261
        %v3263 = vpop.f32.mrb[0].mxu0
        %v3264 = vpop.f32.mrb[0].mxu0
        %v3265 = vadd.f32 %v2960, %v3264
        %v3266 = vpop.f32.mrb[0].mxu0
        %3267 = vmatprep.mubr.bf16.mxu0 %v1739
        %3268 = vmatmul.mubr.bf16.gmra.mrb[0].mxu0 %v1515
        %v3269 = vpop.f32.mrb[0].mxu0
        %v3270 = vadd.f32 %v2965, %v3269
        %v3271 = vpop.f32.mrb[0].mxu0
        %v3272 = vpop.f32.mrb[0].mxu0
        %v3273 = vadd.f32 %v2968, %v3272
        %v3274 = vpop.f32.mrb[0].mxu0
        %3275 = vmatprep.mubr.bf16.mxu0 %v1751
        %3276 = vmatmul.mubr.bf16.gmra.mrb[0].mxu0 %v1516
        %v3277 = vpop.f32.mrb[0].mxu0
        %v3278 = vadd.f32 %v2973, %v3277
        %v3279 = vpop.f32.mrb[0].mxu0
        %v3280 = vpop.f32.mrb[0].mxu0
        %v3281 = vadd.f32 %v2976, %v3280
        %v3282 = vpop.f32.mrb[0].mxu0
        %3283 = vmatprep.mubr.bf16.mxu0 %v1763
        %3284 = vmatmul.mubr.bf16.gmra.mrb[0].mxu0 %v1517
        %v3285 = vpop.f32.mrb[0].mxu0
        %v3286 = vadd.f32 %v2981, %v3285
        %v3287 = vpop.f32.mrb[0].mxu0
        %v3288 = vpop.f32.mrb[0].mxu0
        %v3289 = vadd.f32 %v2984, %v3288
        %v3290 = vpop.f32.mrb[0].mxu0
        %3291 = vmatprep.mubr.bf16.mxu0 %v1775
        %3292 = vmatmul.mubr.bf16.gmra.mrb[0].mxu0 %v1518
        %v3293 = vpop.f32.mrb[0].mxu0
        %v3294 = vadd.f32 %v2989, %v3293
        %v3295 = vpop.f32.mrb[0].mxu0
        %v3296 = vpop.f32.mrb[0].mxu0
        %v3297 = vadd.f32 %v2992, %v3296
        %v3298 = vpop.f32.mrb[0].mxu0
        %3299 = vdwg.mxu0
        %3300 = vmatprep.subr.bf16.mxu0 0
        %3301 = vmatpush1.bf16.msra.mxu0 %v3107
        %3302 = vmatprep.subr.bf16.mxu0 0
        %3303 = vmatpush1.bf16.msra.mxu0 %v3108
        %3304 = vmatprep.subr.bf16.mxu0 0
        %3305 = vmatpush1.bf16.msra.mxu0 %v3109
        %3306 = vmatprep.subr.bf16.mxu0 0
        %3307 = vmatpush1.bf16.msra.mxu0 %v3110
        %3308 = vmatprep.subr.bf16.mxu0 0
        %3309 = vmatpush1.bf16.msra.mxu0 %v3111
        %3310 = vmatprep.subr.bf16.mxu0 0
        %3311 = vmatpush1.bf16.msra.mxu0 %v3112
        %3312 = vmatprep.subr.bf16.mxu0 0
        %3313 = vmatpush1.bf16.msra.mxu0 %v3113
        %3314 = vmatprep.subr.bf16.mxu0 0
        %3315 = vmatpush1.bf16.msra.mxu0 %v3114
        %3316 = vmatprep.subr.bf16.mxu0 0
        %3317 = vmatpush1.bf16.msra.mxu0 0
        %3318 = vmatprep.subr.bf16.mxu0 0
        %3319 = vmatpush1.bf16.msra.mxu0 0
        %3320 = vmatprep.subr.bf16.mxu0 0
        %3321 = vmatpush1.bf16.msra.mxu0 0
        %3322 = vmatprep.subr.bf16.mxu0 0
        %3323 = vmatpush1.bf16.msra.mxu0 0
        %3324 = vmatprep.subr.bf16.mxu0 0
        %3325 = vmatpush1.bf16.msra.mxu0 0
        %3326 = vmatprep.subr.bf16.mxu0 0
        %3327 = vmatpush1.bf16.msra.mxu0 0
        %3328 = vmatprep.subr.bf16.mxu0 0
        %3329 = vmatpush1.bf16.msra.mxu0 0
        %3330 = vmatprep.subr.bf16.mxu0 0
        %3331 = vmatpush1.bf16.msra.mxu0 0
        %3332 = vmatprep.mubr.bf16.mxu0 0
        %3333 = vmatmul.mubr.bf16.gmra.mrb[0].mxu0 %v1843
        %v3334 = vpop.f32.mrb[0].mxu0
        %v3335 = vadd.f32 %v3174, %v3334
        %v3336 = vpop.f32.mrb[0].mxu0
        %v3337 = vpop.f32.mrb[0].mxu0
        %v3338 = vadd.f32 %v3177, %v3337
        %v3339 = vpop.f32.mrb[0].mxu0
        %3340 = vmatprep.mubr.bf16.mxu0 0
        %3341 = vmatmul.mubr.bf16.gmra.mrb[0].mxu0 %v1846
        %v3342 = vpop.f32.mrb[0].mxu0
        %v3343 = vadd.f32 %v3182, %v3342
        %v3344 = vpop.f32.mrb[0].mxu0
        %v3345 = vpop.f32.mrb[0].mxu0
        %v3346 = vadd.f32 %v3185, %v3345
        %v3347 = vpop.f32.mrb[0].mxu0
        %3348 = vmatprep.mubr.bf16.mxu0 0
        %3349 = vmatmul.mubr.bf16.gmra.mrb[0].mxu0 %v1849
        %v3350 = vpop.f32.mrb[0].mxu0
        %v3351 = vadd.f32 %v3190, %v3350
        %v3352 = vpop.f32.mrb[0].mxu0
        %v3353 = vpop.f32.mrb[0].mxu0
        %v3354 = vadd.f32 %v3193, %v3353
        %v3355 = vpop.f32.mrb[0].mxu0
        %3356 = vmatprep.mubr.bf16.mxu0 0
        %3357 = vmatmul.mubr.bf16.gmra.mrb[0].mxu0 %v1852
        %v3358 = vpop.f32.mrb[0].mxu0
        %v3359 = vadd.f32 %v3198, %v3358
        %v3360 = vpop.f32.mrb[0].mxu0
        %v3361 = vpop.f32.mrb[0].mxu0
        %v3362 = vadd.f32 %v3201, %v3361
        %v3363 = vpop.f32.mrb[0].mxu0
        %3364 = vmatprep.mubr.bf16.mxu0 0
        %3365 = vmatmul.mubr.bf16.gmra.mrb[0].mxu0 %v1855
        %v3366 = vpop.f32.mrb[0].mxu0
        %v3367 = vadd.f32 %v3206, %v3366
        %v3368 = vpop.f32.mrb[0].mxu0
        %v3369 = vpop.f32.mrb[0].mxu0
        %v3370 = vadd.f32 %v3209, %v3369
        %v3371 = vpop.f32.mrb[0].mxu0
        %3372 = vmatprep.mubr.bf16.mxu0 0
        %3373 = vmatmul.mubr.bf16.gmra.mrb[0].mxu0 %v1858
        %v3374 = vpop.f32.mrb[0].mxu0
        %v3375 = vadd.f32 %v3214, %v3374
        %v3376 = vpop.f32.mrb[0].mxu0
        %v3377 = vpop.f32.mrb[0].mxu0
        %v3378 = vadd.f32 %v3217, %v3377
        %v3379 = vpop.f32.mrb[0].mxu0
        %3380 = vmatprep.mubr.bf16.mxu0 0
        %3381 = vmatmul.mubr.bf16.gmra.mrb[0].mxu0 %v1861
        %v3382 = vpop.f32.mrb[0].mxu0
        %v3383 = vadd.f32 %v3222, %v3382
        %v3384 = vpop.f32.mrb[0].mxu0
        %v3385 = vpop.f32.mrb[0].mxu0
        %v3386 = vadd.f32 %v3225, %v3385
        %v3387 = vpop.f32.mrb[0].mxu0
        %3388 = vmatprep.mubr.bf16.mxu0 0
        %3389 = vmatmul.mubr.bf16.gmra.mrb[0].mxu0 %v1864
        %v3390 = vpop.f32.mrb[0].mxu0
        %v3391 = vadd.f32 %v3230, %v3390
        %v3392 = vpop.f32.mrb[0].mxu0
        %v3393 = vpop.f32.mrb[0].mxu0
        %v3394 = vadd.f32 %v3233, %v3393
        %v3395 = vpop.f32.mrb[0].mxu0
        %3396 = vmatprep.mubr.bf16.mxu0 0
        %3397 = vmatmul.mubr.bf16.gmra.mrb[0].mxu0 %v1867
        %v3398 = vpop.f32.mrb[0].mxu0
        %v3399 = vadd.f32 %v3238, %v3398
        %v3400 = vpop.f32.mrb[0].mxu0
        %v3401 = vpop.f32.mrb[0].mxu0
        %v3402 = vadd.f32 %v3241, %v3401
        %v3403 = vpop.f32.mrb[0].mxu0
        %3404 = vmatprep.mubr.bf16.mxu0 0
        %3405 = vmatmul.mubr.bf16.gmra.mrb[0].mxu0 %v1870
        %v3406 = vpop.f32.mrb[0].mxu0
        %v3407 = vadd.f32 %v3246, %v3406
        %v3408 = vpop.f32.mrb[0].mxu0
        %v3409 = vpop.f32.mrb[0].mxu0
        %v3410 = vadd.f32 %v3249, %v3409
        %v3411 = vpop.f32.mrb[0].mxu0
        %3412 = vmatprep.mubr.bf16.mxu0 0
        %3413 = vmatmul.mubr.bf16.gmra.mrb[0].mxu0 %v1873
        %v3414 = vpop.f32.mrb[0].mxu0
        %v3415 = vadd.f32 %v3254, %v3414
        %v3416 = vpop.f32.mrb[0].mxu0
        %v3417 = vpop.f32.mrb[0].mxu0
        %v3418 = vadd.f32 %v3257, %v3417
        %v3419 = vpop.f32.mrb[0].mxu0
        %3420 = vmatprep.mubr.bf16.mxu0 0
        %3421 = vmatmul.mubr.bf16.gmra.mrb[0].mxu0 %v1876
        %v3422 = vpop.f32.mrb[0].mxu0
        %v3423 = vadd.f32 %v3262, %v3422
        %v3424 = vpop.f32.mrb[0].mxu0
        %v3425 = vpop.f32.mrb[0].mxu0
        %v3426 = vadd.f32 %v3265, %v3425
        %v3427 = vpop.f32.mrb[0].mxu0
        %3428 = vmatprep.mubr.bf16.mxu0 0
        %3429 = vmatmul.mubr.bf16.gmra.mrb[0].mxu0 %v1879
        %v3430 = vpop.f32.mrb[0].mxu0
        %v3431 = vadd.f32 %v3270, %v3430
        %v3432 = vpop.f32.mrb[0].mxu0
        %v3433 = vpop.f32.mrb[0].mxu0
        %v3434 = vadd.f32 %v3273, %v3433
        %v3435 = vpop.f32.mrb[0].mxu0
        %3436 = vmatprep.mubr.bf16.mxu0 0
        %3437 = vmatmul.mubr.bf16.gmra.mrb[0].mxu0 %v1882
        %v3438 = vpop.f32.mrb[0].mxu0
        %v3439 = vadd.f32 %v3278, %v3438
        %v3440 = vpop.f32.mrb[0].mxu0
        %v3441 = vpop.f32.mrb[0].mxu0
        %v3442 = vadd.f32 %v3281, %v3441
        %v3443 = vpop.f32.mrb[0].mxu0
        %3444 = vmatprep.mubr.bf16.mxu0 0
        %3445 = vmatmul.mubr.bf16.gmra.mrb[0].mxu0 %v1885
        %v3446 = vpop.f32.mrb[0].mxu0
        %v3447 = vadd.f32 %v3286, %v3446
        %v3448 = vpop.f32.mrb[0].mxu0
        %v3449 = vpop.f32.mrb[0].mxu0
        %v3450 = vadd.f32 %v3289, %v3449
        %v3451 = vpop.f32.mrb[0].mxu0
        %3452 = vmatprep.mubr.bf16.mxu0 0
        %3453 = vmatmul.mubr.bf16.gmra.mrb[0].mxu0 %v1888
        %v3454 = vpop.f32.mrb[0].mxu0
        %v3455 = vadd.f32 %v3294, %v3454
        %v3456 = vpop.f32.mrb[0].mxu0
        %v3457 = vpop.f32.mrb[0].mxu0
        %v3458 = vadd.f32 %v3297, %v3457
        %v3459 = vpop.f32.mrb[0].mxu0
        %3460 = vdwg.mxu0
        %s3461 = scalar_lea.vmem [#allocation2], 24
        %v3462 = vld [vmem:[%s3461] sm:$0xf]
        %v3463 = vld [vmem:[%s3461 + $0x4] sm:$0xf]
        %v3464 = vld [vmem:[%s3461 + $0xc] sm:$0xf]
        %v3465 = vld [vmem:[%s3461 + $0x10] sm:$0xf]
        %v3466 = vld [vmem:[%s3461 + $0x18] sm:$0xf]
        %v3467 = vld [vmem:[%s3461 + $0x1c] sm:$0xf]
        %v3468 = vld [vmem:[%s3461 + $0x24] sm:$0xf]
        %v3469 = vld [vmem:[%s3461 + $0x28] sm:$0xf]
        %v3470 = vld [vmem:[%s3461 + $0x30] sm:$0xf]
        %v3471 = vld [vmem:[%s3461 + $0x34] sm:$0xf]
        %v3472 = vld [vmem:[%s3461 + $0x3c] sm:$0xf]
        %v3473 = vld [vmem:[%s3461 + $0x40] sm:$0xf]
        %v3474 = vld [vmem:[%s3461 + $0x48] sm:$0xf]
        %v3475 = vld [vmem:[%s3461 + $0x4c] sm:$0xf]
        %v3476 = vld [vmem:[%s3461 + $0x54] sm:$0xf]
        %v3477 = vld [vmem:[%s3461 + $0x58] sm:$0xf]
        %v3478 = vld [vmem:[%s3461 + $0x60] sm:$0xf]
        %v3479 = vld [vmem:[%s3461 + $0x64] sm:$0xf]
        %v3480 = vld [vmem:[%s3461 + $0x6c] sm:$0xf]
        %v3481 = vld [vmem:[%s3461 + $0x70] sm:$0xf]
        %v3482 = vld [vmem:[%s3461 + $0x78] sm:$0xf]
        %v3483 = vld [vmem:[%s3461 + $0x7c] sm:$0xf]
        %v3484 = vld [vmem:[%s3461 + $0x84] sm:$0xf]
        %v3485 = vld [vmem:[%s3461 + $0x88] sm:$0xf]
        %v3486 = vld [vmem:[%s3461 + $0x90] sm:$0xf]
        %v3487 = vld [vmem:[%s3461 + $0x94] sm:$0xf]
        %v3488 = vld [vmem:[%s3461 + $0x9c] sm:$0xf]
        %v3489 = vld [vmem:[%s3461 + $0xa0] sm:$0xf]
        %v3490 = vld [vmem:[%s3461 + $0xa8] sm:$0xf]
        %v3491 = vld [vmem:[%s3461 + $0xac] sm:$0xf]
        %v3492 = vld [vmem:[%s3461 + $0xb4] sm:$0xf]
        %v3493 = vld [vmem:[%s3461 + $0xb8] sm:$0xf]
        %v3494 = vld [vmem:[%s3461 + $0x8] sm:$0x1]
        %v3495 = vld [vmem:[%s3461 + $0x14] sm:$0x1]
        %v3496 = vld [vmem:[%s3461 + $0x20] sm:$0x1]
        %v3497 = vld [vmem:[%s3461 + $0x2c] sm:$0x1]
        %v3498 = vld [vmem:[%s3461 + $0x38] sm:$0x1]
        %v3499 = vld [vmem:[%s3461 + $0x44] sm:$0x1]
        %v3500 = vld [vmem:[%s3461 + $0x50] sm:$0x1]
        %v3501 = vld [vmem:[%s3461 + $0x5c] sm:$0x1]
        %v3502 = vld [vmem:[%s3461 + $0x68] sm:$0x1]
        %v3503 = vld [vmem:[%s3461 + $0x74] sm:$0x1]
        %v3504 = vld [vmem:[%s3461 + $0x80] sm:$0x1]
        %v3505 = vld [vmem:[%s3461 + $0x8c] sm:$0x1]
        %v3506 = vld [vmem:[%s3461 + $0x98] sm:$0x1]
        %v3507 = vld [vmem:[%s3461 + $0xa4] sm:$0x1]
        %v3508 = vld [vmem:[%s3461 + $0xb0] sm:$0x1]
        %v3509 = vld [vmem:[%s3461 + $0xbc] sm:$0x1]
        %v3510 = vld [vmem:[%s3461] sm:$0xe]
        %v3511 = vld [vmem:[%s3461 + $0xc] sm:$0xe]
        %v3512 = vld [vmem:[%s3461 + $0x18] sm:$0xe]
        %v3513 = vld [vmem:[%s3461 + $0x24] sm:$0xe]
        %v3514 = vld [vmem:[%s3461 + $0x30] sm:$0xe]
        %v3515 = vld [vmem:[%s3461 + $0x3c] sm:$0xe]
        %v3516 = vld [vmem:[%s3461 + $0x48] sm:$0xe]
        %v3517 = vld [vmem:[%s3461 + $0x54] sm:$0xe]
        %v3518 = vld [vmem:[%s3461 + $0x60] sm:$0xe]
        %v3519 = vld [vmem:[%s3461 + $0x6c] sm:$0xe]
        %v3520 = vld [vmem:[%s3461 + $0x78] sm:$0xe]
        %v3521 = vld [vmem:[%s3461 + $0x84] sm:$0xe]
        %v3522 = vld [vmem:[%s3461 + $0x90] sm:$0xe]
        %v3523 = vld [vmem:[%s3461 + $0x9c] sm:$0xe]
        %v3524 = vld [vmem:[%s3461 + $0xa8] sm:$0xe]
        %v3525 = vld [vmem:[%s3461 + $0xb4] sm:$0xe]
        %v3558 = vunpack.c.l.b16 %v3462
        %v3559 = vunpack.c.l.b16 %v3463
        %v3560 = vunpack.c.l.b16 %v3464
        %v3561 = vunpack.c.l.b16 %v3465
        %v3562 = vunpack.c.l.b16 %v3466
        %v3563 = vunpack.c.l.b16 %v3467
        %v3564 = vunpack.c.l.b16 %v3468
        %v3565 = vunpack.c.l.b16 %v3469
        %v3566 = vunpack.c.l.b16 %v3470
        %v3567 = vunpack.c.l.b16 %v3471
        %v3568 = vunpack.c.l.b16 %v3472
        %v3569 = vunpack.c.l.b16 %v3473
        %v3570 = vunpack.c.l.b16 %v3474
        %v3571 = vunpack.c.l.b16 %v3475
        %v3572 = vunpack.c.l.b16 %v3476
        %v3573 = vunpack.c.l.b16 %v3477
        %v3574 = vunpack.c.l.b16 %v3478
        %v3575 = vunpack.c.l.b16 %v3479
        %v3576 = vunpack.c.l.b16 %v3480
        %v3577 = vunpack.c.l.b16 %v3481
        %v3578 = vunpack.c.l.b16 %v3482
        %v3579 = vunpack.c.l.b16 %v3483
        %v3580 = vunpack.c.l.b16 %v3484
        %v3581 = vunpack.c.l.b16 %v3485
        %v3582 = vunpack.c.l.b16 %v3486
        %v3583 = vunpack.c.l.b16 %v3487
        %v3584 = vunpack.c.l.b16 %v3488
        %v3585 = vunpack.c.l.b16 %v3489
        %v3586 = vunpack.c.l.b16 %v3490
        %v3587 = vunpack.c.l.b16 %v3491
        %v3588 = vunpack.c.l.b16 %v3492
        %v3589 = vunpack.c.l.b16 %v3493
        %v3590 = vpack.c.b16 %v3559, %v3558
        %v3591 = vpack.c.b16 %v3561, %v3560
        %v3592 = vpack.c.b16 %v3563, %v3562
        %v3593 = vpack.c.b16 %v3565, %v3564
        %v3594 = vpack.c.b16 %v3567, %v3566
        %v3595 = vpack.c.b16 %v3569, %v3568
        %v3596 = vpack.c.b16 %v3571, %v3570
        %v3597 = vpack.c.b16 %v3573, %v3572
        %v3598 = vpack.c.b16 %v3575, %v3574
        %v3599 = vpack.c.b16 %v3577, %v3576
        %v3600 = vpack.c.b16 %v3579, %v3578
        %v3601 = vpack.c.b16 %v3581, %v3580
        %v3602 = vpack.c.b16 %v3583, %v3582
        %v3603 = vpack.c.b16 %v3585, %v3584
        %v3604 = vpack.c.b16 %v3587, %v3586
        %v3605 = vpack.c.b16 %v3589, %v3588
        %v3638 = vunpack.c.l.b16 %v3494
        %v3639 = vunpack.c.l.b16 %v3495
        %v3640 = vunpack.c.l.b16 %v3496
        %v3641 = vunpack.c.l.b16 %v3497
        %v3642 = vunpack.c.l.b16 %v3498
        %v3643 = vunpack.c.l.b16 %v3499
        %v3644 = vunpack.c.l.b16 %v3500
        %v3645 = vunpack.c.l.b16 %v3501
        %v3646 = vunpack.c.l.b16 %v3502
        %v3647 = vunpack.c.l.b16 %v3503
        %v3648 = vunpack.c.l.b16 %v3504
        %v3649 = vunpack.c.l.b16 %v3505
        %v3650 = vunpack.c.l.b16 %v3506
        %v3651 = vunpack.c.l.b16 %v3507
        %v3652 = vunpack.c.l.b16 %v3508
        %v3653 = vunpack.c.l.b16 %v3509
        %v3654 = vpack.c.b16 %v3638, %v3638
        %v3655 = vpack.c.b16 %v3639, %v3639
        %v3656 = vpack.c.b16 %v3640, %v3640
        %v3657 = vpack.c.b16 %v3641, %v3641
        %v3658 = vpack.c.b16 %v3642, %v3642
        %v3659 = vpack.c.b16 %v3643, %v3643
        %v3660 = vpack.c.b16 %v3644, %v3644
        %v3661 = vpack.c.b16 %v3645, %v3645
        %v3662 = vpack.c.b16 %v3646, %v3646
        %v3663 = vpack.c.b16 %v3647, %v3647
        %v3664 = vpack.c.b16 %v3648, %v3648
        %v3665 = vpack.c.b16 %v3649, %v3649
        %v3666 = vpack.c.b16 %v3650, %v3650
        %v3667 = vpack.c.b16 %v3651, %v3651
        %v3668 = vpack.c.b16 %v3652, %v3652
        %v3669 = vpack.c.b16 %v3653, %v3653
        %v3671 = vshrl.u32 %v3590, 16
        %v3673 = vshll.u32 %v3590, 16
        %v3675 = vrot.slane %v3673, 1
        %v3676 = vor.u32 %v3671, %v3675
        %v3678 = vshll.u32 %v3654, 16
        %v3680 = vrot.slane %v3678, 1
        %v3681 = vsel %vm1583, %v3676, %v3680
        %v3683 = vshrl.u32 %v3591, 16
        %v3685 = vshll.u32 %v3591, 16
        %v3687 = vrot.slane %v3685, 1
        %v3688 = vor.u32 %v3683, %v3687
        %v3690 = vshll.u32 %v3655, 16
        %v3692 = vrot.slane %v3690, 1
        %v3693 = vsel %vm1583, %v3688, %v3692
        %v3695 = vshrl.u32 %v3592, 16
        %v3697 = vshll.u32 %v3592, 16
        %v3699 = vrot.slane %v3697, 1
        %v3700 = vor.u32 %v3695, %v3699
        %v3702 = vshll.u32 %v3656, 16
        %v3704 = vrot.slane %v3702, 1
        %v3705 = vsel %vm1583, %v3700, %v3704
        %v3707 = vshrl.u32 %v3593, 16
        %v3709 = vshll.u32 %v3593, 16
        %v3711 = vrot.slane %v3709, 1
        %v3712 = vor.u32 %v3707, %v3711
        %v3714 = vshll.u32 %v3657, 16
        %v3716 = vrot.slane %v3714, 1
        %v3717 = vsel %vm1583, %v3712, %v3716
        %v3719 = vshrl.u32 %v3594, 16
        %v3721 = vshll.u32 %v3594, 16
        %v3723 = vrot.slane %v3721, 1
        %v3724 = vor.u32 %v3719, %v3723
        %v3726 = vshll.u32 %v3658, 16
        %v3728 = vrot.slane %v3726, 1
        %v3729 = vsel %vm1583, %v3724, %v3728
        %v3731 = vshrl.u32 %v3595, 16
        %v3733 = vshll.u32 %v3595, 16
        %v3735 = vrot.slane %v3733, 1
        %v3736 = vor.u32 %v3731, %v3735
        %v3738 = vshll.u32 %v3659, 16
        %v3740 = vrot.slane %v3738, 1
        %v3741 = vsel %vm1583, %v3736, %v3740
        %v3743 = vshrl.u32 %v3596, 16
        %v3745 = vshll.u32 %v3596, 16
        %v3747 = vrot.slane %v3745, 1
        %v3748 = vor.u32 %v3743, %v3747
        %v3750 = vshll.u32 %v3660, 16
        %v3752 = vrot.slane %v3750, 1
        %v3753 = vsel %vm1583, %v3748, %v3752
        %v3755 = vshrl.u32 %v3597, 16
        %v3757 = vshll.u32 %v3597, 16
        %v3759 = vrot.slane %v3757, 1
        %v3760 = vor.u32 %v3755, %v3759
        %v3762 = vshll.u32 %v3661, 16
        %v3764 = vrot.slane %v3762, 1
        %v3765 = vsel %vm1583, %v3760, %v3764
        %v3767 = vshrl.u32 %v3598, 16
        %v3769 = vshll.u32 %v3598, 16
        %v3771 = vrot.slane %v3769, 1
        %v3772 = vor.u32 %v3767, %v3771
        %v3774 = vshll.u32 %v3662, 16
        %v3776 = vrot.slane %v3774, 1
        %v3777 = vsel %vm1583, %v3772, %v3776
        %v3779 = vshrl.u32 %v3599, 16
        %v3781 = vshll.u32 %v3599, 16
        %v3783 = vrot.slane %v3781, 1
        %v3784 = vor.u32 %v3779, %v3783
        %v3786 = vshll.u32 %v3663, 16
        %v3788 = vrot.slane %v3786, 1
        %v3789 = vsel %vm1583, %v3784, %v3788
        %v3791 = vshrl.u32 %v3600, 16
        %v3793 = vshll.u32 %v3600, 16
        %v3795 = vrot.slane %v3793, 1
        %v3796 = vor.u32 %v3791, %v3795
        %v3798 = vshll.u32 %v3664, 16
        %v3800 = vrot.slane %v3798, 1
        %v3801 = vsel %vm1583, %v3796, %v3800
        %v3803 = vshrl.u32 %v3601, 16
        %v3805 = vshll.u32 %v3601, 16
        %v3807 = vrot.slane %v3805, 1
        %v3808 = vor.u32 %v3803, %v3807
        %v3810 = vshll.u32 %v3665, 16
        %v3812 = vrot.slane %v3810, 1
        %v3813 = vsel %vm1583, %v3808, %v3812
        %v3815 = vshrl.u32 %v3602, 16
        %v3817 = vshll.u32 %v3602, 16
        %v3819 = vrot.slane %v3817, 1
        %v3820 = vor.u32 %v3815, %v3819
        %v3822 = vshll.u32 %v3666, 16
        %v3824 = vrot.slane %v3822, 1
        %v3825 = vsel %vm1583, %v3820, %v3824
        %v3827 = vshrl.u32 %v3603, 16
        %v3829 = vshll.u32 %v3603, 16
        %v3831 = vrot.slane %v3829, 1
        %v3832 = vor.u32 %v3827, %v3831
        %v3834 = vshll.u32 %v3667, 16
        %v3836 = vrot.slane %v3834, 1
        %v3837 = vsel %vm1583, %v3832, %v3836
        %v3839 = vshrl.u32 %v3604, 16
        %v3841 = vshll.u32 %v3604, 16
        %v3843 = vrot.slane %v3841, 1
        %v3844 = vor.u32 %v3839, %v3843
        %v3846 = vshll.u32 %v3668, 16
        %v3848 = vrot.slane %v3846, 1
        %v3849 = vsel %vm1583, %v3844, %v3848
        %v3851 = vshrl.u32 %v3605, 16
        %v3853 = vshll.u32 %v3605, 16
        %v3855 = vrot.slane %v3853, 1
        %v3856 = vor.u32 %v3851, %v3855
        %v3858 = vshll.u32 %v3669, 16
        %v3860 = vrot.slane %v3858, 1
        %v3861 = vsel %vm1583, %v3856, %v3860
        %v3894 = vunpack.c.l.b16 %v3510
        %v3895 = vunpack.c.l.b16 %v3511
        %v3896 = vunpack.c.l.b16 %v3512
        %v3897 = vunpack.c.l.b16 %v3513
        %v3898 = vunpack.c.l.b16 %v3514
        %v3899 = vunpack.c.l.b16 %v3515
        %v3900 = vunpack.c.l.b16 %v3516
        %v3901 = vunpack.c.l.b16 %v3517
        %v3902 = vunpack.c.l.b16 %v3518
        %v3903 = vunpack.c.l.b16 %v3519
        %v3904 = vunpack.c.l.b16 %v3520
        %v3905 = vunpack.c.l.b16 %v3521
        %v3906 = vunpack.c.l.b16 %v3522
        %v3907 = vunpack.c.l.b16 %v3523
        %v3908 = vunpack.c.l.b16 %v3524
        %v3909 = vunpack.c.l.b16 %v3525
        %v3910 = vpack.c.b16 %v3559, %v3894
        %v3911 = vpack.c.b16 %v3561, %v3895
        %v3912 = vpack.c.b16 %v3563, %v3896
        %v3913 = vpack.c.b16 %v3565, %v3897
        %v3914 = vpack.c.b16 %v3567, %v3898
        %v3915 = vpack.c.b16 %v3569, %v3899
        %v3916 = vpack.c.b16 %v3571, %v3900
        %v3917 = vpack.c.b16 %v3573, %v3901
        %v3918 = vpack.c.b16 %v3575, %v3902
        %v3919 = vpack.c.b16 %v3577, %v3903
        %v3920 = vpack.c.b16 %v3579, %v3904
        %v3921 = vpack.c.b16 %v3581, %v3905
        %v3922 = vpack.c.b16 %v3583, %v3906
        %v3923 = vpack.c.b16 %v3585, %v3907
        %v3924 = vpack.c.b16 %v3587, %v3908
        %v3925 = vpack.c.b16 %v3589, %v3909
        %v3926 = vrot.slane %v3910, 1
        %v3927 = vrot.slane %v3654, 1
        %v3928 = vsel %vm1840, %v3926, %v3927
        %v3929 = vrot.slane %v3911, 1
        %v3930 = vrot.slane %v3655, 1
        %v3931 = vsel %vm1840, %v3929, %v3930
        %v3932 = vrot.slane %v3912, 1
        %v3933 = vrot.slane %v3656, 1
        %v3934 = vsel %vm1840, %v3932, %v3933
        %v3935 = vrot.slane %v3913, 1
        %v3936 = vrot.slane %v3657, 1
        %v3937 = vsel %vm1840, %v3935, %v3936
        %v3938 = vrot.slane %v3914, 1
        %v3939 = vrot.slane %v3658, 1
        %v3940 = vsel %vm1840, %v3938, %v3939
        %v3941 = vrot.slane %v3915, 1
        %v3942 = vrot.slane %v3659, 1
        %v3943 = vsel %vm1840, %v3941, %v3942
        %v3944 = vrot.slane %v3916, 1
        %v3945 = vrot.slane %v3660, 1
        %v3946 = vsel %vm1840, %v3944, %v3945
        %v3947 = vrot.slane %v3917, 1
        %v3948 = vrot.slane %v3661, 1
        %v3949 = vsel %vm1840, %v3947, %v3948
        %v3950 = vrot.slane %v3918, 1
        %v3951 = vrot.slane %v3662, 1
        %v3952 = vsel %vm1840, %v3950, %v3951
        %v3953 = vrot.slane %v3919, 1
        %v3954 = vrot.slane %v3663, 1
        %v3955 = vsel %vm1840, %v3953, %v3954
        %v3956 = vrot.slane %v3920, 1
        %v3957 = vrot.slane %v3664, 1
        %v3958 = vsel %vm1840, %v3956, %v3957
        %v3959 = vrot.slane %v3921, 1
        %v3960 = vrot.slane %v3665, 1
        %v3961 = vsel %vm1840, %v3959, %v3960
        %v3962 = vrot.slane %v3922, 1
        %v3963 = vrot.slane %v3666, 1
        %v3964 = vsel %vm1840, %v3962, %v3963
        %v3965 = vrot.slane %v3923, 1
        %v3966 = vrot.slane %v3667, 1
        %v3967 = vsel %vm1840, %v3965, %v3966
        %v3968 = vrot.slane %v3924, 1
        %v3969 = vrot.slane %v3668, 1
        %v3970 = vsel %vm1840, %v3968, %v3969
        %v3971 = vrot.slane %v3925, 1
        %v3972 = vrot.slane %v3669, 1
        %v3973 = vsel %vm1840, %v3971, %v3972
        %v3990 = vld [vmem:[#allocation8 + $0x180] sm:$0xf]
        %v3991 = vld [vmem:[#allocation8 + $0x184] sm:$0xf]
        %v3992 = vld [vmem:[#allocation8 + $0x188] sm:$0xf]
        %v3993 = vld [vmem:[#allocation8 + $0x18c] sm:$0xf]
        %v3994 = vld [vmem:[#allocation8 + $0x190] sm:$0xf]
        %v3995 = vld [vmem:[#allocation8 + $0x194] sm:$0xf]
        %v3996 = vld [vmem:[#allocation8 + $0x198] sm:$0xf]
        %v3997 = vld [vmem:[#allocation8 + $0x19c] sm:$0xf]
        %v3998 = vld [vmem:[#allocation8 + $0x1a0] sm:$0xf]
        %v3999 = vld [vmem:[#allocation8 + $0x1a4] sm:$0xf]
        %v4000 = vld [vmem:[#allocation8 + $0x1a8] sm:$0xf]
        %v4001 = vld [vmem:[#allocation8 + $0x1ac] sm:$0xf]
        %v4002 = vld [vmem:[#allocation8 + $0x1b0] sm:$0xf]
        %v4003 = vld [vmem:[#allocation8 + $0x1b4] sm:$0xf]
        %v4004 = vld [vmem:[#allocation8 + $0x1b8] sm:$0xf]
        %v4005 = vld [vmem:[#allocation8 + $0x1bc] sm:$0xf]
        %v4006 = vld [vmem:[#allocation8 + $0x1c0] sm:$0xf]
        %v4007 = vld [vmem:[#allocation8 + $0x1c4] sm:$0xf]
        %v4008 = vld [vmem:[#allocation8 + $0x1c8] sm:$0xf]
        %v4009 = vld [vmem:[#allocation8 + $0x1cc] sm:$0xf]
        %v4010 = vld [vmem:[#allocation8 + $0x1d0] sm:$0xf]
        %v4011 = vld [vmem:[#allocation8 + $0x1d4] sm:$0xf]
        %v4012 = vld [vmem:[#allocation8 + $0x1d8] sm:$0xf]
        %v4013 = vld [vmem:[#allocation8 + $0x1dc] sm:$0xf]
        %v4014 = vld [vmem:[#allocation8 + $0x1e0] sm:$0xf]
        %v4015 = vld [vmem:[#allocation8 + $0x1e4] sm:$0xf]
        %v4016 = vld [vmem:[#allocation8 + $0x1e8] sm:$0xf]
        %v4017 = vld [vmem:[#allocation8 + $0x1ec] sm:$0xf]
        %v4018 = vld [vmem:[#allocation8 + $0x1f0] sm:$0xf]
        %v4019 = vld [vmem:[#allocation8 + $0x1f4] sm:$0xf]
        %v4020 = vld [vmem:[#allocation8 + $0x1f8] sm:$0xf]
        %v4021 = vld [vmem:[#allocation8 + $0x1fc] sm:$0xf]
        %v4022 = vld [vmem:[#allocation8 + $0x200] sm:$0xf]
        %v4023 = vld [vmem:[#allocation8 + $0x204] sm:$0xf]
        %v4024 = vld [vmem:[#allocation8 + $0x208] sm:$0xf]
        %v4025 = vld [vmem:[#allocation8 + $0x20c] sm:$0xf]
        %v4026 = vld [vmem:[#allocation8 + $0x210] sm:$0xf]
        %v4027 = vld [vmem:[#allocation8 + $0x214] sm:$0xf]
        %v4028 = vld [vmem:[#allocation8 + $0x218] sm:$0xf]
        %v4029 = vld [vmem:[#allocation8 + $0x21c] sm:$0xf]
        %v4030 = vld [vmem:[#allocation8 + $0x220] sm:$0xf]
        %v4031 = vld [vmem:[#allocation8 + $0x224] sm:$0xf]
        %v4032 = vld [vmem:[#allocation8 + $0x228] sm:$0xf]
        %v4033 = vld [vmem:[#allocation8 + $0x22c] sm:$0xf]
        %v4034 = vld [vmem:[#allocation8 + $0x230] sm:$0xf]
        %v4035 = vld [vmem:[#allocation8 + $0x234] sm:$0xf]
        %v4036 = vld [vmem:[#allocation8 + $0x238] sm:$0xf]
        %v4037 = vld [vmem:[#allocation8 + $0x23c] sm:$0xf]
        %v4086 = vunpack.c.l.b16 %v3990
        %v4087 = vunpack.c.l.b16 %v3991
        %v4088 = vunpack.c.l.b16 %v3992
        %v4089 = vunpack.c.l.b16 %v3993
        %v4090 = vunpack.c.l.b16 %v3994
        %v4091 = vunpack.c.l.b16 %v3995
        %v4092 = vunpack.c.l.b16 %v3996
        %v4093 = vunpack.c.l.b16 %v3997
        %v4094 = vunpack.c.l.b16 %v3998
        %v4095 = vunpack.c.l.b16 %v3999
        %v4096 = vunpack.c.l.b16 %v4000
        %v4097 = vunpack.c.l.b16 %v4001
        %v4098 = vunpack.c.l.b16 %v4002
        %v4099 = vunpack.c.l.b16 %v4003
        %v4100 = vunpack.c.l.b16 %v4004
        %v4101 = vunpack.c.l.b16 %v4005
        %v4102 = vunpack.c.l.b16 %v4006
        %v4103 = vunpack.c.l.b16 %v4007
        %v4104 = vunpack.c.l.b16 %v4008
        %v4105 = vunpack.c.l.b16 %v4009
        %v4106 = vunpack.c.l.b16 %v4010
        %v4107 = vunpack.c.l.b16 %v4011
        %v4108 = vunpack.c.l.b16 %v4012
        %v4109 = vunpack.c.l.b16 %v4013
        %v4110 = vunpack.c.l.b16 %v4014
        %v4111 = vunpack.c.l.b16 %v4015
        %v4112 = vunpack.c.l.b16 %v4016
        %v4113 = vunpack.c.l.b16 %v4017
        %v4114 = vunpack.c.l.b16 %v4018
        %v4115 = vunpack.c.l.b16 %v4019
        %v4116 = vunpack.c.l.b16 %v4020
        %v4117 = vunpack.c.l.b16 %v4021
        %v4118 = vunpack.c.l.b16 %v4022
        %v4119 = vunpack.c.l.b16 %v4023
        %v4120 = vunpack.c.l.b16 %v4024
        %v4121 = vunpack.c.l.b16 %v4025
        %v4122 = vunpack.c.l.b16 %v4026
        %v4123 = vunpack.c.l.b16 %v4027
        %v4124 = vunpack.c.l.b16 %v4028
        %v4125 = vunpack.c.l.b16 %v4029
        %v4126 = vunpack.c.l.b16 %v4030
        %v4127 = vunpack.c.l.b16 %v4031
        %v4128 = vunpack.c.l.b16 %v4032
        %v4129 = vunpack.c.l.b16 %v4033
        %v4130 = vunpack.c.l.b16 %v4034
        %v4131 = vunpack.c.l.b16 %v4035
        %v4132 = vunpack.c.l.b16 %v4036
        %v4133 = vunpack.c.l.b16 %v4037
        %v4134 = vpack.c.b16 %v4087, %v4086
        %v4135 = vpack.c.b16 %v4089, %v4088
        %v4136 = vpack.c.b16 %v4091, %v4090
        %v4137 = vpack.c.b16 %v4093, %v4092
        %v4138 = vpack.c.b16 %v4095, %v4094
        %v4139 = vpack.c.b16 %v4097, %v4096
        %v4140 = vpack.c.b16 %v4099, %v4098
        %v4141 = vpack.c.b16 %v4101, %v4100
        %v4142 = vpack.c.b16 %v4103, %v4102
        %v4143 = vpack.c.b16 %v4105, %v4104
        %v4144 = vpack.c.b16 %v4107, %v4106
        %v4145 = vpack.c.b16 %v4109, %v4108
        %v4146 = vpack.c.b16 %v4111, %v4110
        %v4147 = vpack.c.b16 %v4113, %v4112
        %v4148 = vpack.c.b16 %v4115, %v4114
        %v4149 = vpack.c.b16 %v4117, %v4116
        %v4150 = vpack.c.b16 %v4119, %v4118
        %v4151 = vpack.c.b16 %v4121, %v4120
        %v4152 = vpack.c.b16 %v4123, %v4122
        %v4153 = vpack.c.b16 %v4125, %v4124
        %v4154 = vpack.c.b16 %v4127, %v4126
        %v4155 = vpack.c.b16 %v4129, %v4128
        %v4156 = vpack.c.b16 %v4131, %v4130
        %v4157 = vpack.c.b16 %v4133, %v4132
        %4182 = vmatprep.subr.bf16.mxu0 0
        %4183 = vmatpush1.bf16.msra.mxu0 %v4134
        %4184 = vmatprep.subr.bf16.mxu0 0
        %4185 = vmatpush1.bf16.msra.mxu0 %v4135
        %4186 = vmatprep.subr.bf16.mxu0 0
        %4187 = vmatpush1.bf16.msra.mxu0 %v4136
        %4188 = vmatprep.subr.bf16.mxu0 0
        %4189 = vmatpush1.bf16.msra.mxu0 %v4137
        %4190 = vmatprep.subr.bf16.mxu0 0
        %4191 = vmatpush1.bf16.msra.mxu0 %v4138
        %4192 = vmatprep.subr.bf16.mxu0 0
        %4193 = vmatpush1.bf16.msra.mxu0 %v4139
        %4194 = vmatprep.subr.bf16.mxu0 0
        %4195 = vmatpush1.bf16.msra.mxu0 %v4140
        %4196 = vmatprep.subr.bf16.mxu0 0
        %4197 = vmatpush1.bf16.msra.mxu0 %v4141
        %4198 = vmatprep.subr.bf16.mxu0 0
        %4199 = vmatpush1.bf16.msra.mxu0 %v4142
        %4200 = vmatprep.subr.bf16.mxu0 0
        %4201 = vmatpush1.bf16.msra.mxu0 %v4143
        %4202 = vmatprep.subr.bf16.mxu0 0
        %4203 = vmatpush1.bf16.msra.mxu0 %v4144
        %4204 = vmatprep.subr.bf16.mxu0 0
        %4205 = vmatpush1.bf16.msra.mxu0 %v4145
        %4206 = vmatprep.subr.bf16.mxu0 0
        %4207 = vmatpush1.bf16.msra.mxu0 %v4146
        %4208 = vmatprep.subr.bf16.mxu0 0
        %4209 = vmatpush1.bf16.msra.mxu0 %v4147
        %4210 = vmatprep.subr.bf16.mxu0 0
        %4211 = vmatpush1.bf16.msra.mxu0 %v4148
        %4212 = vmatprep.subr.bf16.mxu0 0
        %4213 = vmatpush1.bf16.msra.mxu0 %v4149
        %4214 = vmatprep.mubr.bf16.mxu0 %v3681
        %4215 = vmatmul.mubr.bf16.gmra.mrb[0].mxu0 %v3590
        %v4216 = vpop.f32.mrb[0].mxu0
        %v4217 = vadd.f32 0.0, %v4216
        %v4218 = vpop.f32.mrb[0].mxu0
        %v4219 = vpop.f32.mrb[0].mxu0
        %v4220 = vadd.f32 0.0, %v4219
        %v4221 = vpop.f32.mrb[0].mxu0
        %4222 = vmatprep.mubr.bf16.mxu0 %v3693
        %4223 = vmatmul.mubr.bf16.gmra.mrb[0].mxu0 %v3591
        %v4224 = vpop.f32.mrb[0].mxu0
        %v4225 = vadd.f32 0.0, %v4224
        %v4226 = vpop.f32.mrb[0].mxu0
        %v4227 = vpop.f32.mrb[0].mxu0
        %v4228 = vadd.f32 0.0, %v4227
        %v4229 = vpop.f32.mrb[0].mxu0
        %4230 = vmatprep.mubr.bf16.mxu0 %v3705
        %4231 = vmatmul.mubr.bf16.gmra.mrb[0].mxu0 %v3592
        %v4232 = vpop.f32.mrb[0].mxu0
        %v4233 = vadd.f32 0.0, %v4232
        %v4234 = vpop.f32.mrb[0].mxu0
        %v4235 = vpop.f32.mrb[0].mxu0
        %v4236 = vadd.f32 0.0, %v4235
        %v4237 = vpop.f32.mrb[0].mxu0
        %4238 = vmatprep.mubr.bf16.mxu0 %v3717
        %4239 = vmatmul.mubr.bf16.gmra.mrb[0].mxu0 %v3593
        %v4240 = vpop.f32.mrb[0].mxu0
        %v4241 = vadd.f32 0.0, %v4240
        %v4242 = vpop.f32.mrb[0].mxu0
        %v4243 = vpop.f32.mrb[0].mxu0
        %v4244 = vadd.f32 0.0, %v4243
        %v4245 = vpop.f32.mrb[0].mxu0
        %4246 = vmatprep.mubr.bf16.mxu0 %v3729
        %4247 = vmatmul.mubr.bf16.gmra.mrb[0].mxu0 %v3594
        %v4248 = vpop.f32.mrb[0].mxu0
        %v4249 = vadd.f32 0.0, %v4248
        %v4250 = vpop.f32.mrb[0].mxu0
        %v4251 = vpop.f32.mrb[0].mxu0
        %v4252 = vadd.f32 0.0, %v4251
        %v4253 = vpop.f32.mrb[0].mxu0
        %4254 = vmatprep.mubr.bf16.mxu0 %v3741
        %4255 = vmatmul.mubr.bf16.gmra.mrb[0].mxu0 %v3595
        %v4256 = vpop.f32.mrb[0].mxu0
        %v4257 = vadd.f32 0.0, %v4256
        %v4258 = vpop.f32.mrb[0].mxu0
        %v4259 = vpop.f32.mrb[0].mxu0
        %v4260 = vadd.f32 0.0, %v4259
        %v4261 = vpop.f32.mrb[0].mxu0
        %4262 = vmatprep.mubr.bf16.mxu0 %v3753
        %4263 = vmatmul.mubr.bf16.gmra.mrb[0].mxu0 %v3596
        %v4264 = vpop.f32.mrb[0].mxu0
        %v4265 = vadd.f32 0.0, %v4264
        %v4266 = vpop.f32.mrb[0].mxu0
        %v4267 = vpop.f32.mrb[0].mxu0
        %v4268 = vadd.f32 0.0, %v4267
        %v4269 = vpop.f32.mrb[0].mxu0
        %4270 = vmatprep.mubr.bf16.mxu0 %v3765
        %4271 = vmatmul.mubr.bf16.gmra.mrb[0].mxu0 %v3597
        %v4272 = vpop.f32.mrb[0].mxu0
        %v4273 = vadd.f32 0.0, %v4272
        %v4274 = vpop.f32.mrb[0].mxu0
        %v4275 = vpop.f32.mrb[0].mxu0
        %v4276 = vadd.f32 0.0, %v4275
        %v4277 = vpop.f32.mrb[0].mxu0
        %4278 = vmatprep.mubr.bf16.mxu0 %v3777
        %4279 = vmatmul.mubr.bf16.gmra.mrb[0].mxu0 %v3598
        %v4280 = vpop.f32.mrb[0].mxu0
        %v4281 = vadd.f32 0.0, %v4280
        %v4282 = vpop.f32.mrb[0].mxu0
        %v4283 = vpop.f32.mrb[0].mxu0
        %v4284 = vadd.f32 0.0, %v4283
        %v4285 = vpop.f32.mrb[0].mxu0
        %4286 = vmatprep.mubr.bf16.mxu0 %v3789
        %4287 = vmatmul.mubr.bf16.gmra.mrb[0].mxu0 %v3599
        %v4288 = vpop.f32.mrb[0].mxu0
        %v4289 = vadd.f32 0.0, %v4288
        %v4290 = vpop.f32.mrb[0].mxu0
        %v4291 = vpop.f32.mrb[0].mxu0
        %v4292 = vadd.f32 0.0, %v4291
        %v4293 = vpop.f32.mrb[0].mxu0
        %4294 = vmatprep.mubr.bf16.mxu0 %v3801
        %4295 = vmatmul.mubr.bf16.gmra.mrb[0].mxu0 %v3600
        %v4296 = vpop.f32.mrb[0].mxu0
        %v4297 = vadd.f32 0.0, %v4296
        %v4298 = vpop.f32.mrb[0].mxu0
        %v4299 = vpop.f32.mrb[0].mxu0
        %v4300 = vadd.f32 0.0, %v4299
        %v4301 = vpop.f32.mrb[0].mxu0
        %4302 = vmatprep.mubr.bf16.mxu0 %v3813
        %4303 = vmatmul.mubr.bf16.gmra.mrb[0].mxu0 %v3601
        %v4304 = vpop.f32.mrb[0].mxu0
        %v4305 = vadd.f32 0.0, %v4304
        %v4306 = vpop.f32.mrb[0].mxu0
        %v4307 = vpop.f32.mrb[0].mxu0
        %v4308 = vadd.f32 0.0, %v4307
        %v4309 = vpop.f32.mrb[0].mxu0
        %4310 = vmatprep.mubr.bf16.mxu0 %v3825
        %4311 = vmatmul.mubr.bf16.gmra.mrb[0].mxu0 %v3602
        %v4312 = vpop.f32.mrb[0].mxu0
        %v4313 = vadd.f32 0.0, %v4312
        %v4314 = vpop.f32.mrb[0].mxu0
        %v4315 = vpop.f32.mrb[0].mxu0
        %v4316 = vadd.f32 0.0, %v4315
        %v4317 = vpop.f32.mrb[0].mxu0
        %4318 = vmatprep.mubr.bf16.mxu0 %v3837
        %4319 = vmatmul.mubr.bf16.gmra.mrb[0].mxu0 %v3603
        %v4320 = vpop.f32.mrb[0].mxu0
        %v4321 = vadd.f32 0.0, %v4320
        %v4322 = vpop.f32.mrb[0].mxu0
        %v4323 = vpop.f32.mrb[0].mxu0
        %v4324 = vadd.f32 0.0, %v4323
        %v4325 = vpop.f32.mrb[0].mxu0
        %4326 = vmatprep.mubr.bf16.mxu0 %v3849
        %4327 = vmatmul.mubr.bf16.gmra.mrb[0].mxu0 %v3604
        %v4328 = vpop.f32.mrb[0].mxu0
        %v4329 = vadd.f32 0.0, %v4328
        %v4330 = vpop.f32.mrb[0].mxu0
        %v4331 = vpop.f32.mrb[0].mxu0
        %v4332 = vadd.f32 0.0, %v4331
        %v4333 = vpop.f32.mrb[0].mxu0
        %4334 = vmatprep.mubr.bf16.mxu0 %v3861
        %4335 = vmatmul.mubr.bf16.gmra.mrb[0].mxu0 %v3605
        %v4336 = vpop.f32.mrb[0].mxu0
        %v4337 = vadd.f32 0.0, %v4336
        %v4338 = vpop.f32.mrb[0].mxu0
        %v4339 = vpop.f32.mrb[0].mxu0
        %v4340 = vadd.f32 0.0, %v4339
        %v4341 = vpop.f32.mrb[0].mxu0
        %4342 = vdwg.mxu0
        %4343 = vmatprep.subr.bf16.mxu0 0
        %4344 = vmatpush1.bf16.msra.mxu0 %v4150
        %4345 = vmatprep.subr.bf16.mxu0 0
        %4346 = vmatpush1.bf16.msra.mxu0 %v4151
        %4347 = vmatprep.subr.bf16.mxu0 0
        %4348 = vmatpush1.bf16.msra.mxu0 %v4152
        %4349 = vmatprep.subr.bf16.mxu0 0
        %4350 = vmatpush1.bf16.msra.mxu0 %v4153
        %4351 = vmatprep.subr.bf16.mxu0 0
        %4352 = vmatpush1.bf16.msra.mxu0 %v4154
        %4353 = vmatprep.subr.bf16.mxu0 0
        %4354 = vmatpush1.bf16.msra.mxu0 %v4155
        %4355 = vmatprep.subr.bf16.mxu0 0
        %4356 = vmatpush1.bf16.msra.mxu0 %v4156
        %4357 = vmatprep.subr.bf16.mxu0 0
        %4358 = vmatpush1.bf16.msra.mxu0 %v4157
        %4359 = vmatprep.subr.bf16.mxu0 0
        %4360 = vmatpush1.bf16.msra.mxu0 0
        %4361 = vmatprep.subr.bf16.mxu0 0
        %4362 = vmatpush1.bf16.msra.mxu0 0
        %4363 = vmatprep.subr.bf16.mxu0 0
        %4364 = vmatpush1.bf16.msra.mxu0 0
        %4365 = vmatprep.subr.bf16.mxu0 0
        %4366 = vmatpush1.bf16.msra.mxu0 0
        %4367 = vmatprep.subr.bf16.mxu0 0
        %4368 = vmatpush1.bf16.msra.mxu0 0
        %4369 = vmatprep.subr.bf16.mxu0 0
        %4370 = vmatpush1.bf16.msra.mxu0 0
        %4371 = vmatprep.subr.bf16.mxu0 0
        %4372 = vmatpush1.bf16.msra.mxu0 0
        %4373 = vmatprep.subr.bf16.mxu0 0
        %4374 = vmatpush1.bf16.msra.mxu0 0
        %4375 = vmatprep.mubr.bf16.mxu0 0
        %4376 = vmatmul.mubr.bf16.gmra.mrb[0].mxu0 %v3928
        %v4377 = vpop.f32.mrb[0].mxu0
        %v4378 = vadd.f32 %v4217, %v4377
        %v4379 = vpop.f32.mrb[0].mxu0
        %v4380 = vpop.f32.mrb[0].mxu0
        %v4381 = vadd.f32 %v4220, %v4380
        %v4382 = vpop.f32.mrb[0].mxu0
        %4383 = vmatprep.mubr.bf16.mxu0 0
        %4384 = vmatmul.mubr.bf16.gmra.mrb[0].mxu0 %v3931
        %v4385 = vpop.f32.mrb[0].mxu0
        %v4386 = vadd.f32 %v4225, %v4385
        %v4387 = vpop.f32.mrb[0].mxu0
        %v4388 = vpop.f32.mrb[0].mxu0
        %v4389 = vadd.f32 %v4228, %v4388
        %v4390 = vpop.f32.mrb[0].mxu0
        %4391 = vmatprep.mubr.bf16.mxu0 0
        %4392 = vmatmul.mubr.bf16.gmra.mrb[0].mxu0 %v3934
        %v4393 = vpop.f32.mrb[0].mxu0
        %v4394 = vadd.f32 %v4233, %v4393
        %v4395 = vpop.f32.mrb[0].mxu0
        %v4396 = vpop.f32.mrb[0].mxu0
        %v4397 = vadd.f32 %v4236, %v4396
        %v4398 = vpop.f32.mrb[0].mxu0
        %4399 = vmatprep.mubr.bf16.mxu0 0
        %4400 = vmatmul.mubr.bf16.gmra.mrb[0].mxu0 %v3937
        %v4401 = vpop.f32.mrb[0].mxu0
        %v4402 = vadd.f32 %v4241, %v4401
        %v4403 = vpop.f32.mrb[0].mxu0
        %v4404 = vpop.f32.mrb[0].mxu0
        %v4405 = vadd.f32 %v4244, %v4404
        %v4406 = vpop.f32.mrb[0].mxu0
        %4407 = vmatprep.mubr.bf16.mxu0 0
        %4408 = vmatmul.mubr.bf16.gmra.mrb[0].mxu0 %v3940
        %v4409 = vpop.f32.mrb[0].mxu0
        %v4410 = vadd.f32 %v4249, %v4409
        %v4411 = vpop.f32.mrb[0].mxu0
        %v4412 = vpop.f32.mrb[0].mxu0
        %v4413 = vadd.f32 %v4252, %v4412
        %v4414 = vpop.f32.mrb[0].mxu0
        %4415 = vmatprep.mubr.bf16.mxu0 0
        %4416 = vmatmul.mubr.bf16.gmra.mrb[0].mxu0 %v3943
        %v4417 = vpop.f32.mrb[0].mxu0
        %v4418 = vadd.f32 %v4257, %v4417
        %v4419 = vpop.f32.mrb[0].mxu0
        %v4420 = vpop.f32.mrb[0].mxu0
        %v4421 = vadd.f32 %v4260, %v4420
        %v4422 = vpop.f32.mrb[0].mxu0
        %4423 = vmatprep.mubr.bf16.mxu0 0
        %4424 = vmatmul.mubr.bf16.gmra.mrb[0].mxu0 %v3946
        %v4425 = vpop.f32.mrb[0].mxu0
        %v4426 = vadd.f32 %v4265, %v4425
        %v4427 = vpop.f32.mrb[0].mxu0
        %v4428 = vpop.f32.mrb[0].mxu0
        %v4429 = vadd.f32 %v4268, %v4428
        %v4430 = vpop.f32.mrb[0].mxu0
        %4431 = vmatprep.mubr.bf16.mxu0 0
        %4432 = vmatmul.mubr.bf16.gmra.mrb[0].mxu0 %v3949
        %v4433 = vpop.f32.mrb[0].mxu0
        %v4434 = vadd.f32 %v4273, %v4433
        %v4435 = vpop.f32.mrb[0].mxu0
        %v4436 = vpop.f32.mrb[0].mxu0
        %v4437 = vadd.f32 %v4276, %v4436
        %v4438 = vpop.f32.mrb[0].mxu0
        %4439 = vmatprep.mubr.bf16.mxu0 0
        %4440 = vmatmul.mubr.bf16.gmra.mrb[0].mxu0 %v3952
        %v4441 = vpop.f32.mrb[0].mxu0
        %v4442 = vadd.f32 %v4281, %v4441
        %v4443 = vpop.f32.mrb[0].mxu0
        %v4444 = vpop.f32.mrb[0].mxu0
        %v4445 = vadd.f32 %v4284, %v4444
        %v4446 = vpop.f32.mrb[0].mxu0
        %4447 = vmatprep.mubr.bf16.mxu0 0
        %4448 = vmatmul.mubr.bf16.gmra.mrb[0].mxu0 %v3955
        %v4449 = vpop.f32.mrb[0].mxu0
        %v4450 = vadd.f32 %v4289, %v4449
        %v4451 = vpop.f32.mrb[0].mxu0
        %v4452 = vpop.f32.mrb[0].mxu0
        %v4453 = vadd.f32 %v4292, %v4452
        %v4454 = vpop.f32.mrb[0].mxu0
        %4455 = vmatprep.mubr.bf16.mxu0 0
        %4456 = vmatmul.mubr.bf16.gmra.mrb[0].mxu0 %v3958
        %v4457 = vpop.f32.mrb[0].mxu0
        %v4458 = vadd.f32 %v4297, %v4457
        %v4459 = vpop.f32.mrb[0].mxu0
        %v4460 = vpop.f32.mrb[0].mxu0
        %v4461 = vadd.f32 %v4300, %v4460
        %v4462 = vpop.f32.mrb[0].mxu0
        %4463 = vmatprep.mubr.bf16.mxu0 0
        %4464 = vmatmul.mubr.bf16.gmra.mrb[0].mxu0 %v3961
        %v4465 = vpop.f32.mrb[0].mxu0
        %v4466 = vadd.f32 %v4305, %v4465
        %v4467 = vpop.f32.mrb[0].mxu0
        %v4468 = vpop.f32.mrb[0].mxu0
        %v4469 = vadd.f32 %v4308, %v4468
        %v4470 = vpop.f32.mrb[0].mxu0
        %4471 = vmatprep.mubr.bf16.mxu0 0
        %4472 = vmatmul.mubr.bf16.gmra.mrb[0].mxu0 %v3964
        %v4473 = vpop.f32.mrb[0].mxu0
        %v4474 = vadd.f32 %v4313, %v4473
        %v4475 = vpop.f32.mrb[0].mxu0
        %v4476 = vpop.f32.mrb[0].mxu0
        %v4477 = vadd.f32 %v4316, %v4476
        %v4478 = vpop.f32.mrb[0].mxu0
        %4479 = vmatprep.mubr.bf16.mxu0 0
        %4480 = vmatmul.mubr.bf16.gmra.mrb[0].mxu0 %v3967
        %v4481 = vpop.f32.mrb[0].mxu0
        %v4482 = vadd.f32 %v4321, %v4481
        %v4483 = vpop.f32.mrb[0].mxu0
        %v4484 = vpop.f32.mrb[0].mxu0
        %v4485 = vadd.f32 %v4324, %v4484
        %v4486 = vpop.f32.mrb[0].mxu0
        %4487 = vmatprep.mubr.bf16.mxu0 0
        %4488 = vmatmul.mubr.bf16.gmra.mrb[0].mxu0 %v3970
        %v4489 = vpop.f32.mrb[0].mxu0
        %v4490 = vadd.f32 %v4329, %v4489
        %v4491 = vpop.f32.mrb[0].mxu0
        %v4492 = vpop.f32.mrb[0].mxu0
        %v4493 = vadd.f32 %v4332, %v4492
        %v4494 = vpop.f32.mrb[0].mxu0
        %4495 = vmatprep.mubr.bf16.mxu0 0
        %4496 = vmatmul.mubr.bf16.gmra.mrb[0].mxu0 %v3973
        %v4497 = vpop.f32.mrb[0].mxu0
        %v4498 = vadd.f32 %v4337, %v4497
        %v4499 = vpop.f32.mrb[0].mxu0
        %v4500 = vpop.f32.mrb[0].mxu0
        %v4501 = vadd.f32 %v4340, %v4500
        %v4502 = vpop.f32.mrb[0].mxu0
        %4503 = vdwg.mxu0
        %v4504 = vadd.f32 %v3335, %v4378
        %v4505 = vadd.f32 %v3338, %v4381
        %v4506 = vadd.f32 %v3343, %v4386
        %v4507 = vadd.f32 %v3346, %v4389
        %v4508 = vadd.f32 %v3351, %v4394
        %v4509 = vadd.f32 %v3354, %v4397
        %v4510 = vadd.f32 %v3359, %v4402
        %v4511 = vadd.f32 %v3362, %v4405
        %v4512 = vadd.f32 %v3367, %v4410
        %v4513 = vadd.f32 %v3370, %v4413
        %v4514 = vadd.f32 %v3375, %v4418
        %v4515 = vadd.f32 %v3378, %v4421
        %v4516 = vadd.f32 %v3383, %v4426
        %v4517 = vadd.f32 %v3386, %v4429
        %v4518 = vadd.f32 %v3391, %v4434
        %v4519 = vadd.f32 %v3394, %v4437
        %v4520 = vadd.f32 %v3399, %v4442
        %v4521 = vadd.f32 %v3402, %v4445
        %v4522 = vadd.f32 %v3407, %v4450
        %v4523 = vadd.f32 %v3410, %v4453
        %v4524 = vadd.f32 %v3415, %v4458
        %v4525 = vadd.f32 %v3418, %v4461
        %v4526 = vadd.f32 %v3423, %v4466
        %v4527 = vadd.f32 %v3426, %v4469
        %v4528 = vadd.f32 %v3431, %v4474
        %v4529 = vadd.f32 %v3434, %v4477
        %v4530 = vadd.f32 %v3439, %v4482
        %v4531 = vadd.f32 %v3442, %v4485
        %v4532 = vadd.f32 %v3447, %v4490
        %v4533 = vadd.f32 %v3450, %v4493
        %v4534 = vadd.f32 %v3455, %v4498
        %v4535 = vadd.f32 %v3458, %v4501
        %v4536 = vld [vmem:[%s4] sm:$0x1]
        %v4538 = vlaneseq
        %v4539 = vshrl.u32 %v4538, 7
        %v4540 = vsub.s32 0, %v4539
        %v4541 = vrot.slane %v4536, %v4540
        %v4543 = vadd.f32 %v4504, %v4541
        %v4544 = vadd.f32 %v4505, %v4541
        %v4545 = vadd.f32 %v4506, %v4541
        %v4546 = vadd.f32 %v4507, %v4541
        %v4547 = vadd.f32 %v4508, %v4541
        %v4548 = vadd.f32 %v4509, %v4541
        %v4549 = vadd.f32 %v4510, %v4541
        %v4550 = vadd.f32 %v4511, %v4541
        %v4551 = vadd.f32 %v4512, %v4541
        %v4552 = vadd.f32 %v4513, %v4541
        %v4553 = vadd.f32 %v4514, %v4541
        %v4554 = vadd.f32 %v4515, %v4541
        %v4555 = vadd.f32 %v4516, %v4541
        %v4556 = vadd.f32 %v4517, %v4541
        %v4557 = vadd.f32 %v4518, %v4541
        %v4558 = vadd.f32 %v4519, %v4541
        %v4559 = vadd.f32 %v4520, %v4541
        %v4560 = vadd.f32 %v4521, %v4541
        %v4561 = vadd.f32 %v4522, %v4541
        %v4562 = vadd.f32 %v4523, %v4541
        %v4563 = vadd.f32 %v4524, %v4541
        %v4564 = vadd.f32 %v4525, %v4541
        %v4565 = vadd.f32 %v4526, %v4541
        %v4566 = vadd.f32 %v4527, %v4541
        %v4567 = vadd.f32 %v4528, %v4541
        %v4568 = vadd.f32 %v4529, %v4541
        %v4569 = vadd.f32 %v4530, %v4541
        %v4570 = vadd.f32 %v4531, %v4541
        %v4571 = vadd.f32 %v4532, %v4541
        %v4572 = vadd.f32 %v4533, %v4541
        %v4573 = vadd.f32 %v4534, %v4541
        %v4574 = vadd.f32 %v4535, %v4541
        %v4575 = vmax.f32 %v4543, 0.0
        %v4576 = vmax.f32 %v4544, 0.0
        %v4577 = vmax.f32 %v4545, 0.0
        %v4578 = vmax.f32 %v4546, 0.0
        %v4579 = vmax.f32 %v4547, 0.0
        %v4580 = vmax.f32 %v4548, 0.0
        %v4581 = vmax.f32 %v4549, 0.0
        %v4582 = vmax.f32 %v4550, 0.0
        %v4583 = vmax.f32 %v4551, 0.0
        %v4584 = vmax.f32 %v4552, 0.0
        %v4585 = vmax.f32 %v4553, 0.0
        %v4586 = vmax.f32 %v4554, 0.0
        %v4587 = vmax.f32 %v4555, 0.0
        %v4588 = vmax.f32 %v4556, 0.0
        %v4589 = vmax.f32 %v4557, 0.0
        %v4590 = vmax.f32 %v4558, 0.0
        %v4591 = vmax.f32 %v4559, 0.0
        %v4592 = vmax.f32 %v4560, 0.0
        %v4593 = vmax.f32 %v4561, 0.0
        %v4594 = vmax.f32 %v4562, 0.0
        %v4595 = vmax.f32 %v4563, 0.0
        %v4596 = vmax.f32 %v4564, 0.0
        %v4597 = vmax.f32 %v4565, 0.0
        %v4598 = vmax.f32 %v4566, 0.0
        %v4599 = vmax.f32 %v4567, 0.0
        %v4600 = vmax.f32 %v4568, 0.0
        %v4601 = vmax.f32 %v4569, 0.0
        %v4602 = vmax.f32 %v4570, 0.0
        %v4603 = vmax.f32 %v4571, 0.0
        %v4604 = vmax.f32 %v4572, 0.0
        %v4605 = vmax.f32 %v4573, 0.0
        %v4606 = vmax.f32 %v4574, 0.0
        %v4607 = vpack.c.bf16 %v4576, %v4575
        %v4608 = vpack.c.bf16 %v4578, %v4577
        %v4609 = vpack.c.bf16 %v4580, %v4579
        %v4610 = vpack.c.bf16 %v4582, %v4581
        %v4611 = vpack.c.bf16 %v4584, %v4583
        %v4612 = vpack.c.bf16 %v4586, %v4585
        %v4613 = vpack.c.bf16 %v4588, %v4587
        %v4614 = vpack.c.bf16 %v4590, %v4589
        %v4615 = vpack.c.bf16 %v4592, %v4591
        %v4616 = vpack.c.bf16 %v4594, %v4593
        %v4617 = vpack.c.bf16 %v4596, %v4595
        %v4618 = vpack.c.bf16 %v4598, %v4597
        %v4619 = vpack.c.bf16 %v4600, %v4599
        %v4620 = vpack.c.bf16 %v4602, %v4601
        %v4621 = vpack.c.bf16 %v4604, %v4603
        %v4622 = vpack.c.bf16 %v4606, %v4605
        %v4623 = vld [vmem:[#allocation9] sm:$0xf]
        %v4624 = vld [vmem:[#allocation9 + $0x4] sm:$0xf]
        %v4625 = vld [vmem:[#allocation9 + $0x8] sm:$0xf]
        %v4626 = vld [vmem:[#allocation9 + $0xc] sm:$0xf]
        %v4627 = vld [vmem:[#allocation9 + $0x10] sm:$0xf]
        %v4628 = vld [vmem:[#allocation9 + $0x14] sm:$0xf]
        %v4629 = vld [vmem:[#allocation9 + $0x18] sm:$0xf]
        %v4630 = vld [vmem:[#allocation9 + $0x1c] sm:$0xf]
        %v4631 = vld [vmem:[#allocation9 + $0x20] sm:$0xf]
        %v4632 = vld [vmem:[#allocation9 + $0x24] sm:$0xf]
        %v4633 = vld [vmem:[#allocation9 + $0x28] sm:$0xf]
        %v4634 = vld [vmem:[#allocation9 + $0x2c] sm:$0xf]
        %v4635 = vld [vmem:[#allocation9 + $0x30] sm:$0xf]
        %v4636 = vld [vmem:[#allocation9 + $0x34] sm:$0xf]
        %v4637 = vld [vmem:[#allocation9 + $0x38] sm:$0xf]
        %v4638 = vld [vmem:[#allocation9 + $0x3c] sm:$0xf]
        %v4639 = vld [vmem:[%s6] sm:$0x1]
        %v4641 = vlaneseq
        %v4642 = vshrl.u32 %v4641, 7
        %v4643 = vsub.s32 0, %v4642
        %v4644 = vrot.slane %v4639, %v4643
        %v4662 = vunpack.c.l.b16 %v4623
        %v4663 = vunpack.c.l.b16 %v4624
        %v4664 = vunpack.c.l.b16 %v4625
        %v4665 = vunpack.c.l.b16 %v4626
        %v4666 = vunpack.c.l.b16 %v4627
        %v4667 = vunpack.c.l.b16 %v4628
        %v4668 = vunpack.c.l.b16 %v4629
        %v4669 = vunpack.c.l.b16 %v4630
        %v4670 = vunpack.c.l.b16 %v4631
        %v4671 = vunpack.c.l.b16 %v4632
        %v4672 = vunpack.c.l.b16 %v4633
        %v4673 = vunpack.c.l.b16 %v4634
        %v4674 = vunpack.c.l.b16 %v4635
        %v4675 = vunpack.c.l.b16 %v4636
        %v4676 = vunpack.c.l.b16 %v4637
        %v4677 = vunpack.c.l.b16 %v4638
        %v4678 = vpack.c.b16 %v4663, %v4662
        %v4679 = vpack.c.b16 %v4665, %v4664
        %v4680 = vpack.c.b16 %v4667, %v4666
        %v4681 = vpack.c.b16 %v4669, %v4668
        %v4682 = vpack.c.b16 %v4671, %v4670
        %v4683 = vpack.c.b16 %v4673, %v4672
        %v4684 = vpack.c.b16 %v4675, %v4674
        %v4685 = vpack.c.b16 %v4677, %v4676
        %4694 = vmatprep.subr.bf16.mxu0 0
        %4695 = vmatpush1.bf16.msra.mxu0 %v4678
        %4696 = vmatprep.subr.bf16.mxu0 0
        %4697 = vmatpush1.bf16.msra.mxu0 %v4679
        %4698 = vmatprep.subr.bf16.mxu0 0
        %4699 = vmatpush1.bf16.msra.mxu0 %v4680
        %4700 = vmatprep.subr.bf16.mxu0 0
        %4701 = vmatpush1.bf16.msra.mxu0 %v4681
        %4702 = vmatprep.subr.bf16.mxu0 0
        %4703 = vmatpush1.bf16.msra.mxu0 %v4682
        %4704 = vmatprep.subr.bf16.mxu0 0
        %4705 = vmatpush1.bf16.msra.mxu0 %v4683
        %4706 = vmatprep.subr.bf16.mxu0 0
        %4707 = vmatpush1.bf16.msra.mxu0 %v4684
        %4708 = vmatprep.subr.bf16.mxu0 0
        %4709 = vmatpush1.bf16.msra.mxu0 %v4685
        %4710 = vmatprep.subr.bf16.mxu0 0
        %4711 = vmatpush1.bf16.msra.mxu0 0
        %4712 = vmatprep.subr.bf16.mxu0 0
        %4713 = vmatpush1.bf16.msra.mxu0 0
        %4714 = vmatprep.subr.bf16.mxu0 0
        %4715 = vmatpush1.bf16.msra.mxu0 0
        %4716 = vmatprep.subr.bf16.mxu0 0
        %4717 = vmatpush1.bf16.msra.mxu0 0
        %4718 = vmatprep.subr.bf16.mxu0 0
        %4719 = vmatpush1.bf16.msra.mxu0 0
        %4720 = vmatprep.subr.bf16.mxu0 0
        %4721 = vmatpush1.bf16.msra.mxu0 0
        %4722 = vmatprep.subr.bf16.mxu0 0
        %4723 = vmatpush1.bf16.msra.mxu0 0
        %4724 = vmatprep.subr.bf16.mxu0 0
        %4725 = vmatpush1.bf16.msra.mxu0 0
        %4726 = vmatprep.mubr.bf16.mxu0 0
        %4727 = vmatmul.mubr.bf16.gmra.mrb[0].mxu0 %v4607
        %v4728 = vpop.f32.mrb[0].mxu0
        %v4729 = vadd.f32 %v4644, %v4728
        %v4730 = vpop.f32.mrb[0].mxu0
        %v4731 = vpop.f32.mrb[0].mxu0
        %v4732 = vadd.f32 %v4644, %v4731
        %v4733 = vpop.f32.mrb[0].mxu0
        %4734 = vmatprep.mubr.bf16.mxu0 0
        %4735 = vmatmul.mubr.bf16.gmra.mrb[0].mxu0 %v4608
        %v4736 = vpop.f32.mrb[0].mxu0
        %v4737 = vadd.f32 %v4644, %v4736
        %v4738 = vpop.f32.mrb[0].mxu0
        %v4739 = vpop.f32.mrb[0].mxu0
        %v4740 = vadd.f32 %v4644, %v4739
        %v4741 = vpop.f32.mrb[0].mxu0
        %4742 = vmatprep.mubr.bf16.mxu0 0
        %4743 = vmatmul.mubr.bf16.gmra.mrb[0].mxu0 %v4609
        %v4744 = vpop.f32.mrb[0].mxu0
        %v4745 = vadd.f32 %v4644, %v4744
        %v4746 = vpop.f32.mrb[0].mxu0
        %v4747 = vpop.f32.mrb[0].mxu0
        %v4748 = vadd.f32 %v4644, %v4747
        %v4749 = vpop.f32.mrb[0].mxu0
        %4750 = vmatprep.mubr.bf16.mxu0 0
        %4751 = vmatmul.mubr.bf16.gmra.mrb[0].mxu0 %v4610
        %v4752 = vpop.f32.mrb[0].mxu0
        %v4753 = vadd.f32 %v4644, %v4752
        %v4754 = vpop.f32.mrb[0].mxu0
        %v4755 = vpop.f32.mrb[0].mxu0
        %v4756 = vadd.f32 %v4644, %v4755
        %v4757 = vpop.f32.mrb[0].mxu0
        %4758 = vmatprep.mubr.bf16.mxu0 0
        %4759 = vmatmul.mubr.bf16.gmra.mrb[0].mxu0 %v4611
        %v4760 = vpop.f32.mrb[0].mxu0
        %v4761 = vadd.f32 %v4644, %v4760
        %v4762 = vpop.f32.mrb[0].mxu0
        %v4763 = vpop.f32.mrb[0].mxu0
        %v4764 = vadd.f32 %v4644, %v4763
        %v4765 = vpop.f32.mrb[0].mxu0
        %4766 = vmatprep.mubr.bf16.mxu0 0
        %4767 = vmatmul.mubr.bf16.gmra.mrb[0].mxu0 %v4612
        %v4768 = vpop.f32.mrb[0].mxu0
        %v4769 = vadd.f32 %v4644, %v4768
        %v4770 = vpop.f32.mrb[0].mxu0
        %v4771 = vpop.f32.mrb[0].mxu0
        %v4772 = vadd.f32 %v4644, %v4771
        %v4773 = vpop.f32.mrb[0].mxu0
        %4774 = vmatprep.mubr.bf16.mxu0 0
        %4775 = vmatmul.mubr.bf16.gmra.mrb[0].mxu0 %v4613
        %v4776 = vpop.f32.mrb[0].mxu0
        %v4777 = vadd.f32 %v4644, %v4776
        %v4778 = vpop.f32.mrb[0].mxu0
        %v4779 = vpop.f32.mrb[0].mxu0
        %v4780 = vadd.f32 %v4644, %v4779
        %v4781 = vpop.f32.mrb[0].mxu0
        %4782 = vmatprep.mubr.bf16.mxu0 0
        %4783 = vmatmul.mubr.bf16.gmra.mrb[0].mxu0 %v4614
        %v4784 = vpop.f32.mrb[0].mxu0
        %v4785 = vadd.f32 %v4644, %v4784
        %v4786 = vpop.f32.mrb[0].mxu0
        %v4787 = vpop.f32.mrb[0].mxu0
        %v4788 = vadd.f32 %v4644, %v4787
        %v4789 = vpop.f32.mrb[0].mxu0
        %4790 = vmatprep.mubr.bf16.mxu0 0
        %4791 = vmatmul.mubr.bf16.gmra.mrb[0].mxu0 %v4615
        %v4792 = vpop.f32.mrb[0].mxu0
        %v4793 = vadd.f32 %v4644, %v4792
        %v4794 = vpop.f32.mrb[0].mxu0
        %v4795 = vpop.f32.mrb[0].mxu0
        %v4796 = vadd.f32 %v4644, %v4795
        %v4797 = vpop.f32.mrb[0].mxu0
        %4798 = vmatprep.mubr.bf16.mxu0 0
        %4799 = vmatmul.mubr.bf16.gmra.mrb[0].mxu0 %v4616
        %v4800 = vpop.f32.mrb[0].mxu0
        %v4801 = vadd.f32 %v4644, %v4800
        %v4802 = vpop.f32.mrb[0].mxu0
        %v4803 = vpop.f32.mrb[0].mxu0
        %v4804 = vadd.f32 %v4644, %v4803
        %v4805 = vpop.f32.mrb[0].mxu0
        %4806 = vmatprep.mubr.bf16.mxu0 0
        %4807 = vmatmul.mubr.bf16.gmra.mrb[0].mxu0 %v4617
        %v4808 = vpop.f32.mrb[0].mxu0
        %v4809 = vadd.f32 %v4644, %v4808
        %v4810 = vpop.f32.mrb[0].mxu0
        %v4811 = vpop.f32.mrb[0].mxu0
        %v4812 = vadd.f32 %v4644, %v4811
        %v4813 = vpop.f32.mrb[0].mxu0
        %4814 = vmatprep.mubr.bf16.mxu0 0
        %4815 = vmatmul.mubr.bf16.gmra.mrb[0].mxu0 %v4618
        %v4816 = vpop.f32.mrb[0].mxu0
        %v4817 = vadd.f32 %v4644, %v4816
        %v4818 = vpop.f32.mrb[0].mxu0
        %v4819 = vpop.f32.mrb[0].mxu0
        %v4820 = vadd.f32 %v4644, %v4819
        %v4821 = vpop.f32.mrb[0].mxu0
        %4822 = vmatprep.mubr.bf16.mxu0 0
        %4823 = vmatmul.mubr.bf16.gmra.mrb[0].mxu0 %v4619
        %v4824 = vpop.f32.mrb[0].mxu0
        %v4825 = vadd.f32 %v4644, %v4824
        %v4826 = vpop.f32.mrb[0].mxu0
        %v4827 = vpop.f32.mrb[0].mxu0
        %v4828 = vadd.f32 %v4644, %v4827
        %v4829 = vpop.f32.mrb[0].mxu0
        %4830 = vmatprep.mubr.bf16.mxu0 0
        %4831 = vmatmul.mubr.bf16.gmra.mrb[0].mxu0 %v4620
        %v4832 = vpop.f32.mrb[0].mxu0
        %v4833 = vadd.f32 %v4644, %v4832
        %v4834 = vpop.f32.mrb[0].mxu0
        %v4835 = vpop.f32.mrb[0].mxu0
        %v4836 = vadd.f32 %v4644, %v4835
        %v4837 = vpop.f32.mrb[0].mxu0
        %4838 = vmatprep.mubr.bf16.mxu0 0
        %4839 = vmatmul.mubr.bf16.gmra.mrb[0].mxu0 %v4621
        %v4840 = vpop.f32.mrb[0].mxu0
        %v4841 = vadd.f32 %v4644, %v4840
        %v4842 = vpop.f32.mrb[0].mxu0
        %v4843 = vpop.f32.mrb[0].mxu0
        %v4844 = vadd.f32 %v4644, %v4843
        %v4845 = vpop.f32.mrb[0].mxu0
        %4846 = vmatprep.mubr.bf16.mxu0 0
        %4847 = vmatmul.mubr.bf16.gmra.mrb[0].mxu0 %v4622
        %v4848 = vpop.f32.mrb[0].mxu0
        %v4849 = vadd.f32 %v4644, %v4848
        %v4850 = vpop.f32.mrb[0].mxu0
        %v4851 = vpop.f32.mrb[0].mxu0
        %v4852 = vadd.f32 %v4644, %v4851
        %v4853 = vpop.f32.mrb[0].mxu0
        %4854 = vdwg.mxu0
        %v4855 = vld [vmem:[%s298] sm:$0xf]
        %v4856 = vld [vmem:[%s298 + $0x4] sm:$0xf]
        %v4857 = vld [vmem:[%s298 + $0x8] sm:$0xf]
        %v4858 = vld [vmem:[%s298 + $0xc] sm:$0xf]
        %v4859 = vld [vmem:[%s298 + $0x10] sm:$0xf]
        %v4860 = vld [vmem:[%s298 + $0x14] sm:$0xf]
        %v4861 = vld [vmem:[%s298 + $0x18] sm:$0xf]
        %v4862 = vld [vmem:[%s298 + $0x1c] sm:$0xf]
        %v4863 = vld [vmem:[%s298 + $0x20] sm:$0xf]
        %v4864 = vld [vmem:[%s298 + $0x24] sm:$0xf]
        %v4865 = vld [vmem:[%s298 + $0x28] sm:$0xf]
        %v4866 = vld [vmem:[%s298 + $0x2c] sm:$0xf]
        %v4867 = vld [vmem:[%s298 + $0x30] sm:$0xf]
        %v4868 = vld [vmem:[%s298 + $0x34] sm:$0xf]
        %v4869 = vld [vmem:[%s298 + $0x38] sm:$0xf]
        %v4870 = vld [vmem:[%s298 + $0x3c] sm:$0xf]
        %v4871 = vld [vmem:[%s298 + $0x40] sm:$0xf]
        %v4872 = vld [vmem:[%s298 + $0x44] sm:$0xf]
        %v4873 = vld [vmem:[%s298 + $0x48] sm:$0xf]
        %v4874 = vld [vmem:[%s298 + $0x4c] sm:$0xf]
        %v4875 = vld [vmem:[%s298 + $0x50] sm:$0xf]
        %v4876 = vld [vmem:[%s298 + $0x54] sm:$0xf]
        %v4877 = vld [vmem:[%s298 + $0x58] sm:$0xf]
        %v4878 = vld [vmem:[%s298 + $0x5c] sm:$0xf]
        %v4879 = vld [vmem:[%s298 + $0x60] sm:$0xf]
        %v4880 = vld [vmem:[%s298 + $0x64] sm:$0xf]
        %v4881 = vld [vmem:[%s298 + $0x68] sm:$0xf]
        %v4882 = vld [vmem:[%s298 + $0x6c] sm:$0xf]
        %v4883 = vld [vmem:[%s298 + $0x70] sm:$0xf]
        %v4884 = vld [vmem:[%s298 + $0x74] sm:$0xf]
        %v4885 = vld [vmem:[%s298 + $0x78] sm:$0xf]
        %v4886 = vld [vmem:[%s298 + $0x7c] sm:$0xf]
        %v4887 = vunpack.c.l.bf16 %v4855
        %v4888 = vunpack.c.l.bf16 %v4856
        %v4889 = vunpack.c.l.bf16 %v4857
        %v4890 = vunpack.c.l.bf16 %v4858
        %v4891 = vunpack.c.l.bf16 %v4859
        %v4892 = vunpack.c.l.bf16 %v4860
        %v4893 = vunpack.c.l.bf16 %v4861
        %v4894 = vunpack.c.l.bf16 %v4862
        %v4895 = vunpack.c.l.bf16 %v4863
        %v4896 = vunpack.c.l.bf16 %v4864
        %v4897 = vunpack.c.l.bf16 %v4865
        %v4898 = vunpack.c.l.bf16 %v4866
        %v4899 = vunpack.c.l.bf16 %v4867
        %v4900 = vunpack.c.l.bf16 %v4868
        %v4901 = vunpack.c.l.bf16 %v4869
        %v4902 = vunpack.c.l.bf16 %v4870
        %v4903 = vunpack.c.l.bf16 %v4871
        %v4904 = vunpack.c.l.bf16 %v4872
        %v4905 = vunpack.c.l.bf16 %v4873
        %v4906 = vunpack.c.l.bf16 %v4874
        %v4907 = vunpack.c.l.bf16 %v4875
        %v4908 = vunpack.c.l.bf16 %v4876
        %v4909 = vunpack.c.l.bf16 %v4877
        %v4910 = vunpack.c.l.bf16 %v4878
        %v4911 = vunpack.c.l.bf16 %v4879
        %v4912 = vunpack.c.l.bf16 %v4880
        %v4913 = vunpack.c.l.bf16 %v4881
        %v4914 = vunpack.c.l.bf16 %v4882
        %v4915 = vunpack.c.l.bf16 %v4883
        %v4916 = vunpack.c.l.bf16 %v4884
        %v4917 = vunpack.c.l.bf16 %v4885
        %v4918 = vunpack.c.l.bf16 %v4886
        %v4919 = vadd.f32 %v4729, %v4887
        %v4920 = vadd.f32 %v4732, %v4888
        %v4921 = vadd.f32 %v4737, %v4889
        %v4922 = vadd.f32 %v4740, %v4890
        %v4923 = vadd.f32 %v4745, %v4891
        %v4924 = vadd.f32 %v4748, %v4892
        %v4925 = vadd.f32 %v4753, %v4893
        %v4926 = vadd.f32 %v4756, %v4894
        %v4927 = vadd.f32 %v4761, %v4895
        %v4928 = vadd.f32 %v4764, %v4896
        %v4929 = vadd.f32 %v4769, %v4897
        %v4930 = vadd.f32 %v4772, %v4898
        %v4931 = vadd.f32 %v4777, %v4899
        %v4932 = vadd.f32 %v4780, %v4900
        %v4933 = vadd.f32 %v4785, %v4901
        %v4934 = vadd.f32 %v4788, %v4902
        %v4935 = vadd.f32 %v4793, %v4903
        %v4936 = vadd.f32 %v4796, %v4904
        %v4937 = vadd.f32 %v4801, %v4905
        %v4938 = vadd.f32 %v4804, %v4906
        %v4939 = vadd.f32 %v4809, %v4907
        %v4940 = vadd.f32 %v4812, %v4908
        %v4941 = vadd.f32 %v4817, %v4909
        %v4942 = vadd.f32 %v4820, %v4910
        %v4943 = vadd.f32 %v4825, %v4911
        %v4944 = vadd.f32 %v4828, %v4912
        %v4945 = vadd.f32 %v4833, %v4913
        %v4946 = vadd.f32 %v4836, %v4914
        %v4947 = vadd.f32 %v4841, %v4915
        %v4948 = vadd.f32 %v4844, %v4916
        %v4949 = vadd.f32 %v4849, %v4917
        %v4950 = vadd.f32 %v4852, %v4918
        %v4951 = vmax.f32 %v4919, 0.0
        %v4952 = vmax.f32 %v4920, 0.0
        %v4953 = vmax.f32 %v4921, 0.0
        %v4954 = vmax.f32 %v4922, 0.0
        %v4955 = vmax.f32 %v4923, 0.0
        %v4956 = vmax.f32 %v4924, 0.0
        %v4957 = vmax.f32 %v4925, 0.0
        %v4958 = vmax.f32 %v4926, 0.0
        %v4959 = vmax.f32 %v4927, 0.0
        %v4960 = vmax.f32 %v4928, 0.0
        %v4961 = vmax.f32 %v4929, 0.0
        %v4962 = vmax.f32 %v4930, 0.0
        %v4963 = vmax.f32 %v4931, 0.0
        %v4964 = vmax.f32 %v4932, 0.0
        %v4965 = vmax.f32 %v4933, 0.0
        %v4966 = vmax.f32 %v4934, 0.0
        %v4967 = vmax.f32 %v4935, 0.0
        %v4968 = vmax.f32 %v4936, 0.0
        %v4969 = vmax.f32 %v4937, 0.0
        %v4970 = vmax.f32 %v4938, 0.0
        %v4971 = vmax.f32 %v4939, 0.0
        %v4972 = vmax.f32 %v4940, 0.0
        %v4973 = vmax.f32 %v4941, 0.0
        %v4974 = vmax.f32 %v4942, 0.0
        %v4975 = vmax.f32 %v4943, 0.0
        %v4976 = vmax.f32 %v4944, 0.0
        %v4977 = vmax.f32 %v4945, 0.0
        %v4978 = vmax.f32 %v4946, 0.0
        %v4979 = vmax.f32 %v4947, 0.0
        %v4980 = vmax.f32 %v4948, 0.0
        %v4981 = vmax.f32 %v4949, 0.0
        %v4982 = vmax.f32 %v4950, 0.0
        %v4983 = vpack.c.bf16 %v4952, %v4951
        %v4984 = vpack.c.bf16 %v4954, %v4953
        %v4985 = vpack.c.bf16 %v4956, %v4955
        %v4986 = vpack.c.bf16 %v4958, %v4957
        %v4987 = vpack.c.bf16 %v4960, %v4959
        %v4988 = vpack.c.bf16 %v4962, %v4961
        %v4989 = vpack.c.bf16 %v4964, %v4963
        %v4990 = vpack.c.bf16 %v4966, %v4965
        %v4991 = vpack.c.bf16 %v4968, %v4967
        %v4992 = vpack.c.bf16 %v4970, %v4969
        %v4993 = vpack.c.bf16 %v4972, %v4971
        %v4994 = vpack.c.bf16 %v4974, %v4973
        %v4995 = vpack.c.bf16 %v4976, %v4975
        %v4996 = vpack.c.bf16 %v4978, %v4977
        %v4997 = vpack.c.bf16 %v4980, %v4979
        %v4998 = vpack.c.bf16 %v4982, %v4981
        %v5015 = vunpack.c.l.b16 %v4983
        %v5016 = vunpack.c.h.b16 %v4983
        %v5017 = vunpack.c.l.b16 %v4984
        %v5018 = vunpack.c.h.b16 %v4984
        %v5019 = vunpack.c.l.b16 %v4985
        %v5020 = vunpack.c.h.b16 %v4985
        %v5021 = vunpack.c.l.b16 %v4986
        %v5022 = vunpack.c.h.b16 %v4986
        %v5023 = vunpack.c.l.b16 %v4987
        %v5024 = vunpack.c.h.b16 %v4987
        %v5025 = vunpack.c.l.b16 %v4988
        %v5026 = vunpack.c.h.b16 %v4988
        %v5027 = vunpack.c.l.b16 %v4989
        %v5028 = vunpack.c.h.b16 %v4989
        %v5029 = vunpack.c.l.b16 %v4990
        %v5030 = vunpack.c.h.b16 %v4990
        %v5031 = vunpack.c.l.b16 %v4991
        %v5032 = vunpack.c.h.b16 %v4991
        %v5033 = vunpack.c.l.b16 %v4992
        %v5034 = vunpack.c.h.b16 %v4992
        %v5035 = vunpack.c.l.b16 %v4993
        %v5036 = vunpack.c.h.b16 %v4993
        %v5037 = vunpack.c.l.b16 %v4994
        %v5038 = vunpack.c.h.b16 %v4994
        %v5039 = vunpack.c.l.b16 %v4995
        %v5040 = vunpack.c.h.b16 %v4995
        %v5041 = vunpack.c.l.b16 %v4996
        %v5042 = vunpack.c.h.b16 %v4996
        %v5043 = vunpack.c.l.b16 %v4997
        %v5044 = vunpack.c.h.b16 %v4997
        %v5045 = vunpack.c.l.b16 %v4998
        %v5046 = vunpack.c.h.b16 %v4998
        %v5047 = vpack.c.b16 %v5015, %v5015
        %v5048 = vpack.c.b16 %v5016, %v5016
        %v5049 = vpack.c.b16 %v5017, %v5017
        %v5050 = vpack.c.b16 %v5018, %v5018
        %v5051 = vpack.c.b16 %v5019, %v5019
        %v5052 = vpack.c.b16 %v5020, %v5020
        %v5053 = vpack.c.b16 %v5021, %v5021
        %v5054 = vpack.c.b16 %v5022, %v5022
        %v5055 = vpack.c.b16 %v5023, %v5023
        %v5056 = vpack.c.b16 %v5024, %v5024
        %v5057 = vpack.c.b16 %v5025, %v5025
        %v5058 = vpack.c.b16 %v5026, %v5026
        %v5059 = vpack.c.b16 %v5027, %v5027
        %v5060 = vpack.c.b16 %v5028, %v5028
        %v5061 = vpack.c.b16 %v5029, %v5029
        %v5062 = vpack.c.b16 %v5030, %v5030
        %v5063 = vpack.c.b16 %v5031, %v5031
        %v5064 = vpack.c.b16 %v5032, %v5032
        %v5065 = vpack.c.b16 %v5033, %v5033
        %v5066 = vpack.c.b16 %v5034, %v5034
        %v5067 = vpack.c.b16 %v5035, %v5035
        %v5068 = vpack.c.b16 %v5036, %v5036
        %v5069 = vpack.c.b16 %v5037, %v5037
        %v5070 = vpack.c.b16 %v5038, %v5038
        %v5071 = vpack.c.b16 %v5039, %v5039
        %v5072 = vpack.c.b16 %v5040, %v5040
        %v5073 = vpack.c.b16 %v5041, %v5041
        %v5074 = vpack.c.b16 %v5042, %v5042
        %v5075 = vpack.c.b16 %v5043, %v5043
        %v5076 = vpack.c.b16 %v5044, %v5044
        %v5077 = vpack.c.b16 %v5045, %v5045
        %v5078 = vpack.c.b16 %v5046, %v5046
        %5111 = vst [vmem:[%s340] sm:$0xf] %v5047
        %5112 = vst [vmem:[%s340 + $0x4] sm:$0xf] %v5048
        %5113 = vst [vmem:[%s340 + $0x8] sm:$0xf] %v5049
        %5114 = vst [vmem:[%s340 + $0xc] sm:$0xf] %v5050
        %5115 = vst [vmem:[%s340 + $0x10] sm:$0xf] %v5051
        %5116 = vst [vmem:[%s340 + $0x14] sm:$0xf] %v5052
        %5117 = vst [vmem:[%s340 + $0x18] sm:$0xf] %v5053
        %5118 = vst [vmem:[%s340 + $0x1c] sm:$0xf] %v5054
        %5119 = vst [vmem:[%s340 + $0x20] sm:$0xf] %v5055
        %5120 = vst [vmem:[%s340 + $0x24] sm:$0xf] %v5056
        %5121 = vst [vmem:[%s340 + $0x28] sm:$0xf] %v5057
        %5122 = vst [vmem:[%s340 + $0x2c] sm:$0xf] %v5058
        %5123 = vst [vmem:[%s340 + $0x30] sm:$0xf] %v5059
        %5124 = vst [vmem:[%s340 + $0x34] sm:$0xf] %v5060
        %5125 = vst [vmem:[%s340 + $0x38] sm:$0xf] %v5061
        %5126 = vst [vmem:[%s340 + $0x3c] sm:$0xf] %v5062
        %5127 = vst [vmem:[%s340 + $0x40] sm:$0xf] %v5063
        %5128 = vst [vmem:[%s340 + $0x44] sm:$0xf] %v5064
        %5129 = vst [vmem:[%s340 + $0x48] sm:$0xf] %v5065
        %5130 = vst [vmem:[%s340 + $0x4c] sm:$0xf] %v5066
        %5131 = vst [vmem:[%s340 + $0x50] sm:$0xf] %v5067
        %5132 = vst [vmem:[%s340 + $0x54] sm:$0xf] %v5068
        %5133 = vst [vmem:[%s340 + $0x58] sm:$0xf] %v5069
        %5134 = vst [vmem:[%s340 + $0x5c] sm:$0xf] %v5070
        %5135 = vst [vmem:[%s340 + $0x60] sm:$0xf] %v5071
        %5136 = vst [vmem:[%s340 + $0x64] sm:$0xf] %v5072
        %5137 = vst [vmem:[%s340 + $0x68] sm:$0xf] %v5073
        %5138 = vst [vmem:[%s340 + $0x6c] sm:$0xf] %v5074
        %5139 = vst [vmem:[%s340 + $0x70] sm:$0xf] %v5075
        %5140 = vst [vmem:[%s340 + $0x74] sm:$0xf] %v5076
        %5141 = vst [vmem:[%s340 + $0x78] sm:$0xf] %v5077
        %5142 = vst [vmem:[%s340 + $0x7c] sm:$0xf] %v5078
        %s5143 = sand.u32 %s186, 1
        %s5144 = scalar_lea.sflag [#allocation5], %s5143
        %s5145 = sand.u32 %s186, 1
        %s5146 = smul.addr %s5145, 128
        %s5147 = scalar_lea.vmem [#allocation11], %s5146
        // Predicated region
        $region65: #{tpu_custom_call.1} parent=47 // pred_check
          %p5148 = pneg %p196
        $region66: #{tpu_custom_call.1} parent=47 // pred_check_branch
          %5150 = sbr.rel (%p5148) target = $region68
        $region67: #{tpu_custom_call.1} parent=47 // pred_region
          %s5152 = ssub.s32 2048, 2048
          %5153 = vsyncadd %s5144, %s5152
          %s5154 = smul.addr %s26, 32
          %s5155 = smul.addr %s5154, 64
          %s5156 = scalar_lea.hbm %s7, %s5155
          %s5157 = sshll.u32 %s5147, 4
          %s5158 = int_to_ptr.vmem [resolvable:$true] %s5157
          %5163 = dma.vmem_to_hbm [thread:$0]  %s5158, 2048, %s5156, %s5144, 64, 64, 4
        $region68: #{tpu_custom_call.1} parent=47 // pred_fallthru
          _
      $region48: #{tpu_custom_call.1} parent=5 // pred_fallthru
        _
      %p5164 = scmp.le.s32.totalorder 2, %s21
      // Predicated region
      $region69: #{tpu_custom_call.1} parent=5 // pred_check
        %p5165 = pneg %p5164
      $region70: #{tpu_custom_call.1} parent=5 // pred_check_branch
        %5167 = sbr.rel (%p5165) target = $region72
      $region71: #{tpu_custom_call.1} parent=5 // pred_region
        %s5168 = ssub.s32 %s21, 2
        // Predicated region
        $region73: #{tpu_custom_call.1} parent=71 // pred_check
          %p5169 = pneg %p202
        $region74: #{tpu_custom_call.1} parent=71 // pred_check_branch
          %5171 = sbr.rel (%p5169) target = $region76
        $region75: #{tpu_custom_call.1} parent=71 // pred_region
          %s5172 = sand.u32 %s187, 1
          %s5173 = scalar_lea.sflag [#allocation5], %s5172
          %s5174 = sand.u32 %s187, 1
          %s5175 = smul.addr %s5174, 128
          %s5176 = scalar_lea.vmem [#allocation11], %s5175
          %5177 = dma.done %s5173, 2048
        $region76: #{tpu_custom_call.1} parent=71 // pred_fallthru
          _
      $region72: #{tpu_custom_call.1} parent=5 // pred_fallthru
        _
    $region6: #{tpu_custom_call.1} parent=1 // loop_footer
      %s25 = sadd.s32 1, %s21
    $region7: #{tpu_custom_call.1} parent=1 // loop_footer_branch
      %20 = sbr.rel target = $region3
    $region8: #{tpu_custom_call.1} parent=1 // loop_exit
      _
    %5178 = vsyncpa [#allocation4], 1
    %s5179 = scalar_lea.sflag [#allocation4], 1
    %5180 = vsyncpa %s5179, 1
    %5181 = vsyncpa [#allocation7], 1
    %5182 = vsyncpa [#allocation10], 1
    %5183 = vsyncpa [#allocation5], 1
    %s5184 = scalar_lea.sflag [#allocation5], 1
    %5185 = vsyncpa %s5184, 1

</llo_original>
